<compile_context>
chip_gen: v6e
topology: v6e:2x2x1
jax: 0.10.0
libtpu: 0.0.40
codegen_flags: <defaults>
</compile_context>

<pallas_src>
import functools

import jax
import jax.numpy as jnp
from jax.experimental import pallas as pl
from jax.experimental.pallas import tpu as pltpu


# ----------------------------------------------------------------------------- #
# Pallas kernels
# ----------------------------------------------------------------------------- #
def _stable_sigmoid(y):
    z = jnp.exp(-jnp.abs(y))
    return jnp.where(y >= 0.0, 1.0 / (1.0 + z), z / (1.0 + z))


def _fused_matmul_kernel(x_ref, w_ref, b_ref, o_ref, *, act):
    """o = act(x @ w + b); x/w are bf16, accumulation and epilogue in f32."""
    y = jnp.dot(x_ref[...], w_ref[...], preferred_element_type=jnp.float32)
    y = y + b_ref[...]
    if act == "relu":
        y = jnp.maximum(y, 0.0)
    elif act == "sigmoid":
        y = _stable_sigmoid(y)
    o_ref[...] = y


def _fused_mlp_kernel(x_ref, w1_ref, b1_ref, w2_ref, b2_ref, o_ref):
    """o = relu((x @ w1 + b1) @ w2 + b2)  -- both Linear layers in one kernel."""
    h = jnp.dot(x_ref[...], w1_ref[...], preferred_element_type=jnp.float32)
    h = h + b1_ref[...]
    y = jnp.dot(h.astype(jnp.bfloat16), w2_ref[...],
                preferred_element_type=jnp.float32)
    y = y + b2_ref[...]
    o_ref[...] = jnp.maximum(y, 0.0)


# ----------------------------------------------------------------------------- #
# Pallas wrappers
# ----------------------------------------------------------------------------- #
def _round_up(x, m):
    return ((x + m - 1) // m) * m


def fused_matmul_bias_act(x, w, bias, act="none"):
    """act(x @ w + bias) on the MXU.  x: [M, K] f32, w: [K, N] f32, bias: [N] f32.

    K and N are zero-padded to multiples of 128 (lane-dense loads/stores); M is
    padded to a multiple of 16 only when needed (the large layers are already
    aligned).  Operands are cast to bf16; accumulation/epilogue stay f32.
    """
    M, K = x.shape
    K2, N = w.shape
    assert K == K2
    Mp, Kp, Np = _round_up(M, 16), _round_up(K, 128), _round_up(N, 128)
    if Mp != M or Kp != K:
        x = jnp.pad(x, ((0, Mp - M), (0, Kp - K)))
    if Kp != K or Np != N:
        w = jnp.pad(w, ((0, Kp - K), (0, Np - N)))
    if Np != N:
        bias = jnp.pad(bias, (0, Np - N))

    out = pl.pallas_call(
        functools.partial(_fused_matmul_kernel, act=act),
        out_shape=jax.ShapeDtypeStruct((Mp, Np), jnp.float32),
        grid_spec=pltpu.PrefetchScalarGridSpec(
            num_scalar_prefetch=0,
            grid=(1,),  # single block: every layer fits comfortably in VMEM
            in_specs=[
                pl.BlockSpec((Mp, Kp), lambda i: (0, 0)),
                pl.BlockSpec((Kp, Np), lambda i: (0, 0)),
                pl.BlockSpec((1, Np), lambda i: (0, 0)),
            ],
            out_specs=pl.BlockSpec((Mp, Np), lambda i: (0, 0)),
        ),
        compiler_params=pltpu.CompilerParams(dimension_semantics=("arbitrary",)),
    )(x.astype(jnp.bfloat16), w.astype(jnp.bfloat16),
      bias.reshape(1, Np).astype(jnp.float32))
    return out[:M, :N]


def fused_mlp_relu(x_flat, w1, b1, w2, b2, latent_dim):
    """relu((x @ w1.T + b1) @ w2.T + b2) with PyTorch-layout weights.
    w1: [latent, 256], b1: [latent], w2: [256, latent], b2: [256]."""
    B, F = x_flat.shape                      # F = 256 (multiple of 128)
    L = latent_dim
    Lp = _round_up(L, 128)
    w1m = jnp.pad(jnp.transpose(w1), ((0, 0), (0, Lp - L)))   # [F, Lp]
    b1p = jnp.pad(b1, (0, Lp - L)).reshape(1, Lp)
    w2m = jnp.pad(jnp.transpose(w2), ((0, Lp - L), (0, 0)))   # [Lp, F]
    b2p = b2.reshape(1, F)
    Bp = _round_up(B, 16)
    xin = jnp.pad(x_flat, ((0, Bp - B), (0, 0)))

    out = pl.pallas_call(
        _fused_mlp_kernel,
        out_shape=jax.ShapeDtypeStruct((Bp, F), jnp.float32),
        grid_spec=pltpu.PrefetchScalarGridSpec(
            num_scalar_prefetch=0,
            grid=(1,),
            in_specs=[
                pl.BlockSpec((Bp, F), lambda i: (0, 0)),
                pl.BlockSpec((F, Lp), lambda i: (0, 0)),
                pl.BlockSpec((1, Lp), lambda i: (0, 0)),
                pl.BlockSpec((Lp, F), lambda i: (0, 0)),
                pl.BlockSpec((1, F), lambda i: (0, 0)),
            ],
            out_specs=pl.BlockSpec((Bp, F), lambda i: (0, 0)),
        ),
        compiler_params=pltpu.CompilerParams(dimension_semantics=("arbitrary",)),
    )(xin.astype(jnp.bfloat16), w1m.astype(jnp.bfloat16), b1p.astype(jnp.float32),
      w2m.astype(jnp.bfloat16), b2p.astype(jnp.float32))
    return out[:B]


# ----------------------------------------------------------------------------- #
# Trace-time glue: im2col, BN folding, layer wrappers
# ----------------------------------------------------------------------------- #
def _im2col(x, k, stride, pad):
    """x: [B,H,W,C] NHWC -> patches [B,Ho,Wo,k*k*C] ((di, dj, c) ordering)."""
    x = jnp.pad(x, ((0, 0), (pad, pad), (pad, pad), (0, 0)))
    B, H, W, C = x.shape
    Ho = (H - k) // stride + 1
    Wo = (W - k) // stride + 1
    cols = []
    for di in range(k):
        for dj in range(k):
            cols.append(x[:, di:di + stride * Ho:stride, dj:dj + stride * Wo:stride, :])
    return jnp.concatenate(cols, axis=-1)


def _fold_bn(conv_bias, bn, eps=1e-5):
    gamma, beta, rmean, rvar = bn
    scale = gamma / jnp.sqrt(rvar + eps)
    bias = (conv_bias - rmean) * scale + beta
    return scale, bias


def conv2d_bn_act(x, W, b, bn, k, stride, pad, act):
    """Conv2d + folded BN + activation.  x: [B,H,W,Cin] NHWC; W: [Cout,Cin,kh,kw]."""
    patches = _im2col(x, k, stride, pad)
    B, Ho, Wo, KK = patches.shape
    Cout = W.shape[0]
    scale, bias = _fold_bn(b, bn)
    w_mat = jnp.transpose(W, (2, 3, 1, 0)).reshape(KK, Cout) * scale[None, :]
    out = fused_matmul_bias_act(patches.reshape(B * Ho * Wo, KK), w_mat, bias, act)
    return out.reshape(B, Ho, Wo, Cout)


def convT2d_s2_bn_act(x, Wt, b, bn, act):
    """ConvTranspose2d(k=4, stride=2, padding=1) + folded BN + act via sub-pixel
    (phase) decomposition: one matmul with N = 4*Cout; no input dilation (no 4x
    zero work).  x: [B,h,w,Cin] NHWC; Wt: [Cin,Cout,4,4] (PyTorch layout)."""
    B, h, w, Cin = x.shape
    Cout = Wt.shape[1]
    patches = _im2col(x, 2, 1, 1)                      # [B, h+1, w+1, 4*Cin]
    _, Hp, Wp, KK = patches.shape
    scale, bias = _fold_bn(b, bn)
    # Output phase (r, s) (row/col parity) uses ConvT taps
    #   di = tap_idx[r][a], dj = tap_idx[s][bb] for the (a, bb) 2x2 im2col offsets:
    #   even row p=2m: y = x_pad[m]*W[3] + x_pad[m+1]*W[1]   (patch position m)
    #   odd  row p=2m+1: y = x_pad[m+1]*W[2] + x_pad[m+2]*W[0] (patch position m+1)
    tap_idx = ((3, 1), (2, 0))
    w_cols, b_cols = [], []
    for r in range(2):
        for s in range(2):
            taps = [Wt[:, :, tap_idx[r][a], tap_idx[s][bb]]      # [Cin, Cout]
                    for a in range(2) for bb in range(2)]
            w_phase = jnp.concatenate(taps, axis=0)              # [4*Cin, Cout]
            w_cols.append(w_phase * scale[None, :])
            b_cols.append(bias)
    w_big = jnp.concatenate(w_cols, axis=1)                      # [4*Cin, 4*Cout]
    b_big = jnp.concatenate(b_cols, axis=0)                      # [4*Cout]
    out = fused_matmul_bias_act(patches.reshape(B * Hp * Wp, KK), w_big, b_big, act)
    out = out.reshape(B, Hp, Wp, 4, Cout)
    phases = [out[:, r:r + h, s:s + w, 2 * r + s, :]
              for r in range(2) for s in range(2)]               # each [B,h,w,Cout]
    stacked = jnp.stack(phases, axis=3).reshape(B, h, w, 2, 2, Cout)
    return stacked.transpose(0, 1, 3, 2, 4, 5).reshape(B, 2 * h, 2 * w, Cout)


def convT2d_s1_bn_act(x, Wt, b, bn, k, pad, act):
    """ConvTranspose2d(stride=1) == Conv2d with flipped kernel, swapped channels,
    padding k-1-pad."""
    W_eq = jnp.transpose(jnp.flip(Wt, axis=(2, 3)), (1, 0, 2, 3))  # [Cout,Cin,kh,kw]
    return conv2d_bn_act(x, W_eq, b, bn, k, 1, k - 1 - pad, act)


# ----------------------------------------------------------------------------- #
# Deterministic parameter construction (shapes from CAE.__init__)
# ----------------------------------------------------------------------------- #
def _init_conv(key, cout, cin, k):
    k1, k2 = jax.random.split(key)
    bound = 1.0 / jnp.sqrt(cin * k * k)
    W = jax.random.uniform(k1, (cout, cin, k, k), jnp.float32, -bound, bound)
    b = jax.random.uniform(k2, (cout,), jnp.float32, -bound, bound)
    return W, b


def _init_convT(key, cin, cout, k):
    k1, k2 = jax.random.split(key)
    bound = 1.0 / jnp.sqrt(cin * k * k)
    W = jax.random.uniform(k1, (cin, cout, k, k), jnp.float32, -bound, bound)
    b = jax.random.uniform(k2, (cout,), jnp.float32, -bound, bound)
    return W, b


def _init_bn(key, c):
    k1, k2, k3, k4 = jax.random.split(key, 4)
    gamma = jax.random.uniform(k1, (c,), jnp.float32, 0.5, 1.5)
    beta = jax.random.uniform(k2, (c,), jnp.float32, -0.1, 0.1)
    rmean = jax.random.uniform(k3, (c,), jnp.float32, -0.1, 0.1)
    rvar = jax.random.uniform(k4, (c,), jnp.float32, 0.5, 1.5)
    return gamma, beta, rmean, rvar


def _init_linear(key, fin, fout):
    k1, k2 = jax.random.split(key)
    bound = 1.0 / jnp.sqrt(fin)
    W = jax.random.uniform(k1, (fout, fin), jnp.float32, -bound, bound)  # PyTorch layout
    b = jax.random.uniform(k2, (fout,), jnp.float32, -bound, bound)
    return W, b


def make_params(latent_dim=2, seed=0):
    key = jax.random.PRNGKey(seed)
    keys = jax.random.split(key, 32)
    ki = iter(keys)

    enc_spec = [(3, 64, 3, 1, 1), (64, 64, 4, 2, 1), (64, 32, 3, 1, 1),
                (32, 32, 4, 2, 1), (32, 16, 3, 1, 1), (16, 16, 4, 2, 1)]
    enc = []
    for cin, cout, k, s, p in enc_spec:
        W, b = _init_conv(next(ki), cout, cin, k)
        bn = _init_bn(next(ki), cout)
        enc.append((W, b, bn, k, s, p))

    emb_w, emb_b = _init_linear(next(ki), 16 * 4 * 4, latent_dim)
    dec_emb_w, dec_emb_b = _init_linear(next(ki), latent_dim, 16 * 4 * 4)

    dec_spec = [(16, 32, 4, 2, 1), (32, 32, 3, 1, 1), (32, 64, 4, 2, 1),
                (64, 64, 3, 1, 1), (64, 3, 4, 2, 1)]
    dec = []
    for cin, cout, k, s, p in dec_spec:
        W, b = _init_convT(next(ki), cin, cout, k)
        bn = _init_bn(next(ki), cout)
        dec.append((W, b, bn, k, s, p))

    return {"enc": enc, "emb": (emb_w, emb_b), "dec_emb": (dec_emb_w, dec_emb_b),
            "dec": dec, "latent_dim": latent_dim}


# ----------------------------------------------------------------------------- #
# CAE forward
# ----------------------------------------------------------------------------- #
def cae_forward(x_nchw, params):
    x = jnp.transpose(x_nchw, (0, 2, 3, 1)).astype(jnp.float32)  # NCHW -> NHWC
    B = x.shape[0]

    # ---------------- encoder ----------------
    for (W, b, bn, k, s, p) in params["enc"]:
        x = conv2d_bn_act(x, W, b, bn, k, s, p, "relu")          # -> [B, 4, 4, 16]

    # flatten with PyTorch NCHW ordering: (C, H, W)
    flat = jnp.transpose(x, (0, 3, 1, 2)).reshape(B, 16 * 4 * 4)

    # embedding + decode_embedding + ReLU, fused in one kernel
    emb_w, emb_b = params["emb"]
    dec_w, dec_b = params["dec_emb"]
    rev = fused_mlp_relu(flat, emb_w, emb_b, dec_w, dec_b, params["latent_dim"])

    # view(-1, 16, 4, 4) (NCHW) -> NHWC
    x = jnp.transpose(rev.reshape(B, 16, 4, 4), (0, 2, 3, 1))

    # ---------------- decoder ----------------
    n_dec = len(params["dec"])
    for i, (Wt, b, bn, k, s, p) in enumerate(params["dec"]):
        act = "sigmoid" if i == n_dec - 1 else "relu"
        if s == 2:
            x = convT2d_s2_bn_act(x, Wt, b, bn, act)
        else:
            x = convT2d_s1_bn_act(x, Wt, b, bn, k, p, act)

    return jnp.transpose(x, (0, 3, 1, 2))                        # NHWC -> NCHW


# ----------------------------------------------------------------------------- #
if __name__ == "__main__":
    params = make_params(latent_dim=2, seed=0)
    key = jax.random.PRNGKey(0)
    # input_dim = 3072 = 3 * 32 * 32
    x = jax.random.uniform(key, (2, 3, 32, 32), jnp.float32)

    fwd = jax.jit(lambda t: cae_forward(t, params))   # params are trace-time constants
    out = jax.block_until_ready(fwd(x))

    assert out.shape == (2, 3, 32, 32), out.shape
    assert out.dtype == jnp.float32
    assert bool(jnp.all(jnp.isfinite(out)))
    # sigmoid output range
    assert bool(jnp.all(out >= 0.0)) and bool(jnp.all(out <= 1.0))
    print("KERNEL_OK")
</pallas_src>

<mosaic_0001>
module attributes {stable_mosaic.version = 11 : i64} {
  func.func @_fused_matmul_kernel(%arg0: i32, %arg1: memref<2048x128xbf16, #tpu.memory_space<vmem>>, %arg2: memref<128x128xbf16, #tpu.memory_space<vmem>>, %arg3: memref<1x128xf32, #tpu.memory_space<vmem>>, %arg4: memref<2048x128xf32, #tpu.memory_space<vmem>>) attributes {dimension_semantics = [#tpu.dimension_semantics<arbitrary>], iteration_bounds = array<i64: 1>, scalar_prefetch = 0 : i64, scratch_operands = 0 : i64, tpu.core_type = #tpu.core_type<tc>, window_params = [{pipeline_mode = #tpu.pipeline_mode<synchronous>, transform_indices = @transform_0, window_bounds = array<i64: 2048, 128>}, {pipeline_mode = #tpu.pipeline_mode<synchronous>, transform_indices = @transform_1, window_bounds = array<i64: 128, 128>}, {pipeline_mode = #tpu.pipeline_mode<synchronous>, transform_indices = @transform_2, window_bounds = array<i64: 1, 128>}, {pipeline_mode = #tpu.pipeline_mode<synchronous>, transform_indices = @transform_3, window_bounds = array<i64: 2048, 128>}]} {
    %c0 = arith.constant 0 : index
    %c0_0 = arith.constant 0 : index
    %0 = vector.load %arg1[%c0, %c0_0] : memref<2048x128xbf16, #tpu.memory_space<vmem>>, vector<2048x128xbf16>
    %c0_1 = arith.constant 0 : index
    %c0_2 = arith.constant 0 : index
    %1 = vector.load %arg2[%c0_1, %c0_2] : memref<128x128xbf16, #tpu.memory_space<vmem>>, vector<128x128xbf16>
    %cst = arith.constant dense<0.000000e+00> : vector<2048x128xf32>
    %2 = tpu.matmul %0, %1, %cst {dimension_numbers = #tpu.dot_dimension_numbers<[1], [0], [0], [1], [0, 0, 1, 1], [], []>} : vector<2048x128xbf16>, vector<128x128xbf16>, vector<2048x128xf32> -> vector<2048x128xf32>
    %c0_3 = arith.constant 0 : index
    %c0_4 = arith.constant 0 : index
    %3 = vector.load %arg3[%c0_3, %c0_4] : memref<1x128xf32, #tpu.memory_space<vmem>>, vector<1x128xf32>
    %4 = vector.broadcast %3 : vector<1x128xf32> to vector<2048x128xf32>
    %5 = arith.addf %2, %4 : vector<2048x128xf32>
    %cst_5 = arith.constant 0.000000e+00 : f32
    %6 = vector.broadcast %cst_5 : f32 to vector<2048x128xf32>
    %7 = arith.maximumf %5, %6 : vector<2048x128xf32>
    %c0_6 = arith.constant 0 : index
    %c0_7 = arith.constant 0 : index
    %8 = vector.load %arg4[%c0_6, %c0_7] : memref<2048x128xf32, #tpu.memory_space<vmem>>, vector<2048x128xf32>
    tpu.vector_store %arg4[%c0_6, %c0_7], %7 {strides = array<i32>} : memref<2048x128xf32, #tpu.memory_space<vmem>>, vector<2048x128xf32>,
    return
  }
  func.func @transform_0(%arg0: i32) -> (i32, i32) {
    %c0_i32 = arith.constant 0 : i32
    %c0_i32_0 = arith.constant 0 : i32
    %c0_i32_1 = arith.constant 0 : i32
    return %c0_i32, %c0_i32_0 : i32, i32
  }
  func.func @transform_1(%arg0: i32) -> (i32, i32) {
    %c0_i32 = arith.constant 0 : i32
    %c0_i32_0 = arith.constant 0 : i32
    %c0_i32_1 = arith.constant 0 : i32
    return %c0_i32, %c0_i32_0 : i32, i32
  }
  func.func @transform_2(%arg0: i32) -> (i32, i32) {
    %c0_i32 = arith.constant 0 : i32
    %c0_i32_0 = arith.constant 0 : i32
    %c0_i32_1 = arith.constant 0 : i32
    return %c0_i32, %c0_i32_0 : i32, i32
  }
  func.func @transform_3(%arg0: i32) -> (i32, i32) {
    %c0_i32 = arith.constant 0 : i32
    %c0_i32_0 = arith.constant 0 : i32
    %c0_i32_1 = arith.constant 0 : i32
    return %c0_i32, %c0_i32_0 : i32, i32
  }
}

module attributes {stable_mosaic.version = 11 : i64} {
  func.func @_fused_matmul_kernel(%arg0: i32, %arg1: memref<512x1024xbf16, #tpu.memory_space<vmem>>, %arg2: memref<1024x128xbf16, #tpu.memory_space<vmem>>, %arg3: memref<1x128xf32, #tpu.memory_space<vmem>>, %arg4: memref<512x128xf32, #tpu.memory_space<vmem>>) attributes {dimension_semantics = [#tpu.dimension_semantics<arbitrary>], iteration_bounds = array<i64: 1>, scalar_prefetch = 0 : i64, scratch_operands = 0 : i64, tpu.core_type = #tpu.core_type<tc>, window_params = [{pipeline_mode = #tpu.pipeline_mode<synchronous>, transform_indices = @transform_0, window_bounds = array<i64: 512, 1024>}, {pipeline_mode = #tpu.pipeline_mode<synchronous>, transform_indices = @transform_1, window_bounds = array<i64: 1024, 128>}, {pipeline_mode = #tpu.pipeline_mode<synchronous>, transform_indices = @transform_2, window_bounds = array<i64: 1, 128>}, {pipeline_mode = #tpu.pipeline_mode<synchronous>, transform_indices = @transform_3, window_bounds = array<i64: 512, 128>}]} {
    %c0 = arith.constant 0 : index
    %c0_0 = arith.constant 0 : index
    %0 = vector.load %arg1[%c0, %c0_0] : memref<512x1024xbf16, #tpu.memory_space<vmem>>, vector<512x1024xbf16>
    %c0_1 = arith.constant 0 : index
    %c0_2 = arith.constant 0 : index
    %1 = vector.load %arg2[%c0_1, %c0_2] : memref<1024x128xbf16, #tpu.memory_space<vmem>>, vector<1024x128xbf16>
    %cst = arith.constant dense<0.000000e+00> : vector<512x128xf32>
    %2 = tpu.matmul %0, %1, %cst {dimension_numbers = #tpu.dot_dimension_numbers<[1], [0], [0], [1], [0, 0, 1, 1], [], []>} : vector<512x1024xbf16>, vector<1024x128xbf16>, vector<512x128xf32> -> vector<512x128xf32>
    %c0_3 = arith.constant 0 : index
    %c0_4 = arith.constant 0 : index
    %3 = vector.load %arg3[%c0_3, %c0_4] : memref<1x128xf32, #tpu.memory_space<vmem>>, vector<1x128xf32>
    %4 = vector.broadcast %3 : vector<1x128xf32> to vector<512x128xf32>
    %5 = arith.addf %2, %4 : vector<512x128xf32>
    %cst_5 = arith.constant 0.000000e+00 : f32
    %6 = vector.broadcast %cst_5 : f32 to vector<512x128xf32>
    %7 = arith.maximumf %5, %6 : vector<512x128xf32>
    %c0_6 = arith.constant 0 : index
    %c0_7 = arith.constant 0 : index
    %8 = vector.load %arg4[%c0_6, %c0_7] : memref<512x128xf32, #tpu.memory_space<vmem>>, vector<512x128xf32>
    tpu.vector_store %arg4[%c0_6, %c0_7], %7 {strides = array<i32>} : memref<512x128xf32, #tpu.memory_space<vmem>>, vector<512x128xf32>,
    return
  }
  func.func @transform_0(%arg0: i32) -> (i32, i32) {
    %c0_i32 = arith.constant 0 : i32
    %c0_i32_0 = arith.constant 0 : i32
    %c0_i32_1 = arith.constant 0 : i32
    return %c0_i32, %c0_i32_0 : i32, i32
  }
  func.func @transform_1(%arg0: i32) -> (i32, i32) {
    %c0_i32 = arith.constant 0 : i32
    %c0_i32_0 = arith.constant 0 : i32
    %c0_i32_1 = arith.constant 0 : i32
    return %c0_i32, %c0_i32_0 : i32, i32
  }
  func.func @transform_2(%arg0: i32) -> (i32, i32) {
    %c0_i32 = arith.constant 0 : i32
    %c0_i32_0 = arith.constant 0 : i32
    %c0_i32_1 = arith.constant 0 : i32
    return %c0_i32, %c0_i32_0 : i32, i32
  }
  func.func @transform_3(%arg0: i32) -> (i32, i32) {
    %c0_i32 = arith.constant 0 : i32
    %c0_i32_0 = arith.constant 0 : i32
    %c0_i32_1 = arith.constant 0 : i32
    return %c0_i32, %c0_i32_0 : i32, i32
  }
}

module attributes {stable_mosaic.version = 11 : i64} {
  func.func @_fused_matmul_kernel(%arg0: i32, %arg1: memref<512x640xbf16, #tpu.memory_space<vmem>>, %arg2: memref<640x128xbf16, #tpu.memory_space<vmem>>, %arg3: memref<1x128xf32, #tpu.memory_space<vmem>>, %arg4: memref<512x128xf32, #tpu.memory_space<vmem>>) attributes {dimension_semantics = [#tpu.dimension_semantics<arbitrary>], iteration_bounds = array<i64: 1>, scalar_prefetch = 0 : i64, scratch_operands = 0 : i64, tpu.core_type = #tpu.core_type<tc>, window_params = [{pipeline_mode = #tpu.pipeline_mode<synchronous>, transform_indices = @transform_0, window_bounds = array<i64: 512, 640>}, {pipeline_mode = #tpu.pipeline_mode<synchronous>, transform_indices = @transform_1, window_bounds = array<i64: 640, 128>}, {pipeline_mode = #tpu.pipeline_mode<synchronous>, transform_indices = @transform_2, window_bounds = array<i64: 1, 128>}, {pipeline_mode = #tpu.pipeline_mode<synchronous>, transform_indices = @transform_3, window_bounds = array<i64: 512, 128>}]} {
    %c0 = arith.constant 0 : index
    %c0_0 = arith.constant 0 : index
    %0 = vector.load %arg1[%c0, %c0_0] : memref<512x640xbf16, #tpu.memory_space<vmem>>, vector<512x640xbf16>
    %c0_1 = arith.constant 0 : index
    %c0_2 = arith.constant 0 : index
    %1 = vector.load %arg2[%c0_1, %c0_2] : memref<640x128xbf16, #tpu.memory_space<vmem>>, vector<640x128xbf16>
    %cst = arith.constant dense<0.000000e+00> : vector<512x128xf32>
    %2 = tpu.matmul %0, %1, %cst {dimension_numbers = #tpu.dot_dimension_numbers<[1], [0], [0], [1], [0, 0, 1, 1], [], []>} : vector<512x640xbf16>, vector<640x128xbf16>, vector<512x128xf32> -> vector<512x128xf32>
    %c0_3 = arith.constant 0 : index
    %c0_4 = arith.constant 0 : index
    %3 = vector.load %arg3[%c0_3, %c0_4] : memref<1x128xf32, #tpu.memory_space<vmem>>, vector<1x128xf32>
    %4 = vector.broadcast %3 : vector<1x128xf32> to vector<512x128xf32>
    %5 = arith.addf %2, %4 : vector<512x128xf32>
    %cst_5 = arith.constant 0.000000e+00 : f32
    %6 = vector.broadcast %cst_5 : f32 to vector<512x128xf32>
    %7 = arith.maximumf %5, %6 : vector<512x128xf32>
    %c0_6 = arith.constant 0 : index
    %c0_7 = arith.constant 0 : index
    %8 = vector.load %arg4[%c0_6, %c0_7] : memref<512x128xf32, #tpu.memory_space<vmem>>, vector<512x128xf32>
    tpu.vector_store %arg4[%c0_6, %c0_7], %7 {strides = array<i32>} : memref<512x128xf32, #tpu.memory_space<vmem>>, vector<512x128xf32>,
    return
  }
  func.func @transform_0(%arg0: i32) -> (i32, i32) {
    %c0_i32 = arith.constant 0 : i32
    %c0_i32_0 = arith.constant 0 : i32
    %c0_i32_1 = arith.constant 0 : i32
    return %c0_i32, %c0_i32_0 : i32, i32
  }
  func.func @transform_1(%arg0: i32) -> (i32, i32) {
    %c0_i32 = arith.constant 0 : i32
    %c0_i32_0 = arith.constant 0 : i32
    %c0_i32_1 = arith.constant 0 : i32
    return %c0_i32, %c0_i32_0 : i32, i32
  }
  func.func @transform_2(%arg0: i32) -> (i32, i32) {
    %c0_i32 = arith.constant 0 : i32
    %c0_i32_0 = arith.constant 0 : i32
    %c0_i32_1 = arith.constant 0 : i32
    return %c0_i32, %c0_i32_0 : i32, i32
  }
  func.func @transform_3(%arg0: i32) -> (i32, i32) {
    %c0_i32 = arith.constant 0 : i32
    %c0_i32_0 = arith.constant 0 : i32
    %c0_i32_1 = arith.constant 0 : i32
    return %c0_i32, %c0_i32_0 : i32, i32
  }
}

module attributes {stable_mosaic.version = 11 : i64} {
  func.func @_fused_matmul_kernel(%arg0: i32, %arg1: memref<128x512xbf16, #tpu.memory_space<vmem>>, %arg2: memref<512x128xbf16, #tpu.memory_space<vmem>>, %arg3: memref<1x128xf32, #tpu.memory_space<vmem>>, %arg4: memref<128x128xf32, #tpu.memory_space<vmem>>) attributes {dimension_semantics = [#tpu.dimension_semantics<arbitrary>], iteration_bounds = array<i64: 1>, scalar_prefetch = 0 : i64, scratch_operands = 0 : i64, tpu.core_type = #tpu.core_type<tc>, window_params = [{pipeline_mode = #tpu.pipeline_mode<synchronous>, transform_indices = @transform_0, window_bounds = array<i64: 128, 512>}, {pipeline_mode = #tpu.pipeline_mode<synchronous>, transform_indices = @transform_1, window_bounds = array<i64: 512, 128>}, {pipeline_mode = #tpu.pipeline_mode<synchronous>, transform_indices = @transform_2, window_bounds = array<i64: 1, 128>}, {pipeline_mode = #tpu.pipeline_mode<synchronous>, transform_indices = @transform_3, window_bounds = array<i64: 128, 128>}]} {
    %c0 = arith.constant 0 : index
    %c0_0 = arith.constant 0 : index
    %0 = vector.load %arg1[%c0, %c0_0] : memref<128x512xbf16, #tpu.memory_space<vmem>>, vector<128x512xbf16>
    %c0_1 = arith.constant 0 : index
    %c0_2 = arith.constant 0 : index
    %1 = vector.load %arg2[%c0_1, %c0_2] : memref<512x128xbf16, #tpu.memory_space<vmem>>, vector<512x128xbf16>
    %cst = arith.constant dense<0.000000e+00> : vector<128x128xf32>
    %2 = tpu.matmul %0, %1, %cst {dimension_numbers = #tpu.dot_dimension_numbers<[1], [0], [0], [1], [0, 0, 1, 1], [], []>} : vector<128x512xbf16>, vector<512x128xbf16>, vector<128x128xf32> -> vector<128x128xf32>
    %c0_3 = arith.constant 0 : index
    %c0_4 = arith.constant 0 : index
    %3 = vector.load %arg3[%c0_3, %c0_4] : memref<1x128xf32, #tpu.memory_space<vmem>>, vector<1x128xf32>
    %4 = vector.broadcast %3 : vector<1x128xf32> to vector<128x128xf32>
    %5 = arith.addf %2, %4 : vector<128x128xf32>
    %cst_5 = arith.constant 0.000000e+00 : f32
    %6 = vector.broadcast %cst_5 : f32 to vector<128x128xf32>
    %7 = arith.maximumf %5, %6 : vector<128x128xf32>
    %c0_6 = arith.constant 0 : index
    %c0_7 = arith.constant 0 : index
    %8 = vector.load %arg4[%c0_6, %c0_7] : memref<128x128xf32, #tpu.memory_space<vmem>>, vector<128x128xf32>
    tpu.vector_store %arg4[%c0_6, %c0_7], %7 {strides = array<i32>} : memref<128x128xf32, #tpu.memory_space<vmem>>, vector<128x128xf32>,
    return
  }
  func.func @transform_0(%arg0: i32) -> (i32, i32) {
    %c0_i32 = arith.constant 0 : i32
    %c0_i32_0 = arith.constant 0 : i32
    %c0_i32_1 = arith.constant 0 : i32
    return %c0_i32, %c0_i32_0 : i32, i32
  }
  func.func @transform_1(%arg0: i32) -> (i32, i32) {
    %c0_i32 = arith.constant 0 : i32
    %c0_i32_0 = arith.constant 0 : i32
    %c0_i32_1 = arith.constant 0 : i32
    return %c0_i32, %c0_i32_0 : i32, i32
  }
  func.func @transform_2(%arg0: i32) -> (i32, i32) {
    %c0_i32 = arith.constant 0 : i32
    %c0_i32_0 = arith.constant 0 : i32
    %c0_i32_1 = arith.constant 0 : i32
    return %c0_i32, %c0_i32_0 : i32, i32
  }
  func.func @transform_3(%arg0: i32) -> (i32, i32) {
    %c0_i32 = arith.constant 0 : i32
    %c0_i32_0 = arith.constant 0 : i32
    %c0_i32_1 = arith.constant 0 : i32
    return %c0_i32, %c0_i32_0 : i32, i32
  }
}

module attributes {stable_mosaic.version = 11 : i64} {
  func.func @_fused_matmul_kernel(%arg0: i32, %arg1: memref<128x384xbf16, #tpu.memory_space<vmem>>, %arg2: memref<384x128xbf16, #tpu.memory_space<vmem>>, %arg3: memref<1x128xf32, #tpu.memory_space<vmem>>, %arg4: memref<128x128xf32, #tpu.memory_space<vmem>>) attributes {dimension_semantics = [#tpu.dimension_semantics<arbitrary>], iteration_bounds = array<i64: 1>, scalar_prefetch = 0 : i64, scratch_operands = 0 : i64, tpu.core_type = #tpu.core_type<tc>, window_params = [{pipeline_mode = #tpu.pipeline_mode<synchronous>, transform_indices = @transform_0, window_bounds = array<i64: 128, 384>}, {pipeline_mode = #tpu.pipeline_mode<synchronous>, transform_indices = @transform_1, window_bounds = array<i64: 384, 128>}, {pipeline_mode = #tpu.pipeline_mode<synchronous>, transform_indices = @transform_2, window_bounds = array<i64: 1, 128>}, {pipeline_mode = #tpu.pipeline_mode<synchronous>, transform_indices = @transform_3, window_bounds = array<i64: 128, 128>}]} {
    %c0 = arith.constant 0 : index
    %c0_0 = arith.constant 0 : index
    %0 = vector.load %arg1[%c0, %c0_0] : memref<128x384xbf16, #tpu.memory_space<vmem>>, vector<128x384xbf16>
    %c0_1 = arith.constant 0 : index
    %c0_2 = arith.constant 0 : index
    %1 = vector.load %arg2[%c0_1, %c0_2] : memref<384x128xbf16, #tpu.memory_space<vmem>>, vector<384x128xbf16>
    %cst = arith.constant dense<0.000000e+00> : vector<128x128xf32>
    %2 = tpu.matmul %0, %1, %cst {dimension_numbers = #tpu.dot_dimension_numbers<[1], [0], [0], [1], [0, 0, 1, 1], [], []>} : vector<128x384xbf16>, vector<384x128xbf16>, vector<128x128xf32> -> vector<128x128xf32>
    %c0_3 = arith.constant 0 : index
    %c0_4 = arith.constant 0 : index
    %3 = vector.load %arg3[%c0_3, %c0_4] : memref<1x128xf32, #tpu.memory_space<vmem>>, vector<1x128xf32>
    %4 = vector.broadcast %3 : vector<1x128xf32> to vector<128x128xf32>
    %5 = arith.addf %2, %4 : vector<128x128xf32>
    %cst_5 = arith.constant 0.000000e+00 : f32
    %6 = vector.broadcast %cst_5 : f32 to vector<128x128xf32>
    %7 = arith.maximumf %5, %6 : vector<128x128xf32>
    %c0_6 = arith.constant 0 : index
    %c0_7 = arith.constant 0 : index
    %8 = vector.load %arg4[%c0_6, %c0_7] : memref<128x128xf32, #tpu.memory_space<vmem>>, vector<128x128xf32>
    tpu.vector_store %arg4[%c0_6, %c0_7], %7 {strides = array<i32>} : memref<128x128xf32, #tpu.memory_space<vmem>>, vector<128x128xf32>,
    return
  }
  func.func @transform_0(%arg0: i32) -> (i32, i32) {
    %c0_i32 = arith.constant 0 : i32
    %c0_i32_0 = arith.constant 0 : i32
    %c0_i32_1 = arith.constant 0 : i32
    return %c0_i32, %c0_i32_0 : i32, i32
  }
  func.func @transform_1(%arg0: i32) -> (i32, i32) {
    %c0_i32 = arith.constant 0 : i32
    %c0_i32_0 = arith.constant 0 : i32
    %c0_i32_1 = arith.constant 0 : i32
    return %c0_i32, %c0_i32_0 : i32, i32
  }
  func.func @transform_2(%arg0: i32) -> (i32, i32) {
    %c0_i32 = arith.constant 0 : i32
    %c0_i32_0 = arith.constant 0 : i32
    %c0_i32_1 = arith.constant 0 : i32
    return %c0_i32, %c0_i32_0 : i32, i32
  }
  func.func @transform_3(%arg0: i32) -> (i32, i32) {
    %c0_i32 = arith.constant 0 : i32
    %c0_i32_0 = arith.constant 0 : i32
    %c0_i32_1 = arith.constant 0 : i32
    return %c0_i32, %c0_i32_0 : i32, i32
  }
}

module attributes {stable_mosaic.version = 11 : i64} {
  func.func @_fused_matmul_kernel(%arg0: i32, %arg1: memref<32x256xbf16, #tpu.memory_space<vmem>>, %arg2: memref<256x128xbf16, #tpu.memory_space<vmem>>, %arg3: memref<1x128xf32, #tpu.memory_space<vmem>>, %arg4: memref<32x128xf32, #tpu.memory_space<vmem>>) attributes {dimension_semantics = [#tpu.dimension_semantics<arbitrary>], iteration_bounds = array<i64: 1>, scalar_prefetch = 0 : i64, scratch_operands = 0 : i64, tpu.core_type = #tpu.core_type<tc>, window_params = [{pipeline_mode = #tpu.pipeline_mode<synchronous>, transform_indices = @transform_0, window_bounds = array<i64: 32, 256>}, {pipeline_mode = #tpu.pipeline_mode<synchronous>, transform_indices = @transform_1, window_bounds = array<i64: 256, 128>}, {pipeline_mode = #tpu.pipeline_mode<synchronous>, transform_indices = @transform_2, window_bounds = array<i64: 1, 128>}, {pipeline_mode = #tpu.pipeline_mode<synchronous>, transform_indices = @transform_3, window_bounds = array<i64: 32, 128>}]} {
    %c0 = arith.constant 0 : index
    %c0_0 = arith.constant 0 : index
    %0 = vector.load %arg1[%c0, %c0_0] : memref<32x256xbf16, #tpu.memory_space<vmem>>, vector<32x256xbf16>
    %c0_1 = arith.constant 0 : index
    %c0_2 = arith.constant 0 : index
    %1 = vector.load %arg2[%c0_1, %c0_2] : memref<256x128xbf16, #tpu.memory_space<vmem>>, vector<256x128xbf16>
    %cst = arith.constant dense<0.000000e+00> : vector<32x128xf32>
    %2 = tpu.matmul %0, %1, %cst {dimension_numbers = #tpu.dot_dimension_numbers<[1], [0], [0], [1], [0, 0, 1, 1], [], []>} : vector<32x256xbf16>, vector<256x128xbf16>, vector<32x128xf32> -> vector<32x128xf32>
    %c0_3 = arith.constant 0 : index
    %c0_4 = arith.constant 0 : index
    %3 = vector.load %arg3[%c0_3, %c0_4] : memref<1x128xf32, #tpu.memory_space<vmem>>, vector<1x128xf32>
    %4 = vector.broadcast %3 : vector<1x128xf32> to vector<32x128xf32>
    %5 = arith.addf %2, %4 : vector<32x128xf32>
    %cst_5 = arith.constant 0.000000e+00 : f32
    %6 = vector.broadcast %cst_5 : f32 to vector<32x128xf32>
    %7 = arith.maximumf %5, %6 : vector<32x128xf32>
    %c0_6 = arith.constant 0 : index
    %c0_7 = arith.constant 0 : index
    %8 = vector.load %arg4[%c0_6, %c0_7] : memref<32x128xf32, #tpu.memory_space<vmem>>, vector<32x128xf32>
    tpu.vector_store %arg4[%c0_6, %c0_7], %7 {strides = array<i32>} : memref<32x128xf32, #tpu.memory_space<vmem>>, vector<32x128xf32>,
    return
  }
  func.func @transform_0(%arg0: i32) -> (i32, i32) {
    %c0_i32 = arith.constant 0 : i32
    %c0_i32_0 = arith.constant 0 : i32
    %c0_i32_1 = arith.constant 0 : i32
    return %c0_i32, %c0_i32_0 : i32, i32
  }
  func.func @transform_1(%arg0: i32) -> (i32, i32) {
    %c0_i32 = arith.constant 0 : i32
    %c0_i32_0 = arith.constant 0 : i32
    %c0_i32_1 = arith.constant 0 : i32
    return %c0_i32, %c0_i32_0 : i32, i32
  }
  func.func @transform_2(%arg0: i32) -> (i32, i32) {
    %c0_i32 = arith.constant 0 : i32
    %c0_i32_0 = arith.constant 0 : i32
    %c0_i32_1 = arith.constant 0 : i32
    return %c0_i32, %c0_i32_0 : i32, i32
  }
  func.func @transform_3(%arg0: i32) -> (i32, i32) {
    %c0_i32 = arith.constant 0 : i32
    %c0_i32_0 = arith.constant 0 : i32
    %c0_i32_1 = arith.constant 0 : i32
    return %c0_i32, %c0_i32_0 : i32, i32
  }
}

module attributes {stable_mosaic.version = 11 : i64} {
  func.func @_fused_mlp_kernel(%arg0: i32, %arg1: memref<16x256xbf16, #tpu.memory_space<vmem>>, %arg2: memref<256x128xbf16, #tpu.memory_space<vmem>>, %arg3: memref<1x128xf32, #tpu.memory_space<vmem>>, %arg4: memref<128x256xbf16, #tpu.memory_space<vmem>>, %arg5: memref<1x256xf32, #tpu.memory_space<vmem>>, %arg6: memref<16x256xf32, #tpu.memory_space<vmem>>) attributes {dimension_semantics = [#tpu.dimension_semantics<arbitrary>], iteration_bounds = array<i64: 1>, scalar_prefetch = 0 : i64, scratch_operands = 0 : i64, tpu.core_type = #tpu.core_type<tc>, window_params = [{pipeline_mode = #tpu.pipeline_mode<synchronous>, transform_indices = @transform_0, window_bounds = array<i64: 16, 256>}, {pipeline_mode = #tpu.pipeline_mode<synchronous>, transform_indices = @transform_1, window_bounds = array<i64: 256, 128>}, {pipeline_mode = #tpu.pipeline_mode<synchronous>, transform_indices = @transform_2, window_bounds = array<i64: 1, 128>}, {pipeline_mode = #tpu.pipeline_mode<synchronous>, transform_indices = @transform_3, window_bounds = array<i64: 128, 256>}, {pipeline_mode = #tpu.pipeline_mode<synchronous>, transform_indices = @transform_4, window_bounds = array<i64: 1, 256>}, {pipeline_mode = #tpu.pipeline_mode<synchronous>, transform_indices = @transform_5, window_bounds = array<i64: 16, 256>}]} {
    %c0 = arith.constant 0 : index
    %c0_0 = arith.constant 0 : index
    %0 = vector.load %arg1[%c0, %c0_0] : memref<16x256xbf16, #tpu.memory_space<vmem>>, vector<16x256xbf16>
    %c0_1 = arith.constant 0 : index
    %c0_2 = arith.constant 0 : index
    %1 = vector.load %arg2[%c0_1, %c0_2] : memref<256x128xbf16, #tpu.memory_space<vmem>>, vector<256x128xbf16>
    %cst = arith.constant dense<0.000000e+00> : vector<16x128xf32>
    %2 = tpu.matmul %0, %1, %cst {dimension_numbers = #tpu.dot_dimension_numbers<[1], [0], [0], [1], [0, 0, 1, 1], [], []>} : vector<16x256xbf16>, vector<256x128xbf16>, vector<16x128xf32> -> vector<16x128xf32>
    %c0_3 = arith.constant 0 : index
    %c0_4 = arith.constant 0 : index
    %3 = vector.load %arg3[%c0_3, %c0_4] : memref<1x128xf32, #tpu.memory_space<vmem>>, vector<1x128xf32>
    %4 = vector.broadcast %3 : vector<1x128xf32> to vector<16x128xf32>
    %5 = arith.addf %2, %4 : vector<16x128xf32>
    %6 = arith.truncf %5 : vector<16x128xf32> to vector<16x128xbf16>
    %c0_5 = arith.constant 0 : index
    %c0_6 = arith.constant 0 : index
    %7 = vector.load %arg4[%c0_5, %c0_6] : memref<128x256xbf16, #tpu.memory_space<vmem>>, vector<128x256xbf16>
    %cst_7 = arith.constant dense<0.000000e+00> : vector<16x256xf32>
    %8 = tpu.matmul %6, %7, %cst_7 {dimension_numbers = #tpu.dot_dimension_numbers<[1], [0], [0], [1], [0, 0, 1, 1], [], []>} : vector<16x128xbf16>, vector<128x256xbf16>, vector<16x256xf32> -> vector<16x256xf32>
    %c0_8 = arith.constant 0 : index
    %c0_9 = arith.constant 0 : index
    %9 = vector.load %arg5[%c0_8, %c0_9] : memref<1x256xf32, #tpu.memory_space<vmem>>, vector<1x256xf32>
    %10 = vector.broadcast %9 : vector<1x256xf32> to vector<16x256xf32>
    %11 = arith.addf %8, %10 : vector<16x256xf32>
    %cst_10 = arith.constant 0.000000e+00 : f32
    %12 = vector.broadcast %cst_10 : f32 to vector<16x256xf32>
    %13 = arith.maximumf %11, %12 : vector<16x256xf32>
    %c0_11 = arith.constant 0 : index
    %c0_12 = arith.constant 0 : index
    %14 = vector.load %arg6[%c0_11, %c0_12] : memref<16x256xf32, #tpu.memory_space<vmem>>, vector<16x256xf32>
    tpu.vector_store %arg6[%c0_11, %c0_12], %13 {strides = array<i32>} : memref<16x256xf32, #tpu.memory_space<vmem>>, vector<16x256xf32>,
    return
  }
  func.func @transform_0(%arg0: i32) -> (i32, i32) {
    %c0_i32 = arith.constant 0 : i32
    %c0_i32_0 = arith.constant 0 : i32
    %c0_i32_1 = arith.constant 0 : i32
    return %c0_i32, %c0_i32_0 : i32, i32
  }
  func.func @transform_1(%arg0: i32) -> (i32, i32) {
    %c0_i32 = arith.constant 0 : i32
    %c0_i32_0 = arith.constant 0 : i32
    %c0_i32_1 = arith.constant 0 : i32
    return %c0_i32, %c0_i32_0 : i32, i32
  }
  func.func @transform_2(%arg0: i32) -> (i32, i32) {
    %c0_i32 = arith.constant 0 : i32
    %c0_i32_0 = arith.constant 0 : i32
    %c0_i32_1 = arith.constant 0 : i32
    return %c0_i32, %c0_i32_0 : i32, i32
  }
  func.func @transform_3(%arg0: i32) -> (i32, i32) {
    %c0_i32 = arith.constant 0 : i32
    %c0_i32_0 = arith.constant 0 : i32
    %c0_i32_1 = arith.constant 0 : i32
    return %c0_i32, %c0_i32_0 : i32, i32
  }
  func.func @transform_4(%arg0: i32) -> (i32, i32) {
    %c0_i32 = arith.constant 0 : i32
    %c0_i32_0 = arith.constant 0 : i32
    %c0_i32_1 = arith.constant 0 : i32
    return %c0_i32, %c0_i32_0 : i32, i32
  }
  func.func @transform_5(%arg0: i32) -> (i32, i32) {
    %c0_i32 = arith.constant 0 : i32
    %c0_i32_0 = arith.constant 0 : i32
    %c0_i32_1 = arith.constant 0 : i32
    return %c0_i32, %c0_i32_0 : i32, i32
  }
}

module attributes {stable_mosaic.version = 11 : i64} {
  func.func @_fused_matmul_kernel(%arg0: i32, %arg1: memref<64x128xbf16, #tpu.memory_space<vmem>>, %arg2: memref<128x128xbf16, #tpu.memory_space<vmem>>, %arg3: memref<1x128xf32, #tpu.memory_space<vmem>>, %arg4: memref<64x128xf32, #tpu.memory_space<vmem>>) attributes {dimension_semantics = [#tpu.dimension_semantics<arbitrary>], iteration_bounds = array<i64: 1>, scalar_prefetch = 0 : i64, scratch_operands = 0 : i64, tpu.core_type = #tpu.core_type<tc>, window_params = [{pipeline_mode = #tpu.pipeline_mode<synchronous>, transform_indices = @transform_0, window_bounds = array<i64: 64, 128>}, {pipeline_mode = #tpu.pipeline_mode<synchronous>, transform_indices = @transform_1, window_bounds = array<i64: 128, 128>}, {pipeline_mode = #tpu.pipeline_mode<synchronous>, transform_indices = @transform_2, window_bounds = array<i64: 1, 128>}, {pipeline_mode = #tpu.pipeline_mode<synchronous>, transform_indices = @transform_3, window_bounds = array<i64: 64, 128>}]} {
    %c0 = arith.constant 0 : index
    %c0_0 = arith.constant 0 : index
    %0 = vector.load %arg1[%c0, %c0_0] : memref<64x128xbf16, #tpu.memory_space<vmem>>, vector<64x128xbf16>
    %c0_1 = arith.constant 0 : index
    %c0_2 = arith.constant 0 : index
    %1 = vector.load %arg2[%c0_1, %c0_2] : memref<128x128xbf16, #tpu.memory_space<vmem>>, vector<128x128xbf16>
    %cst = arith.constant dense<0.000000e+00> : vector<64x128xf32>
    %2 = tpu.matmul %0, %1, %cst {dimension_numbers = #tpu.dot_dimension_numbers<[1], [0], [0], [1], [0, 0, 1, 1], [], []>} : vector<64x128xbf16>, vector<128x128xbf16>, vector<64x128xf32> -> vector<64x128xf32>
    %c0_3 = arith.constant 0 : index
    %c0_4 = arith.constant 0 : index
    %3 = vector.load %arg3[%c0_3, %c0_4] : memref<1x128xf32, #tpu.memory_space<vmem>>, vector<1x128xf32>
    %4 = vector.broadcast %3 : vector<1x128xf32> to vector<64x128xf32>
    %5 = arith.addf %2, %4 : vector<64x128xf32>
    %cst_5 = arith.constant 0.000000e+00 : f32
    %6 = vector.broadcast %cst_5 : f32 to vector<64x128xf32>
    %7 = arith.maximumf %5, %6 : vector<64x128xf32>
    %c0_6 = arith.constant 0 : index
    %c0_7 = arith.constant 0 : index
    %8 = vector.load %arg4[%c0_6, %c0_7] : memref<64x128xf32, #tpu.memory_space<vmem>>, vector<64x128xf32>
    tpu.vector_store %arg4[%c0_6, %c0_7], %7 {strides = array<i32>} : memref<64x128xf32, #tpu.memory_space<vmem>>, vector<64x128xf32>,
    return
  }
  func.func @transform_0(%arg0: i32) -> (i32, i32) {
    %c0_i32 = arith.constant 0 : i32
    %c0_i32_0 = arith.constant 0 : i32
    %c0_i32_1 = arith.constant 0 : i32
    return %c0_i32, %c0_i32_0 : i32, i32
  }
  func.func @transform_1(%arg0: i32) -> (i32, i32) {
    %c0_i32 = arith.constant 0 : i32
    %c0_i32_0 = arith.constant 0 : i32
    %c0_i32_1 = arith.constant 0 : i32
    return %c0_i32, %c0_i32_0 : i32, i32
  }
  func.func @transform_2(%arg0: i32) -> (i32, i32) {
    %c0_i32 = arith.constant 0 : i32
    %c0_i32_0 = arith.constant 0 : i32
    %c0_i32_1 = arith.constant 0 : i32
    return %c0_i32, %c0_i32_0 : i32, i32
  }
  func.func @transform_3(%arg0: i32) -> (i32, i32) {
    %c0_i32 = arith.constant 0 : i32
    %c0_i32_0 = arith.constant 0 : i32
    %c0_i32_1 = arith.constant 0 : i32
    return %c0_i32, %c0_i32_0 : i32, i32
  }
}

module attributes {stable_mosaic.version = 11 : i64} {
  func.func @_fused_matmul_kernel(%arg0: i32, %arg1: memref<176x128xbf16, #tpu.memory_space<vmem>>, %arg2: memref<128x256xbf16, #tpu.memory_space<vmem>>, %arg3: memref<1x256xf32, #tpu.memory_space<vmem>>, %arg4: memref<176x256xf32, #tpu.memory_space<vmem>>) attributes {dimension_semantics = [#tpu.dimension_semantics<arbitrary>], iteration_bounds = array<i64: 1>, scalar_prefetch = 0 : i64, scratch_operands = 0 : i64, tpu.core_type = #tpu.core_type<tc>, window_params = [{pipeline_mode = #tpu.pipeline_mode<synchronous>, transform_indices = @transform_0, window_bounds = array<i64: 176, 128>}, {pipeline_mode = #tpu.pipeline_mode<synchronous>, transform_indices = @transform_1, window_bounds = array<i64: 128, 256>}, {pipeline_mode = #tpu.pipeline_mode<synchronous>, transform_indices = @transform_2, window_bounds = array<i64: 1, 256>}, {pipeline_mode = #tpu.pipeline_mode<synchronous>, transform_indices = @transform_3, window_bounds = array<i64: 176, 256>}]} {
    %c0 = arith.constant 0 : index
    %c0_0 = arith.constant 0 : index
    %0 = vector.load %arg1[%c0, %c0_0] : memref<176x128xbf16, #tpu.memory_space<vmem>>, vector<176x128xbf16>
    %c0_1 = arith.constant 0 : index
    %c0_2 = arith.constant 0 : index
    %1 = vector.load %arg2[%c0_1, %c0_2] : memref<128x256xbf16, #tpu.memory_space<vmem>>, vector<128x256xbf16>
    %cst = arith.constant dense<0.000000e+00> : vector<176x256xf32>
    %2 = tpu.matmul %0, %1, %cst {dimension_numbers = #tpu.dot_dimension_numbers<[1], [0], [0], [1], [0, 0, 1, 1], [], []>} : vector<176x128xbf16>, vector<128x256xbf16>, vector<176x256xf32> -> vector<176x256xf32>
    %c0_3 = arith.constant 0 : index
    %c0_4 = arith.constant 0 : index
    %3 = vector.load %arg3[%c0_3, %c0_4] : memref<1x256xf32, #tpu.memory_space<vmem>>, vector<1x256xf32>
    %4 = vector.broadcast %3 : vector<1x256xf32> to vector<176x256xf32>
    %5 = arith.addf %2, %4 : vector<176x256xf32>
    %cst_5 = arith.constant 0.000000e+00 : f32
    %6 = vector.broadcast %cst_5 : f32 to vector<176x256xf32>
    %7 = arith.maximumf %5, %6 : vector<176x256xf32>
    %c0_6 = arith.constant 0 : index
    %c0_7 = arith.constant 0 : index
    %8 = vector.load %arg4[%c0_6, %c0_7] : memref<176x256xf32, #tpu.memory_space<vmem>>, vector<176x256xf32>
    tpu.vector_store %arg4[%c0_6, %c0_7], %7 {strides = array<i32>} : memref<176x256xf32, #tpu.memory_space<vmem>>, vector<176x256xf32>,
    return
  }
  func.func @transform_0(%arg0: i32) -> (i32, i32) {
    %c0_i32 = arith.constant 0 : i32
    %c0_i32_0 = arith.constant 0 : i32
    %c0_i32_1 = arith.constant 0 : i32
    return %c0_i32, %c0_i32_0 : i32, i32
  }
  func.func @transform_1(%arg0: i32) -> (i32, i32) {
    %c0_i32 = arith.constant 0 : i32
    %c0_i32_0 = arith.constant 0 : i32
    %c0_i32_1 = arith.constant 0 : i32
    return %c0_i32, %c0_i32_0 : i32, i32
  }
  func.func @transform_2(%arg0: i32) -> (i32, i32) {
    %c0_i32 = arith.constant 0 : i32
    %c0_i32_0 = arith.constant 0 : i32
    %c0_i32_1 = arith.constant 0 : i32
    return %c0_i32, %c0_i32_0 : i32, i32
  }
  func.func @transform_3(%arg0: i32) -> (i32, i32) {
    %c0_i32 = arith.constant 0 : i32
    %c0_i32_0 = arith.constant 0 : i32
    %c0_i32_1 = arith.constant 0 : i32
    return %c0_i32, %c0_i32_0 : i32, i32
  }
}

module attributes {stable_mosaic.version = 11 : i64} {
  func.func @_fused_matmul_kernel(%arg0: i32, %arg1: memref<592x256xbf16, #tpu.memory_space<vmem>>, %arg2: memref<256x128xbf16, #tpu.memory_space<vmem>>, %arg3: memref<1x128xf32, #tpu.memory_space<vmem>>, %arg4: memref<592x128xf32, #tpu.memory_space<vmem>>) attributes {dimension_semantics = [#tpu.dimension_semantics<arbitrary>], iteration_bounds = array<i64: 1>, scalar_prefetch = 0 : i64, scratch_operands = 0 : i64, tpu.core_type = #tpu.core_type<tc>, window_params = [{pipeline_mode = #tpu.pipeline_mode<synchronous>, transform_indices = @transform_0, window_bounds = array<i64: 592, 256>}, {pipeline_mode = #tpu.pipeline_mode<synchronous>, transform_indices = @transform_1, window_bounds = array<i64: 256, 128>}, {pipeline_mode = #tpu.pipeline_mode<synchronous>, transform_indices = @transform_2, window_bounds = array<i64: 1, 128>}, {pipeline_mode = #tpu.pipeline_mode<synchronous>, transform_indices = @transform_3, window_bounds = array<i64: 592, 128>}]} {
    %c0 = arith.constant 0 : index
    %c0_0 = arith.constant 0 : index
    %0 = vector.load %arg1[%c0, %c0_0] : memref<592x256xbf16, #tpu.memory_space<vmem>>, vector<592x256xbf16>
    %c0_1 = arith.constant 0 : index
    %c0_2 = arith.constant 0 : index
    %1 = vector.load %arg2[%c0_1, %c0_2] : memref<256x128xbf16, #tpu.memory_space<vmem>>, vector<256x128xbf16>
    %cst = arith.constant dense<0.000000e+00> : vector<592x128xf32>
    %2 = tpu.matmul %0, %1, %cst {dimension_numbers = #tpu.dot_dimension_numbers<[1], [0], [0], [1], [0, 0, 1, 1], [], []>} : vector<592x256xbf16>, vector<256x128xbf16>, vector<592x128xf32> -> vector<592x128xf32>
    %c0_3 = arith.constant 0 : index
    %c0_4 = arith.constant 0 : index
    %3 = vector.load %arg3[%c0_3, %c0_4] : memref<1x128xf32, #tpu.memory_space<vmem>>, vector<1x128xf32>
    %4 = vector.broadcast %3 : vector<1x128xf32> to vector<592x128xf32>
    %5 = arith.addf %2, %4 : vector<592x128xf32>
    %6 = math.absf %5 : vector<592x128xf32>
    %cst_5 = arith.constant 0.000000e+00 : f32
    %7 = vector.broadcast %cst_5 : f32 to vector<592x128xf32>
    %8 = arith.subf %7, %6 : vector<592x128xf32>
    %9 = math.exp %8 : vector<592x128xf32>
    %cst_6 = arith.constant 0.000000e+00 : f32
    %10 = vector.broadcast %cst_6 : f32 to vector<592x128xf32>
    %11 = arith.cmpf oge, %5, %10 : vector<592x128xf32>
    %cst_7 = arith.constant 1.000000e+00 : f32
    %12 = vector.broadcast %cst_7 : f32 to vector<592x128xf32>
    %13 = arith.addf %12, %9 : vector<592x128xf32>
    %cst_8 = arith.constant 1.000000e+00 : f32
    %14 = vector.broadcast %cst_8 : f32 to vector<592x128xf32>
    %15 = arith.divf %14, %13 : vector<592x128xf32>
    %cst_9 = arith.constant 1.000000e+00 : f32
    %16 = vector.broadcast %cst_9 : f32 to vector<592x128xf32>
    %17 = arith.addf %16, %9 : vector<592x128xf32>
    %18 = arith.divf %9, %17 : vector<592x128xf32>
    %19 = arith.select %11, %15, %18 : vector<592x128xi1>, vector<592x128xf32>
    %c0_10 = arith.constant 0 : index
    %c0_11 = arith.constant 0 : index
    %20 = vector.load %arg4[%c0_10, %c0_11] : memref<592x128xf32, #tpu.memory_space<vmem>>, vector<592x128xf32>
    tpu.vector_store %arg4[%c0_10, %c0_11], %19 {strides = array<i32>} : memref<592x128xf32, #tpu.memory_space<vmem>>, vector<592x128xf32>,
    return
  }
  func.func @transform_0(%arg0: i32) -> (i32, i32) {
    %c0_i32 = arith.constant 0 : i32
    %c0_i32_0 = arith.constant 0 : i32
    %c0_i32_1 = arith.constant 0 : i32
    return %c0_i32, %c0_i32_0 : i32, i32
  }
  func.func @transform_1(%arg0: i32) -> (i32, i32) {
    %c0_i32 = arith.constant 0 : i32
    %c0_i32_0 = arith.constant 0 : i32
    %c0_i32_1 = arith.constant 0 : i32
    return %c0_i32, %c0_i32_0 : i32, i32
  }
  func.func @transform_2(%arg0: i32) -> (i32, i32) {
    %c0_i32 = arith.constant 0 : i32
    %c0_i32_0 = arith.constant 0 : i32
    %c0_i32_1 = arith.constant 0 : i32
    return %c0_i32, %c0_i32_0 : i32, i32
  }
  func.func @transform_3(%arg0: i32) -> (i32, i32) {
    %c0_i32 = arith.constant 0 : i32
    %c0_i32_0 = arith.constant 0 : i32
    %c0_i32_1 = arith.constant 0 : i32
    return %c0_i32, %c0_i32_0 : i32, i32
  }
}

</mosaic_0001>

<llo_original>
// kernel: _lambda_.12
$region0: #{_lambda_.12}
  #allocation0 [shape = 'u32[]', space=smem, size = 0x4, offset = 0x4, fixed_abs, tag = 'smem constant byte address 0x4 - core index']
  #allocation1 [shape = 'u32[144,128]{1,0:T(1,128)}', space=vmem, size = 0x12000, scoped, tag = 'internal scratch']
  %s0 = inlined_call_operand.vmem [shape: bf16[2048,128], index: 0, kind: input, shape index: {}]
  %s1 = inlined_call_operand.vmem [shape: bf16[128,128], index: 1, kind: input, shape index: {}]
  %s2 = inlined_call_operand.vmem [shape: f32[1,128], index: 2, kind: input, shape index: {}]
  %s3 = inlined_call_operand.vmem [shape: f32[2048,128], index: 3, kind: output, shape index: {}]
  %s4 = sld [smem:[#allocation0]]
  $region22: #{_lambda_.12} parent=0
    _
  %s6 = ssub.s32 1, %s4
  %s7 = scalar_select 0, %s6, %s4
  // Predicated region
  $region2: #{_lambda_.12} parent=0 // pred_check
    _
  $region3: #{_lambda_.12} parent=0 // pred_check_branch
    %9 = sbr.rel (0) target = $region5
  $region4: #{_lambda_.12} parent=0 // pred_region
    _
  $region5: #{_lambda_.12} parent=0 // pred_fallthru
    _
  // Predicated region
  $region6: #{_lambda_.12} parent=0 // pred_check
    _
  $region7: #{_lambda_.12} parent=0 // pred_check_branch
    %11 = sbr.rel (0) target = $region9
  $region8: #{_lambda_.12} parent=0 // pred_region
    _
  $region9: #{_lambda_.12} parent=0 // pred_fallthru
    _
  // Predicated region
  $region10: #{_lambda_.12} parent=0 // pred_check
    _
  $region11: #{_lambda_.12} parent=0 // pred_check_branch
    %13 = sbr.rel (0) target = $region13
  $region12: #{_lambda_.12} parent=0 // pred_region
    _
  $region13: #{_lambda_.12} parent=0 // pred_fallthru
    _
  %v15 = vld [vmem:[%s0] sm:$0xf]
  %v16 = vld [vmem:[%s0 + $0x4] sm:$0xf]
  %v17 = vld [vmem:[%s0 + $0x8] sm:$0xf]
  %v18 = vld [vmem:[%s0 + $0xc] sm:$0xf]
  %v19 = vld [vmem:[%s0 + $0x10] sm:$0xf]
  %v20 = vld [vmem:[%s0 + $0x14] sm:$0xf]
  %v21 = vld [vmem:[%s0 + $0x18] sm:$0xf]
  %v22 = vld [vmem:[%s0 + $0x1c] sm:$0xf]
  %v23 = vld [vmem:[%s0 + $0x20] sm:$0xf]
  %v24 = vld [vmem:[%s0 + $0x24] sm:$0xf]
  %v25 = vld [vmem:[%s0 + $0x28] sm:$0xf]
  %v26 = vld [vmem:[%s0 + $0x2c] sm:$0xf]
  %v27 = vld [vmem:[%s0 + $0x30] sm:$0xf]
  %v28 = vld [vmem:[%s0 + $0x34] sm:$0xf]
  %v29 = vld [vmem:[%s0 + $0x38] sm:$0xf]
  %v30 = vld [vmem:[%s0 + $0x3c] sm:$0xf]
  %v31 = vld [vmem:[%s0 + $0x40] sm:$0xf]
  %v32 = vld [vmem:[%s0 + $0x44] sm:$0xf]
  %v33 = vld [vmem:[%s0 + $0x48] sm:$0xf]
  %v34 = vld [vmem:[%s0 + $0x4c] sm:$0xf]
  %v35 = vld [vmem:[%s0 + $0x50] sm:$0xf]
  %v36 = vld [vmem:[%s0 + $0x54] sm:$0xf]
  %v37 = vld [vmem:[%s0 + $0x58] sm:$0xf]
  %v38 = vld [vmem:[%s0 + $0x5c] sm:$0xf]
  %v39 = vld [vmem:[%s0 + $0x60] sm:$0xf]
  %v40 = vld [vmem:[%s0 + $0x64] sm:$0xf]
  %v41 = vld [vmem:[%s0 + $0x68] sm:$0xf]
  %v42 = vld [vmem:[%s0 + $0x6c] sm:$0xf]
  %v43 = vld [vmem:[%s0 + $0x70] sm:$0xf]
  %v44 = vld [vmem:[%s0 + $0x74] sm:$0xf]
  %v45 = vld [vmem:[%s0 + $0x78] sm:$0xf]
  %v46 = vld [vmem:[%s0 + $0x7c] sm:$0xf]
  %v47 = vld [vmem:[%s0 + $0x80] sm:$0xf]
  %v48 = vld [vmem:[%s0 + $0x84] sm:$0xf]
  %v49 = vld [vmem:[%s0 + $0x88] sm:$0xf]
  %v50 = vld [vmem:[%s0 + $0x8c] sm:$0xf]
  %v51 = vld [vmem:[%s0 + $0x90] sm:$0xf]
  %v52 = vld [vmem:[%s0 + $0x94] sm:$0xf]
  %v53 = vld [vmem:[%s0 + $0x98] sm:$0xf]
  %v54 = vld [vmem:[%s0 + $0x9c] sm:$0xf]
  %v55 = vld [vmem:[%s0 + $0xa0] sm:$0xf]
  %v56 = vld [vmem:[%s0 + $0xa4] sm:$0xf]
  %v57 = vld [vmem:[%s0 + $0xa8] sm:$0xf]
  %v58 = vld [vmem:[%s0 + $0xac] sm:$0xf]
  %v59 = vld [vmem:[%s0 + $0xb0] sm:$0xf]
  %v60 = vld [vmem:[%s0 + $0xb4] sm:$0xf]
  %v61 = vld [vmem:[%s0 + $0xb8] sm:$0xf]
  %v62 = vld [vmem:[%s0 + $0xbc] sm:$0xf]
  %v63 = vld [vmem:[%s0 + $0xc0] sm:$0xf]
  %v64 = vld [vmem:[%s0 + $0xc4] sm:$0xf]
  %v65 = vld [vmem:[%s0 + $0xc8] sm:$0xf]
  %v66 = vld [vmem:[%s0 + $0xcc] sm:$0xf]
  %v67 = vld [vmem:[%s0 + $0xd0] sm:$0xf]
  %v68 = vld [vmem:[%s0 + $0xd4] sm:$0xf]
  %v69 = vld [vmem:[%s0 + $0xd8] sm:$0xf]
  %v70 = vld [vmem:[%s0 + $0xdc] sm:$0xf]
  %v71 = vld [vmem:[%s0 + $0xe0] sm:$0xf]
  %v72 = vld [vmem:[%s0 + $0xe4] sm:$0xf]
  %v73 = vld [vmem:[%s0 + $0xe8] sm:$0xf]
  %v74 = vld [vmem:[%s0 + $0xec] sm:$0xf]
  %v75 = vld [vmem:[%s0 + $0xf0] sm:$0xf]
  %v76 = vld [vmem:[%s0 + $0xf4] sm:$0xf]
  %v77 = vld [vmem:[%s0 + $0xf8] sm:$0xf]
  %v78 = vld [vmem:[%s0 + $0xfc] sm:$0xf]
  %v79 = vld [vmem:[%s0 + $0x100] sm:$0xf]
  %v80 = vld [vmem:[%s0 + $0x104] sm:$0xf]
  %v81 = vld [vmem:[%s0 + $0x108] sm:$0xf]
  %v82 = vld [vmem:[%s0 + $0x10c] sm:$0xf]
  %v83 = vld [vmem:[%s0 + $0x110] sm:$0xf]
  %v84 = vld [vmem:[%s0 + $0x114] sm:$0xf]
  %v85 = vld [vmem:[%s0 + $0x118] sm:$0xf]
  %v86 = vld [vmem:[%s0 + $0x11c] sm:$0xf]
  %v87 = vld [vmem:[%s0 + $0x120] sm:$0xf]
  %v88 = vld [vmem:[%s0 + $0x124] sm:$0xf]
  %v89 = vld [vmem:[%s0 + $0x128] sm:$0xf]
  %v90 = vld [vmem:[%s0 + $0x12c] sm:$0xf]
  %v91 = vld [vmem:[%s0 + $0x130] sm:$0xf]
  %v92 = vld [vmem:[%s0 + $0x134] sm:$0xf]
  %v93 = vld [vmem:[%s0 + $0x138] sm:$0xf]
  %v94 = vld [vmem:[%s0 + $0x13c] sm:$0xf]
  %v95 = vld [vmem:[%s0 + $0x140] sm:$0xf]
  %v96 = vld [vmem:[%s0 + $0x144] sm:$0xf]
  %v97 = vld [vmem:[%s0 + $0x148] sm:$0xf]
  %v98 = vld [vmem:[%s0 + $0x14c] sm:$0xf]
  %v99 = vld [vmem:[%s0 + $0x150] sm:$0xf]
  %v100 = vld [vmem:[%s0 + $0x154] sm:$0xf]
  %v101 = vld [vmem:[%s0 + $0x158] sm:$0xf]
  %v102 = vld [vmem:[%s0 + $0x15c] sm:$0xf]
  %v103 = vld [vmem:[%s0 + $0x160] sm:$0xf]
  %v104 = vld [vmem:[%s0 + $0x164] sm:$0xf]
  %v105 = vld [vmem:[%s0 + $0x168] sm:$0xf]
  %v106 = vld [vmem:[%s0 + $0x16c] sm:$0xf]
  %v107 = vld [vmem:[%s0 + $0x170] sm:$0xf]
  %v108 = vld [vmem:[%s0 + $0x174] sm:$0xf]
  %v109 = vld [vmem:[%s0 + $0x178] sm:$0xf]
  %v110 = vld [vmem:[%s0 + $0x17c] sm:$0xf]
  %v111 = vld [vmem:[%s0 + $0x180] sm:$0xf]
  %v112 = vld [vmem:[%s0 + $0x184] sm:$0xf]
  %v113 = vld [vmem:[%s0 + $0x188] sm:$0xf]
  %v114 = vld [vmem:[%s0 + $0x18c] sm:$0xf]
  %v115 = vld [vmem:[%s0 + $0x190] sm:$0xf]
  %v116 = vld [vmem:[%s0 + $0x194] sm:$0xf]
  %v117 = vld [vmem:[%s0 + $0x198] sm:$0xf]
  %v118 = vld [vmem:[%s0 + $0x19c] sm:$0xf]
  %v119 = vld [vmem:[%s0 + $0x1a0] sm:$0xf]
  %v120 = vld [vmem:[%s0 + $0x1a4] sm:$0xf]
  %v121 = vld [vmem:[%s0 + $0x1a8] sm:$0xf]
  %v122 = vld [vmem:[%s0 + $0x1ac] sm:$0xf]
  %v123 = vld [vmem:[%s0 + $0x1b0] sm:$0xf]
  %v124 = vld [vmem:[%s0 + $0x1b4] sm:$0xf]
  %v125 = vld [vmem:[%s0 + $0x1b8] sm:$0xf]
  %v126 = vld [vmem:[%s0 + $0x1bc] sm:$0xf]
  %v127 = vld [vmem:[%s0 + $0x1c0] sm:$0xf]
  %v128 = vld [vmem:[%s0 + $0x1c4] sm:$0xf]
  %v129 = vld [vmem:[%s0 + $0x1c8] sm:$0xf]
  %v130 = vld [vmem:[%s0 + $0x1cc] sm:$0xf]
  %v131 = vld [vmem:[%s0 + $0x1d0] sm:$0xf]
  %v132 = vld [vmem:[%s0 + $0x1d4] sm:$0xf]
  %v133 = vld [vmem:[%s0 + $0x1d8] sm:$0xf]
  %v134 = vld [vmem:[%s0 + $0x1dc] sm:$0xf]
  %v135 = vld [vmem:[%s0 + $0x1e0] sm:$0xf]
  %v136 = vld [vmem:[%s0 + $0x1e4] sm:$0xf]
  %v137 = vld [vmem:[%s0 + $0x1e8] sm:$0xf]
  %v138 = vld [vmem:[%s0 + $0x1ec] sm:$0xf]
  %v139 = vld [vmem:[%s0 + $0x1f0] sm:$0xf]
  %v140 = vld [vmem:[%s0 + $0x1f4] sm:$0xf]
  %v141 = vld [vmem:[%s0 + $0x1f8] sm:$0xf]
  %v142 = vld [vmem:[%s0 + $0x1fc] sm:$0xf]
  %v143 = vld [vmem:[%s0 + $0x200] sm:$0xf]
  %v144 = vld [vmem:[%s0 + $0x204] sm:$0xf]
  %v145 = vld [vmem:[%s0 + $0x208] sm:$0xf]
  %v146 = vld [vmem:[%s0 + $0x20c] sm:$0xf]
  %v147 = vld [vmem:[%s0 + $0x210] sm:$0xf]
  %v148 = vld [vmem:[%s0 + $0x214] sm:$0xf]
  %v149 = vld [vmem:[%s0 + $0x218] sm:$0xf]
  %v150 = vld [vmem:[%s0 + $0x21c] sm:$0xf]
  %v151 = vld [vmem:[%s0 + $0x220] sm:$0xf]
  %v152 = vld [vmem:[%s0 + $0x224] sm:$0xf]
  %v153 = vld [vmem:[%s0 + $0x228] sm:$0xf]
  %v154 = vld [vmem:[%s0 + $0x22c] sm:$0xf]
  %v155 = vld [vmem:[%s0 + $0x230] sm:$0xf]
  %v156 = vld [vmem:[%s0 + $0x234] sm:$0xf]
  %v157 = vld [vmem:[%s0 + $0x238] sm:$0xf]
  %v158 = vld [vmem:[%s0 + $0x23c] sm:$0xf]
  %v159 = vld [vmem:[%s0 + $0x240] sm:$0xf]
  %v160 = vld [vmem:[%s0 + $0x244] sm:$0xf]
  %v161 = vld [vmem:[%s0 + $0x248] sm:$0xf]
  %v162 = vld [vmem:[%s0 + $0x24c] sm:$0xf]
  %v163 = vld [vmem:[%s0 + $0x250] sm:$0xf]
  %v164 = vld [vmem:[%s0 + $0x254] sm:$0xf]
  %v165 = vld [vmem:[%s0 + $0x258] sm:$0xf]
  %v166 = vld [vmem:[%s0 + $0x25c] sm:$0xf]
  %v167 = vld [vmem:[%s0 + $0x260] sm:$0xf]
  %v168 = vld [vmem:[%s0 + $0x264] sm:$0xf]
  %v169 = vld [vmem:[%s0 + $0x268] sm:$0xf]
  %v170 = vld [vmem:[%s0 + $0x26c] sm:$0xf]
  %v171 = vld [vmem:[%s0 + $0x270] sm:$0xf]
  %v172 = vld [vmem:[%s0 + $0x274] sm:$0xf]
  %v173 = vld [vmem:[%s0 + $0x278] sm:$0xf]
  %v174 = vld [vmem:[%s0 + $0x27c] sm:$0xf]
  %v175 = vld [vmem:[%s0 + $0x280] sm:$0xf]
  %v176 = vld [vmem:[%s0 + $0x284] sm:$0xf]
  %v177 = vld [vmem:[%s0 + $0x288] sm:$0xf]
  %v178 = vld [vmem:[%s0 + $0x28c] sm:$0xf]
  %v179 = vld [vmem:[%s0 + $0x290] sm:$0xf]
  %v180 = vld [vmem:[%s0 + $0x294] sm:$0xf]
  %v181 = vld [vmem:[%s0 + $0x298] sm:$0xf]
  %v182 = vld [vmem:[%s0 + $0x29c] sm:$0xf]
  %v183 = vld [vmem:[%s0 + $0x2a0] sm:$0xf]
  %v184 = vld [vmem:[%s0 + $0x2a4] sm:$0xf]
  %v185 = vld [vmem:[%s0 + $0x2a8] sm:$0xf]
  %v186 = vld [vmem:[%s0 + $0x2ac] sm:$0xf]
  %v187 = vld [vmem:[%s0 + $0x2b0] sm:$0xf]
  %v188 = vld [vmem:[%s0 + $0x2b4] sm:$0xf]
  %v189 = vld [vmem:[%s0 + $0x2b8] sm:$0xf]
  %v190 = vld [vmem:[%s0 + $0x2bc] sm:$0xf]
  %v191 = vld [vmem:[%s0 + $0x2c0] sm:$0xf]
  %v192 = vld [vmem:[%s0 + $0x2c4] sm:$0xf]
  %v193 = vld [vmem:[%s0 + $0x2c8] sm:$0xf]
  %v194 = vld [vmem:[%s0 + $0x2cc] sm:$0xf]
  %v195 = vld [vmem:[%s0 + $0x2d0] sm:$0xf]
  %v196 = vld [vmem:[%s0 + $0x2d4] sm:$0xf]
  %v197 = vld [vmem:[%s0 + $0x2d8] sm:$0xf]
  %v198 = vld [vmem:[%s0 + $0x2dc] sm:$0xf]
  %v199 = vld [vmem:[%s0 + $0x2e0] sm:$0xf]
  %v200 = vld [vmem:[%s0 + $0x2e4] sm:$0xf]
  %v201 = vld [vmem:[%s0 + $0x2e8] sm:$0xf]
  %v202 = vld [vmem:[%s0 + $0x2ec] sm:$0xf]
  %v203 = vld [vmem:[%s0 + $0x2f0] sm:$0xf]
  %v204 = vld [vmem:[%s0 + $0x2f4] sm:$0xf]
  %v205 = vld [vmem:[%s0 + $0x2f8] sm:$0xf]
  %v206 = vld [vmem:[%s0 + $0x2fc] sm:$0xf]
  %v207 = vld [vmem:[%s0 + $0x300] sm:$0xf]
  %v208 = vld [vmem:[%s0 + $0x304] sm:$0xf]
  %v209 = vld [vmem:[%s0 + $0x308] sm:$0xf]
  %v210 = vld [vmem:[%s0 + $0x30c] sm:$0xf]
  %v211 = vld [vmem:[%s0 + $0x310] sm:$0xf]
  %v212 = vld [vmem:[%s0 + $0x314] sm:$0xf]
  %v213 = vld [vmem:[%s0 + $0x318] sm:$0xf]
  %v214 = vld [vmem:[%s0 + $0x31c] sm:$0xf]
  %v215 = vld [vmem:[%s0 + $0x320] sm:$0xf]
  %v216 = vld [vmem:[%s0 + $0x324] sm:$0xf]
  %v217 = vld [vmem:[%s0 + $0x328] sm:$0xf]
  %v218 = vld [vmem:[%s0 + $0x32c] sm:$0xf]
  %v219 = vld [vmem:[%s0 + $0x330] sm:$0xf]
  %v220 = vld [vmem:[%s0 + $0x334] sm:$0xf]
  %v221 = vld [vmem:[%s0 + $0x338] sm:$0xf]
  %v222 = vld [vmem:[%s0 + $0x33c] sm:$0xf]
  %v223 = vld [vmem:[%s0 + $0x340] sm:$0xf]
  %v224 = vld [vmem:[%s0 + $0x344] sm:$0xf]
  %v225 = vld [vmem:[%s0 + $0x348] sm:$0xf]
  %v226 = vld [vmem:[%s0 + $0x34c] sm:$0xf]
  %v227 = vld [vmem:[%s0 + $0x350] sm:$0xf]
  %v228 = vld [vmem:[%s0 + $0x354] sm:$0xf]
  %v229 = vld [vmem:[%s0 + $0x358] sm:$0xf]
  %v230 = vld [vmem:[%s0 + $0x35c] sm:$0xf]
  %v231 = vld [vmem:[%s0 + $0x360] sm:$0xf]
  %v232 = vld [vmem:[%s0 + $0x364] sm:$0xf]
  %v233 = vld [vmem:[%s0 + $0x368] sm:$0xf]
  %v234 = vld [vmem:[%s0 + $0x36c] sm:$0xf]
  %v235 = vld [vmem:[%s0 + $0x370] sm:$0xf]
  %v236 = vld [vmem:[%s0 + $0x374] sm:$0xf]
  %v237 = vld [vmem:[%s0 + $0x378] sm:$0xf]
  %v238 = vld [vmem:[%s0 + $0x37c] sm:$0xf]
  %v239 = vld [vmem:[%s0 + $0x380] sm:$0xf]
  %v240 = vld [vmem:[%s0 + $0x384] sm:$0xf]
  %v241 = vld [vmem:[%s0 + $0x388] sm:$0xf]
  %v242 = vld [vmem:[%s0 + $0x38c] sm:$0xf]
  %v243 = vld [vmem:[%s0 + $0x390] sm:$0xf]
  %v244 = vld [vmem:[%s0 + $0x394] sm:$0xf]
  %v245 = vld [vmem:[%s0 + $0x398] sm:$0xf]
  %v246 = vld [vmem:[%s0 + $0x39c] sm:$0xf]
  %v247 = vld [vmem:[%s0 + $0x3a0] sm:$0xf]
  %v248 = vld [vmem:[%s0 + $0x3a4] sm:$0xf]
  %v249 = vld [vmem:[%s0 + $0x3a8] sm:$0xf]
  %v250 = vld [vmem:[%s0 + $0x3ac] sm:$0xf]
  %v251 = vld [vmem:[%s0 + $0x3b0] sm:$0xf]
  %v252 = vld [vmem:[%s0 + $0x3b4] sm:$0xf]
  %v253 = vld [vmem:[%s0 + $0x3b8] sm:$0xf]
  %v254 = vld [vmem:[%s0 + $0x3bc] sm:$0xf]
  %v255 = vld [vmem:[%s0 + $0x3c0] sm:$0xf]
  %v256 = vld [vmem:[%s0 + $0x3c4] sm:$0xf]
  %v257 = vld [vmem:[%s0 + $0x3c8] sm:$0xf]
  %v258 = vld [vmem:[%s0 + $0x3cc] sm:$0xf]
  %v259 = vld [vmem:[%s0 + $0x3d0] sm:$0xf]
  %v260 = vld [vmem:[%s0 + $0x3d4] sm:$0xf]
  %v261 = vld [vmem:[%s0 + $0x3d8] sm:$0xf]
  %v262 = vld [vmem:[%s0 + $0x3dc] sm:$0xf]
  %v263 = vld [vmem:[%s0 + $0x3e0] sm:$0xf]
  %v264 = vld [vmem:[%s0 + $0x3e4] sm:$0xf]
  %v265 = vld [vmem:[%s0 + $0x3e8] sm:$0xf]
  %v266 = vld [vmem:[%s0 + $0x3ec] sm:$0xf]
  %v267 = vld [vmem:[%s0 + $0x3f0] sm:$0xf]
  %v268 = vld [vmem:[%s0 + $0x3f4] sm:$0xf]
  %v269 = vld [vmem:[%s0 + $0x3f8] sm:$0xf]
  %v270 = vld [vmem:[%s0 + $0x3fc] sm:$0xf]
  %v271 = vld [vmem:[%s1] sm:$0xf]
  %v272 = vld [vmem:[%s1 + $0x4] sm:$0xf]
  %v273 = vld [vmem:[%s1 + $0x8] sm:$0xf]
  %v274 = vld [vmem:[%s1 + $0xc] sm:$0xf]
  %v275 = vld [vmem:[%s1 + $0x10] sm:$0xf]
  %v276 = vld [vmem:[%s1 + $0x14] sm:$0xf]
  %v277 = vld [vmem:[%s1 + $0x18] sm:$0xf]
  %v278 = vld [vmem:[%s1 + $0x1c] sm:$0xf]
  %v279 = vld [vmem:[%s1 + $0x20] sm:$0xf]
  %v280 = vld [vmem:[%s1 + $0x24] sm:$0xf]
  %v281 = vld [vmem:[%s1 + $0x28] sm:$0xf]
  %v282 = vld [vmem:[%s1 + $0x2c] sm:$0xf]
  %v283 = vld [vmem:[%s1 + $0x30] sm:$0xf]
  %v284 = vld [vmem:[%s1 + $0x34] sm:$0xf]
  %v285 = vld [vmem:[%s1 + $0x38] sm:$0xf]
  %v286 = vld [vmem:[%s1 + $0x3c] sm:$0xf]
  %v287 = vld [vmem:[%s2] sm:$0x1]
  %v289 = vlaneseq
  %v290 = vshrl.u32 %v289, 7
  %v291 = vsub.s32 0, %v290
  %v292 = vrot.slane %v287, %v291
  %v550 = vunpack.c.l.b16 %v15
  %v551 = vunpack.c.l.b16 %v16
  %v552 = vunpack.c.l.b16 %v17
  %v553 = vunpack.c.l.b16 %v18
  %v554 = vunpack.c.l.b16 %v19
  %v555 = vunpack.c.l.b16 %v20
  %v556 = vunpack.c.l.b16 %v21
  %v557 = vunpack.c.l.b16 %v22
  %v558 = vunpack.c.l.b16 %v23
  %v559 = vunpack.c.l.b16 %v24
  %v560 = vunpack.c.l.b16 %v25
  %v561 = vunpack.c.l.b16 %v26
  %v562 = vunpack.c.l.b16 %v27
  %v563 = vunpack.c.l.b16 %v28
  %v564 = vunpack.c.l.b16 %v29
  %v565 = vunpack.c.l.b16 %v30
  %v566 = vunpack.c.l.b16 %v31
  %v567 = vunpack.c.l.b16 %v32
  %v568 = vunpack.c.l.b16 %v33
  %v569 = vunpack.c.l.b16 %v34
  %v570 = vunpack.c.l.b16 %v35
  %v571 = vunpack.c.l.b16 %v36
  %v572 = vunpack.c.l.b16 %v37
  %v573 = vunpack.c.l.b16 %v38
  %v574 = vunpack.c.l.b16 %v39
  %v575 = vunpack.c.l.b16 %v40
  %v576 = vunpack.c.l.b16 %v41
  %v577 = vunpack.c.l.b16 %v42
  %v578 = vunpack.c.l.b16 %v43
  %v579 = vunpack.c.l.b16 %v44
  %v580 = vunpack.c.l.b16 %v45
  %v581 = vunpack.c.l.b16 %v46
  %v582 = vunpack.c.l.b16 %v47
  %v583 = vunpack.c.l.b16 %v48
  %v584 = vunpack.c.l.b16 %v49
  %v585 = vunpack.c.l.b16 %v50
  %v586 = vunpack.c.l.b16 %v51
  %v587 = vunpack.c.l.b16 %v52
  %v588 = vunpack.c.l.b16 %v53
  %v589 = vunpack.c.l.b16 %v54
  %v590 = vunpack.c.l.b16 %v55
  %v591 = vunpack.c.l.b16 %v56
  %v592 = vunpack.c.l.b16 %v57
  %v593 = vunpack.c.l.b16 %v58
  %v594 = vunpack.c.l.b16 %v59
  %v595 = vunpack.c.l.b16 %v60
  %v596 = vunpack.c.l.b16 %v61
  %v597 = vunpack.c.l.b16 %v62
  %v598 = vunpack.c.l.b16 %v63
  %v599 = vunpack.c.l.b16 %v64
  %v600 = vunpack.c.l.b16 %v65
  %v601 = vunpack.c.l.b16 %v66
  %v602 = vunpack.c.l.b16 %v67
  %v603 = vunpack.c.l.b16 %v68
  %v604 = vunpack.c.l.b16 %v69
  %v605 = vunpack.c.l.b16 %v70
  %v606 = vunpack.c.l.b16 %v71
  %v607 = vunpack.c.l.b16 %v72
  %v608 = vunpack.c.l.b16 %v73
  %v609 = vunpack.c.l.b16 %v74
  %v610 = vunpack.c.l.b16 %v75
  %v611 = vunpack.c.l.b16 %v76
  %v612 = vunpack.c.l.b16 %v77
  %v613 = vunpack.c.l.b16 %v78
  %v614 = vunpack.c.l.b16 %v79
  %v615 = vunpack.c.l.b16 %v80
  %v616 = vunpack.c.l.b16 %v81
  %v617 = vunpack.c.l.b16 %v82
  %v618 = vunpack.c.l.b16 %v83
  %v619 = vunpack.c.l.b16 %v84
  %v620 = vunpack.c.l.b16 %v85
  %v621 = vunpack.c.l.b16 %v86
  %v622 = vunpack.c.l.b16 %v87
  %v623 = vunpack.c.l.b16 %v88
  %v624 = vunpack.c.l.b16 %v89
  %v625 = vunpack.c.l.b16 %v90
  %v626 = vunpack.c.l.b16 %v91
  %v627 = vunpack.c.l.b16 %v92
  %v628 = vunpack.c.l.b16 %v93
  %v629 = vunpack.c.l.b16 %v94
  %v630 = vunpack.c.l.b16 %v95
  %v631 = vunpack.c.l.b16 %v96
  %v632 = vunpack.c.l.b16 %v97
  %v633 = vunpack.c.l.b16 %v98
  %v634 = vunpack.c.l.b16 %v99
  %v635 = vunpack.c.l.b16 %v100
  %v636 = vunpack.c.l.b16 %v101
  %v637 = vunpack.c.l.b16 %v102
  %v638 = vunpack.c.l.b16 %v103
  %v639 = vunpack.c.l.b16 %v104
  %v640 = vunpack.c.l.b16 %v105
  %v641 = vunpack.c.l.b16 %v106
  %v642 = vunpack.c.l.b16 %v107
  %v643 = vunpack.c.l.b16 %v108
  %v644 = vunpack.c.l.b16 %v109
  %v645 = vunpack.c.l.b16 %v110
  %v646 = vunpack.c.l.b16 %v111
  %v647 = vunpack.c.l.b16 %v112
  %v648 = vunpack.c.l.b16 %v113
  %v649 = vunpack.c.l.b16 %v114
  %v650 = vunpack.c.l.b16 %v115
  %v651 = vunpack.c.l.b16 %v116
  %v652 = vunpack.c.l.b16 %v117
  %v653 = vunpack.c.l.b16 %v118
  %v654 = vunpack.c.l.b16 %v119
  %v655 = vunpack.c.l.b16 %v120
  %v656 = vunpack.c.l.b16 %v121
  %v657 = vunpack.c.l.b16 %v122
  %v658 = vunpack.c.l.b16 %v123
  %v659 = vunpack.c.l.b16 %v124
  %v660 = vunpack.c.l.b16 %v125
  %v661 = vunpack.c.l.b16 %v126
  %v662 = vunpack.c.l.b16 %v127
  %v663 = vunpack.c.l.b16 %v128
  %v664 = vunpack.c.l.b16 %v129
  %v665 = vunpack.c.l.b16 %v130
  %v666 = vunpack.c.l.b16 %v131
  %v667 = vunpack.c.l.b16 %v132
  %v668 = vunpack.c.l.b16 %v133
  %v669 = vunpack.c.l.b16 %v134
  %v670 = vunpack.c.l.b16 %v135
  %v671 = vunpack.c.l.b16 %v136
  %v672 = vunpack.c.l.b16 %v137
  %v673 = vunpack.c.l.b16 %v138
  %v674 = vunpack.c.l.b16 %v139
  %v675 = vunpack.c.l.b16 %v140
  %v676 = vunpack.c.l.b16 %v141
  %v677 = vunpack.c.l.b16 %v142
  %v678 = vunpack.c.l.b16 %v143
  %v679 = vunpack.c.l.b16 %v144
  %v680 = vunpack.c.l.b16 %v145
  %v681 = vunpack.c.l.b16 %v146
  %v682 = vunpack.c.l.b16 %v147
  %v683 = vunpack.c.l.b16 %v148
  %v684 = vunpack.c.l.b16 %v149
  %v685 = vunpack.c.l.b16 %v150
  %v686 = vunpack.c.l.b16 %v151
  %v687 = vunpack.c.l.b16 %v152
  %v688 = vunpack.c.l.b16 %v153
  %v689 = vunpack.c.l.b16 %v154
  %v690 = vunpack.c.l.b16 %v155
  %v691 = vunpack.c.l.b16 %v156
  %v692 = vunpack.c.l.b16 %v157
  %v693 = vunpack.c.l.b16 %v158
  %v694 = vunpack.c.l.b16 %v159
  %v695 = vunpack.c.l.b16 %v160
  %v696 = vunpack.c.l.b16 %v161
  %v697 = vunpack.c.l.b16 %v162
  %v698 = vunpack.c.l.b16 %v163
  %v699 = vunpack.c.l.b16 %v164
  %v700 = vunpack.c.l.b16 %v165
  %v701 = vunpack.c.l.b16 %v166
  %v702 = vunpack.c.l.b16 %v167
  %v703 = vunpack.c.l.b16 %v168
  %v704 = vunpack.c.l.b16 %v169
  %v705 = vunpack.c.l.b16 %v170
  %v706 = vunpack.c.l.b16 %v171
  %v707 = vunpack.c.l.b16 %v172
  %v708 = vunpack.c.l.b16 %v173
  %v709 = vunpack.c.l.b16 %v174
  %v710 = vunpack.c.l.b16 %v175
  %v711 = vunpack.c.l.b16 %v176
  %v712 = vunpack.c.l.b16 %v177
  %v713 = vunpack.c.l.b16 %v178
  %v714 = vunpack.c.l.b16 %v179
  %v715 = vunpack.c.l.b16 %v180
  %v716 = vunpack.c.l.b16 %v181
  %v717 = vunpack.c.l.b16 %v182
  %v718 = vunpack.c.l.b16 %v183
  %v719 = vunpack.c.l.b16 %v184
  %v720 = vunpack.c.l.b16 %v185
  %v721 = vunpack.c.l.b16 %v186
  %v722 = vunpack.c.l.b16 %v187
  %v723 = vunpack.c.l.b16 %v188
  %v724 = vunpack.c.l.b16 %v189
  %v725 = vunpack.c.l.b16 %v190
  %v726 = vunpack.c.l.b16 %v191
  %v727 = vunpack.c.l.b16 %v192
  %v728 = vunpack.c.l.b16 %v193
  %v729 = vunpack.c.l.b16 %v194
  %v730 = vunpack.c.l.b16 %v195
  %v731 = vunpack.c.l.b16 %v196
  %v732 = vunpack.c.l.b16 %v197
  %v733 = vunpack.c.l.b16 %v198
  %v734 = vunpack.c.l.b16 %v199
  %v735 = vunpack.c.l.b16 %v200
  %v736 = vunpack.c.l.b16 %v201
  %v737 = vunpack.c.l.b16 %v202
  %v738 = vunpack.c.l.b16 %v203
  %v739 = vunpack.c.l.b16 %v204
  %v740 = vunpack.c.l.b16 %v205
  %v741 = vunpack.c.l.b16 %v206
  %v742 = vunpack.c.l.b16 %v207
  %v743 = vunpack.c.l.b16 %v208
  %v744 = vunpack.c.l.b16 %v209
  %v745 = vunpack.c.l.b16 %v210
  %v746 = vunpack.c.l.b16 %v211
  %v747 = vunpack.c.l.b16 %v212
  %v748 = vunpack.c.l.b16 %v213
  %v749 = vunpack.c.l.b16 %v214
  %v750 = vunpack.c.l.b16 %v215
  %v751 = vunpack.c.l.b16 %v216
  %v752 = vunpack.c.l.b16 %v217
  %v753 = vunpack.c.l.b16 %v218
  %v754 = vunpack.c.l.b16 %v219
  %v755 = vunpack.c.l.b16 %v220
  %v756 = vunpack.c.l.b16 %v221
  %v757 = vunpack.c.l.b16 %v222
  %v758 = vunpack.c.l.b16 %v223
  %v759 = vunpack.c.l.b16 %v224
  %v760 = vunpack.c.l.b16 %v225
  %v761 = vunpack.c.l.b16 %v226
  %v762 = vunpack.c.l.b16 %v227
  %v763 = vunpack.c.l.b16 %v228
  %v764 = vunpack.c.l.b16 %v229
  %v765 = vunpack.c.l.b16 %v230
  %v766 = vunpack.c.l.b16 %v231
  %v767 = vunpack.c.l.b16 %v232
  %v768 = vunpack.c.l.b16 %v233
  %v769 = vunpack.c.l.b16 %v234
  %v770 = vunpack.c.l.b16 %v235
  %v771 = vunpack.c.l.b16 %v236
  %v772 = vunpack.c.l.b16 %v237
  %v773 = vunpack.c.l.b16 %v238
  %v774 = vunpack.c.l.b16 %v239
  %v775 = vunpack.c.l.b16 %v240
  %v776 = vunpack.c.l.b16 %v241
  %v777 = vunpack.c.l.b16 %v242
  %v778 = vunpack.c.l.b16 %v243
  %v779 = vunpack.c.l.b16 %v244
  %v780 = vunpack.c.l.b16 %v245
  %v781 = vunpack.c.l.b16 %v246
  %v782 = vunpack.c.l.b16 %v247
  %v783 = vunpack.c.l.b16 %v248
  %v784 = vunpack.c.l.b16 %v249
  %v785 = vunpack.c.l.b16 %v250
  %v786 = vunpack.c.l.b16 %v251
  %v787 = vunpack.c.l.b16 %v252
  %v788 = vunpack.c.l.b16 %v253
  %v789 = vunpack.c.l.b16 %v254
  %v790 = vunpack.c.l.b16 %v255
  %v791 = vunpack.c.l.b16 %v256
  %v792 = vunpack.c.l.b16 %v257
  %v793 = vunpack.c.l.b16 %v258
  %v794 = vunpack.c.l.b16 %v259
  %v795 = vunpack.c.l.b16 %v260
  %v796 = vunpack.c.l.b16 %v261
  %v797 = vunpack.c.l.b16 %v262
  %v798 = vunpack.c.l.b16 %v263
  %v799 = vunpack.c.l.b16 %v264
  %v800 = vunpack.c.l.b16 %v265
  %v801 = vunpack.c.l.b16 %v266
  %v802 = vunpack.c.l.b16 %v267
  %v803 = vunpack.c.l.b16 %v268
  %v804 = vunpack.c.l.b16 %v269
  %v805 = vunpack.c.l.b16 %v270
  %v806 = vpack.c.b16 %v551, %v550
  %v807 = vpack.c.b16 %v553, %v552
  %v808 = vpack.c.b16 %v555, %v554
  %v809 = vpack.c.b16 %v557, %v556
  %v810 = vpack.c.b16 %v559, %v558
  %v811 = vpack.c.b16 %v561, %v560
  %v812 = vpack.c.b16 %v563, %v562
  %v813 = vpack.c.b16 %v565, %v564
  %v814 = vpack.c.b16 %v567, %v566
  %v815 = vpack.c.b16 %v569, %v568
  %v816 = vpack.c.b16 %v571, %v570
  %v817 = vpack.c.b16 %v573, %v572
  %v818 = vpack.c.b16 %v575, %v574
  %v819 = vpack.c.b16 %v577, %v576
  %v820 = vpack.c.b16 %v579, %v578
  %v821 = vpack.c.b16 %v581, %v580
  %v822 = vpack.c.b16 %v583, %v582
  %v823 = vpack.c.b16 %v585, %v584
  %v824 = vpack.c.b16 %v587, %v586
  %v825 = vpack.c.b16 %v589, %v588
  %v826 = vpack.c.b16 %v591, %v590
  %v827 = vpack.c.b16 %v593, %v592
  %v828 = vpack.c.b16 %v595, %v594
  %v829 = vpack.c.b16 %v597, %v596
  %v830 = vpack.c.b16 %v599, %v598
  %v831 = vpack.c.b16 %v601, %v600
  %v832 = vpack.c.b16 %v603, %v602
  %v833 = vpack.c.b16 %v605, %v604
  %v834 = vpack.c.b16 %v607, %v606
  %v835 = vpack.c.b16 %v609, %v608
  %v836 = vpack.c.b16 %v611, %v610
  %v837 = vpack.c.b16 %v613, %v612
  %v838 = vpack.c.b16 %v615, %v614
  %v839 = vpack.c.b16 %v617, %v616
  %v840 = vpack.c.b16 %v619, %v618
  %v841 = vpack.c.b16 %v621, %v620
  %v842 = vpack.c.b16 %v623, %v622
  %v843 = vpack.c.b16 %v625, %v624
  %v844 = vpack.c.b16 %v627, %v626
  %v845 = vpack.c.b16 %v629, %v628
  %v846 = vpack.c.b16 %v631, %v630
  %v847 = vpack.c.b16 %v633, %v632
  %v848 = vpack.c.b16 %v635, %v634
  %v849 = vpack.c.b16 %v637, %v636
  %v850 = vpack.c.b16 %v639, %v638
  %v851 = vpack.c.b16 %v641, %v640
  %v852 = vpack.c.b16 %v643, %v642
  %v853 = vpack.c.b16 %v645, %v644
  %v854 = vpack.c.b16 %v647, %v646
  %v855 = vpack.c.b16 %v649, %v648
  %v856 = vpack.c.b16 %v651, %v650
  %v857 = vpack.c.b16 %v653, %v652
  %v858 = vpack.c.b16 %v655, %v654
  %v859 = vpack.c.b16 %v657, %v656
  %v860 = vpack.c.b16 %v659, %v658
  %v861 = vpack.c.b16 %v661, %v660
  %v862 = vpack.c.b16 %v663, %v662
  %v863 = vpack.c.b16 %v665, %v664
  %v864 = vpack.c.b16 %v667, %v666
  %v865 = vpack.c.b16 %v669, %v668
  %v866 = vpack.c.b16 %v671, %v670
  %v867 = vpack.c.b16 %v673, %v672
  %v868 = vpack.c.b16 %v675, %v674
  %v869 = vpack.c.b16 %v677, %v676
  %v870 = vpack.c.b16 %v679, %v678
  %v871 = vpack.c.b16 %v681, %v680
  %v872 = vpack.c.b16 %v683, %v682
  %v873 = vpack.c.b16 %v685, %v684
  %v874 = vpack.c.b16 %v687, %v686
  %v875 = vpack.c.b16 %v689, %v688
  %v876 = vpack.c.b16 %v691, %v690
  %v877 = vpack.c.b16 %v693, %v692
  %v878 = vpack.c.b16 %v695, %v694
  %v879 = vpack.c.b16 %v697, %v696
  %v880 = vpack.c.b16 %v699, %v698
  %v881 = vpack.c.b16 %v701, %v700
  %v882 = vpack.c.b16 %v703, %v702
  %v883 = vpack.c.b16 %v705, %v704
  %v884 = vpack.c.b16 %v707, %v706
  %v885 = vpack.c.b16 %v709, %v708
  %v886 = vpack.c.b16 %v711, %v710
  %v887 = vpack.c.b16 %v713, %v712
  %v888 = vpack.c.b16 %v715, %v714
  %v889 = vpack.c.b16 %v717, %v716
  %v890 = vpack.c.b16 %v719, %v718
  %v891 = vpack.c.b16 %v721, %v720
  %v892 = vpack.c.b16 %v723, %v722
  %v893 = vpack.c.b16 %v725, %v724
  %v894 = vpack.c.b16 %v727, %v726
  %v895 = vpack.c.b16 %v729, %v728
  %v896 = vpack.c.b16 %v731, %v730
  %v897 = vpack.c.b16 %v733, %v732
  %v898 = vpack.c.b16 %v735, %v734
  %v899 = vpack.c.b16 %v737, %v736
  %v900 = vpack.c.b16 %v739, %v738
  %v901 = vpack.c.b16 %v741, %v740
  %v902 = vpack.c.b16 %v743, %v742
  %v903 = vpack.c.b16 %v745, %v744
  %v904 = vpack.c.b16 %v747, %v746
  %v905 = vpack.c.b16 %v749, %v748
  %v906 = vpack.c.b16 %v751, %v750
  %v907 = vpack.c.b16 %v753, %v752
  %v908 = vpack.c.b16 %v755, %v754
  %v909 = vpack.c.b16 %v757, %v756
  %v910 = vpack.c.b16 %v759, %v758
  %v911 = vpack.c.b16 %v761, %v760
  %v912 = vpack.c.b16 %v763, %v762
  %v913 = vpack.c.b16 %v765, %v764
  %v914 = vpack.c.b16 %v767, %v766
  %v915 = vpack.c.b16 %v769, %v768
  %v916 = vpack.c.b16 %v771, %v770
  %v917 = vpack.c.b16 %v773, %v772
  %v918 = vpack.c.b16 %v775, %v774
  %v919 = vpack.c.b16 %v777, %v776
  %v920 = vpack.c.b16 %v779, %v778
  %v921 = vpack.c.b16 %v781, %v780
  %v922 = vpack.c.b16 %v783, %v782
  %v923 = vpack.c.b16 %v785, %v784
  %v924 = vpack.c.b16 %v787, %v786
  %v925 = vpack.c.b16 %v789, %v788
  %v926 = vpack.c.b16 %v791, %v790
  %v927 = vpack.c.b16 %v793, %v792
  %v928 = vpack.c.b16 %v795, %v794
  %v929 = vpack.c.b16 %v797, %v796
  %v930 = vpack.c.b16 %v799, %v798
  %v931 = vpack.c.b16 %v801, %v800
  %v932 = vpack.c.b16 %v803, %v802
  %v933 = vpack.c.b16 %v805, %v804
  %v1078 = vunpack.c.l.b16 %v271
  %v1079 = vunpack.c.l.b16 %v272
  %v1080 = vunpack.c.l.b16 %v273
  %v1081 = vunpack.c.l.b16 %v274
  %v1082 = vunpack.c.l.b16 %v275
  %v1083 = vunpack.c.l.b16 %v276
  %v1084 = vunpack.c.l.b16 %v277
  %v1085 = vunpack.c.l.b16 %v278
  %v1086 = vunpack.c.l.b16 %v279
  %v1087 = vunpack.c.l.b16 %v280
  %v1088 = vunpack.c.l.b16 %v281
  %v1089 = vunpack.c.l.b16 %v282
  %v1090 = vunpack.c.l.b16 %v283
  %v1091 = vunpack.c.l.b16 %v284
  %v1092 = vunpack.c.l.b16 %v285
  %v1093 = vunpack.c.l.b16 %v286
  %v1094 = vpack.c.b16 %v1079, %v1078
  %v1095 = vpack.c.b16 %v1081, %v1080
  %v1096 = vpack.c.b16 %v1083, %v1082
  %v1097 = vpack.c.b16 %v1085, %v1084
  %v1098 = vpack.c.b16 %v1087, %v1086
  %v1099 = vpack.c.b16 %v1089, %v1088
  %v1100 = vpack.c.b16 %v1091, %v1090
  %v1101 = vpack.c.b16 %v1093, %v1092
  %1110 = vmatprep.subr.bf16.mxu0 0
  %1111 = vmatpush1.bf16.msra.mxu0 %v1101
  %1112 = vmatprep.subr.bf16.mxu0 0
  %1113 = vmatpush1.bf16.msra.mxu0 %v1100
  %1114 = vmatprep.subr.bf16.mxu0 0
  %1115 = vmatpush1.bf16.msra.mxu0 %v1099
  %1116 = vmatprep.subr.bf16.mxu0 0
  %1117 = vmatpush1.bf16.msra.mxu0 %v1098
  %1118 = vmatprep.subr.bf16.mxu0 0
  %1119 = vmatpush1.bf16.msra.mxu0 %v1097
  %1120 = vmatprep.subr.bf16.mxu0 0
  %1121 = vmatpush1.bf16.msra.mxu0 %v1096
  %1122 = vmatprep.subr.bf16.mxu0 0
  %1123 = vmatpush1.bf16.msra.mxu0 %v1095
  %1124 = vmatprep.subr.bf16.mxu0 0
  %1125 = vmatpush1.bf16.msra.mxu0 %v1094
  %1126 = vmatprep.subr.bf16.mxu0 0
  %1127 = vmatpush2.bf16.msra.mxu0 0
  %1128 = vmatprep.subr.bf16.mxu0 0
  %1129 = vmatpush2.bf16.msra.mxu0 0
  %1130 = vmatprep.subr.bf16.mxu0 0
  %1131 = vmatpush2.bf16.msra.mxu0 0
  %1132 = vmatprep.subr.bf16.mxu0 0
  %1133 = vmatpush2.bf16.msra.mxu0 0
  %1134 = vmatprep.subr.bf16.mxu0 0
  %1135 = vmatpush2.bf16.msra.mxu0 0
  %1136 = vmatprep.subr.bf16.mxu0 0
  %1137 = vmatpush2.bf16.msra.mxu0 0
  %1138 = vmatprep.subr.bf16.mxu0 0
  %1139 = vmatpush2.bf16.msra.mxu0 0
  %1140 = vmatprep.subr.bf16.mxu0 0
  %1141 = vmatpush2.bf16.msra.mxu0 0
  %1142 = vmatprep.mubr.bf16.mxu0 0
  %1143 = vmatmul.mubr.bf16.gmra.mxu0 %v806
  %v1144 = vpop.f32.mrf.mxu0
  %v1145 = vadd.f32 %v292, %v1144
  %v1146 = vpop.f32.mrf.mxu0
  %v1147 = vpop.f32.mrf.mxu0
  %v1148 = vadd.f32 %v292, %v1147
  %v1149 = vpop.f32.mrf.mxu0
  %1150 = vmatprep.mubr.bf16.mxu0 0
  %1151 = vmatmul.mubr.bf16.gmra.mxu0 %v807
  %v1152 = vpop.f32.mrf.mxu0
  %v1153 = vadd.f32 %v292, %v1152
  %v1154 = vpop.f32.mrf.mxu0
  %v1155 = vpop.f32.mrf.mxu0
  %v1156 = vadd.f32 %v292, %v1155
  %v1157 = vpop.f32.mrf.mxu0
  %1158 = vmatprep.mubr.bf16.mxu0 0
  %1159 = vmatmul.mubr.bf16.gmra.mxu0 %v808
  %v1160 = vpop.f32.mrf.mxu0
  %v1161 = vadd.f32 %v292, %v1160
  %v1162 = vpop.f32.mrf.mxu0
  %v1163 = vpop.f32.mrf.mxu0
  %v1164 = vadd.f32 %v292, %v1163
  %v1165 = vpop.f32.mrf.mxu0
  %1166 = vmatprep.mubr.bf16.mxu0 0
  %1167 = vmatmul.mubr.bf16.gmra.mxu0 %v809
  %v1168 = vpop.f32.mrf.mxu0
  %v1169 = vadd.f32 %v292, %v1168
  %v1170 = vpop.f32.mrf.mxu0
  %v1171 = vpop.f32.mrf.mxu0
  %v1172 = vadd.f32 %v292, %v1171
  %v1173 = vpop.f32.mrf.mxu0
  %1174 = vmatprep.mubr.bf16.mxu0 0
  %1175 = vmatmul.mubr.bf16.gmra.mxu0 %v810
  %v1176 = vpop.f32.mrf.mxu0
  %v1177 = vadd.f32 %v292, %v1176
  %v1178 = vpop.f32.mrf.mxu0
  %v1179 = vpop.f32.mrf.mxu0
  %v1180 = vadd.f32 %v292, %v1179
  %v1181 = vpop.f32.mrf.mxu0
  %1182 = vmatprep.mubr.bf16.mxu0 0
  %1183 = vmatmul.mubr.bf16.gmra.mxu0 %v811
  %v1184 = vpop.f32.mrf.mxu0
  %v1185 = vadd.f32 %v292, %v1184
  %v1186 = vpop.f32.mrf.mxu0
  %v1187 = vpop.f32.mrf.mxu0
  %v1188 = vadd.f32 %v292, %v1187
  %v1189 = vpop.f32.mrf.mxu0
  %1190 = vmatprep.mubr.bf16.mxu0 0
  %1191 = vmatmul.mubr.bf16.gmra.mxu0 %v812
  %v1192 = vpop.f32.mrf.mxu0
  %v1193 = vadd.f32 %v292, %v1192
  %v1194 = vpop.f32.mrf.mxu0
  %v1195 = vpop.f32.mrf.mxu0
  %v1196 = vadd.f32 %v292, %v1195
  %v1197 = vpop.f32.mrf.mxu0
  %1198 = vmatprep.mubr.bf16.mxu0 0
  %1199 = vmatmul.mubr.bf16.gmra.mxu0 %v813
  %v1200 = vpop.f32.mrf.mxu0
  %v1201 = vadd.f32 %v292, %v1200
  %v1202 = vpop.f32.mrf.mxu0
  %v1203 = vpop.f32.mrf.mxu0
  %v1204 = vadd.f32 %v292, %v1203
  %v1205 = vpop.f32.mrf.mxu0
  %1206 = vmatprep.mubr.bf16.mxu0 0
  %1207 = vmatmul.mubr.bf16.gmra.mxu0 %v814
  %v1208 = vpop.f32.mrf.mxu0
  %v1209 = vadd.f32 %v292, %v1208
  %v1210 = vpop.f32.mrf.mxu0
  %v1211 = vpop.f32.mrf.mxu0
  %v1212 = vadd.f32 %v292, %v1211
  %v1213 = vpop.f32.mrf.mxu0
  %1214 = vmatprep.mubr.bf16.mxu0 0
  %1215 = vmatmul.mubr.bf16.gmra.mxu0 %v815
  %v1216 = vpop.f32.mrf.mxu0
  %v1217 = vadd.f32 %v292, %v1216
  %v1218 = vpop.f32.mrf.mxu0
  %v1219 = vpop.f32.mrf.mxu0
  %v1220 = vadd.f32 %v292, %v1219
  %v1221 = vpop.f32.mrf.mxu0
  %1222 = vmatprep.mubr.bf16.mxu0 0
  %1223 = vmatmul.mubr.bf16.gmra.mxu0 %v816
  %v1224 = vpop.f32.mrf.mxu0
  %v1225 = vadd.f32 %v292, %v1224
  %v1226 = vpop.f32.mrf.mxu0
  %v1227 = vpop.f32.mrf.mxu0
  %v1228 = vadd.f32 %v292, %v1227
  %v1229 = vpop.f32.mrf.mxu0
  %1230 = vmatprep.mubr.bf16.mxu0 0
  %1231 = vmatmul.mubr.bf16.gmra.mxu0 %v817
  %v1232 = vpop.f32.mrf.mxu0
  %v1233 = vadd.f32 %v292, %v1232
  %v1234 = vpop.f32.mrf.mxu0
  %v1235 = vpop.f32.mrf.mxu0
  %v1236 = vadd.f32 %v292, %v1235
  %v1237 = vpop.f32.mrf.mxu0
  %1238 = vmatprep.mubr.bf16.mxu0 0
  %1239 = vmatmul.mubr.bf16.gmra.mxu0 %v818
  %v1240 = vpop.f32.mrf.mxu0
  %v1241 = vadd.f32 %v292, %v1240
  %v1242 = vpop.f32.mrf.mxu0
  %v1243 = vpop.f32.mrf.mxu0
  %v1244 = vadd.f32 %v292, %v1243
  %v1245 = vpop.f32.mrf.mxu0
  %1246 = vmatprep.mubr.bf16.mxu0 0
  %1247 = vmatmul.mubr.bf16.gmra.mxu0 %v819
  %v1248 = vpop.f32.mrf.mxu0
  %v1249 = vadd.f32 %v292, %v1248
  %v1250 = vpop.f32.mrf.mxu0
  %v1251 = vpop.f32.mrf.mxu0
  %v1252 = vadd.f32 %v292, %v1251
  %v1253 = vpop.f32.mrf.mxu0
  %1254 = vmatprep.mubr.bf16.mxu0 0
  %1255 = vmatmul.mubr.bf16.gmra.mxu0 %v820
  %v1256 = vpop.f32.mrf.mxu0
  %v1257 = vadd.f32 %v292, %v1256
  %v1258 = vpop.f32.mrf.mxu0
  %v1259 = vpop.f32.mrf.mxu0
  %v1260 = vadd.f32 %v292, %v1259
  %v1261 = vpop.f32.mrf.mxu0
  %1262 = vmatprep.mubr.bf16.mxu0 0
  %1263 = vmatmul.mubr.bf16.gmra.mxu0 %v821
  %v1264 = vpop.f32.mrf.mxu0
  %v1265 = vadd.f32 %v292, %v1264
  %v1266 = vpop.f32.mrf.mxu0
  %v1267 = vpop.f32.mrf.mxu0
  %v1268 = vadd.f32 %v292, %v1267
  %v1269 = vpop.f32.mrf.mxu0
  %1270 = vmatprep.mubr.bf16.mxu0 0
  %1271 = vmatmul.mubr.bf16.gmra.mxu0 %v822
  %v1272 = vpop.f32.mrf.mxu0
  %v1273 = vadd.f32 %v292, %v1272
  %v1274 = vpop.f32.mrf.mxu0
  %v1275 = vpop.f32.mrf.mxu0
  %v1276 = vadd.f32 %v292, %v1275
  %v1277 = vpop.f32.mrf.mxu0
  %1278 = vmatprep.mubr.bf16.mxu0 0
  %1279 = vmatmul.mubr.bf16.gmra.mxu0 %v823
  %v1280 = vpop.f32.mrf.mxu0
  %v1281 = vadd.f32 %v292, %v1280
  %v1282 = vpop.f32.mrf.mxu0
  %v1283 = vpop.f32.mrf.mxu0
  %v1284 = vadd.f32 %v292, %v1283
  %v1285 = vpop.f32.mrf.mxu0
  %1286 = vmatprep.mubr.bf16.mxu0 0
  %1287 = vmatmul.mubr.bf16.gmra.mxu0 %v824
  %v1288 = vpop.f32.mrf.mxu0
  %v1289 = vadd.f32 %v292, %v1288
  %v1290 = vpop.f32.mrf.mxu0
  %v1291 = vpop.f32.mrf.mxu0
  %v1292 = vadd.f32 %v292, %v1291
  %v1293 = vpop.f32.mrf.mxu0
  %1294 = vmatprep.mubr.bf16.mxu0 0
  %1295 = vmatmul.mubr.bf16.gmra.mxu0 %v825
  %v1296 = vpop.f32.mrf.mxu0
  %v1297 = vadd.f32 %v292, %v1296
  %v1298 = vpop.f32.mrf.mxu0
  %v1299 = vpop.f32.mrf.mxu0
  %v1300 = vadd.f32 %v292, %v1299
  %v1301 = vpop.f32.mrf.mxu0
  %1302 = vmatprep.mubr.bf16.mxu0 0
  %1303 = vmatmul.mubr.bf16.gmra.mxu0 %v826
  %v1304 = vpop.f32.mrf.mxu0
  %v1305 = vadd.f32 %v292, %v1304
  %v1306 = vpop.f32.mrf.mxu0
  %v1307 = vpop.f32.mrf.mxu0
  %v1308 = vadd.f32 %v292, %v1307
  %v1309 = vpop.f32.mrf.mxu0
  %1310 = vmatprep.mubr.bf16.mxu0 0
  %1311 = vmatmul.mubr.bf16.gmra.mxu0 %v827
  %v1312 = vpop.f32.mrf.mxu0
  %v1313 = vadd.f32 %v292, %v1312
  %v1314 = vpop.f32.mrf.mxu0
  %v1315 = vpop.f32.mrf.mxu0
  %v1316 = vadd.f32 %v292, %v1315
  %v1317 = vpop.f32.mrf.mxu0
  %1318 = vmatprep.mubr.bf16.mxu0 0
  %1319 = vmatmul.mubr.bf16.gmra.mxu0 %v828
  %v1320 = vpop.f32.mrf.mxu0
  %v1321 = vadd.f32 %v292, %v1320
  %v1322 = vpop.f32.mrf.mxu0
  %v1323 = vpop.f32.mrf.mxu0
  %v1324 = vadd.f32 %v292, %v1323
  %v1325 = vpop.f32.mrf.mxu0
  %1326 = vmatprep.mubr.bf16.mxu0 0
  %1327 = vmatmul.mubr.bf16.gmra.mxu0 %v829
  %v1328 = vpop.f32.mrf.mxu0
  %v1329 = vadd.f32 %v292, %v1328
  %v1330 = vpop.f32.mrf.mxu0
  %v1331 = vpop.f32.mrf.mxu0
  %v1332 = vadd.f32 %v292, %v1331
  %v1333 = vpop.f32.mrf.mxu0
  %1334 = vmatprep.mubr.bf16.mxu0 0
  %1335 = vmatmul.mubr.bf16.gmra.mxu0 %v830
  %v1336 = vpop.f32.mrf.mxu0
  %v1337 = vadd.f32 %v292, %v1336
  %v1338 = vpop.f32.mrf.mxu0
  %v1339 = vpop.f32.mrf.mxu0
  %v1340 = vadd.f32 %v292, %v1339
  %v1341 = vpop.f32.mrf.mxu0
  %1342 = vmatprep.mubr.bf16.mxu0 0
  %1343 = vmatmul.mubr.bf16.gmra.mxu0 %v831
  %v1344 = vpop.f32.mrf.mxu0
  %v1345 = vadd.f32 %v292, %v1344
  %v1346 = vpop.f32.mrf.mxu0
  %v1347 = vpop.f32.mrf.mxu0
  %v1348 = vadd.f32 %v292, %v1347
  %v1349 = vpop.f32.mrf.mxu0
  %1350 = vmatprep.mubr.bf16.mxu0 0
  %1351 = vmatmul.mubr.bf16.gmra.mxu0 %v832
  %v1352 = vpop.f32.mrf.mxu0
  %v1353 = vadd.f32 %v292, %v1352
  %v1354 = vpop.f32.mrf.mxu0
  %v1355 = vpop.f32.mrf.mxu0
  %v1356 = vadd.f32 %v292, %v1355
  %v1357 = vpop.f32.mrf.mxu0
  %1358 = vmatprep.mubr.bf16.mxu0 0
  %1359 = vmatmul.mubr.bf16.gmra.mxu0 %v833
  %v1360 = vpop.f32.mrf.mxu0
  %v1361 = vadd.f32 %v292, %v1360
  %v1362 = vpop.f32.mrf.mxu0
  %v1363 = vpop.f32.mrf.mxu0
  %v1364 = vadd.f32 %v292, %v1363
  %v1365 = vpop.f32.mrf.mxu0
  %1366 = vmatprep.mubr.bf16.mxu0 0
  %1367 = vmatmul.mubr.bf16.gmra.mxu0 %v834
  %v1368 = vpop.f32.mrf.mxu0
  %v1369 = vadd.f32 %v292, %v1368
  %v1370 = vpop.f32.mrf.mxu0
  %v1371 = vpop.f32.mrf.mxu0
  %v1372 = vadd.f32 %v292, %v1371
  %v1373 = vpop.f32.mrf.mxu0
  %1374 = vmatprep.mubr.bf16.mxu0 0
  %1375 = vmatmul.mubr.bf16.gmra.mxu0 %v835
  %v1376 = vpop.f32.mrf.mxu0
  %v1377 = vadd.f32 %v292, %v1376
  %v1378 = vpop.f32.mrf.mxu0
  %v1379 = vpop.f32.mrf.mxu0
  %v1380 = vadd.f32 %v292, %v1379
  %v1381 = vpop.f32.mrf.mxu0
  %1382 = vmatprep.mubr.bf16.mxu0 0
  %1383 = vmatmul.mubr.bf16.gmra.mxu0 %v836
  %v1384 = vpop.f32.mrf.mxu0
  %v1385 = vadd.f32 %v292, %v1384
  %v1386 = vpop.f32.mrf.mxu0
  %v1387 = vpop.f32.mrf.mxu0
  %v1388 = vadd.f32 %v292, %v1387
  %v1389 = vpop.f32.mrf.mxu0
  %1390 = vmatprep.mubr.bf16.mxu0 0
  %1391 = vmatmul.mubr.bf16.gmra.mxu0 %v837
  %v1392 = vpop.f32.mrf.mxu0
  %v1393 = vadd.f32 %v292, %v1392
  %v1394 = vpop.f32.mrf.mxu0
  %v1395 = vpop.f32.mrf.mxu0
  %v1396 = vadd.f32 %v292, %v1395
  %v1397 = vpop.f32.mrf.mxu0
  %1398 = vmatprep.mubr.bf16.mxu0 0
  %1399 = vmatmul.mubr.bf16.gmra.mxu0 %v838
  %v1400 = vpop.f32.mrf.mxu0
  %v1401 = vadd.f32 %v292, %v1400
  %v1402 = vpop.f32.mrf.mxu0
  %v1403 = vpop.f32.mrf.mxu0
  %v1404 = vadd.f32 %v292, %v1403
  %v1405 = vpop.f32.mrf.mxu0
  %1406 = vmatprep.mubr.bf16.mxu0 0
  %1407 = vmatmul.mubr.bf16.gmra.mxu0 %v839
  %v1408 = vpop.f32.mrf.mxu0
  %v1409 = vadd.f32 %v292, %v1408
  %v1410 = vpop.f32.mrf.mxu0
  %v1411 = vpop.f32.mrf.mxu0
  %v1412 = vadd.f32 %v292, %v1411
  %v1413 = vpop.f32.mrf.mxu0
  %1414 = vmatprep.mubr.bf16.mxu0 0
  %1415 = vmatmul.mubr.bf16.gmra.mxu0 %v840
  %v1416 = vpop.f32.mrf.mxu0
  %v1417 = vadd.f32 %v292, %v1416
  %v1418 = vpop.f32.mrf.mxu0
  %v1419 = vpop.f32.mrf.mxu0
  %v1420 = vadd.f32 %v292, %v1419
  %v1421 = vpop.f32.mrf.mxu0
  %1422 = vmatprep.mubr.bf16.mxu0 0
  %1423 = vmatmul.mubr.bf16.gmra.mxu0 %v841
  %v1424 = vpop.f32.mrf.mxu0
  %v1425 = vadd.f32 %v292, %v1424
  %v1426 = vpop.f32.mrf.mxu0
  %v1427 = vpop.f32.mrf.mxu0
  %v1428 = vadd.f32 %v292, %v1427
  %v1429 = vpop.f32.mrf.mxu0
  %1430 = vmatprep.mubr.bf16.mxu0 0
  %1431 = vmatmul.mubr.bf16.gmra.mxu0 %v842
  %v1432 = vpop.f32.mrf.mxu0
  %v1433 = vadd.f32 %v292, %v1432
  %v1434 = vpop.f32.mrf.mxu0
  %v1435 = vpop.f32.mrf.mxu0
  %v1436 = vadd.f32 %v292, %v1435
  %v1437 = vpop.f32.mrf.mxu0
  %1438 = vmatprep.mubr.bf16.mxu0 0
  %1439 = vmatmul.mubr.bf16.gmra.mxu0 %v843
  %v1440 = vpop.f32.mrf.mxu0
  %v1441 = vadd.f32 %v292, %v1440
  %v1442 = vpop.f32.mrf.mxu0
  %v1443 = vpop.f32.mrf.mxu0
  %v1444 = vadd.f32 %v292, %v1443
  %v1445 = vpop.f32.mrf.mxu0
  %1446 = vmatprep.mubr.bf16.mxu0 0
  %1447 = vmatmul.mubr.bf16.gmra.mxu0 %v844
  %v1448 = vpop.f32.mrf.mxu0
  %v1449 = vadd.f32 %v292, %v1448
  %v1450 = vpop.f32.mrf.mxu0
  %v1451 = vpop.f32.mrf.mxu0
  %v1452 = vadd.f32 %v292, %v1451
  %v1453 = vpop.f32.mrf.mxu0
  %1454 = vmatprep.mubr.bf16.mxu0 0
  %1455 = vmatmul.mubr.bf16.gmra.mxu0 %v845
  %v1456 = vpop.f32.mrf.mxu0
  %v1457 = vadd.f32 %v292, %v1456
  %v1458 = vpop.f32.mrf.mxu0
  %v1459 = vpop.f32.mrf.mxu0
  %v1460 = vadd.f32 %v292, %v1459
  %v1461 = vpop.f32.mrf.mxu0
  %1462 = vmatprep.mubr.bf16.mxu0 0
  %1463 = vmatmul.mubr.bf16.gmra.mxu0 %v846
  %v1464 = vpop.f32.mrf.mxu0
  %v1465 = vadd.f32 %v292, %v1464
  %v1466 = vpop.f32.mrf.mxu0
  %v1467 = vpop.f32.mrf.mxu0
  %v1468 = vadd.f32 %v292, %v1467
  %v1469 = vpop.f32.mrf.mxu0
  %1470 = vmatprep.mubr.bf16.mxu0 0
  %1471 = vmatmul.mubr.bf16.gmra.mxu0 %v847
  %v1472 = vpop.f32.mrf.mxu0
  %v1473 = vadd.f32 %v292, %v1472
  %v1474 = vpop.f32.mrf.mxu0
  %v1475 = vpop.f32.mrf.mxu0
  %v1476 = vadd.f32 %v292, %v1475
  %v1477 = vpop.f32.mrf.mxu0
  %1478 = vmatprep.mubr.bf16.mxu0 0
  %1479 = vmatmul.mubr.bf16.gmra.mxu0 %v848
  %v1480 = vpop.f32.mrf.mxu0
  %v1481 = vadd.f32 %v292, %v1480
  %v1482 = vpop.f32.mrf.mxu0
  %v1483 = vpop.f32.mrf.mxu0
  %v1484 = vadd.f32 %v292, %v1483
  %v1485 = vpop.f32.mrf.mxu0
  %1486 = vmatprep.mubr.bf16.mxu0 0
  %1487 = vmatmul.mubr.bf16.gmra.mxu0 %v849
  %v1488 = vpop.f32.mrf.mxu0
  %v1489 = vadd.f32 %v292, %v1488
  %v1490 = vpop.f32.mrf.mxu0
  %v1491 = vpop.f32.mrf.mxu0
  %v1492 = vadd.f32 %v292, %v1491
  %v1493 = vpop.f32.mrf.mxu0
  %1494 = vmatprep.mubr.bf16.mxu0 0
  %1495 = vmatmul.mubr.bf16.gmra.mxu0 %v850
  %v1496 = vpop.f32.mrf.mxu0
  %v1497 = vadd.f32 %v292, %v1496
  %v1498 = vpop.f32.mrf.mxu0
  %v1499 = vpop.f32.mrf.mxu0
  %v1500 = vadd.f32 %v292, %v1499
  %v1501 = vpop.f32.mrf.mxu0
  %1502 = vmatprep.mubr.bf16.mxu0 0
  %1503 = vmatmul.mubr.bf16.gmra.mxu0 %v851
  %v1504 = vpop.f32.mrf.mxu0
  %v1505 = vadd.f32 %v292, %v1504
  %v1506 = vpop.f32.mrf.mxu0
  %v1507 = vpop.f32.mrf.mxu0
  %v1508 = vadd.f32 %v292, %v1507
  %v1509 = vpop.f32.mrf.mxu0
  %1510 = vmatprep.mubr.bf16.mxu0 0
  %1511 = vmatmul.mubr.bf16.gmra.mxu0 %v852
  %v1512 = vpop.f32.mrf.mxu0
  %v1513 = vadd.f32 %v292, %v1512
  %v1514 = vpop.f32.mrf.mxu0
  %v1515 = vpop.f32.mrf.mxu0
  %v1516 = vadd.f32 %v292, %v1515
  %v1517 = vpop.f32.mrf.mxu0
  %1518 = vmatprep.mubr.bf16.mxu0 0
  %1519 = vmatmul.mubr.bf16.gmra.mxu0 %v853
  %v1520 = vpop.f32.mrf.mxu0
  %v1521 = vadd.f32 %v292, %v1520
  %v1522 = vpop.f32.mrf.mxu0
  %v1523 = vpop.f32.mrf.mxu0
  %v1524 = vadd.f32 %v292, %v1523
  %v1525 = vpop.f32.mrf.mxu0
  %1526 = vmatprep.mubr.bf16.mxu0 0
  %1527 = vmatmul.mubr.bf16.gmra.mxu0 %v854
  %v1528 = vpop.f32.mrf.mxu0
  %v1529 = vadd.f32 %v292, %v1528
  %v1530 = vpop.f32.mrf.mxu0
  %v1531 = vpop.f32.mrf.mxu0
  %v1532 = vadd.f32 %v292, %v1531
  %v1533 = vpop.f32.mrf.mxu0
  %1534 = vmatprep.mubr.bf16.mxu0 0
  %1535 = vmatmul.mubr.bf16.gmra.mxu0 %v855
  %v1536 = vpop.f32.mrf.mxu0
  %v1537 = vadd.f32 %v292, %v1536
  %v1538 = vpop.f32.mrf.mxu0
  %v1539 = vpop.f32.mrf.mxu0
  %v1540 = vadd.f32 %v292, %v1539
  %v1541 = vpop.f32.mrf.mxu0
  %1542 = vmatprep.mubr.bf16.mxu0 0
  %1543 = vmatmul.mubr.bf16.gmra.mxu0 %v856
  %v1544 = vpop.f32.mrf.mxu0
  %v1545 = vadd.f32 %v292, %v1544
  %v1546 = vpop.f32.mrf.mxu0
  %v1547 = vpop.f32.mrf.mxu0
  %v1548 = vadd.f32 %v292, %v1547
  %v1549 = vpop.f32.mrf.mxu0
  %1550 = vmatprep.mubr.bf16.mxu0 0
  %1551 = vmatmul.mubr.bf16.gmra.mxu0 %v857
  %v1552 = vpop.f32.mrf.mxu0
  %v1553 = vadd.f32 %v292, %v1552
  %v1554 = vpop.f32.mrf.mxu0
  %v1555 = vpop.f32.mrf.mxu0
  %v1556 = vadd.f32 %v292, %v1555
  %v1557 = vpop.f32.mrf.mxu0
  %1558 = vmatprep.mubr.bf16.mxu0 0
  %1559 = vmatmul.mubr.bf16.gmra.mxu0 %v858
  %v1560 = vpop.f32.mrf.mxu0
  %v1561 = vadd.f32 %v292, %v1560
  %v1562 = vpop.f32.mrf.mxu0
  %v1563 = vpop.f32.mrf.mxu0
  %v1564 = vadd.f32 %v292, %v1563
  %v1565 = vpop.f32.mrf.mxu0
  %1566 = vmatprep.mubr.bf16.mxu0 0
  %1567 = vmatmul.mubr.bf16.gmra.mxu0 %v859
  %v1568 = vpop.f32.mrf.mxu0
  %v1569 = vadd.f32 %v292, %v1568
  %v1570 = vpop.f32.mrf.mxu0
  %v1571 = vpop.f32.mrf.mxu0
  %v1572 = vadd.f32 %v292, %v1571
  %v1573 = vpop.f32.mrf.mxu0
  %1574 = vmatprep.mubr.bf16.mxu0 0
  %1575 = vmatmul.mubr.bf16.gmra.mxu0 %v860
  %v1576 = vpop.f32.mrf.mxu0
  %v1577 = vadd.f32 %v292, %v1576
  %v1578 = vpop.f32.mrf.mxu0
  %v1579 = vpop.f32.mrf.mxu0
  %v1580 = vadd.f32 %v292, %v1579
  %v1581 = vpop.f32.mrf.mxu0
  %1582 = vmatprep.mubr.bf16.mxu0 0
  %1583 = vmatmul.mubr.bf16.gmra.mxu0 %v861
  %v1584 = vpop.f32.mrf.mxu0
  %v1585 = vadd.f32 %v292, %v1584
  %v1586 = vpop.f32.mrf.mxu0
  %v1587 = vpop.f32.mrf.mxu0
  %v1588 = vadd.f32 %v292, %v1587
  %v1589 = vpop.f32.mrf.mxu0
  %1590 = vmatprep.mubr.bf16.mxu0 0
  %1591 = vmatmul.mubr.bf16.gmra.mxu0 %v862
  %v1592 = vpop.f32.mrf.mxu0
  %v1593 = vadd.f32 %v292, %v1592
  %v1594 = vpop.f32.mrf.mxu0
  %v1595 = vpop.f32.mrf.mxu0
  %v1596 = vadd.f32 %v292, %v1595
  %v1597 = vpop.f32.mrf.mxu0
  %1598 = vmatprep.mubr.bf16.mxu0 0
  %1599 = vmatmul.mubr.bf16.gmra.mxu0 %v863
  %v1600 = vpop.f32.mrf.mxu0
  %v1601 = vadd.f32 %v292, %v1600
  %v1602 = vpop.f32.mrf.mxu0
  %v1603 = vpop.f32.mrf.mxu0
  %v1604 = vadd.f32 %v292, %v1603
  %v1605 = vpop.f32.mrf.mxu0
  %1606 = vmatprep.mubr.bf16.mxu0 0
  %1607 = vmatmul.mubr.bf16.gmra.mxu0 %v864
  %v1608 = vpop.f32.mrf.mxu0
  %v1609 = vadd.f32 %v292, %v1608
  %v1610 = vpop.f32.mrf.mxu0
  %v1611 = vpop.f32.mrf.mxu0
  %v1612 = vadd.f32 %v292, %v1611
  %v1613 = vpop.f32.mrf.mxu0
  %1614 = vmatprep.mubr.bf16.mxu0 0
  %1615 = vmatmul.mubr.bf16.gmra.mxu0 %v865
  %v1616 = vpop.f32.mrf.mxu0
  %v1617 = vadd.f32 %v292, %v1616
  %v1618 = vpop.f32.mrf.mxu0
  %v1619 = vpop.f32.mrf.mxu0
  %v1620 = vadd.f32 %v292, %v1619
  %v1621 = vpop.f32.mrf.mxu0
  %1622 = vmatprep.mubr.bf16.mxu0 0
  %1623 = vmatmul.mubr.bf16.gmra.mxu0 %v866
  %v1624 = vpop.f32.mrf.mxu0
  %v1625 = vadd.f32 %v292, %v1624
  %v1626 = vpop.f32.mrf.mxu0
  %v1627 = vpop.f32.mrf.mxu0
  %v1628 = vadd.f32 %v292, %v1627
  %v1629 = vpop.f32.mrf.mxu0
  %1630 = vmatprep.mubr.bf16.mxu0 0
  %1631 = vmatmul.mubr.bf16.gmra.mxu0 %v867
  %v1632 = vpop.f32.mrf.mxu0
  %v1633 = vadd.f32 %v292, %v1632
  %v1634 = vpop.f32.mrf.mxu0
  %v1635 = vpop.f32.mrf.mxu0
  %v1636 = vadd.f32 %v292, %v1635
  %v1637 = vpop.f32.mrf.mxu0
  %1638 = vmatprep.mubr.bf16.mxu0 0
  %1639 = vmatmul.mubr.bf16.gmra.mxu0 %v868
  %v1640 = vpop.f32.mrf.mxu0
  %v1641 = vadd.f32 %v292, %v1640
  %v1642 = vpop.f32.mrf.mxu0
  %v1643 = vpop.f32.mrf.mxu0
  %v1644 = vadd.f32 %v292, %v1643
  %v1645 = vpop.f32.mrf.mxu0
  %1646 = vmatprep.mubr.bf16.mxu0 0
  %1647 = vmatmul.mubr.bf16.gmra.mxu0 %v869
  %v1648 = vpop.f32.mrf.mxu0
  %v1649 = vadd.f32 %v292, %v1648
  %v1650 = vpop.f32.mrf.mxu0
  %v1651 = vpop.f32.mrf.mxu0
  %v1652 = vadd.f32 %v292, %v1651
  %v1653 = vpop.f32.mrf.mxu0
  %1654 = vmatprep.mubr.bf16.mxu0 0
  %1655 = vmatmul.mubr.bf16.gmra.mxu0 %v870
  %v1656 = vpop.f32.mrf.mxu0
  %v1657 = vadd.f32 %v292, %v1656
  %v1658 = vpop.f32.mrf.mxu0
  %v1659 = vpop.f32.mrf.mxu0
  %v1660 = vadd.f32 %v292, %v1659
  %v1661 = vpop.f32.mrf.mxu0
  %1662 = vmatprep.mubr.bf16.mxu0 0
  %1663 = vmatmul.mubr.bf16.gmra.mxu0 %v871
  %v1664 = vpop.f32.mrf.mxu0
  %v1665 = vadd.f32 %v292, %v1664
  %v1666 = vpop.f32.mrf.mxu0
  %v1667 = vpop.f32.mrf.mxu0
  %v1668 = vadd.f32 %v292, %v1667
  %v1669 = vpop.f32.mrf.mxu0
  %1670 = vmatprep.mubr.bf16.mxu0 0
  %1671 = vmatmul.mubr.bf16.gmra.mxu0 %v872
  %v1672 = vpop.f32.mrf.mxu0
  %v1673 = vadd.f32 %v292, %v1672
  %v1674 = vpop.f32.mrf.mxu0
  %v1675 = vpop.f32.mrf.mxu0
  %v1676 = vadd.f32 %v292, %v1675
  %v1677 = vpop.f32.mrf.mxu0
  %1678 = vmatprep.mubr.bf16.mxu0 0
  %1679 = vmatmul.mubr.bf16.gmra.mxu0 %v873
  %v1680 = vpop.f32.mrf.mxu0
  %v1681 = vadd.f32 %v292, %v1680
  %v1682 = vpop.f32.mrf.mxu0
  %v1683 = vpop.f32.mrf.mxu0
  %v1684 = vadd.f32 %v292, %v1683
  %v1685 = vpop.f32.mrf.mxu0
  %1686 = vmatprep.mubr.bf16.mxu0 0
  %1687 = vmatmul.mubr.bf16.gmra.mxu0 %v874
  %v1688 = vpop.f32.mrf.mxu0
  %v1689 = vadd.f32 %v292, %v1688
  %v1690 = vpop.f32.mrf.mxu0
  %v1691 = vpop.f32.mrf.mxu0
  %v1692 = vadd.f32 %v292, %v1691
  %v1693 = vpop.f32.mrf.mxu0
  %1694 = vmatprep.mubr.bf16.mxu0 0
  %1695 = vmatmul.mubr.bf16.gmra.mxu0 %v875
  %v1696 = vpop.f32.mrf.mxu0
  %v1697 = vadd.f32 %v292, %v1696
  %v1698 = vpop.f32.mrf.mxu0
  %v1699 = vpop.f32.mrf.mxu0
  %v1700 = vadd.f32 %v292, %v1699
  %v1701 = vpop.f32.mrf.mxu0
  %1702 = vmatprep.mubr.bf16.mxu0 0
  %1703 = vmatmul.mubr.bf16.gmra.mxu0 %v876
  %v1704 = vpop.f32.mrf.mxu0
  %v1705 = vadd.f32 %v292, %v1704
  %v1706 = vpop.f32.mrf.mxu0
  %v1707 = vpop.f32.mrf.mxu0
  %v1708 = vadd.f32 %v292, %v1707
  %v1709 = vpop.f32.mrf.mxu0
  %1710 = vmatprep.mubr.bf16.mxu0 0
  %1711 = vmatmul.mubr.bf16.gmra.mxu0 %v877
  %v1712 = vpop.f32.mrf.mxu0
  %v1713 = vadd.f32 %v292, %v1712
  %v1714 = vpop.f32.mrf.mxu0
  %v1715 = vpop.f32.mrf.mxu0
  %v1716 = vadd.f32 %v292, %v1715
  %v1717 = vpop.f32.mrf.mxu0
  %1718 = vmatprep.mubr.bf16.mxu0 0
  %1719 = vmatmul.mubr.bf16.gmra.mxu0 %v878
  %v1720 = vpop.f32.mrf.mxu0
  %v1721 = vadd.f32 %v292, %v1720
  %v1722 = vpop.f32.mrf.mxu0
  %v1723 = vpop.f32.mrf.mxu0
  %v1724 = vadd.f32 %v292, %v1723
  %v1725 = vpop.f32.mrf.mxu0
  %1726 = vmatprep.mubr.bf16.mxu0 0
  %1727 = vmatmul.mubr.bf16.gmra.mxu0 %v879
  %v1728 = vpop.f32.mrf.mxu0
  %v1729 = vadd.f32 %v292, %v1728
  %v1730 = vpop.f32.mrf.mxu0
  %v1731 = vpop.f32.mrf.mxu0
  %v1732 = vadd.f32 %v292, %v1731
  %v1733 = vpop.f32.mrf.mxu0
  %1734 = vmatprep.mubr.bf16.mxu0 0
  %1735 = vmatmul.mubr.bf16.gmra.mxu0 %v880
  %v1736 = vpop.f32.mrf.mxu0
  %v1737 = vadd.f32 %v292, %v1736
  %v1738 = vpop.f32.mrf.mxu0
  %v1739 = vpop.f32.mrf.mxu0
  %v1740 = vadd.f32 %v292, %v1739
  %v1741 = vpop.f32.mrf.mxu0
  %1742 = vmatprep.mubr.bf16.mxu0 0
  %1743 = vmatmul.mubr.bf16.gmra.mxu0 %v881
  %v1744 = vpop.f32.mrf.mxu0
  %v1745 = vadd.f32 %v292, %v1744
  %v1746 = vpop.f32.mrf.mxu0
  %v1747 = vpop.f32.mrf.mxu0
  %v1748 = vadd.f32 %v292, %v1747
  %v1749 = vpop.f32.mrf.mxu0
  %1750 = vmatprep.mubr.bf16.mxu0 0
  %1751 = vmatmul.mubr.bf16.gmra.mxu0 %v882
  %v1752 = vpop.f32.mrf.mxu0
  %v1753 = vadd.f32 %v292, %v1752
  %v1754 = vpop.f32.mrf.mxu0
  %v1755 = vpop.f32.mrf.mxu0
  %v1756 = vadd.f32 %v292, %v1755
  %v1757 = vpop.f32.mrf.mxu0
  %1758 = vmatprep.mubr.bf16.mxu0 0
  %1759 = vmatmul.mubr.bf16.gmra.mxu0 %v883
  %v1760 = vpop.f32.mrf.mxu0
  %v1761 = vadd.f32 %v292, %v1760
  %v1762 = vpop.f32.mrf.mxu0
  %v1763 = vpop.f32.mrf.mxu0
  %v1764 = vadd.f32 %v292, %v1763
  %v1765 = vpop.f32.mrf.mxu0
  %1766 = vmatprep.mubr.bf16.mxu0 0
  %1767 = vmatmul.mubr.bf16.gmra.mxu0 %v884
  %v1768 = vpop.f32.mrf.mxu0
  %v1769 = vadd.f32 %v292, %v1768
  %v1770 = vpop.f32.mrf.mxu0
  %v1771 = vpop.f32.mrf.mxu0
  %v1772 = vadd.f32 %v292, %v1771
  %v1773 = vpop.f32.mrf.mxu0
  %1774 = vmatprep.mubr.bf16.mxu0 0
  %1775 = vmatmul.mubr.bf16.gmra.mxu0 %v885
  %v1776 = vpop.f32.mrf.mxu0
  %v1777 = vadd.f32 %v292, %v1776
  %v1778 = vpop.f32.mrf.mxu0
  %v1779 = vpop.f32.mrf.mxu0
  %v1780 = vadd.f32 %v292, %v1779
  %v1781 = vpop.f32.mrf.mxu0
  %1782 = vmatprep.mubr.bf16.mxu0 0
  %1783 = vmatmul.mubr.bf16.gmra.mxu0 %v886
  %v1784 = vpop.f32.mrf.mxu0
  %v1785 = vadd.f32 %v292, %v1784
  %v1786 = vpop.f32.mrf.mxu0
  %v1787 = vpop.f32.mrf.mxu0
  %v1788 = vadd.f32 %v292, %v1787
  %v1789 = vpop.f32.mrf.mxu0
  %1790 = vmatprep.mubr.bf16.mxu0 0
  %1791 = vmatmul.mubr.bf16.gmra.mxu0 %v887
  %v1792 = vpop.f32.mrf.mxu0
  %v1793 = vadd.f32 %v292, %v1792
  %v1794 = vpop.f32.mrf.mxu0
  %v1795 = vpop.f32.mrf.mxu0
  %v1796 = vadd.f32 %v292, %v1795
  %v1797 = vpop.f32.mrf.mxu0
  %1798 = vmatprep.mubr.bf16.mxu0 0
  %1799 = vmatmul.mubr.bf16.gmra.mxu0 %v888
  %v1800 = vpop.f32.mrf.mxu0
  %v1801 = vadd.f32 %v292, %v1800
  %v1802 = vpop.f32.mrf.mxu0
  %v1803 = vpop.f32.mrf.mxu0
  %v1804 = vadd.f32 %v292, %v1803
  %v1805 = vpop.f32.mrf.mxu0
  %1806 = vmatprep.mubr.bf16.mxu0 0
  %1807 = vmatmul.mubr.bf16.gmra.mxu0 %v889
  %v1808 = vpop.f32.mrf.mxu0
  %v1809 = vadd.f32 %v292, %v1808
  %v1810 = vpop.f32.mrf.mxu0
  %v1811 = vpop.f32.mrf.mxu0
  %v1812 = vadd.f32 %v292, %v1811
  %v1813 = vpop.f32.mrf.mxu0
  %1814 = vmatprep.mubr.bf16.mxu0 0
  %1815 = vmatmul.mubr.bf16.gmra.mxu0 %v890
  %v1816 = vpop.f32.mrf.mxu0
  %v1817 = vadd.f32 %v292, %v1816
  %v1818 = vpop.f32.mrf.mxu0
  %v1819 = vpop.f32.mrf.mxu0
  %v1820 = vadd.f32 %v292, %v1819
  %v1821 = vpop.f32.mrf.mxu0
  %1822 = vmatprep.mubr.bf16.mxu0 0
  %1823 = vmatmul.mubr.bf16.gmra.mxu0 %v891
  %v1824 = vpop.f32.mrf.mxu0
  %v1825 = vadd.f32 %v292, %v1824
  %v1826 = vpop.f32.mrf.mxu0
  %v1827 = vpop.f32.mrf.mxu0
  %v1828 = vadd.f32 %v292, %v1827
  %v1829 = vpop.f32.mrf.mxu0
  %1830 = vmatprep.mubr.bf16.mxu0 0
  %1831 = vmatmul.mubr.bf16.gmra.mxu0 %v892
  %v1832 = vpop.f32.mrf.mxu0
  %v1833 = vadd.f32 %v292, %v1832
  %v1834 = vpop.f32.mrf.mxu0
  %v1835 = vpop.f32.mrf.mxu0
  %v1836 = vadd.f32 %v292, %v1835
  %v1837 = vpop.f32.mrf.mxu0
  %1838 = vmatprep.mubr.bf16.mxu0 0
  %1839 = vmatmul.mubr.bf16.gmra.mxu0 %v893
  %v1840 = vpop.f32.mrf.mxu0
  %v1841 = vadd.f32 %v292, %v1840
  %v1842 = vpop.f32.mrf.mxu0
  %v1843 = vpop.f32.mrf.mxu0
  %v1844 = vadd.f32 %v292, %v1843
  %v1845 = vpop.f32.mrf.mxu0
  %1846 = vmatprep.mubr.bf16.mxu0 0
  %1847 = vmatmul.mubr.bf16.gmra.mxu0 %v894
  %v1848 = vpop.f32.mrf.mxu0
  %v1849 = vadd.f32 %v292, %v1848
  %v1850 = vpop.f32.mrf.mxu0
  %v1851 = vpop.f32.mrf.mxu0
  %v1852 = vadd.f32 %v292, %v1851
  %v1853 = vpop.f32.mrf.mxu0
  %1854 = vmatprep.mubr.bf16.mxu0 0
  %1855 = vmatmul.mubr.bf16.gmra.mxu0 %v895
  %v1856 = vpop.f32.mrf.mxu0
  %v1857 = vadd.f32 %v292, %v1856
  %v1858 = vpop.f32.mrf.mxu0
  %v1859 = vpop.f32.mrf.mxu0
  %v1860 = vadd.f32 %v292, %v1859
  %v1861 = vpop.f32.mrf.mxu0
  %1862 = vmatprep.mubr.bf16.mxu0 0
  %1863 = vmatmul.mubr.bf16.gmra.mxu0 %v896
  %v1864 = vpop.f32.mrf.mxu0
  %v1865 = vadd.f32 %v292, %v1864
  %v1866 = vpop.f32.mrf.mxu0
  %v1867 = vpop.f32.mrf.mxu0
  %v1868 = vadd.f32 %v292, %v1867
  %v1869 = vpop.f32.mrf.mxu0
  %1870 = vmatprep.mubr.bf16.mxu0 0
  %1871 = vmatmul.mubr.bf16.gmra.mxu0 %v897
  %v1872 = vpop.f32.mrf.mxu0
  %v1873 = vadd.f32 %v292, %v1872
  %v1874 = vpop.f32.mrf.mxu0
  %v1875 = vpop.f32.mrf.mxu0
  %v1876 = vadd.f32 %v292, %v1875
  %v1877 = vpop.f32.mrf.mxu0
  %1878 = vmatprep.mubr.bf16.mxu0 0
  %1879 = vmatmul.mubr.bf16.gmra.mxu0 %v898
  %v1880 = vpop.f32.mrf.mxu0
  %v1881 = vadd.f32 %v292, %v1880
  %v1882 = vpop.f32.mrf.mxu0
  %v1883 = vpop.f32.mrf.mxu0
  %v1884 = vadd.f32 %v292, %v1883
  %v1885 = vpop.f32.mrf.mxu0
  %1886 = vmatprep.mubr.bf16.mxu0 0
  %1887 = vmatmul.mubr.bf16.gmra.mxu0 %v899
  %v1888 = vpop.f32.mrf.mxu0
  %v1889 = vadd.f32 %v292, %v1888
  %v1890 = vpop.f32.mrf.mxu0
  %v1891 = vpop.f32.mrf.mxu0
  %v1892 = vadd.f32 %v292, %v1891
  %v1893 = vpop.f32.mrf.mxu0
  %1894 = vmatprep.mubr.bf16.mxu0 0
  %1895 = vmatmul.mubr.bf16.gmra.mxu0 %v900
  %v1896 = vpop.f32.mrf.mxu0
  %v1897 = vadd.f32 %v292, %v1896
  %v1898 = vpop.f32.mrf.mxu0
  %v1899 = vpop.f32.mrf.mxu0
  %v1900 = vadd.f32 %v292, %v1899
  %v1901 = vpop.f32.mrf.mxu0
  %1902 = vmatprep.mubr.bf16.mxu0 0
  %1903 = vmatmul.mubr.bf16.gmra.mxu0 %v901
  %v1904 = vpop.f32.mrf.mxu0
  %v1905 = vadd.f32 %v292, %v1904
  %v1906 = vpop.f32.mrf.mxu0
  %v1907 = vpop.f32.mrf.mxu0
  %v1908 = vadd.f32 %v292, %v1907
  %v1909 = vpop.f32.mrf.mxu0
  %1910 = vmatprep.mubr.bf16.mxu0 0
  %1911 = vmatmul.mubr.bf16.gmra.mxu0 %v902
  %v1912 = vpop.f32.mrf.mxu0
  %v1913 = vadd.f32 %v292, %v1912
  %v1914 = vpop.f32.mrf.mxu0
  %v1915 = vpop.f32.mrf.mxu0
  %v1916 = vadd.f32 %v292, %v1915
  %v1917 = vpop.f32.mrf.mxu0
  %1918 = vmatprep.mubr.bf16.mxu0 0
  %1919 = vmatmul.mubr.bf16.gmra.mxu0 %v903
  %v1920 = vpop.f32.mrf.mxu0
  %v1921 = vadd.f32 %v292, %v1920
  %v1922 = vpop.f32.mrf.mxu0
  %v1923 = vpop.f32.mrf.mxu0
  %v1924 = vadd.f32 %v292, %v1923
  %v1925 = vpop.f32.mrf.mxu0
  %1926 = vmatprep.mubr.bf16.mxu0 0
  %1927 = vmatmul.mubr.bf16.gmra.mxu0 %v904
  %v1928 = vpop.f32.mrf.mxu0
  %v1929 = vadd.f32 %v292, %v1928
  %v1930 = vpop.f32.mrf.mxu0
  %v1931 = vpop.f32.mrf.mxu0
  %v1932 = vadd.f32 %v292, %v1931
  %v1933 = vpop.f32.mrf.mxu0
  %1934 = vmatprep.mubr.bf16.mxu0 0
  %1935 = vmatmul.mubr.bf16.gmra.mxu0 %v905
  %v1936 = vpop.f32.mrf.mxu0
  %v1937 = vadd.f32 %v292, %v1936
  %v1938 = vpop.f32.mrf.mxu0
  %v1939 = vpop.f32.mrf.mxu0
  %v1940 = vadd.f32 %v292, %v1939
  %v1941 = vpop.f32.mrf.mxu0
  %1942 = vmatprep.mubr.bf16.mxu0 0
  %1943 = vmatmul.mubr.bf16.gmra.mxu0 %v906
  %v1944 = vpop.f32.mrf.mxu0
  %v1945 = vadd.f32 %v292, %v1944
  %v1946 = vpop.f32.mrf.mxu0
  %v1947 = vpop.f32.mrf.mxu0
  %v1948 = vadd.f32 %v292, %v1947
  %v1949 = vpop.f32.mrf.mxu0
  %1950 = vmatprep.mubr.bf16.mxu0 0
  %1951 = vmatmul.mubr.bf16.gmra.mxu0 %v907
  %v1952 = vpop.f32.mrf.mxu0
  %v1953 = vadd.f32 %v292, %v1952
  %v1954 = vpop.f32.mrf.mxu0
  %v1955 = vpop.f32.mrf.mxu0
  %v1956 = vadd.f32 %v292, %v1955
  %v1957 = vpop.f32.mrf.mxu0
  %1958 = vmatprep.mubr.bf16.mxu0 0
  %1959 = vmatmul.mubr.bf16.gmra.mxu0 %v908
  %v1960 = vpop.f32.mrf.mxu0
  %v1961 = vadd.f32 %v292, %v1960
  %v1962 = vpop.f32.mrf.mxu0
  %v1963 = vpop.f32.mrf.mxu0
  %v1964 = vadd.f32 %v292, %v1963
  %v1965 = vpop.f32.mrf.mxu0
  %1966 = vmatprep.mubr.bf16.mxu0 0
  %1967 = vmatmul.mubr.bf16.gmra.mxu0 %v909
  %v1968 = vpop.f32.mrf.mxu0
  %v1969 = vadd.f32 %v292, %v1968
  %v1970 = vpop.f32.mrf.mxu0
  %v1971 = vpop.f32.mrf.mxu0
  %v1972 = vadd.f32 %v292, %v1971
  %v1973 = vpop.f32.mrf.mxu0
  %1974 = vmatprep.mubr.bf16.mxu0 0
  %1975 = vmatmul.mubr.bf16.gmra.mxu0 %v910
  %v1976 = vpop.f32.mrf.mxu0
  %v1977 = vadd.f32 %v292, %v1976
  %v1978 = vpop.f32.mrf.mxu0
  %v1979 = vpop.f32.mrf.mxu0
  %v1980 = vadd.f32 %v292, %v1979
  %v1981 = vpop.f32.mrf.mxu0
  %1982 = vmatprep.mubr.bf16.mxu0 0
  %1983 = vmatmul.mubr.bf16.gmra.mxu0 %v911
  %v1984 = vpop.f32.mrf.mxu0
  %v1985 = vadd.f32 %v292, %v1984
  %v1986 = vpop.f32.mrf.mxu0
  %v1987 = vpop.f32.mrf.mxu0
  %v1988 = vadd.f32 %v292, %v1987
  %v1989 = vpop.f32.mrf.mxu0
  %1990 = vmatprep.mubr.bf16.mxu0 0
  %1991 = vmatmul.mubr.bf16.gmra.mxu0 %v912
  %v1992 = vpop.f32.mrf.mxu0
  %v1993 = vadd.f32 %v292, %v1992
  %v1994 = vpop.f32.mrf.mxu0
  %v1995 = vpop.f32.mrf.mxu0
  %v1996 = vadd.f32 %v292, %v1995
  %v1997 = vpop.f32.mrf.mxu0
  %1998 = vmatprep.mubr.bf16.mxu0 0
  %1999 = vmatmul.mubr.bf16.gmra.mxu0 %v913
  %v2000 = vpop.f32.mrf.mxu0
  %v2001 = vadd.f32 %v292, %v2000
  %v2002 = vpop.f32.mrf.mxu0
  %v2003 = vpop.f32.mrf.mxu0
  %v2004 = vadd.f32 %v292, %v2003
  %v2005 = vpop.f32.mrf.mxu0
  %2006 = vmatprep.mubr.bf16.mxu0 0
  %2007 = vmatmul.mubr.bf16.gmra.mxu0 %v914
  %v2008 = vpop.f32.mrf.mxu0
  %v2009 = vadd.f32 %v292, %v2008
  %v2010 = vpop.f32.mrf.mxu0
  %v2011 = vpop.f32.mrf.mxu0
  %v2012 = vadd.f32 %v292, %v2011
  %v2013 = vpop.f32.mrf.mxu0
  %2014 = vmatprep.mubr.bf16.mxu0 0
  %2015 = vmatmul.mubr.bf16.gmra.mxu0 %v915
  %v2016 = vpop.f32.mrf.mxu0
  %v2017 = vadd.f32 %v292, %v2016
  %v2018 = vpop.f32.mrf.mxu0
  %v2019 = vpop.f32.mrf.mxu0
  %v2020 = vadd.f32 %v292, %v2019
  %v2021 = vpop.f32.mrf.mxu0
  %2022 = vmatprep.mubr.bf16.mxu0 0
  %2023 = vmatmul.mubr.bf16.gmra.mxu0 %v916
  %v2024 = vpop.f32.mrf.mxu0
  %v2025 = vadd.f32 %v292, %v2024
  %v2026 = vpop.f32.mrf.mxu0
  %v2027 = vpop.f32.mrf.mxu0
  %v2028 = vadd.f32 %v292, %v2027
  %v2029 = vpop.f32.mrf.mxu0
  %2030 = vmatprep.mubr.bf16.mxu0 0
  %2031 = vmatmul.mubr.bf16.gmra.mxu0 %v917
  %v2032 = vpop.f32.mrf.mxu0
  %v2033 = vadd.f32 %v292, %v2032
  %v2034 = vpop.f32.mrf.mxu0
  %v2035 = vpop.f32.mrf.mxu0
  %v2036 = vadd.f32 %v292, %v2035
  %v2037 = vpop.f32.mrf.mxu0
  %2038 = vmatprep.mubr.bf16.mxu0 0
  %2039 = vmatmul.mubr.bf16.gmra.mxu0 %v918
  %v2040 = vpop.f32.mrf.mxu0
  %v2041 = vadd.f32 %v292, %v2040
  %v2042 = vpop.f32.mrf.mxu0
  %v2043 = vpop.f32.mrf.mxu0
  %v2044 = vadd.f32 %v292, %v2043
  %v2045 = vpop.f32.mrf.mxu0
  %2046 = vmatprep.mubr.bf16.mxu0 0
  %2047 = vmatmul.mubr.bf16.gmra.mxu0 %v919
  %v2048 = vpop.f32.mrf.mxu0
  %v2049 = vadd.f32 %v292, %v2048
  %v2050 = vpop.f32.mrf.mxu0
  %v2051 = vpop.f32.mrf.mxu0
  %v2052 = vadd.f32 %v292, %v2051
  %v2053 = vpop.f32.mrf.mxu0
  %2054 = vmatprep.mubr.bf16.mxu0 0
  %2055 = vmatmul.mubr.bf16.gmra.mxu0 %v920
  %v2056 = vpop.f32.mrf.mxu0
  %v2057 = vadd.f32 %v292, %v2056
  %v2058 = vpop.f32.mrf.mxu0
  %v2059 = vpop.f32.mrf.mxu0
  %v2060 = vadd.f32 %v292, %v2059
  %v2061 = vpop.f32.mrf.mxu0
  %2062 = vmatprep.mubr.bf16.mxu0 0
  %2063 = vmatmul.mubr.bf16.gmra.mxu0 %v921
  %v2064 = vpop.f32.mrf.mxu0
  %v2065 = vadd.f32 %v292, %v2064
  %v2066 = vpop.f32.mrf.mxu0
  %v2067 = vpop.f32.mrf.mxu0
  %v2068 = vadd.f32 %v292, %v2067
  %v2069 = vpop.f32.mrf.mxu0
  %2070 = vmatprep.mubr.bf16.mxu0 0
  %2071 = vmatmul.mubr.bf16.gmra.mxu0 %v922
  %v2072 = vpop.f32.mrf.mxu0
  %v2073 = vadd.f32 %v292, %v2072
  %v2074 = vpop.f32.mrf.mxu0
  %v2075 = vpop.f32.mrf.mxu0
  %v2076 = vadd.f32 %v292, %v2075
  %v2077 = vpop.f32.mrf.mxu0
  %2078 = vmatprep.mubr.bf16.mxu0 0
  %2079 = vmatmul.mubr.bf16.gmra.mxu0 %v923
  %v2080 = vpop.f32.mrf.mxu0
  %v2081 = vadd.f32 %v292, %v2080
  %v2082 = vpop.f32.mrf.mxu0
  %v2083 = vpop.f32.mrf.mxu0
  %v2084 = vadd.f32 %v292, %v2083
  %v2085 = vpop.f32.mrf.mxu0
  %2086 = vmatprep.mubr.bf16.mxu0 0
  %2087 = vmatmul.mubr.bf16.gmra.mxu0 %v924
  %v2088 = vpop.f32.mrf.mxu0
  %v2089 = vadd.f32 %v292, %v2088
  %v2090 = vpop.f32.mrf.mxu0
  %v2091 = vpop.f32.mrf.mxu0
  %v2092 = vadd.f32 %v292, %v2091
  %v2093 = vpop.f32.mrf.mxu0
  %2094 = vmatprep.mubr.bf16.mxu0 0
  %2095 = vmatmul.mubr.bf16.gmra.mxu0 %v925
  %v2096 = vpop.f32.mrf.mxu0
  %v2097 = vadd.f32 %v292, %v2096
  %v2098 = vpop.f32.mrf.mxu0
  %v2099 = vpop.f32.mrf.mxu0
  %v2100 = vadd.f32 %v292, %v2099
  %v2101 = vpop.f32.mrf.mxu0
  %2102 = vmatprep.mubr.bf16.mxu0 0
  %2103 = vmatmul.mubr.bf16.gmra.mxu0 %v926
  %v2104 = vpop.f32.mrf.mxu0
  %v2105 = vadd.f32 %v292, %v2104
  %v2106 = vpop.f32.mrf.mxu0
  %v2107 = vpop.f32.mrf.mxu0
  %v2108 = vadd.f32 %v292, %v2107
  %v2109 = vpop.f32.mrf.mxu0
  %2110 = vmatprep.mubr.bf16.mxu0 0
  %2111 = vmatmul.mubr.bf16.gmra.mxu0 %v927
  %v2112 = vpop.f32.mrf.mxu0
  %v2113 = vadd.f32 %v292, %v2112
  %v2114 = vpop.f32.mrf.mxu0
  %v2115 = vpop.f32.mrf.mxu0
  %v2116 = vadd.f32 %v292, %v2115
  %v2117 = vpop.f32.mrf.mxu0
  %2118 = vmatprep.mubr.bf16.mxu0 0
  %2119 = vmatmul.mubr.bf16.gmra.mxu0 %v928
  %v2120 = vpop.f32.mrf.mxu0
  %v2121 = vadd.f32 %v292, %v2120
  %v2122 = vpop.f32.mrf.mxu0
  %v2123 = vpop.f32.mrf.mxu0
  %v2124 = vadd.f32 %v292, %v2123
  %v2125 = vpop.f32.mrf.mxu0
  %2126 = vmatprep.mubr.bf16.mxu0 0
  %2127 = vmatmul.mubr.bf16.gmra.mxu0 %v929
  %v2128 = vpop.f32.mrf.mxu0
  %v2129 = vadd.f32 %v292, %v2128
  %v2130 = vpop.f32.mrf.mxu0
  %v2131 = vpop.f32.mrf.mxu0
  %v2132 = vadd.f32 %v292, %v2131
  %v2133 = vpop.f32.mrf.mxu0
  %2134 = vmatprep.mubr.bf16.mxu0 0
  %2135 = vmatmul.mubr.bf16.gmra.mxu0 %v930
  %v2136 = vpop.f32.mrf.mxu0
  %v2137 = vadd.f32 %v292, %v2136
  %v2138 = vpop.f32.mrf.mxu0
  %v2139 = vpop.f32.mrf.mxu0
  %v2140 = vadd.f32 %v292, %v2139
  %v2141 = vpop.f32.mrf.mxu0
  %2142 = vmatprep.mubr.bf16.mxu0 0
  %2143 = vmatmul.mubr.bf16.gmra.mxu0 %v931
  %v2144 = vpop.f32.mrf.mxu0
  %v2145 = vadd.f32 %v292, %v2144
  %v2146 = vpop.f32.mrf.mxu0
  %v2147 = vpop.f32.mrf.mxu0
  %v2148 = vadd.f32 %v292, %v2147
  %v2149 = vpop.f32.mrf.mxu0
  %2150 = vmatprep.mubr.bf16.mxu0 0
  %2151 = vmatmul.mubr.bf16.gmra.mxu0 %v932
  %v2152 = vpop.f32.mrf.mxu0
  %v2153 = vadd.f32 %v292, %v2152
  %v2154 = vpop.f32.mrf.mxu0
  %v2155 = vpop.f32.mrf.mxu0
  %v2156 = vadd.f32 %v292, %v2155
  %v2157 = vpop.f32.mrf.mxu0
  %2158 = vmatprep.mubr.bf16.mxu0 0
  %2159 = vmatmul.mubr.bf16.gmra.mxu0 %v933
  %v2160 = vpop.f32.mrf.mxu0
  %v2161 = vadd.f32 %v292, %v2160
  %v2162 = vpop.f32.mrf.mxu0
  %v2163 = vpop.f32.mrf.mxu0
  %v2164 = vadd.f32 %v292, %v2163
  %v2165 = vpop.f32.mrf.mxu0
  %2166 = vdwg.mxu0
  %v2167 = vmax.f32 %v1145, 0.0
  %v2168 = vmax.f32 %v1148, 0.0
  %v2169 = vmax.f32 %v1153, 0.0
  %v2170 = vmax.f32 %v1156, 0.0
  %v2171 = vmax.f32 %v1161, 0.0
  %v2172 = vmax.f32 %v1164, 0.0
  %v2173 = vmax.f32 %v1169, 0.0
  %v2174 = vmax.f32 %v1172, 0.0
  %v2175 = vmax.f32 %v1177, 0.0
  %v2176 = vmax.f32 %v1180, 0.0
  %v2177 = vmax.f32 %v1185, 0.0
  %v2178 = vmax.f32 %v1188, 0.0
  %v2179 = vmax.f32 %v1193, 0.0
  %v2180 = vmax.f32 %v1196, 0.0
  %v2181 = vmax.f32 %v1201, 0.0
  %v2182 = vmax.f32 %v1204, 0.0
  %v2183 = vmax.f32 %v1209, 0.0
  %v2184 = vmax.f32 %v1212, 0.0
  %v2185 = vmax.f32 %v1217, 0.0
  %v2186 = vmax.f32 %v1220, 0.0
  %v2187 = vmax.f32 %v1225, 0.0
  %v2188 = vmax.f32 %v1228, 0.0
  %v2189 = vmax.f32 %v1233, 0.0
  %v2190 = vmax.f32 %v1236, 0.0
  %v2191 = vmax.f32 %v1241, 0.0
  %v2192 = vmax.f32 %v1244, 0.0
  %v2193 = vmax.f32 %v1249, 0.0
  %v2194 = vmax.f32 %v1252, 0.0
  %v2195 = vmax.f32 %v1257, 0.0
  %v2196 = vmax.f32 %v1260, 0.0
  %v2197 = vmax.f32 %v1265, 0.0
  %v2198 = vmax.f32 %v1268, 0.0
  %v2199 = vmax.f32 %v1273, 0.0
  %v2200 = vmax.f32 %v1276, 0.0
  %v2201 = vmax.f32 %v1281, 0.0
  %v2202 = vmax.f32 %v1284, 0.0
  %v2203 = vmax.f32 %v1289, 0.0
  %v2204 = vmax.f32 %v1292, 0.0
  %v2205 = vmax.f32 %v1297, 0.0
  %v2206 = vmax.f32 %v1300, 0.0
  %v2207 = vmax.f32 %v1305, 0.0
  %v2208 = vmax.f32 %v1308, 0.0
  %v2209 = vmax.f32 %v1313, 0.0
  %v2210 = vmax.f32 %v1316, 0.0
  %v2211 = vmax.f32 %v1321, 0.0
  %v2212 = vmax.f32 %v1324, 0.0
  %v2213 = vmax.f32 %v1329, 0.0
  %v2214 = vmax.f32 %v1332, 0.0
  %v2215 = vmax.f32 %v1337, 0.0
  %v2216 = vmax.f32 %v1340, 0.0
  %v2217 = vmax.f32 %v1345, 0.0
  %v2218 = vmax.f32 %v1348, 0.0
  %v2219 = vmax.f32 %v1353, 0.0
  %v2220 = vmax.f32 %v1356, 0.0
  %v2221 = vmax.f32 %v1361, 0.0
  %v2222 = vmax.f32 %v1364, 0.0
  %v2223 = vmax.f32 %v1369, 0.0
  %v2224 = vmax.f32 %v1372, 0.0
  %v2225 = vmax.f32 %v1377, 0.0
  %v2226 = vmax.f32 %v1380, 0.0
  %v2227 = vmax.f32 %v1385, 0.0
  %v2228 = vmax.f32 %v1388, 0.0
  %v2229 = vmax.f32 %v1393, 0.0
  %v2230 = vmax.f32 %v1396, 0.0
  %v2231 = vmax.f32 %v1401, 0.0
  %v2232 = vmax.f32 %v1404, 0.0
  %v2233 = vmax.f32 %v1409, 0.0
  %v2234 = vmax.f32 %v1412, 0.0
  %v2235 = vmax.f32 %v1417, 0.0
  %v2236 = vmax.f32 %v1420, 0.0
  %v2237 = vmax.f32 %v1425, 0.0
  %v2238 = vmax.f32 %v1428, 0.0
  %v2239 = vmax.f32 %v1433, 0.0
  %v2240 = vmax.f32 %v1436, 0.0
  %v2241 = vmax.f32 %v1441, 0.0
  %v2242 = vmax.f32 %v1444, 0.0
  %v2243 = vmax.f32 %v1449, 0.0
  %v2244 = vmax.f32 %v1452, 0.0
  %v2245 = vmax.f32 %v1457, 0.0
  %v2246 = vmax.f32 %v1460, 0.0
  %v2247 = vmax.f32 %v1465, 0.0
  %v2248 = vmax.f32 %v1468, 0.0
  %v2249 = vmax.f32 %v1473, 0.0
  %v2250 = vmax.f32 %v1476, 0.0
  %v2251 = vmax.f32 %v1481, 0.0
  %v2252 = vmax.f32 %v1484, 0.0
  %v2253 = vmax.f32 %v1489, 0.0
  %v2254 = vmax.f32 %v1492, 0.0
  %v2255 = vmax.f32 %v1497, 0.0
  %v2256 = vmax.f32 %v1500, 0.0
  %v2257 = vmax.f32 %v1505, 0.0
  %v2258 = vmax.f32 %v1508, 0.0
  %v2259 = vmax.f32 %v1513, 0.0
  %v2260 = vmax.f32 %v1516, 0.0
  %v2261 = vmax.f32 %v1521, 0.0
  %v2262 = vmax.f32 %v1524, 0.0
  %v2263 = vmax.f32 %v1529, 0.0
  %v2264 = vmax.f32 %v1532, 0.0
  %v2265 = vmax.f32 %v1537, 0.0
  %v2266 = vmax.f32 %v1540, 0.0
  %v2267 = vmax.f32 %v1545, 0.0
  %v2268 = vmax.f32 %v1548, 0.0
  %v2269 = vmax.f32 %v1553, 0.0
  %v2270 = vmax.f32 %v1556, 0.0
  %v2271 = vmax.f32 %v1561, 0.0
  %v2272 = vmax.f32 %v1564, 0.0
  %v2273 = vmax.f32 %v1569, 0.0
  %v2274 = vmax.f32 %v1572, 0.0
  %v2275 = vmax.f32 %v1577, 0.0
  %v2276 = vmax.f32 %v1580, 0.0
  %v2277 = vmax.f32 %v1585, 0.0
  %v2278 = vmax.f32 %v1588, 0.0
  %v2279 = vmax.f32 %v1593, 0.0
  %v2280 = vmax.f32 %v1596, 0.0
  %v2281 = vmax.f32 %v1601, 0.0
  %v2282 = vmax.f32 %v1604, 0.0
  %v2283 = vmax.f32 %v1609, 0.0
  %v2284 = vmax.f32 %v1612, 0.0
  %v2285 = vmax.f32 %v1617, 0.0
  %v2286 = vmax.f32 %v1620, 0.0
  %v2287 = vmax.f32 %v1625, 0.0
  %v2288 = vmax.f32 %v1628, 0.0
  %v2289 = vmax.f32 %v1633, 0.0
  %v2290 = vmax.f32 %v1636, 0.0
  %v2291 = vmax.f32 %v1641, 0.0
  %v2292 = vmax.f32 %v1644, 0.0
  %v2293 = vmax.f32 %v1649, 0.0
  %v2294 = vmax.f32 %v1652, 0.0
  %v2295 = vmax.f32 %v1657, 0.0
  %v2296 = vmax.f32 %v1660, 0.0
  %v2297 = vmax.f32 %v1665, 0.0
  %v2298 = vmax.f32 %v1668, 0.0
  %v2299 = vmax.f32 %v1673, 0.0
  %v2300 = vmax.f32 %v1676, 0.0
  %v2301 = vmax.f32 %v1681, 0.0
  %v2302 = vmax.f32 %v1684, 0.0
  %v2303 = vmax.f32 %v1689, 0.0
  %v2304 = vmax.f32 %v1692, 0.0
  %v2305 = vmax.f32 %v1697, 0.0
  %v2306 = vmax.f32 %v1700, 0.0
  %v2307 = vmax.f32 %v1705, 0.0
  %v2308 = vmax.f32 %v1708, 0.0
  %v2309 = vmax.f32 %v1713, 0.0
  %v2310 = vmax.f32 %v1716, 0.0
  %v2311 = vmax.f32 %v1721, 0.0
  %v2312 = vmax.f32 %v1724, 0.0
  %v2313 = vmax.f32 %v1729, 0.0
  %v2314 = vmax.f32 %v1732, 0.0
  %v2315 = vmax.f32 %v1737, 0.0
  %v2316 = vmax.f32 %v1740, 0.0
  %v2317 = vmax.f32 %v1745, 0.0
  %v2318 = vmax.f32 %v1748, 0.0
  %v2319 = vmax.f32 %v1753, 0.0
  %v2320 = vmax.f32 %v1756, 0.0
  %v2321 = vmax.f32 %v1761, 0.0
  %v2322 = vmax.f32 %v1764, 0.0
  %v2323 = vmax.f32 %v1769, 0.0
  %v2324 = vmax.f32 %v1772, 0.0
  %v2325 = vmax.f32 %v1777, 0.0
  %v2326 = vmax.f32 %v1780, 0.0
  %v2327 = vmax.f32 %v1785, 0.0
  %v2328 = vmax.f32 %v1788, 0.0
  %v2329 = vmax.f32 %v1793, 0.0
  %v2330 = vmax.f32 %v1796, 0.0
  %v2331 = vmax.f32 %v1801, 0.0
  %v2332 = vmax.f32 %v1804, 0.0
  %v2333 = vmax.f32 %v1809, 0.0
  %v2334 = vmax.f32 %v1812, 0.0
  %v2335 = vmax.f32 %v1817, 0.0
  %v2336 = vmax.f32 %v1820, 0.0
  %v2337 = vmax.f32 %v1825, 0.0
  %v2338 = vmax.f32 %v1828, 0.0
  %v2339 = vmax.f32 %v1833, 0.0
  %v2340 = vmax.f32 %v1836, 0.0
  %v2341 = vmax.f32 %v1841, 0.0
  %v2342 = vmax.f32 %v1844, 0.0
  %v2343 = vmax.f32 %v1849, 0.0
  %v2344 = vmax.f32 %v1852, 0.0
  %v2345 = vmax.f32 %v1857, 0.0
  %v2346 = vmax.f32 %v1860, 0.0
  %v2347 = vmax.f32 %v1865, 0.0
  %v2348 = vmax.f32 %v1868, 0.0
  %v2349 = vmax.f32 %v1873, 0.0
  %v2350 = vmax.f32 %v1876, 0.0
  %v2351 = vmax.f32 %v1881, 0.0
  %v2352 = vmax.f32 %v1884, 0.0
  %v2353 = vmax.f32 %v1889, 0.0
  %v2354 = vmax.f32 %v1892, 0.0
  %v2355 = vmax.f32 %v1897, 0.0
  %v2356 = vmax.f32 %v1900, 0.0
  %v2357 = vmax.f32 %v1905, 0.0
  %v2358 = vmax.f32 %v1908, 0.0
  %v2359 = vmax.f32 %v1913, 0.0
  %v2360 = vmax.f32 %v1916, 0.0
  %v2361 = vmax.f32 %v1921, 0.0
  %v2362 = vmax.f32 %v1924, 0.0
  %v2363 = vmax.f32 %v1929, 0.0
  %v2364 = vmax.f32 %v1932, 0.0
  %v2365 = vmax.f32 %v1937, 0.0
  %v2366 = vmax.f32 %v1940, 0.0
  %v2367 = vmax.f32 %v1945, 0.0
  %v2368 = vmax.f32 %v1948, 0.0
  %v2369 = vmax.f32 %v1953, 0.0
  %v2370 = vmax.f32 %v1956, 0.0
  %v2371 = vmax.f32 %v1961, 0.0
  %v2372 = vmax.f32 %v1964, 0.0
  %v2373 = vmax.f32 %v1969, 0.0
  %v2374 = vmax.f32 %v1972, 0.0
  %v2375 = vmax.f32 %v1977, 0.0
  %v2376 = vmax.f32 %v1980, 0.0
  %v2377 = vmax.f32 %v1985, 0.0
  %v2378 = vmax.f32 %v1988, 0.0
  %v2379 = vmax.f32 %v1993, 0.0
  %v2380 = vmax.f32 %v1996, 0.0
  %v2381 = vmax.f32 %v2001, 0.0
  %v2382 = vmax.f32 %v2004, 0.0
  %v2383 = vmax.f32 %v2009, 0.0
  %v2384 = vmax.f32 %v2012, 0.0
  %v2385 = vmax.f32 %v2017, 0.0
  %v2386 = vmax.f32 %v2020, 0.0
  %v2387 = vmax.f32 %v2025, 0.0
  %v2388 = vmax.f32 %v2028, 0.0
  %v2389 = vmax.f32 %v2033, 0.0
  %v2390 = vmax.f32 %v2036, 0.0
  %v2391 = vmax.f32 %v2041, 0.0
  %v2392 = vmax.f32 %v2044, 0.0
  %v2393 = vmax.f32 %v2049, 0.0
  %v2394 = vmax.f32 %v2052, 0.0
  %v2395 = vmax.f32 %v2057, 0.0
  %v2396 = vmax.f32 %v2060, 0.0
  %v2397 = vmax.f32 %v2065, 0.0
  %v2398 = vmax.f32 %v2068, 0.0
  %v2399 = vmax.f32 %v2073, 0.0
  %v2400 = vmax.f32 %v2076, 0.0
  %v2401 = vmax.f32 %v2081, 0.0
  %v2402 = vmax.f32 %v2084, 0.0
  %v2403 = vmax.f32 %v2089, 0.0
  %v2404 = vmax.f32 %v2092, 0.0
  %v2405 = vmax.f32 %v2097, 0.0
  %v2406 = vmax.f32 %v2100, 0.0
  %v2407 = vmax.f32 %v2105, 0.0
  %v2408 = vmax.f32 %v2108, 0.0
  %v2409 = vmax.f32 %v2113, 0.0
  %v2410 = vmax.f32 %v2116, 0.0
  %v2411 = vmax.f32 %v2121, 0.0
  %v2412 = vmax.f32 %v2124, 0.0
  %v2413 = vmax.f32 %v2129, 0.0
  %v2414 = vmax.f32 %v2132, 0.0
  %v2415 = vmax.f32 %v2137, 0.0
  %v2416 = vmax.f32 %v2140, 0.0
  %v2417 = vmax.f32 %v2145, 0.0
  %v2418 = vmax.f32 %v2148, 0.0
  %v2419 = vmax.f32 %v2153, 0.0
  %v2420 = vmax.f32 %v2156, 0.0
  %v2421 = vmax.f32 %v2161, 0.0
  %v2422 = vmax.f32 %v2164, 0.0
  %2423 = vst [vmem:[%s3] sm:$0xff] %v2167
  %2424 = vst [vmem:[%s3 + $0x8] sm:$0xff] %v2168
  %2425 = vst [vmem:[%s3 + $0x10] sm:$0xff] %v2169
  %2426 = vst [vmem:[%s3 + $0x18] sm:$0xff] %v2170
  %2427 = vst [vmem:[%s3 + $0x20] sm:$0xff] %v2171
  %2428 = vst [vmem:[%s3 + $0x28] sm:$0xff] %v2172
  %2429 = vst [vmem:[%s3 + $0x30] sm:$0xff] %v2173
  %2430 = vst [vmem:[%s3 + $0x38] sm:$0xff] %v2174
  %2431 = vst [vmem:[%s3 + $0x40] sm:$0xff] %v2175
  %2432 = vst [vmem:[%s3 + $0x48] sm:$0xff] %v2176
  %2433 = vst [vmem:[%s3 + $0x50] sm:$0xff] %v2177
  %2434 = vst [vmem:[%s3 + $0x58] sm:$0xff] %v2178
  %2435 = vst [vmem:[%s3 + $0x60] sm:$0xff] %v2179
  %2436 = vst [vmem:[%s3 + $0x68] sm:$0xff] %v2180
  %2437 = vst [vmem:[%s3 + $0x70] sm:$0xff] %v2181
  %2438 = vst [vmem:[%s3 + $0x78] sm:$0xff] %v2182
  %2439 = vst [vmem:[%s3 + $0x80] sm:$0xff] %v2183
  %2440 = vst [vmem:[%s3 + $0x88] sm:$0xff] %v2184
  %2441 = vst [vmem:[%s3 + $0x90] sm:$0xff] %v2185
  %2442 = vst [vmem:[%s3 + $0x98] sm:$0xff] %v2186
  %2443 = vst [vmem:[%s3 + $0xa0] sm:$0xff] %v2187
  %2444 = vst [vmem:[%s3 + $0xa8] sm:$0xff] %v2188
  %2445 = vst [vmem:[%s3 + $0xb0] sm:$0xff] %v2189
  %2446 = vst [vmem:[%s3 + $0xb8] sm:$0xff] %v2190
  %2447 = vst [vmem:[%s3 + $0xc0] sm:$0xff] %v2191
  %2448 = vst [vmem:[%s3 + $0xc8] sm:$0xff] %v2192
  %2449 = vst [vmem:[%s3 + $0xd0] sm:$0xff] %v2193
  %2450 = vst [vmem:[%s3 + $0xd8] sm:$0xff] %v2194
  %2451 = vst [vmem:[%s3 + $0xe0] sm:$0xff] %v2195
  %2452 = vst [vmem:[%s3 + $0xe8] sm:$0xff] %v2196
  %2453 = vst [vmem:[%s3 + $0xf0] sm:$0xff] %v2197
  %2454 = vst [vmem:[%s3 + $0xf8] sm:$0xff] %v2198
  %2455 = vst [vmem:[%s3 + $0x100] sm:$0xff] %v2199
  %2456 = vst [vmem:[%s3 + $0x108] sm:$0xff] %v2200
  %2457 = vst [vmem:[%s3 + $0x110] sm:$0xff] %v2201
  %2458 = vst [vmem:[%s3 + $0x118] sm:$0xff] %v2202
  %2459 = vst [vmem:[%s3 + $0x120] sm:$0xff] %v2203
  %2460 = vst [vmem:[%s3 + $0x128] sm:$0xff] %v2204
  %2461 = vst [vmem:[%s3 + $0x130] sm:$0xff] %v2205
  %2462 = vst [vmem:[%s3 + $0x138] sm:$0xff] %v2206
  %2463 = vst [vmem:[%s3 + $0x140] sm:$0xff] %v2207
  %2464 = vst [vmem:[%s3 + $0x148] sm:$0xff] %v2208
  %2465 = vst [vmem:[%s3 + $0x150] sm:$0xff] %v2209
  %2466 = vst [vmem:[%s3 + $0x158] sm:$0xff] %v2210
  %2467 = vst [vmem:[%s3 + $0x160] sm:$0xff] %v2211
  %2468 = vst [vmem:[%s3 + $0x168] sm:$0xff] %v2212
  %2469 = vst [vmem:[%s3 + $0x170] sm:$0xff] %v2213
  %2470 = vst [vmem:[%s3 + $0x178] sm:$0xff] %v2214
  %2471 = vst [vmem:[%s3 + $0x180] sm:$0xff] %v2215
  %2472 = vst [vmem:[%s3 + $0x188] sm:$0xff] %v2216
  %2473 = vst [vmem:[%s3 + $0x190] sm:$0xff] %v2217
  %2474 = vst [vmem:[%s3 + $0x198] sm:$0xff] %v2218
  %2475 = vst [vmem:[%s3 + $0x1a0] sm:$0xff] %v2219
  %2476 = vst [vmem:[%s3 + $0x1a8] sm:$0xff] %v2220
  %2477 = vst [vmem:[%s3 + $0x1b0] sm:$0xff] %v2221
  %2478 = vst [vmem:[%s3 + $0x1b8] sm:$0xff] %v2222
  %2479 = vst [vmem:[%s3 + $0x1c0] sm:$0xff] %v2223
  %2480 = vst [vmem:[%s3 + $0x1c8] sm:$0xff] %v2224
  %2481 = vst [vmem:[%s3 + $0x1d0] sm:$0xff] %v2225
  %2482 = vst [vmem:[%s3 + $0x1d8] sm:$0xff] %v2226
  %2483 = vst [vmem:[%s3 + $0x1e0] sm:$0xff] %v2227
  %2484 = vst [vmem:[%s3 + $0x1e8] sm:$0xff] %v2228
  %2485 = vst [vmem:[%s3 + $0x1f0] sm:$0xff] %v2229
  %2486 = vst [vmem:[%s3 + $0x1f8] sm:$0xff] %v2230
  %2487 = vst [vmem:[%s3 + $0x200] sm:$0xff] %v2231
  %2488 = vst [vmem:[%s3 + $0x208] sm:$0xff] %v2232
  %2489 = vst [vmem:[%s3 + $0x210] sm:$0xff] %v2233
  %2490 = vst [vmem:[%s3 + $0x218] sm:$0xff] %v2234
  %2491 = vst [vmem:[%s3 + $0x220] sm:$0xff] %v2235
  %2492 = vst [vmem:[%s3 + $0x228] sm:$0xff] %v2236
  %2493 = vst [vmem:[%s3 + $0x230] sm:$0xff] %v2237
  %2494 = vst [vmem:[%s3 + $0x238] sm:$0xff] %v2238
  %2495 = vst [vmem:[%s3 + $0x240] sm:$0xff] %v2239
  %2496 = vst [vmem:[%s3 + $0x248] sm:$0xff] %v2240
  %2497 = vst [vmem:[%s3 + $0x250] sm:$0xff] %v2241
  %2498 = vst [vmem:[%s3 + $0x258] sm:$0xff] %v2242
  %2499 = vst [vmem:[%s3 + $0x260] sm:$0xff] %v2243
  %2500 = vst [vmem:[%s3 + $0x268] sm:$0xff] %v2244
  %2501 = vst [vmem:[%s3 + $0x270] sm:$0xff] %v2245
  %2502 = vst [vmem:[%s3 + $0x278] sm:$0xff] %v2246
  %2503 = vst [vmem:[%s3 + $0x280] sm:$0xff] %v2247
  %2504 = vst [vmem:[%s3 + $0x288] sm:$0xff] %v2248
  %2505 = vst [vmem:[%s3 + $0x290] sm:$0xff] %v2249
  %2506 = vst [vmem:[%s3 + $0x298] sm:$0xff] %v2250
  %2507 = vst [vmem:[%s3 + $0x2a0] sm:$0xff] %v2251
  %2508 = vst [vmem:[%s3 + $0x2a8] sm:$0xff] %v2252
  %2509 = vst [vmem:[%s3 + $0x2b0] sm:$0xff] %v2253
  %2510 = vst [vmem:[%s3 + $0x2b8] sm:$0xff] %v2254
  %2511 = vst [vmem:[%s3 + $0x2c0] sm:$0xff] %v2255
  %2512 = vst [vmem:[%s3 + $0x2c8] sm:$0xff] %v2256
  %2513 = vst [vmem:[%s3 + $0x2d0] sm:$0xff] %v2257
  %2514 = vst [vmem:[%s3 + $0x2d8] sm:$0xff] %v2258
  %2515 = vst [vmem:[%s3 + $0x2e0] sm:$0xff] %v2259
  %2516 = vst [vmem:[%s3 + $0x2e8] sm:$0xff] %v2260
  %2517 = vst [vmem:[%s3 + $0x2f0] sm:$0xff] %v2261
  %2518 = vst [vmem:[%s3 + $0x2f8] sm:$0xff] %v2262
  %2519 = vst [vmem:[%s3 + $0x300] sm:$0xff] %v2263
  %2520 = vst [vmem:[%s3 + $0x308] sm:$0xff] %v2264
  %2521 = vst [vmem:[%s3 + $0x310] sm:$0xff] %v2265
  %2522 = vst [vmem:[%s3 + $0x318] sm:$0xff] %v2266
  %2523 = vst [vmem:[%s3 + $0x320] sm:$0xff] %v2267
  %2524 = vst [vmem:[%s3 + $0x328] sm:$0xff] %v2268
  %2525 = vst [vmem:[%s3 + $0x330] sm:$0xff] %v2269
  %2526 = vst [vmem:[%s3 + $0x338] sm:$0xff] %v2270
  %2527 = vst [vmem:[%s3 + $0x340] sm:$0xff] %v2271
  %2528 = vst [vmem:[%s3 + $0x348] sm:$0xff] %v2272
  %2529 = vst [vmem:[%s3 + $0x350] sm:$0xff] %v2273
  %2530 = vst [vmem:[%s3 + $0x358] sm:$0xff] %v2274
  %2531 = vst [vmem:[%s3 + $0x360] sm:$0xff] %v2275
  %2532 = vst [vmem:[%s3 + $0x368] sm:$0xff] %v2276
  %2533 = vst [vmem:[%s3 + $0x370] sm:$0xff] %v2277
  %2534 = vst [vmem:[%s3 + $0x378] sm:$0xff] %v2278
  %2535 = vst [vmem:[%s3 + $0x380] sm:$0xff] %v2279
  %2536 = vst [vmem:[%s3 + $0x388] sm:$0xff] %v2280
  %2537 = vst [vmem:[%s3 + $0x390] sm:$0xff] %v2281
  %2538 = vst [vmem:[%s3 + $0x398] sm:$0xff] %v2282
  %2539 = vst [vmem:[%s3 + $0x3a0] sm:$0xff] %v2283
  %2540 = vst [vmem:[%s3 + $0x3a8] sm:$0xff] %v2284
  %2541 = vst [vmem:[%s3 + $0x3b0] sm:$0xff] %v2285
  %2542 = vst [vmem:[%s3 + $0x3b8] sm:$0xff] %v2286
  %2543 = vst [vmem:[%s3 + $0x3c0] sm:$0xff] %v2287
  %2544 = vst [vmem:[%s3 + $0x3c8] sm:$0xff] %v2288
  %2545 = vst [vmem:[%s3 + $0x3d0] sm:$0xff] %v2289
  %2546 = vst [vmem:[%s3 + $0x3d8] sm:$0xff] %v2290
  %2547 = vst [vmem:[%s3 + $0x3e0] sm:$0xff] %v2291
  %2548 = vst [vmem:[%s3 + $0x3e8] sm:$0xff] %v2292
  %2549 = vst [vmem:[%s3 + $0x3f0] sm:$0xff] %v2293
  %2550 = vst [vmem:[%s3 + $0x3f8] sm:$0xff] %v2294
  %2551 = vst [vmem:[%s3 + $0x400] sm:$0xff] %v2295
  %2552 = vst [vmem:[%s3 + $0x408] sm:$0xff] %v2296
  %2553 = vst [vmem:[%s3 + $0x410] sm:$0xff] %v2297
  %2554 = vst [vmem:[%s3 + $0x418] sm:$0xff] %v2298
  %2555 = vst [vmem:[%s3 + $0x420] sm:$0xff] %v2299
  %2556 = vst [vmem:[%s3 + $0x428] sm:$0xff] %v2300
  %2557 = vst [vmem:[%s3 + $0x430] sm:$0xff] %v2301
  %2558 = vst [vmem:[%s3 + $0x438] sm:$0xff] %v2302
  %2559 = vst [vmem:[%s3 + $0x440] sm:$0xff] %v2303
  %2560 = vst [vmem:[%s3 + $0x448] sm:$0xff] %v2304
  %2561 = vst [vmem:[%s3 + $0x450] sm:$0xff] %v2305
  %2562 = vst [vmem:[%s3 + $0x458] sm:$0xff] %v2306
  %2563 = vst [vmem:[%s3 + $0x460] sm:$0xff] %v2307
  %2564 = vst [vmem:[%s3 + $0x468] sm:$0xff] %v2308
  %2565 = vst [vmem:[%s3 + $0x470] sm:$0xff] %v2309
  %2566 = vst [vmem:[%s3 + $0x478] sm:$0xff] %v2310
  %2567 = vst [vmem:[%s3 + $0x480] sm:$0xff] %v2311
  %2568 = vst [vmem:[%s3 + $0x488] sm:$0xff] %v2312
  %2569 = vst [vmem:[%s3 + $0x490] sm:$0xff] %v2313
  %2570 = vst [vmem:[%s3 + $0x498] sm:$0xff] %v2314
  %2571 = vst [vmem:[%s3 + $0x4a0] sm:$0xff] %v2315
  %2572 = vst [vmem:[%s3 + $0x4a8] sm:$0xff] %v2316
  %2573 = vst [vmem:[%s3 + $0x4b0] sm:$0xff] %v2317
  %2574 = vst [vmem:[%s3 + $0x4b8] sm:$0xff] %v2318
  %2575 = vst [vmem:[%s3 + $0x4c0] sm:$0xff] %v2319
  %2576 = vst [vmem:[%s3 + $0x4c8] sm:$0xff] %v2320
  %2577 = vst [vmem:[%s3 + $0x4d0] sm:$0xff] %v2321
  %2578 = vst [vmem:[%s3 + $0x4d8] sm:$0xff] %v2322
  %2579 = vst [vmem:[%s3 + $0x4e0] sm:$0xff] %v2323
  %2580 = vst [vmem:[%s3 + $0x4e8] sm:$0xff] %v2324
  %2581 = vst [vmem:[%s3 + $0x4f0] sm:$0xff] %v2325
  %2582 = vst [vmem:[%s3 + $0x4f8] sm:$0xff] %v2326
  %2583 = vst [vmem:[%s3 + $0x500] sm:$0xff] %v2327
  %2584 = vst [vmem:[%s3 + $0x508] sm:$0xff] %v2328
  %2585 = vst [vmem:[%s3 + $0x510] sm:$0xff] %v2329
  %2586 = vst [vmem:[%s3 + $0x518] sm:$0xff] %v2330
  %2587 = vst [vmem:[%s3 + $0x520] sm:$0xff] %v2331
  %2588 = vst [vmem:[%s3 + $0x528] sm:$0xff] %v2332
  %2589 = vst [vmem:[%s3 + $0x530] sm:$0xff] %v2333
  %2590 = vst [vmem:[%s3 + $0x538] sm:$0xff] %v2334
  %2591 = vst [vmem:[%s3 + $0x540] sm:$0xff] %v2335
  %2592 = vst [vmem:[%s3 + $0x548] sm:$0xff] %v2336
  %2593 = vst [vmem:[%s3 + $0x550] sm:$0xff] %v2337
  %2594 = vst [vmem:[%s3 + $0x558] sm:$0xff] %v2338
  %2595 = vst [vmem:[%s3 + $0x560] sm:$0xff] %v2339
  %2596 = vst [vmem:[%s3 + $0x568] sm:$0xff] %v2340
  %2597 = vst [vmem:[%s3 + $0x570] sm:$0xff] %v2341
  %2598 = vst [vmem:[%s3 + $0x578] sm:$0xff] %v2342
  %2599 = vst [vmem:[%s3 + $0x580] sm:$0xff] %v2343
  %2600 = vst [vmem:[%s3 + $0x588] sm:$0xff] %v2344
  %2601 = vst [vmem:[%s3 + $0x590] sm:$0xff] %v2345
  %2602 = vst [vmem:[%s3 + $0x598] sm:$0xff] %v2346
  %2603 = vst [vmem:[%s3 + $0x5a0] sm:$0xff] %v2347
  %2604 = vst [vmem:[%s3 + $0x5a8] sm:$0xff] %v2348
  %2605 = vst [vmem:[%s3 + $0x5b0] sm:$0xff] %v2349
  %2606 = vst [vmem:[%s3 + $0x5b8] sm:$0xff] %v2350
  %2607 = vst [vmem:[%s3 + $0x5c0] sm:$0xff] %v2351
  %2608 = vst [vmem:[%s3 + $0x5c8] sm:$0xff] %v2352
  %2609 = vst [vmem:[%s3 + $0x5d0] sm:$0xff] %v2353
  %2610 = vst [vmem:[%s3 + $0x5d8] sm:$0xff] %v2354
  %2611 = vst [vmem:[%s3 + $0x5e0] sm:$0xff] %v2355
  %2612 = vst [vmem:[%s3 + $0x5e8] sm:$0xff] %v2356
  %2613 = vst [vmem:[%s3 + $0x5f0] sm:$0xff] %v2357
  %2614 = vst [vmem:[%s3 + $0x5f8] sm:$0xff] %v2358
  %2615 = vst [vmem:[%s3 + $0x600] sm:$0xff] %v2359
  %2616 = vst [vmem:[%s3 + $0x608] sm:$0xff] %v2360
  %2617 = vst [vmem:[%s3 + $0x610] sm:$0xff] %v2361
  %2618 = vst [vmem:[%s3 + $0x618] sm:$0xff] %v2362
  %2619 = vst [vmem:[%s3 + $0x620] sm:$0xff] %v2363
  %2620 = vst [vmem:[%s3 + $0x628] sm:$0xff] %v2364
  %2621 = vst [vmem:[%s3 + $0x630] sm:$0xff] %v2365
  %2622 = vst [vmem:[%s3 + $0x638] sm:$0xff] %v2366
  %2623 = vst [vmem:[%s3 + $0x640] sm:$0xff] %v2367
  %2624 = vst [vmem:[%s3 + $0x648] sm:$0xff] %v2368
  %2625 = vst [vmem:[%s3 + $0x650] sm:$0xff] %v2369
  %2626 = vst [vmem:[%s3 + $0x658] sm:$0xff] %v2370
  %2627 = vst [vmem:[%s3 + $0x660] sm:$0xff] %v2371
  %2628 = vst [vmem:[%s3 + $0x668] sm:$0xff] %v2372
  %2629 = vst [vmem:[%s3 + $0x670] sm:$0xff] %v2373
  %2630 = vst [vmem:[%s3 + $0x678] sm:$0xff] %v2374
  %2631 = vst [vmem:[%s3 + $0x680] sm:$0xff] %v2375
  %2632 = vst [vmem:[%s3 + $0x688] sm:$0xff] %v2376
  %2633 = vst [vmem:[%s3 + $0x690] sm:$0xff] %v2377
  %2634 = vst [vmem:[%s3 + $0x698] sm:$0xff] %v2378
  %2635 = vst [vmem:[%s3 + $0x6a0] sm:$0xff] %v2379
  %2636 = vst [vmem:[%s3 + $0x6a8] sm:$0xff] %v2380
  %2637 = vst [vmem:[%s3 + $0x6b0] sm:$0xff] %v2381
  %2638 = vst [vmem:[%s3 + $0x6b8] sm:$0xff] %v2382
  %2639 = vst [vmem:[%s3 + $0x6c0] sm:$0xff] %v2383
  %2640 = vst [vmem:[%s3 + $0x6c8] sm:$0xff] %v2384
  %2641 = vst [vmem:[%s3 + $0x6d0] sm:$0xff] %v2385
  %2642 = vst [vmem:[%s3 + $0x6d8] sm:$0xff] %v2386
  %2643 = vst [vmem:[%s3 + $0x6e0] sm:$0xff] %v2387
  %2644 = vst [vmem:[%s3 + $0x6e8] sm:$0xff] %v2388
  %2645 = vst [vmem:[%s3 + $0x6f0] sm:$0xff] %v2389
  %2646 = vst [vmem:[%s3 + $0x6f8] sm:$0xff] %v2390
  %2647 = vst [vmem:[%s3 + $0x700] sm:$0xff] %v2391
  %2648 = vst [vmem:[%s3 + $0x708] sm:$0xff] %v2392
  %2649 = vst [vmem:[%s3 + $0x710] sm:$0xff] %v2393
  %2650 = vst [vmem:[%s3 + $0x718] sm:$0xff] %v2394
  %2651 = vst [vmem:[%s3 + $0x720] sm:$0xff] %v2395
  %2652 = vst [vmem:[%s3 + $0x728] sm:$0xff] %v2396
  %2653 = vst [vmem:[%s3 + $0x730] sm:$0xff] %v2397
  %2654 = vst [vmem:[%s3 + $0x738] sm:$0xff] %v2398
  %2655 = vst [vmem:[%s3 + $0x740] sm:$0xff] %v2399
  %2656 = vst [vmem:[%s3 + $0x748] sm:$0xff] %v2400
  %2657 = vst [vmem:[%s3 + $0x750] sm:$0xff] %v2401
  %2658 = vst [vmem:[%s3 + $0x758] sm:$0xff] %v2402
  %2659 = vst [vmem:[%s3 + $0x760] sm:$0xff] %v2403
  %2660 = vst [vmem:[%s3 + $0x768] sm:$0xff] %v2404
  %2661 = vst [vmem:[%s3 + $0x770] sm:$0xff] %v2405
  %2662 = vst [vmem:[%s3 + $0x778] sm:$0xff] %v2406
  %2663 = vst [vmem:[%s3 + $0x780] sm:$0xff] %v2407
  %2664 = vst [vmem:[%s3 + $0x788] sm:$0xff] %v2408
  %2665 = vst [vmem:[%s3 + $0x790] sm:$0xff] %v2409
  %2666 = vst [vmem:[%s3 + $0x798] sm:$0xff] %v2410
  %2667 = vst [vmem:[%s3 + $0x7a0] sm:$0xff] %v2411
  %2668 = vst [vmem:[%s3 + $0x7a8] sm:$0xff] %v2412
  %2669 = vst [vmem:[%s3 + $0x7b0] sm:$0xff] %v2413
  %2670 = vst [vmem:[%s3 + $0x7b8] sm:$0xff] %v2414
  %2671 = vst [vmem:[%s3 + $0x7c0] sm:$0xff] %v2415
  %2672 = vst [vmem:[%s3 + $0x7c8] sm:$0xff] %v2416
  %2673 = vst [vmem:[%s3 + $0x7d0] sm:$0xff] %v2417
  %2674 = vst [vmem:[%s3 + $0x7d8] sm:$0xff] %v2418
  %2675 = vst [vmem:[%s3 + $0x7e0] sm:$0xff] %v2419
  %2676 = vst [vmem:[%s3 + $0x7e8] sm:$0xff] %v2420
  %2677 = vst [vmem:[%s3 + $0x7f0] sm:$0xff] %v2421
  %2678 = vst [vmem:[%s3 + $0x7f8] sm:$0xff] %v2422
  // Predicated region
  $region14: #{_lambda_.12} parent=0 // pred_check
    _
  $region15: #{_lambda_.12} parent=0 // pred_check_branch
    %2680 = sbr.rel (0) target = $region17
  $region16: #{_lambda_.12} parent=0 // pred_region
    _
  $region17: #{_lambda_.12} parent=0 // pred_fallthru
    _
  // Predicated region
  $region18: #{_lambda_.12} parent=0 // pred_check
    _
  $region19: #{_lambda_.12} parent=0 // pred_check_branch
    %2682 = sbr.rel (0) target = $region21
  $region20: #{_lambda_.12} parent=0 // pred_region
    _
  $region21: #{_lambda_.12} parent=0 // pred_fallthru
    _

// kernel: _lambda_.13
$region0: #{_lambda_.13}
  #allocation0 [shape = 'u32[]', space=smem, size = 0x4, offset = 0x4, fixed_abs, tag = 'smem constant byte address 0x4 - core index']
  #allocation1 [shape = 'u32[144,128]{1,0:T(1,128)}', space=vmem, size = 0x12000, scoped, tag = 'internal scratch']
  %s0 = inlined_call_operand.vmem [shape: bf16[512,1024], index: 0, kind: input, shape index: {}]
  %s1 = inlined_call_operand.vmem [shape: bf16[1024,128], index: 1, kind: input, shape index: {}]
  %s2 = inlined_call_operand.vmem [shape: f32[1,128], index: 2, kind: input, shape index: {}]
  %s3 = inlined_call_operand.vmem [shape: f32[512,128], index: 3, kind: output, shape index: {}]
  %s4 = sld [smem:[#allocation0]]
  $region22: #{_lambda_.13} parent=0
    _
  %s6 = ssub.s32 1, %s4
  %s7 = scalar_select 0, %s6, %s4
  // Predicated region
  $region2: #{_lambda_.13} parent=0 // pred_check
    _
  $region3: #{_lambda_.13} parent=0 // pred_check_branch
    %9 = sbr.rel (0) target = $region5
  $region4: #{_lambda_.13} parent=0 // pred_region
    _
  $region5: #{_lambda_.13} parent=0 // pred_fallthru
    _
  // Predicated region
  $region6: #{_lambda_.13} parent=0 // pred_check
    _
  $region7: #{_lambda_.13} parent=0 // pred_check_branch
    %11 = sbr.rel (0) target = $region9
  $region8: #{_lambda_.13} parent=0 // pred_region
    _
  $region9: #{_lambda_.13} parent=0 // pred_fallthru
    _
  // Predicated region
  $region10: #{_lambda_.13} parent=0 // pred_check
    _
  $region11: #{_lambda_.13} parent=0 // pred_check_branch
    %13 = sbr.rel (0) target = $region13
  $region12: #{_lambda_.13} parent=0 // pred_region
    _
  $region13: #{_lambda_.13} parent=0 // pred_fallthru
    _
  %v15 = vld [vmem:[%s0] sm:$0xff]
  %v16 = vld [vmem:[%s0 + $0x8] sm:$0xff]
  %v17 = vld [vmem:[%s0 + $0x10] sm:$0xff]
  %v18 = vld [vmem:[%s0 + $0x18] sm:$0xff]
  %v19 = vld [vmem:[%s0 + $0x20] sm:$0xff]
  %v20 = vld [vmem:[%s0 + $0x28] sm:$0xff]
  %v21 = vld [vmem:[%s0 + $0x30] sm:$0xff]
  %v22 = vld [vmem:[%s0 + $0x38] sm:$0xff]
  %v23 = vld [vmem:[%s0 + $0x40] sm:$0xff]
  %v24 = vld [vmem:[%s0 + $0x48] sm:$0xff]
  %v25 = vld [vmem:[%s0 + $0x50] sm:$0xff]
  %v26 = vld [vmem:[%s0 + $0x58] sm:$0xff]
  %v27 = vld [vmem:[%s0 + $0x60] sm:$0xff]
  %v28 = vld [vmem:[%s0 + $0x68] sm:$0xff]
  %v29 = vld [vmem:[%s0 + $0x70] sm:$0xff]
  %v30 = vld [vmem:[%s0 + $0x78] sm:$0xff]
  %v31 = vld [vmem:[%s0 + $0x80] sm:$0xff]
  %v32 = vld [vmem:[%s0 + $0x88] sm:$0xff]
  %v33 = vld [vmem:[%s0 + $0x90] sm:$0xff]
  %v34 = vld [vmem:[%s0 + $0x98] sm:$0xff]
  %v35 = vld [vmem:[%s0 + $0xa0] sm:$0xff]
  %v36 = vld [vmem:[%s0 + $0xa8] sm:$0xff]
  %v37 = vld [vmem:[%s0 + $0xb0] sm:$0xff]
  %v38 = vld [vmem:[%s0 + $0xb8] sm:$0xff]
  %v39 = vld [vmem:[%s0 + $0xc0] sm:$0xff]
  %v40 = vld [vmem:[%s0 + $0xc8] sm:$0xff]
  %v41 = vld [vmem:[%s0 + $0xd0] sm:$0xff]
  %v42 = vld [vmem:[%s0 + $0xd8] sm:$0xff]
  %v43 = vld [vmem:[%s0 + $0xe0] sm:$0xff]
  %v44 = vld [vmem:[%s0 + $0xe8] sm:$0xff]
  %v45 = vld [vmem:[%s0 + $0xf0] sm:$0xff]
  %v46 = vld [vmem:[%s0 + $0xf8] sm:$0xff]
  %v47 = vld [vmem:[%s0 + $0x100] sm:$0xff]
  %v48 = vld [vmem:[%s0 + $0x108] sm:$0xff]
  %v49 = vld [vmem:[%s0 + $0x110] sm:$0xff]
  %v50 = vld [vmem:[%s0 + $0x118] sm:$0xff]
  %v51 = vld [vmem:[%s0 + $0x120] sm:$0xff]
  %v52 = vld [vmem:[%s0 + $0x128] sm:$0xff]
  %v53 = vld [vmem:[%s0 + $0x130] sm:$0xff]
  %v54 = vld [vmem:[%s0 + $0x138] sm:$0xff]
  %v55 = vld [vmem:[%s0 + $0x140] sm:$0xff]
  %v56 = vld [vmem:[%s0 + $0x148] sm:$0xff]
  %v57 = vld [vmem:[%s0 + $0x150] sm:$0xff]
  %v58 = vld [vmem:[%s0 + $0x158] sm:$0xff]
  %v59 = vld [vmem:[%s0 + $0x160] sm:$0xff]
  %v60 = vld [vmem:[%s0 + $0x168] sm:$0xff]
  %v61 = vld [vmem:[%s0 + $0x170] sm:$0xff]
  %v62 = vld [vmem:[%s0 + $0x178] sm:$0xff]
  %v63 = vld [vmem:[%s0 + $0x180] sm:$0xff]
  %v64 = vld [vmem:[%s0 + $0x188] sm:$0xff]
  %v65 = vld [vmem:[%s0 + $0x190] sm:$0xff]
  %v66 = vld [vmem:[%s0 + $0x198] sm:$0xff]
  %v67 = vld [vmem:[%s0 + $0x1a0] sm:$0xff]
  %v68 = vld [vmem:[%s0 + $0x1a8] sm:$0xff]
  %v69 = vld [vmem:[%s0 + $0x1b0] sm:$0xff]
  %v70 = vld [vmem:[%s0 + $0x1b8] sm:$0xff]
  %v71 = vld [vmem:[%s0 + $0x1c0] sm:$0xff]
  %v72 = vld [vmem:[%s0 + $0x1c8] sm:$0xff]
  %v73 = vld [vmem:[%s0 + $0x1d0] sm:$0xff]
  %v74 = vld [vmem:[%s0 + $0x1d8] sm:$0xff]
  %v75 = vld [vmem:[%s0 + $0x1e0] sm:$0xff]
  %v76 = vld [vmem:[%s0 + $0x1e8] sm:$0xff]
  %v77 = vld [vmem:[%s0 + $0x1f0] sm:$0xff]
  %v78 = vld [vmem:[%s0 + $0x1f8] sm:$0xff]
  %v79 = vld [vmem:[%s0 + $0x200] sm:$0xff]
  %v80 = vld [vmem:[%s0 + $0x208] sm:$0xff]
  %v81 = vld [vmem:[%s0 + $0x210] sm:$0xff]
  %v82 = vld [vmem:[%s0 + $0x218] sm:$0xff]
  %v83 = vld [vmem:[%s0 + $0x220] sm:$0xff]
  %v84 = vld [vmem:[%s0 + $0x228] sm:$0xff]
  %v85 = vld [vmem:[%s0 + $0x230] sm:$0xff]
  %v86 = vld [vmem:[%s0 + $0x238] sm:$0xff]
  %v87 = vld [vmem:[%s0 + $0x240] sm:$0xff]
  %v88 = vld [vmem:[%s0 + $0x248] sm:$0xff]
  %v89 = vld [vmem:[%s0 + $0x250] sm:$0xff]
  %v90 = vld [vmem:[%s0 + $0x258] sm:$0xff]
  %v91 = vld [vmem:[%s0 + $0x260] sm:$0xff]
  %v92 = vld [vmem:[%s0 + $0x268] sm:$0xff]
  %v93 = vld [vmem:[%s0 + $0x270] sm:$0xff]
  %v94 = vld [vmem:[%s0 + $0x278] sm:$0xff]
  %v95 = vld [vmem:[%s0 + $0x280] sm:$0xff]
  %v96 = vld [vmem:[%s0 + $0x288] sm:$0xff]
  %v97 = vld [vmem:[%s0 + $0x290] sm:$0xff]
  %v98 = vld [vmem:[%s0 + $0x298] sm:$0xff]
  %v99 = vld [vmem:[%s0 + $0x2a0] sm:$0xff]
  %v100 = vld [vmem:[%s0 + $0x2a8] sm:$0xff]
  %v101 = vld [vmem:[%s0 + $0x2b0] sm:$0xff]
  %v102 = vld [vmem:[%s0 + $0x2b8] sm:$0xff]
  %v103 = vld [vmem:[%s0 + $0x2c0] sm:$0xff]
  %v104 = vld [vmem:[%s0 + $0x2c8] sm:$0xff]
  %v105 = vld [vmem:[%s0 + $0x2d0] sm:$0xff]
  %v106 = vld [vmem:[%s0 + $0x2d8] sm:$0xff]
  %v107 = vld [vmem:[%s0 + $0x2e0] sm:$0xff]
  %v108 = vld [vmem:[%s0 + $0x2e8] sm:$0xff]
  %v109 = vld [vmem:[%s0 + $0x2f0] sm:$0xff]
  %v110 = vld [vmem:[%s0 + $0x2f8] sm:$0xff]
  %v111 = vld [vmem:[%s0 + $0x300] sm:$0xff]
  %v112 = vld [vmem:[%s0 + $0x308] sm:$0xff]
  %v113 = vld [vmem:[%s0 + $0x310] sm:$0xff]
  %v114 = vld [vmem:[%s0 + $0x318] sm:$0xff]
  %v115 = vld [vmem:[%s0 + $0x320] sm:$0xff]
  %v116 = vld [vmem:[%s0 + $0x328] sm:$0xff]
  %v117 = vld [vmem:[%s0 + $0x330] sm:$0xff]
  %v118 = vld [vmem:[%s0 + $0x338] sm:$0xff]
  %v119 = vld [vmem:[%s0 + $0x340] sm:$0xff]
  %v120 = vld [vmem:[%s0 + $0x348] sm:$0xff]
  %v121 = vld [vmem:[%s0 + $0x350] sm:$0xff]
  %v122 = vld [vmem:[%s0 + $0x358] sm:$0xff]
  %v123 = vld [vmem:[%s0 + $0x360] sm:$0xff]
  %v124 = vld [vmem:[%s0 + $0x368] sm:$0xff]
  %v125 = vld [vmem:[%s0 + $0x370] sm:$0xff]
  %v126 = vld [vmem:[%s0 + $0x378] sm:$0xff]
  %v127 = vld [vmem:[%s0 + $0x380] sm:$0xff]
  %v128 = vld [vmem:[%s0 + $0x388] sm:$0xff]
  %v129 = vld [vmem:[%s0 + $0x390] sm:$0xff]
  %v130 = vld [vmem:[%s0 + $0x398] sm:$0xff]
  %v131 = vld [vmem:[%s0 + $0x3a0] sm:$0xff]
  %v132 = vld [vmem:[%s0 + $0x3a8] sm:$0xff]
  %v133 = vld [vmem:[%s0 + $0x3b0] sm:$0xff]
  %v134 = vld [vmem:[%s0 + $0x3b8] sm:$0xff]
  %v135 = vld [vmem:[%s0 + $0x3c0] sm:$0xff]
  %v136 = vld [vmem:[%s0 + $0x3c8] sm:$0xff]
  %v137 = vld [vmem:[%s0 + $0x3d0] sm:$0xff]
  %v138 = vld [vmem:[%s0 + $0x3d8] sm:$0xff]
  %v139 = vld [vmem:[%s0 + $0x3e0] sm:$0xff]
  %v140 = vld [vmem:[%s0 + $0x3e8] sm:$0xff]
  %v141 = vld [vmem:[%s0 + $0x3f0] sm:$0xff]
  %v142 = vld [vmem:[%s0 + $0x3f8] sm:$0xff]
  %v143 = vld [vmem:[%s0 + $0x400] sm:$0xff]
  %v144 = vld [vmem:[%s0 + $0x408] sm:$0xff]
  %v145 = vld [vmem:[%s0 + $0x410] sm:$0xff]
  %v146 = vld [vmem:[%s0 + $0x418] sm:$0xff]
  %v147 = vld [vmem:[%s0 + $0x420] sm:$0xff]
  %v148 = vld [vmem:[%s0 + $0x428] sm:$0xff]
  %v149 = vld [vmem:[%s0 + $0x430] sm:$0xff]
  %v150 = vld [vmem:[%s0 + $0x438] sm:$0xff]
  %v151 = vld [vmem:[%s0 + $0x440] sm:$0xff]
  %v152 = vld [vmem:[%s0 + $0x448] sm:$0xff]
  %v153 = vld [vmem:[%s0 + $0x450] sm:$0xff]
  %v154 = vld [vmem:[%s0 + $0x458] sm:$0xff]
  %v155 = vld [vmem:[%s0 + $0x460] sm:$0xff]
  %v156 = vld [vmem:[%s0 + $0x468] sm:$0xff]
  %v157 = vld [vmem:[%s0 + $0x470] sm:$0xff]
  %v158 = vld [vmem:[%s0 + $0x478] sm:$0xff]
  %v159 = vld [vmem:[%s0 + $0x480] sm:$0xff]
  %v160 = vld [vmem:[%s0 + $0x488] sm:$0xff]
  %v161 = vld [vmem:[%s0 + $0x490] sm:$0xff]
  %v162 = vld [vmem:[%s0 + $0x498] sm:$0xff]
  %v163 = vld [vmem:[%s0 + $0x4a0] sm:$0xff]
  %v164 = vld [vmem:[%s0 + $0x4a8] sm:$0xff]
  %v165 = vld [vmem:[%s0 + $0x4b0] sm:$0xff]
  %v166 = vld [vmem:[%s0 + $0x4b8] sm:$0xff]
  %v167 = vld [vmem:[%s0 + $0x4c0] sm:$0xff]
  %v168 = vld [vmem:[%s0 + $0x4c8] sm:$0xff]
  %v169 = vld [vmem:[%s0 + $0x4d0] sm:$0xff]
  %v170 = vld [vmem:[%s0 + $0x4d8] sm:$0xff]
  %v171 = vld [vmem:[%s0 + $0x4e0] sm:$0xff]
  %v172 = vld [vmem:[%s0 + $0x4e8] sm:$0xff]
  %v173 = vld [vmem:[%s0 + $0x4f0] sm:$0xff]
  %v174 = vld [vmem:[%s0 + $0x4f8] sm:$0xff]
  %v175 = vld [vmem:[%s0 + $0x500] sm:$0xff]
  %v176 = vld [vmem:[%s0 + $0x508] sm:$0xff]
  %v177 = vld [vmem:[%s0 + $0x510] sm:$0xff]
  %v178 = vld [vmem:[%s0 + $0x518] sm:$0xff]
  %v179 = vld [vmem:[%s0 + $0x520] sm:$0xff]
  %v180 = vld [vmem:[%s0 + $0x528] sm:$0xff]
  %v181 = vld [vmem:[%s0 + $0x530] sm:$0xff]
  %v182 = vld [vmem:[%s0 + $0x538] sm:$0xff]
  %v183 = vld [vmem:[%s0 + $0x540] sm:$0xff]
  %v184 = vld [vmem:[%s0 + $0x548] sm:$0xff]
  %v185 = vld [vmem:[%s0 + $0x550] sm:$0xff]
  %v186 = vld [vmem:[%s0 + $0x558] sm:$0xff]
  %v187 = vld [vmem:[%s0 + $0x560] sm:$0xff]
  %v188 = vld [vmem:[%s0 + $0x568] sm:$0xff]
  %v189 = vld [vmem:[%s0 + $0x570] sm:$0xff]
  %v190 = vld [vmem:[%s0 + $0x578] sm:$0xff]
  %v191 = vld [vmem:[%s0 + $0x580] sm:$0xff]
  %v192 = vld [vmem:[%s0 + $0x588] sm:$0xff]
  %v193 = vld [vmem:[%s0 + $0x590] sm:$0xff]
  %v194 = vld [vmem:[%s0 + $0x598] sm:$0xff]
  %v195 = vld [vmem:[%s0 + $0x5a0] sm:$0xff]
  %v196 = vld [vmem:[%s0 + $0x5a8] sm:$0xff]
  %v197 = vld [vmem:[%s0 + $0x5b0] sm:$0xff]
  %v198 = vld [vmem:[%s0 + $0x5b8] sm:$0xff]
  %v199 = vld [vmem:[%s0 + $0x5c0] sm:$0xff]
  %v200 = vld [vmem:[%s0 + $0x5c8] sm:$0xff]
  %v201 = vld [vmem:[%s0 + $0x5d0] sm:$0xff]
  %v202 = vld [vmem:[%s0 + $0x5d8] sm:$0xff]
  %v203 = vld [vmem:[%s0 + $0x5e0] sm:$0xff]
  %v204 = vld [vmem:[%s0 + $0x5e8] sm:$0xff]
  %v205 = vld [vmem:[%s0 + $0x5f0] sm:$0xff]
  %v206 = vld [vmem:[%s0 + $0x5f8] sm:$0xff]
  %v207 = vld [vmem:[%s0 + $0x600] sm:$0xff]
  %v208 = vld [vmem:[%s0 + $0x608] sm:$0xff]
  %v209 = vld [vmem:[%s0 + $0x610] sm:$0xff]
  %v210 = vld [vmem:[%s0 + $0x618] sm:$0xff]
  %v211 = vld [vmem:[%s0 + $0x620] sm:$0xff]
  %v212 = vld [vmem:[%s0 + $0x628] sm:$0xff]
  %v213 = vld [vmem:[%s0 + $0x630] sm:$0xff]
  %v214 = vld [vmem:[%s0 + $0x638] sm:$0xff]
  %v215 = vld [vmem:[%s0 + $0x640] sm:$0xff]
  %v216 = vld [vmem:[%s0 + $0x648] sm:$0xff]
  %v217 = vld [vmem:[%s0 + $0x650] sm:$0xff]
  %v218 = vld [vmem:[%s0 + $0x658] sm:$0xff]
  %v219 = vld [vmem:[%s0 + $0x660] sm:$0xff]
  %v220 = vld [vmem:[%s0 + $0x668] sm:$0xff]
  %v221 = vld [vmem:[%s0 + $0x670] sm:$0xff]
  %v222 = vld [vmem:[%s0 + $0x678] sm:$0xff]
  %v223 = vld [vmem:[%s0 + $0x680] sm:$0xff]
  %v224 = vld [vmem:[%s0 + $0x688] sm:$0xff]
  %v225 = vld [vmem:[%s0 + $0x690] sm:$0xff]
  %v226 = vld [vmem:[%s0 + $0x698] sm:$0xff]
  %v227 = vld [vmem:[%s0 + $0x6a0] sm:$0xff]
  %v228 = vld [vmem:[%s0 + $0x6a8] sm:$0xff]
  %v229 = vld [vmem:[%s0 + $0x6b0] sm:$0xff]
  %v230 = vld [vmem:[%s0 + $0x6b8] sm:$0xff]
  %v231 = vld [vmem:[%s0 + $0x6c0] sm:$0xff]
  %v232 = vld [vmem:[%s0 + $0x6c8] sm:$0xff]
  %v233 = vld [vmem:[%s0 + $0x6d0] sm:$0xff]
  %v234 = vld [vmem:[%s0 + $0x6d8] sm:$0xff]
  %v235 = vld [vmem:[%s0 + $0x6e0] sm:$0xff]
  %v236 = vld [vmem:[%s0 + $0x6e8] sm:$0xff]
  %v237 = vld [vmem:[%s0 + $0x6f0] sm:$0xff]
  %v238 = vld [vmem:[%s0 + $0x6f8] sm:$0xff]
  %v239 = vld [vmem:[%s0 + $0x700] sm:$0xff]
  %v240 = vld [vmem:[%s0 + $0x708] sm:$0xff]
  %v241 = vld [vmem:[%s0 + $0x710] sm:$0xff]
  %v242 = vld [vmem:[%s0 + $0x718] sm:$0xff]
  %v243 = vld [vmem:[%s0 + $0x720] sm:$0xff]
  %v244 = vld [vmem:[%s0 + $0x728] sm:$0xff]
  %v245 = vld [vmem:[%s0 + $0x730] sm:$0xff]
  %v246 = vld [vmem:[%s0 + $0x738] sm:$0xff]
  %v247 = vld [vmem:[%s0 + $0x740] sm:$0xff]
  %v248 = vld [vmem:[%s0 + $0x748] sm:$0xff]
  %v249 = vld [vmem:[%s0 + $0x750] sm:$0xff]
  %v250 = vld [vmem:[%s0 + $0x758] sm:$0xff]
  %v251 = vld [vmem:[%s0 + $0x760] sm:$0xff]
  %v252 = vld [vmem:[%s0 + $0x768] sm:$0xff]
  %v253 = vld [vmem:[%s0 + $0x770] sm:$0xff]
  %v254 = vld [vmem:[%s0 + $0x778] sm:$0xff]
  %v255 = vld [vmem:[%s0 + $0x780] sm:$0xff]
  %v256 = vld [vmem:[%s0 + $0x788] sm:$0xff]
  %v257 = vld [vmem:[%s0 + $0x790] sm:$0xff]
  %v258 = vld [vmem:[%s0 + $0x798] sm:$0xff]
  %v259 = vld [vmem:[%s0 + $0x7a0] sm:$0xff]
  %v260 = vld [vmem:[%s0 + $0x7a8] sm:$0xff]
  %v261 = vld [vmem:[%s0 + $0x7b0] sm:$0xff]
  %v262 = vld [vmem:[%s0 + $0x7b8] sm:$0xff]
  %v263 = vld [vmem:[%s0 + $0x7c0] sm:$0xff]
  %v264 = vld [vmem:[%s0 + $0x7c8] sm:$0xff]
  %v265 = vld [vmem:[%s0 + $0x7d0] sm:$0xff]
  %v266 = vld [vmem:[%s0 + $0x7d8] sm:$0xff]
  %v267 = vld [vmem:[%s0 + $0x7e0] sm:$0xff]
  %v268 = vld [vmem:[%s0 + $0x7e8] sm:$0xff]
  %v269 = vld [vmem:[%s0 + $0x7f0] sm:$0xff]
  %v270 = vld [vmem:[%s0 + $0x7f8] sm:$0xff]
  %v271 = vld [vmem:[%s1] sm:$0xf]
  %v272 = vld [vmem:[%s1 + $0x4] sm:$0xf]
  %v273 = vld [vmem:[%s1 + $0x8] sm:$0xf]
  %v274 = vld [vmem:[%s1 + $0xc] sm:$0xf]
  %v275 = vld [vmem:[%s1 + $0x10] sm:$0xf]
  %v276 = vld [vmem:[%s1 + $0x14] sm:$0xf]
  %v277 = vld [vmem:[%s1 + $0x18] sm:$0xf]
  %v278 = vld [vmem:[%s1 + $0x1c] sm:$0xf]
  %v279 = vld [vmem:[%s1 + $0x20] sm:$0xf]
  %v280 = vld [vmem:[%s1 + $0x24] sm:$0xf]
  %v281 = vld [vmem:[%s1 + $0x28] sm:$0xf]
  %v282 = vld [vmem:[%s1 + $0x2c] sm:$0xf]
  %v283 = vld [vmem:[%s1 + $0x30] sm:$0xf]
  %v284 = vld [vmem:[%s1 + $0x34] sm:$0xf]
  %v285 = vld [vmem:[%s1 + $0x38] sm:$0xf]
  %v286 = vld [vmem:[%s1 + $0x3c] sm:$0xf]
  %v287 = vld [vmem:[%s1 + $0x40] sm:$0xf]
  %v288 = vld [vmem:[%s1 + $0x44] sm:$0xf]
  %v289 = vld [vmem:[%s1 + $0x48] sm:$0xf]
  %v290 = vld [vmem:[%s1 + $0x4c] sm:$0xf]
  %v291 = vld [vmem:[%s1 + $0x50] sm:$0xf]
  %v292 = vld [vmem:[%s1 + $0x54] sm:$0xf]
  %v293 = vld [vmem:[%s1 + $0x58] sm:$0xf]
  %v294 = vld [vmem:[%s1 + $0x5c] sm:$0xf]
  %v295 = vld [vmem:[%s1 + $0x60] sm:$0xf]
  %v296 = vld [vmem:[%s1 + $0x64] sm:$0xf]
  %v297 = vld [vmem:[%s1 + $0x68] sm:$0xf]
  %v298 = vld [vmem:[%s1 + $0x6c] sm:$0xf]
  %v299 = vld [vmem:[%s1 + $0x70] sm:$0xf]
  %v300 = vld [vmem:[%s1 + $0x74] sm:$0xf]
  %v301 = vld [vmem:[%s1 + $0x78] sm:$0xf]
  %v302 = vld [vmem:[%s1 + $0x7c] sm:$0xf]
  %v303 = vld [vmem:[%s1 + $0x80] sm:$0xf]
  %v304 = vld [vmem:[%s1 + $0x84] sm:$0xf]
  %v305 = vld [vmem:[%s1 + $0x88] sm:$0xf]
  %v306 = vld [vmem:[%s1 + $0x8c] sm:$0xf]
  %v307 = vld [vmem:[%s1 + $0x90] sm:$0xf]
  %v308 = vld [vmem:[%s1 + $0x94] sm:$0xf]
  %v309 = vld [vmem:[%s1 + $0x98] sm:$0xf]
  %v310 = vld [vmem:[%s1 + $0x9c] sm:$0xf]
  %v311 = vld [vmem:[%s1 + $0xa0] sm:$0xf]
  %v312 = vld [vmem:[%s1 + $0xa4] sm:$0xf]
  %v313 = vld [vmem:[%s1 + $0xa8] sm:$0xf]
  %v314 = vld [vmem:[%s1 + $0xac] sm:$0xf]
  %v315 = vld [vmem:[%s1 + $0xb0] sm:$0xf]
  %v316 = vld [vmem:[%s1 + $0xb4] sm:$0xf]
  %v317 = vld [vmem:[%s1 + $0xb8] sm:$0xf]
  %v318 = vld [vmem:[%s1 + $0xbc] sm:$0xf]
  %v319 = vld [vmem:[%s1 + $0xc0] sm:$0xf]
  %v320 = vld [vmem:[%s1 + $0xc4] sm:$0xf]
  %v321 = vld [vmem:[%s1 + $0xc8] sm:$0xf]
  %v322 = vld [vmem:[%s1 + $0xcc] sm:$0xf]
  %v323 = vld [vmem:[%s1 + $0xd0] sm:$0xf]
  %v324 = vld [vmem:[%s1 + $0xd4] sm:$0xf]
  %v325 = vld [vmem:[%s1 + $0xd8] sm:$0xf]
  %v326 = vld [vmem:[%s1 + $0xdc] sm:$0xf]
  %v327 = vld [vmem:[%s1 + $0xe0] sm:$0xf]
  %v328 = vld [vmem:[%s1 + $0xe4] sm:$0xf]
  %v329 = vld [vmem:[%s1 + $0xe8] sm:$0xf]
  %v330 = vld [vmem:[%s1 + $0xec] sm:$0xf]
  %v331 = vld [vmem:[%s1 + $0xf0] sm:$0xf]
  %v332 = vld [vmem:[%s1 + $0xf4] sm:$0xf]
  %v333 = vld [vmem:[%s1 + $0xf8] sm:$0xf]
  %v334 = vld [vmem:[%s1 + $0xfc] sm:$0xf]
  %v335 = vld [vmem:[%s1 + $0x100] sm:$0xf]
  %v336 = vld [vmem:[%s1 + $0x104] sm:$0xf]
  %v337 = vld [vmem:[%s1 + $0x108] sm:$0xf]
  %v338 = vld [vmem:[%s1 + $0x10c] sm:$0xf]
  %v339 = vld [vmem:[%s1 + $0x110] sm:$0xf]
  %v340 = vld [vmem:[%s1 + $0x114] sm:$0xf]
  %v341 = vld [vmem:[%s1 + $0x118] sm:$0xf]
  %v342 = vld [vmem:[%s1 + $0x11c] sm:$0xf]
  %v343 = vld [vmem:[%s1 + $0x120] sm:$0xf]
  %v344 = vld [vmem:[%s1 + $0x124] sm:$0xf]
  %v345 = vld [vmem:[%s1 + $0x128] sm:$0xf]
  %v346 = vld [vmem:[%s1 + $0x12c] sm:$0xf]
  %v347 = vld [vmem:[%s1 + $0x130] sm:$0xf]
  %v348 = vld [vmem:[%s1 + $0x134] sm:$0xf]
  %v349 = vld [vmem:[%s1 + $0x138] sm:$0xf]
  %v350 = vld [vmem:[%s1 + $0x13c] sm:$0xf]
  %v351 = vld [vmem:[%s1 + $0x140] sm:$0xf]
  %v352 = vld [vmem:[%s1 + $0x144] sm:$0xf]
  %v353 = vld [vmem:[%s1 + $0x148] sm:$0xf]
  %v354 = vld [vmem:[%s1 + $0x14c] sm:$0xf]
  %v355 = vld [vmem:[%s1 + $0x150] sm:$0xf]
  %v356 = vld [vmem:[%s1 + $0x154] sm:$0xf]
  %v357 = vld [vmem:[%s1 + $0x158] sm:$0xf]
  %v358 = vld [vmem:[%s1 + $0x15c] sm:$0xf]
  %v359 = vld [vmem:[%s1 + $0x160] sm:$0xf]
  %v360 = vld [vmem:[%s1 + $0x164] sm:$0xf]
  %v361 = vld [vmem:[%s1 + $0x168] sm:$0xf]
  %v362 = vld [vmem:[%s1 + $0x16c] sm:$0xf]
  %v363 = vld [vmem:[%s1 + $0x170] sm:$0xf]
  %v364 = vld [vmem:[%s1 + $0x174] sm:$0xf]
  %v365 = vld [vmem:[%s1 + $0x178] sm:$0xf]
  %v366 = vld [vmem:[%s1 + $0x17c] sm:$0xf]
  %v367 = vld [vmem:[%s1 + $0x180] sm:$0xf]
  %v368 = vld [vmem:[%s1 + $0x184] sm:$0xf]
  %v369 = vld [vmem:[%s1 + $0x188] sm:$0xf]
  %v370 = vld [vmem:[%s1 + $0x18c] sm:$0xf]
  %v371 = vld [vmem:[%s1 + $0x190] sm:$0xf]
  %v372 = vld [vmem:[%s1 + $0x194] sm:$0xf]
  %v373 = vld [vmem:[%s1 + $0x198] sm:$0xf]
  %v374 = vld [vmem:[%s1 + $0x19c] sm:$0xf]
  %v375 = vld [vmem:[%s1 + $0x1a0] sm:$0xf]
  %v376 = vld [vmem:[%s1 + $0x1a4] sm:$0xf]
  %v377 = vld [vmem:[%s1 + $0x1a8] sm:$0xf]
  %v378 = vld [vmem:[%s1 + $0x1ac] sm:$0xf]
  %v379 = vld [vmem:[%s1 + $0x1b0] sm:$0xf]
  %v380 = vld [vmem:[%s1 + $0x1b4] sm:$0xf]
  %v381 = vld [vmem:[%s1 + $0x1b8] sm:$0xf]
  %v382 = vld [vmem:[%s1 + $0x1bc] sm:$0xf]
  %v383 = vld [vmem:[%s1 + $0x1c0] sm:$0xf]
  %v384 = vld [vmem:[%s1 + $0x1c4] sm:$0xf]
  %v385 = vld [vmem:[%s1 + $0x1c8] sm:$0xf]
  %v386 = vld [vmem:[%s1 + $0x1cc] sm:$0xf]
  %v387 = vld [vmem:[%s1 + $0x1d0] sm:$0xf]
  %v388 = vld [vmem:[%s1 + $0x1d4] sm:$0xf]
  %v389 = vld [vmem:[%s1 + $0x1d8] sm:$0xf]
  %v390 = vld [vmem:[%s1 + $0x1dc] sm:$0xf]
  %v391 = vld [vmem:[%s1 + $0x1e0] sm:$0xf]
  %v392 = vld [vmem:[%s1 + $0x1e4] sm:$0xf]
  %v393 = vld [vmem:[%s1 + $0x1e8] sm:$0xf]
  %v394 = vld [vmem:[%s1 + $0x1ec] sm:$0xf]
  %v395 = vld [vmem:[%s1 + $0x1f0] sm:$0xf]
  %v396 = vld [vmem:[%s1 + $0x1f4] sm:$0xf]
  %v397 = vld [vmem:[%s1 + $0x1f8] sm:$0xf]
  %v398 = vld [vmem:[%s1 + $0x1fc] sm:$0xf]
  %v399 = vld [vmem:[%s2] sm:$0x1]
  %v401 = vlaneseq
  %v402 = vshrl.u32 %v401, 7
  %v403 = vsub.s32 0, %v402
  %v404 = vrot.slane %v399, %v403
  %v662 = vunpack.c.l.b16 %v15
  %v663 = vunpack.c.h.b16 %v15
  %v664 = vunpack.c.l.b16 %v16
  %v665 = vunpack.c.h.b16 %v16
  %v666 = vunpack.c.l.b16 %v17
  %v667 = vunpack.c.h.b16 %v17
  %v668 = vunpack.c.l.b16 %v18
  %v669 = vunpack.c.h.b16 %v18
  %v670 = vunpack.c.l.b16 %v19
  %v671 = vunpack.c.h.b16 %v19
  %v672 = vunpack.c.l.b16 %v20
  %v673 = vunpack.c.h.b16 %v20
  %v674 = vunpack.c.l.b16 %v21
  %v675 = vunpack.c.h.b16 %v21
  %v676 = vunpack.c.l.b16 %v22
  %v677 = vunpack.c.h.b16 %v22
  %v678 = vunpack.c.l.b16 %v23
  %v679 = vunpack.c.h.b16 %v23
  %v680 = vunpack.c.l.b16 %v24
  %v681 = vunpack.c.h.b16 %v24
  %v682 = vunpack.c.l.b16 %v25
  %v683 = vunpack.c.h.b16 %v25
  %v684 = vunpack.c.l.b16 %v26
  %v685 = vunpack.c.h.b16 %v26
  %v686 = vunpack.c.l.b16 %v27
  %v687 = vunpack.c.h.b16 %v27
  %v688 = vunpack.c.l.b16 %v28
  %v689 = vunpack.c.h.b16 %v28
  %v690 = vunpack.c.l.b16 %v29
  %v691 = vunpack.c.h.b16 %v29
  %v692 = vunpack.c.l.b16 %v30
  %v693 = vunpack.c.h.b16 %v30
  %v694 = vunpack.c.l.b16 %v31
  %v695 = vunpack.c.h.b16 %v31
  %v696 = vunpack.c.l.b16 %v32
  %v697 = vunpack.c.h.b16 %v32
  %v698 = vunpack.c.l.b16 %v33
  %v699 = vunpack.c.h.b16 %v33
  %v700 = vunpack.c.l.b16 %v34
  %v701 = vunpack.c.h.b16 %v34
  %v702 = vunpack.c.l.b16 %v35
  %v703 = vunpack.c.h.b16 %v35
  %v704 = vunpack.c.l.b16 %v36
  %v705 = vunpack.c.h.b16 %v36
  %v706 = vunpack.c.l.b16 %v37
  %v707 = vunpack.c.h.b16 %v37
  %v708 = vunpack.c.l.b16 %v38
  %v709 = vunpack.c.h.b16 %v38
  %v710 = vunpack.c.l.b16 %v39
  %v711 = vunpack.c.h.b16 %v39
  %v712 = vunpack.c.l.b16 %v40
  %v713 = vunpack.c.h.b16 %v40
  %v714 = vunpack.c.l.b16 %v41
  %v715 = vunpack.c.h.b16 %v41
  %v716 = vunpack.c.l.b16 %v42
  %v717 = vunpack.c.h.b16 %v42
  %v718 = vunpack.c.l.b16 %v43
  %v719 = vunpack.c.h.b16 %v43
  %v720 = vunpack.c.l.b16 %v44
  %v721 = vunpack.c.h.b16 %v44
  %v722 = vunpack.c.l.b16 %v45
  %v723 = vunpack.c.h.b16 %v45
  %v724 = vunpack.c.l.b16 %v46
  %v725 = vunpack.c.h.b16 %v46
  %v726 = vunpack.c.l.b16 %v47
  %v727 = vunpack.c.h.b16 %v47
  %v728 = vunpack.c.l.b16 %v48
  %v729 = vunpack.c.h.b16 %v48
  %v730 = vunpack.c.l.b16 %v49
  %v731 = vunpack.c.h.b16 %v49
  %v732 = vunpack.c.l.b16 %v50
  %v733 = vunpack.c.h.b16 %v50
  %v734 = vunpack.c.l.b16 %v51
  %v735 = vunpack.c.h.b16 %v51
  %v736 = vunpack.c.l.b16 %v52
  %v737 = vunpack.c.h.b16 %v52
  %v738 = vunpack.c.l.b16 %v53
  %v739 = vunpack.c.h.b16 %v53
  %v740 = vunpack.c.l.b16 %v54
  %v741 = vunpack.c.h.b16 %v54
  %v742 = vunpack.c.l.b16 %v55
  %v743 = vunpack.c.h.b16 %v55
  %v744 = vunpack.c.l.b16 %v56
  %v745 = vunpack.c.h.b16 %v56
  %v746 = vunpack.c.l.b16 %v57
  %v747 = vunpack.c.h.b16 %v57
  %v748 = vunpack.c.l.b16 %v58
  %v749 = vunpack.c.h.b16 %v58
  %v750 = vunpack.c.l.b16 %v59
  %v751 = vunpack.c.h.b16 %v59
  %v752 = vunpack.c.l.b16 %v60
  %v753 = vunpack.c.h.b16 %v60
  %v754 = vunpack.c.l.b16 %v61
  %v755 = vunpack.c.h.b16 %v61
  %v756 = vunpack.c.l.b16 %v62
  %v757 = vunpack.c.h.b16 %v62
  %v758 = vunpack.c.l.b16 %v63
  %v759 = vunpack.c.h.b16 %v63
  %v760 = vunpack.c.l.b16 %v64
  %v761 = vunpack.c.h.b16 %v64
  %v762 = vunpack.c.l.b16 %v65
  %v763 = vunpack.c.h.b16 %v65
  %v764 = vunpack.c.l.b16 %v66
  %v765 = vunpack.c.h.b16 %v66
  %v766 = vunpack.c.l.b16 %v67
  %v767 = vunpack.c.h.b16 %v67
  %v768 = vunpack.c.l.b16 %v68
  %v769 = vunpack.c.h.b16 %v68
  %v770 = vunpack.c.l.b16 %v69
  %v771 = vunpack.c.h.b16 %v69
  %v772 = vunpack.c.l.b16 %v70
  %v773 = vunpack.c.h.b16 %v70
  %v774 = vunpack.c.l.b16 %v71
  %v775 = vunpack.c.h.b16 %v71
  %v776 = vunpack.c.l.b16 %v72
  %v777 = vunpack.c.h.b16 %v72
  %v778 = vunpack.c.l.b16 %v73
  %v779 = vunpack.c.h.b16 %v73
  %v780 = vunpack.c.l.b16 %v74
  %v781 = vunpack.c.h.b16 %v74
  %v782 = vunpack.c.l.b16 %v75
  %v783 = vunpack.c.h.b16 %v75
  %v784 = vunpack.c.l.b16 %v76
  %v785 = vunpack.c.h.b16 %v76
  %v786 = vunpack.c.l.b16 %v77
  %v787 = vunpack.c.h.b16 %v77
  %v788 = vunpack.c.l.b16 %v78
  %v789 = vunpack.c.h.b16 %v78
  %v790 = vunpack.c.l.b16 %v79
  %v791 = vunpack.c.h.b16 %v79
  %v792 = vunpack.c.l.b16 %v80
  %v793 = vunpack.c.h.b16 %v80
  %v794 = vunpack.c.l.b16 %v81
  %v795 = vunpack.c.h.b16 %v81
  %v796 = vunpack.c.l.b16 %v82
  %v797 = vunpack.c.h.b16 %v82
  %v798 = vunpack.c.l.b16 %v83
  %v799 = vunpack.c.h.b16 %v83
  %v800 = vunpack.c.l.b16 %v84
  %v801 = vunpack.c.h.b16 %v84
  %v802 = vunpack.c.l.b16 %v85
  %v803 = vunpack.c.h.b16 %v85
  %v804 = vunpack.c.l.b16 %v86
  %v805 = vunpack.c.h.b16 %v86
  %v806 = vunpack.c.l.b16 %v87
  %v807 = vunpack.c.h.b16 %v87
  %v808 = vunpack.c.l.b16 %v88
  %v809 = vunpack.c.h.b16 %v88
  %v810 = vunpack.c.l.b16 %v89
  %v811 = vunpack.c.h.b16 %v89
  %v812 = vunpack.c.l.b16 %v90
  %v813 = vunpack.c.h.b16 %v90
  %v814 = vunpack.c.l.b16 %v91
  %v815 = vunpack.c.h.b16 %v91
  %v816 = vunpack.c.l.b16 %v92
  %v817 = vunpack.c.h.b16 %v92
  %v818 = vunpack.c.l.b16 %v93
  %v819 = vunpack.c.h.b16 %v93
  %v820 = vunpack.c.l.b16 %v94
  %v821 = vunpack.c.h.b16 %v94
  %v822 = vunpack.c.l.b16 %v95
  %v823 = vunpack.c.h.b16 %v95
  %v824 = vunpack.c.l.b16 %v96
  %v825 = vunpack.c.h.b16 %v96
  %v826 = vunpack.c.l.b16 %v97
  %v827 = vunpack.c.h.b16 %v97
  %v828 = vunpack.c.l.b16 %v98
  %v829 = vunpack.c.h.b16 %v98
  %v830 = vunpack.c.l.b16 %v99
  %v831 = vunpack.c.h.b16 %v99
  %v832 = vunpack.c.l.b16 %v100
  %v833 = vunpack.c.h.b16 %v100
  %v834 = vunpack.c.l.b16 %v101
  %v835 = vunpack.c.h.b16 %v101
  %v836 = vunpack.c.l.b16 %v102
  %v837 = vunpack.c.h.b16 %v102
  %v838 = vunpack.c.l.b16 %v103
  %v839 = vunpack.c.h.b16 %v103
  %v840 = vunpack.c.l.b16 %v104
  %v841 = vunpack.c.h.b16 %v104
  %v842 = vunpack.c.l.b16 %v105
  %v843 = vunpack.c.h.b16 %v105
  %v844 = vunpack.c.l.b16 %v106
  %v845 = vunpack.c.h.b16 %v106
  %v846 = vunpack.c.l.b16 %v107
  %v847 = vunpack.c.h.b16 %v107
  %v848 = vunpack.c.l.b16 %v108
  %v849 = vunpack.c.h.b16 %v108
  %v850 = vunpack.c.l.b16 %v109
  %v851 = vunpack.c.h.b16 %v109
  %v852 = vunpack.c.l.b16 %v110
  %v853 = vunpack.c.h.b16 %v110
  %v854 = vunpack.c.l.b16 %v111
  %v855 = vunpack.c.h.b16 %v111
  %v856 = vunpack.c.l.b16 %v112
  %v857 = vunpack.c.h.b16 %v112
  %v858 = vunpack.c.l.b16 %v113
  %v859 = vunpack.c.h.b16 %v113
  %v860 = vunpack.c.l.b16 %v114
  %v861 = vunpack.c.h.b16 %v114
  %v862 = vunpack.c.l.b16 %v115
  %v863 = vunpack.c.h.b16 %v115
  %v864 = vunpack.c.l.b16 %v116
  %v865 = vunpack.c.h.b16 %v116
  %v866 = vunpack.c.l.b16 %v117
  %v867 = vunpack.c.h.b16 %v117
  %v868 = vunpack.c.l.b16 %v118
  %v869 = vunpack.c.h.b16 %v118
  %v870 = vunpack.c.l.b16 %v119
  %v871 = vunpack.c.h.b16 %v119
  %v872 = vunpack.c.l.b16 %v120
  %v873 = vunpack.c.h.b16 %v120
  %v874 = vunpack.c.l.b16 %v121
  %v875 = vunpack.c.h.b16 %v121
  %v876 = vunpack.c.l.b16 %v122
  %v877 = vunpack.c.h.b16 %v122
  %v878 = vunpack.c.l.b16 %v123
  %v879 = vunpack.c.h.b16 %v123
  %v880 = vunpack.c.l.b16 %v124
  %v881 = vunpack.c.h.b16 %v124
  %v882 = vunpack.c.l.b16 %v125
  %v883 = vunpack.c.h.b16 %v125
  %v884 = vunpack.c.l.b16 %v126
  %v885 = vunpack.c.h.b16 %v126
  %v886 = vunpack.c.l.b16 %v127
  %v887 = vunpack.c.h.b16 %v127
  %v888 = vunpack.c.l.b16 %v128
  %v889 = vunpack.c.h.b16 %v128
  %v890 = vunpack.c.l.b16 %v129
  %v891 = vunpack.c.h.b16 %v129
  %v892 = vunpack.c.l.b16 %v130
  %v893 = vunpack.c.h.b16 %v130
  %v894 = vunpack.c.l.b16 %v131
  %v895 = vunpack.c.h.b16 %v131
  %v896 = vunpack.c.l.b16 %v132
  %v897 = vunpack.c.h.b16 %v132
  %v898 = vunpack.c.l.b16 %v133
  %v899 = vunpack.c.h.b16 %v133
  %v900 = vunpack.c.l.b16 %v134
  %v901 = vunpack.c.h.b16 %v134
  %v902 = vunpack.c.l.b16 %v135
  %v903 = vunpack.c.h.b16 %v135
  %v904 = vunpack.c.l.b16 %v136
  %v905 = vunpack.c.h.b16 %v136
  %v906 = vunpack.c.l.b16 %v137
  %v907 = vunpack.c.h.b16 %v137
  %v908 = vunpack.c.l.b16 %v138
  %v909 = vunpack.c.h.b16 %v138
  %v910 = vunpack.c.l.b16 %v139
  %v911 = vunpack.c.h.b16 %v139
  %v912 = vunpack.c.l.b16 %v140
  %v913 = vunpack.c.h.b16 %v140
  %v914 = vunpack.c.l.b16 %v141
  %v915 = vunpack.c.h.b16 %v141
  %v916 = vunpack.c.l.b16 %v142
  %v917 = vunpack.c.h.b16 %v142
  %v918 = vunpack.c.l.b16 %v143
  %v919 = vunpack.c.h.b16 %v143
  %v920 = vunpack.c.l.b16 %v144
  %v921 = vunpack.c.h.b16 %v144
  %v922 = vunpack.c.l.b16 %v145
  %v923 = vunpack.c.h.b16 %v145
  %v924 = vunpack.c.l.b16 %v146
  %v925 = vunpack.c.h.b16 %v146
  %v926 = vunpack.c.l.b16 %v147
  %v927 = vunpack.c.h.b16 %v147
  %v928 = vunpack.c.l.b16 %v148
  %v929 = vunpack.c.h.b16 %v148
  %v930 = vunpack.c.l.b16 %v149
  %v931 = vunpack.c.h.b16 %v149
  %v932 = vunpack.c.l.b16 %v150
  %v933 = vunpack.c.h.b16 %v150
  %v934 = vunpack.c.l.b16 %v151
  %v935 = vunpack.c.h.b16 %v151
  %v936 = vunpack.c.l.b16 %v152
  %v937 = vunpack.c.h.b16 %v152
  %v938 = vunpack.c.l.b16 %v153
  %v939 = vunpack.c.h.b16 %v153
  %v940 = vunpack.c.l.b16 %v154
  %v941 = vunpack.c.h.b16 %v154
  %v942 = vunpack.c.l.b16 %v155
  %v943 = vunpack.c.h.b16 %v155
  %v944 = vunpack.c.l.b16 %v156
  %v945 = vunpack.c.h.b16 %v156
  %v946 = vunpack.c.l.b16 %v157
  %v947 = vunpack.c.h.b16 %v157
  %v948 = vunpack.c.l.b16 %v158
  %v949 = vunpack.c.h.b16 %v158
  %v950 = vunpack.c.l.b16 %v159
  %v951 = vunpack.c.h.b16 %v159
  %v952 = vunpack.c.l.b16 %v160
  %v953 = vunpack.c.h.b16 %v160
  %v954 = vunpack.c.l.b16 %v161
  %v955 = vunpack.c.h.b16 %v161
  %v956 = vunpack.c.l.b16 %v162
  %v957 = vunpack.c.h.b16 %v162
  %v958 = vunpack.c.l.b16 %v163
  %v959 = vunpack.c.h.b16 %v163
  %v960 = vunpack.c.l.b16 %v164
  %v961 = vunpack.c.h.b16 %v164
  %v962 = vunpack.c.l.b16 %v165
  %v963 = vunpack.c.h.b16 %v165
  %v964 = vunpack.c.l.b16 %v166
  %v965 = vunpack.c.h.b16 %v166
  %v966 = vunpack.c.l.b16 %v167
  %v967 = vunpack.c.h.b16 %v167
  %v968 = vunpack.c.l.b16 %v168
  %v969 = vunpack.c.h.b16 %v168
  %v970 = vunpack.c.l.b16 %v169
  %v971 = vunpack.c.h.b16 %v169
  %v972 = vunpack.c.l.b16 %v170
  %v973 = vunpack.c.h.b16 %v170
  %v974 = vunpack.c.l.b16 %v171
  %v975 = vunpack.c.h.b16 %v171
  %v976 = vunpack.c.l.b16 %v172
  %v977 = vunpack.c.h.b16 %v172
  %v978 = vunpack.c.l.b16 %v173
  %v979 = vunpack.c.h.b16 %v173
  %v980 = vunpack.c.l.b16 %v174
  %v981 = vunpack.c.h.b16 %v174
  %v982 = vunpack.c.l.b16 %v175
  %v983 = vunpack.c.h.b16 %v175
  %v984 = vunpack.c.l.b16 %v176
  %v985 = vunpack.c.h.b16 %v176
  %v986 = vunpack.c.l.b16 %v177
  %v987 = vunpack.c.h.b16 %v177
  %v988 = vunpack.c.l.b16 %v178
  %v989 = vunpack.c.h.b16 %v178
  %v990 = vunpack.c.l.b16 %v179
  %v991 = vunpack.c.h.b16 %v179
  %v992 = vunpack.c.l.b16 %v180
  %v993 = vunpack.c.h.b16 %v180
  %v994 = vunpack.c.l.b16 %v181
  %v995 = vunpack.c.h.b16 %v181
  %v996 = vunpack.c.l.b16 %v182
  %v997 = vunpack.c.h.b16 %v182
  %v998 = vunpack.c.l.b16 %v183
  %v999 = vunpack.c.h.b16 %v183
  %v1000 = vunpack.c.l.b16 %v184
  %v1001 = vunpack.c.h.b16 %v184
  %v1002 = vunpack.c.l.b16 %v185
  %v1003 = vunpack.c.h.b16 %v185
  %v1004 = vunpack.c.l.b16 %v186
  %v1005 = vunpack.c.h.b16 %v186
  %v1006 = vunpack.c.l.b16 %v187
  %v1007 = vunpack.c.h.b16 %v187
  %v1008 = vunpack.c.l.b16 %v188
  %v1009 = vunpack.c.h.b16 %v188
  %v1010 = vunpack.c.l.b16 %v189
  %v1011 = vunpack.c.h.b16 %v189
  %v1012 = vunpack.c.l.b16 %v190
  %v1013 = vunpack.c.h.b16 %v190
  %v1014 = vunpack.c.l.b16 %v191
  %v1015 = vunpack.c.h.b16 %v191
  %v1016 = vunpack.c.l.b16 %v192
  %v1017 = vunpack.c.h.b16 %v192
  %v1018 = vunpack.c.l.b16 %v193
  %v1019 = vunpack.c.h.b16 %v193
  %v1020 = vunpack.c.l.b16 %v194
  %v1021 = vunpack.c.h.b16 %v194
  %v1022 = vunpack.c.l.b16 %v195
  %v1023 = vunpack.c.h.b16 %v195
  %v1024 = vunpack.c.l.b16 %v196
  %v1025 = vunpack.c.h.b16 %v196
  %v1026 = vunpack.c.l.b16 %v197
  %v1027 = vunpack.c.h.b16 %v197
  %v1028 = vunpack.c.l.b16 %v198
  %v1029 = vunpack.c.h.b16 %v198
  %v1030 = vunpack.c.l.b16 %v199
  %v1031 = vunpack.c.h.b16 %v199
  %v1032 = vunpack.c.l.b16 %v200
  %v1033 = vunpack.c.h.b16 %v200
  %v1034 = vunpack.c.l.b16 %v201
  %v1035 = vunpack.c.h.b16 %v201
  %v1036 = vunpack.c.l.b16 %v202
  %v1037 = vunpack.c.h.b16 %v202
  %v1038 = vunpack.c.l.b16 %v203
  %v1039 = vunpack.c.h.b16 %v203
  %v1040 = vunpack.c.l.b16 %v204
  %v1041 = vunpack.c.h.b16 %v204
  %v1042 = vunpack.c.l.b16 %v205
  %v1043 = vunpack.c.h.b16 %v205
  %v1044 = vunpack.c.l.b16 %v206
  %v1045 = vunpack.c.h.b16 %v206
  %v1046 = vunpack.c.l.b16 %v207
  %v1047 = vunpack.c.h.b16 %v207
  %v1048 = vunpack.c.l.b16 %v208
  %v1049 = vunpack.c.h.b16 %v208
  %v1050 = vunpack.c.l.b16 %v209
  %v1051 = vunpack.c.h.b16 %v209
  %v1052 = vunpack.c.l.b16 %v210
  %v1053 = vunpack.c.h.b16 %v210
  %v1054 = vunpack.c.l.b16 %v211
  %v1055 = vunpack.c.h.b16 %v211
  %v1056 = vunpack.c.l.b16 %v212
  %v1057 = vunpack.c.h.b16 %v212
  %v1058 = vunpack.c.l.b16 %v213
  %v1059 = vunpack.c.h.b16 %v213
  %v1060 = vunpack.c.l.b16 %v214
  %v1061 = vunpack.c.h.b16 %v214
  %v1062 = vunpack.c.l.b16 %v215
  %v1063 = vunpack.c.h.b16 %v215
  %v1064 = vunpack.c.l.b16 %v216
  %v1065 = vunpack.c.h.b16 %v216
  %v1066 = vunpack.c.l.b16 %v217
  %v1067 = vunpack.c.h.b16 %v217
  %v1068 = vunpack.c.l.b16 %v218
  %v1069 = vunpack.c.h.b16 %v218
  %v1070 = vunpack.c.l.b16 %v219
  %v1071 = vunpack.c.h.b16 %v219
  %v1072 = vunpack.c.l.b16 %v220
  %v1073 = vunpack.c.h.b16 %v220
  %v1074 = vunpack.c.l.b16 %v221
  %v1075 = vunpack.c.h.b16 %v221
  %v1076 = vunpack.c.l.b16 %v222
  %v1077 = vunpack.c.h.b16 %v222
  %v1078 = vunpack.c.l.b16 %v223
  %v1079 = vunpack.c.h.b16 %v223
  %v1080 = vunpack.c.l.b16 %v224
  %v1081 = vunpack.c.h.b16 %v224
  %v1082 = vunpack.c.l.b16 %v225
  %v1083 = vunpack.c.h.b16 %v225
  %v1084 = vunpack.c.l.b16 %v226
  %v1085 = vunpack.c.h.b16 %v226
  %v1086 = vunpack.c.l.b16 %v227
  %v1087 = vunpack.c.h.b16 %v227
  %v1088 = vunpack.c.l.b16 %v228
  %v1089 = vunpack.c.h.b16 %v228
  %v1090 = vunpack.c.l.b16 %v229
  %v1091 = vunpack.c.h.b16 %v229
  %v1092 = vunpack.c.l.b16 %v230
  %v1093 = vunpack.c.h.b16 %v230
  %v1094 = vunpack.c.l.b16 %v231
  %v1095 = vunpack.c.h.b16 %v231
  %v1096 = vunpack.c.l.b16 %v232
  %v1097 = vunpack.c.h.b16 %v232
  %v1098 = vunpack.c.l.b16 %v233
  %v1099 = vunpack.c.h.b16 %v233
  %v1100 = vunpack.c.l.b16 %v234
  %v1101 = vunpack.c.h.b16 %v234
  %v1102 = vunpack.c.l.b16 %v235
  %v1103 = vunpack.c.h.b16 %v235
  %v1104 = vunpack.c.l.b16 %v236
  %v1105 = vunpack.c.h.b16 %v236
  %v1106 = vunpack.c.l.b16 %v237
  %v1107 = vunpack.c.h.b16 %v237
  %v1108 = vunpack.c.l.b16 %v238
  %v1109 = vunpack.c.h.b16 %v238
  %v1110 = vunpack.c.l.b16 %v239
  %v1111 = vunpack.c.h.b16 %v239
  %v1112 = vunpack.c.l.b16 %v240
  %v1113 = vunpack.c.h.b16 %v240
  %v1114 = vunpack.c.l.b16 %v241
  %v1115 = vunpack.c.h.b16 %v241
  %v1116 = vunpack.c.l.b16 %v242
  %v1117 = vunpack.c.h.b16 %v242
  %v1118 = vunpack.c.l.b16 %v243
  %v1119 = vunpack.c.h.b16 %v243
  %v1120 = vunpack.c.l.b16 %v244
  %v1121 = vunpack.c.h.b16 %v244
  %v1122 = vunpack.c.l.b16 %v245
  %v1123 = vunpack.c.h.b16 %v245
  %v1124 = vunpack.c.l.b16 %v246
  %v1125 = vunpack.c.h.b16 %v246
  %v1126 = vunpack.c.l.b16 %v247
  %v1127 = vunpack.c.h.b16 %v247
  %v1128 = vunpack.c.l.b16 %v248
  %v1129 = vunpack.c.h.b16 %v248
  %v1130 = vunpack.c.l.b16 %v249
  %v1131 = vunpack.c.h.b16 %v249
  %v1132 = vunpack.c.l.b16 %v250
  %v1133 = vunpack.c.h.b16 %v250
  %v1134 = vunpack.c.l.b16 %v251
  %v1135 = vunpack.c.h.b16 %v251
  %v1136 = vunpack.c.l.b16 %v252
  %v1137 = vunpack.c.h.b16 %v252
  %v1138 = vunpack.c.l.b16 %v253
  %v1139 = vunpack.c.h.b16 %v253
  %v1140 = vunpack.c.l.b16 %v254
  %v1141 = vunpack.c.h.b16 %v254
  %v1142 = vunpack.c.l.b16 %v255
  %v1143 = vunpack.c.h.b16 %v255
  %v1144 = vunpack.c.l.b16 %v256
  %v1145 = vunpack.c.h.b16 %v256
  %v1146 = vunpack.c.l.b16 %v257
  %v1147 = vunpack.c.h.b16 %v257
  %v1148 = vunpack.c.l.b16 %v258
  %v1149 = vunpack.c.h.b16 %v258
  %v1150 = vunpack.c.l.b16 %v259
  %v1151 = vunpack.c.h.b16 %v259
  %v1152 = vunpack.c.l.b16 %v260
  %v1153 = vunpack.c.h.b16 %v260
  %v1154 = vunpack.c.l.b16 %v261
  %v1155 = vunpack.c.h.b16 %v261
  %v1156 = vunpack.c.l.b16 %v262
  %v1157 = vunpack.c.h.b16 %v262
  %v1158 = vunpack.c.l.b16 %v263
  %v1159 = vunpack.c.h.b16 %v263
  %v1160 = vunpack.c.l.b16 %v264
  %v1161 = vunpack.c.h.b16 %v264
  %v1162 = vunpack.c.l.b16 %v265
  %v1163 = vunpack.c.h.b16 %v265
  %v1164 = vunpack.c.l.b16 %v266
  %v1165 = vunpack.c.h.b16 %v266
  %v1166 = vunpack.c.l.b16 %v267
  %v1167 = vunpack.c.h.b16 %v267
  %v1168 = vunpack.c.l.b16 %v268
  %v1169 = vunpack.c.h.b16 %v268
  %v1170 = vunpack.c.l.b16 %v269
  %v1171 = vunpack.c.h.b16 %v269
  %v1172 = vunpack.c.l.b16 %v270
  %v1173 = vunpack.c.h.b16 %v270
  %v1174 = vpack.c.b16 %v670, %v662
  %v1175 = vpack.c.b16 %v671, %v663
  %v1176 = vpack.c.b16 %v672, %v664
  %v1177 = vpack.c.b16 %v673, %v665
  %v1178 = vpack.c.b16 %v674, %v666
  %v1179 = vpack.c.b16 %v675, %v667
  %v1180 = vpack.c.b16 %v676, %v668
  %v1181 = vpack.c.b16 %v677, %v669
  %v1182 = vpack.c.b16 %v686, %v678
  %v1183 = vpack.c.b16 %v687, %v679
  %v1184 = vpack.c.b16 %v688, %v680
  %v1185 = vpack.c.b16 %v689, %v681
  %v1186 = vpack.c.b16 %v690, %v682
  %v1187 = vpack.c.b16 %v691, %v683
  %v1188 = vpack.c.b16 %v692, %v684
  %v1189 = vpack.c.b16 %v693, %v685
  %v1190 = vpack.c.b16 %v702, %v694
  %v1191 = vpack.c.b16 %v703, %v695
  %v1192 = vpack.c.b16 %v704, %v696
  %v1193 = vpack.c.b16 %v705, %v697
  %v1194 = vpack.c.b16 %v706, %v698
  %v1195 = vpack.c.b16 %v707, %v699
  %v1196 = vpack.c.b16 %v708, %v700
  %v1197 = vpack.c.b16 %v709, %v701
  %v1198 = vpack.c.b16 %v718, %v710
  %v1199 = vpack.c.b16 %v719, %v711
  %v1200 = vpack.c.b16 %v720, %v712
  %v1201 = vpack.c.b16 %v721, %v713
  %v1202 = vpack.c.b16 %v722, %v714
  %v1203 = vpack.c.b16 %v723, %v715
  %v1204 = vpack.c.b16 %v724, %v716
  %v1205 = vpack.c.b16 %v725, %v717
  %v1206 = vpack.c.b16 %v734, %v726
  %v1207 = vpack.c.b16 %v735, %v727
  %v1208 = vpack.c.b16 %v736, %v728
  %v1209 = vpack.c.b16 %v737, %v729
  %v1210 = vpack.c.b16 %v738, %v730
  %v1211 = vpack.c.b16 %v739, %v731
  %v1212 = vpack.c.b16 %v740, %v732
  %v1213 = vpack.c.b16 %v741, %v733
  %v1214 = vpack.c.b16 %v750, %v742
  %v1215 = vpack.c.b16 %v751, %v743
  %v1216 = vpack.c.b16 %v752, %v744
  %v1217 = vpack.c.b16 %v753, %v745
  %v1218 = vpack.c.b16 %v754, %v746
  %v1219 = vpack.c.b16 %v755, %v747
  %v1220 = vpack.c.b16 %v756, %v748
  %v1221 = vpack.c.b16 %v757, %v749
  %v1222 = vpack.c.b16 %v766, %v758
  %v1223 = vpack.c.b16 %v767, %v759
  %v1224 = vpack.c.b16 %v768, %v760
  %v1225 = vpack.c.b16 %v769, %v761
  %v1226 = vpack.c.b16 %v770, %v762
  %v1227 = vpack.c.b16 %v771, %v763
  %v1228 = vpack.c.b16 %v772, %v764
  %v1229 = vpack.c.b16 %v773, %v765
  %v1230 = vpack.c.b16 %v782, %v774
  %v1231 = vpack.c.b16 %v783, %v775
  %v1232 = vpack.c.b16 %v784, %v776
  %v1233 = vpack.c.b16 %v785, %v777
  %v1234 = vpack.c.b16 %v786, %v778
  %v1235 = vpack.c.b16 %v787, %v779
  %v1236 = vpack.c.b16 %v788, %v780
  %v1237 = vpack.c.b16 %v789, %v781
  %v1238 = vpack.c.b16 %v798, %v790
  %v1239 = vpack.c.b16 %v799, %v791
  %v1240 = vpack.c.b16 %v800, %v792
  %v1241 = vpack.c.b16 %v801, %v793
  %v1242 = vpack.c.b16 %v802, %v794
  %v1243 = vpack.c.b16 %v803, %v795
  %v1244 = vpack.c.b16 %v804, %v796
  %v1245 = vpack.c.b16 %v805, %v797
  %v1246 = vpack.c.b16 %v814, %v806
  %v1247 = vpack.c.b16 %v815, %v807
  %v1248 = vpack.c.b16 %v816, %v808
  %v1249 = vpack.c.b16 %v817, %v809
  %v1250 = vpack.c.b16 %v818, %v810
  %v1251 = vpack.c.b16 %v819, %v811
  %v1252 = vpack.c.b16 %v820, %v812
  %v1253 = vpack.c.b16 %v821, %v813
  %v1254 = vpack.c.b16 %v830, %v822
  %v1255 = vpack.c.b16 %v831, %v823
  %v1256 = vpack.c.b16 %v832, %v824
  %v1257 = vpack.c.b16 %v833, %v825
  %v1258 = vpack.c.b16 %v834, %v826
  %v1259 = vpack.c.b16 %v835, %v827
  %v1260 = vpack.c.b16 %v836, %v828
  %v1261 = vpack.c.b16 %v837, %v829
  %v1262 = vpack.c.b16 %v846, %v838
  %v1263 = vpack.c.b16 %v847, %v839
  %v1264 = vpack.c.b16 %v848, %v840
  %v1265 = vpack.c.b16 %v849, %v841
  %v1266 = vpack.c.b16 %v850, %v842
  %v1267 = vpack.c.b16 %v851, %v843
  %v1268 = vpack.c.b16 %v852, %v844
  %v1269 = vpack.c.b16 %v853, %v845
  %v1270 = vpack.c.b16 %v862, %v854
  %v1271 = vpack.c.b16 %v863, %v855
  %v1272 = vpack.c.b16 %v864, %v856
  %v1273 = vpack.c.b16 %v865, %v857
  %v1274 = vpack.c.b16 %v866, %v858
  %v1275 = vpack.c.b16 %v867, %v859
  %v1276 = vpack.c.b16 %v868, %v860
  %v1277 = vpack.c.b16 %v869, %v861
  %v1278 = vpack.c.b16 %v878, %v870
  %v1279 = vpack.c.b16 %v879, %v871
  %v1280 = vpack.c.b16 %v880, %v872
  %v1281 = vpack.c.b16 %v881, %v873
  %v1282 = vpack.c.b16 %v882, %v874
  %v1283 = vpack.c.b16 %v883, %v875
  %v1284 = vpack.c.b16 %v884, %v876
  %v1285 = vpack.c.b16 %v885, %v877
  %v1286 = vpack.c.b16 %v894, %v886
  %v1287 = vpack.c.b16 %v895, %v887
  %v1288 = vpack.c.b16 %v896, %v888
  %v1289 = vpack.c.b16 %v897, %v889
  %v1290 = vpack.c.b16 %v898, %v890
  %v1291 = vpack.c.b16 %v899, %v891
  %v1292 = vpack.c.b16 %v900, %v892
  %v1293 = vpack.c.b16 %v901, %v893
  %v1294 = vpack.c.b16 %v910, %v902
  %v1295 = vpack.c.b16 %v911, %v903
  %v1296 = vpack.c.b16 %v912, %v904
  %v1297 = vpack.c.b16 %v913, %v905
  %v1298 = vpack.c.b16 %v914, %v906
  %v1299 = vpack.c.b16 %v915, %v907
  %v1300 = vpack.c.b16 %v916, %v908
  %v1301 = vpack.c.b16 %v917, %v909
  %v1302 = vpack.c.b16 %v926, %v918
  %v1303 = vpack.c.b16 %v927, %v919
  %v1304 = vpack.c.b16 %v928, %v920
  %v1305 = vpack.c.b16 %v929, %v921
  %v1306 = vpack.c.b16 %v930, %v922
  %v1307 = vpack.c.b16 %v931, %v923
  %v1308 = vpack.c.b16 %v932, %v924
  %v1309 = vpack.c.b16 %v933, %v925
  %v1310 = vpack.c.b16 %v942, %v934
  %v1311 = vpack.c.b16 %v943, %v935
  %v1312 = vpack.c.b16 %v944, %v936
  %v1313 = vpack.c.b16 %v945, %v937
  %v1314 = vpack.c.b16 %v946, %v938
  %v1315 = vpack.c.b16 %v947, %v939
  %v1316 = vpack.c.b16 %v948, %v940
  %v1317 = vpack.c.b16 %v949, %v941
  %v1318 = vpack.c.b16 %v958, %v950
  %v1319 = vpack.c.b16 %v959, %v951
  %v1320 = vpack.c.b16 %v960, %v952
  %v1321 = vpack.c.b16 %v961, %v953
  %v1322 = vpack.c.b16 %v962, %v954
  %v1323 = vpack.c.b16 %v963, %v955
  %v1324 = vpack.c.b16 %v964, %v956
  %v1325 = vpack.c.b16 %v965, %v957
  %v1326 = vpack.c.b16 %v974, %v966
  %v1327 = vpack.c.b16 %v975, %v967
  %v1328 = vpack.c.b16 %v976, %v968
  %v1329 = vpack.c.b16 %v977, %v969
  %v1330 = vpack.c.b16 %v978, %v970
  %v1331 = vpack.c.b16 %v979, %v971
  %v1332 = vpack.c.b16 %v980, %v972
  %v1333 = vpack.c.b16 %v981, %v973
  %v1334 = vpack.c.b16 %v990, %v982
  %v1335 = vpack.c.b16 %v991, %v983
  %v1336 = vpack.c.b16 %v992, %v984
  %v1337 = vpack.c.b16 %v993, %v985
  %v1338 = vpack.c.b16 %v994, %v986
  %v1339 = vpack.c.b16 %v995, %v987
  %v1340 = vpack.c.b16 %v996, %v988
  %v1341 = vpack.c.b16 %v997, %v989
  %v1342 = vpack.c.b16 %v1006, %v998
  %v1343 = vpack.c.b16 %v1007, %v999
  %v1344 = vpack.c.b16 %v1008, %v1000
  %v1345 = vpack.c.b16 %v1009, %v1001
  %v1346 = vpack.c.b16 %v1010, %v1002
  %v1347 = vpack.c.b16 %v1011, %v1003
  %v1348 = vpack.c.b16 %v1012, %v1004
  %v1349 = vpack.c.b16 %v1013, %v1005
  %v1350 = vpack.c.b16 %v1022, %v1014
  %v1351 = vpack.c.b16 %v1023, %v1015
  %v1352 = vpack.c.b16 %v1024, %v1016
  %v1353 = vpack.c.b16 %v1025, %v1017
  %v1354 = vpack.c.b16 %v1026, %v1018
  %v1355 = vpack.c.b16 %v1027, %v1019
  %v1356 = vpack.c.b16 %v1028, %v1020
  %v1357 = vpack.c.b16 %v1029, %v1021
  %v1358 = vpack.c.b16 %v1038, %v1030
  %v1359 = vpack.c.b16 %v1039, %v1031
  %v1360 = vpack.c.b16 %v1040, %v1032
  %v1361 = vpack.c.b16 %v1041, %v1033
  %v1362 = vpack.c.b16 %v1042, %v1034
  %v1363 = vpack.c.b16 %v1043, %v1035
  %v1364 = vpack.c.b16 %v1044, %v1036
  %v1365 = vpack.c.b16 %v1045, %v1037
  %v1366 = vpack.c.b16 %v1054, %v1046
  %v1367 = vpack.c.b16 %v1055, %v1047
  %v1368 = vpack.c.b16 %v1056, %v1048
  %v1369 = vpack.c.b16 %v1057, %v1049
  %v1370 = vpack.c.b16 %v1058, %v1050
  %v1371 = vpack.c.b16 %v1059, %v1051
  %v1372 = vpack.c.b16 %v1060, %v1052
  %v1373 = vpack.c.b16 %v1061, %v1053
  %v1374 = vpack.c.b16 %v1070, %v1062
  %v1375 = vpack.c.b16 %v1071, %v1063
  %v1376 = vpack.c.b16 %v1072, %v1064
  %v1377 = vpack.c.b16 %v1073, %v1065
  %v1378 = vpack.c.b16 %v1074, %v1066
  %v1379 = vpack.c.b16 %v1075, %v1067
  %v1380 = vpack.c.b16 %v1076, %v1068
  %v1381 = vpack.c.b16 %v1077, %v1069
  %v1382 = vpack.c.b16 %v1086, %v1078
  %v1383 = vpack.c.b16 %v1087, %v1079
  %v1384 = vpack.c.b16 %v1088, %v1080
  %v1385 = vpack.c.b16 %v1089, %v1081
  %v1386 = vpack.c.b16 %v1090, %v1082
  %v1387 = vpack.c.b16 %v1091, %v1083
  %v1388 = vpack.c.b16 %v1092, %v1084
  %v1389 = vpack.c.b16 %v1093, %v1085
  %v1390 = vpack.c.b16 %v1102, %v1094
  %v1391 = vpack.c.b16 %v1103, %v1095
  %v1392 = vpack.c.b16 %v1104, %v1096
  %v1393 = vpack.c.b16 %v1105, %v1097
  %v1394 = vpack.c.b16 %v1106, %v1098
  %v1395 = vpack.c.b16 %v1107, %v1099
  %v1396 = vpack.c.b16 %v1108, %v1100
  %v1397 = vpack.c.b16 %v1109, %v1101
  %v1398 = vpack.c.b16 %v1118, %v1110
  %v1399 = vpack.c.b16 %v1119, %v1111
  %v1400 = vpack.c.b16 %v1120, %v1112
  %v1401 = vpack.c.b16 %v1121, %v1113
  %v1402 = vpack.c.b16 %v1122, %v1114
  %v1403 = vpack.c.b16 %v1123, %v1115
  %v1404 = vpack.c.b16 %v1124, %v1116
  %v1405 = vpack.c.b16 %v1125, %v1117
  %v1406 = vpack.c.b16 %v1134, %v1126
  %v1407 = vpack.c.b16 %v1135, %v1127
  %v1408 = vpack.c.b16 %v1136, %v1128
  %v1409 = vpack.c.b16 %v1137, %v1129
  %v1410 = vpack.c.b16 %v1138, %v1130
  %v1411 = vpack.c.b16 %v1139, %v1131
  %v1412 = vpack.c.b16 %v1140, %v1132
  %v1413 = vpack.c.b16 %v1141, %v1133
  %v1414 = vpack.c.b16 %v1150, %v1142
  %v1415 = vpack.c.b16 %v1151, %v1143
  %v1416 = vpack.c.b16 %v1152, %v1144
  %v1417 = vpack.c.b16 %v1153, %v1145
  %v1418 = vpack.c.b16 %v1154, %v1146
  %v1419 = vpack.c.b16 %v1155, %v1147
  %v1420 = vpack.c.b16 %v1156, %v1148
  %v1421 = vpack.c.b16 %v1157, %v1149
  %v1422 = vpack.c.b16 %v1166, %v1158
  %v1423 = vpack.c.b16 %v1167, %v1159
  %v1424 = vpack.c.b16 %v1168, %v1160
  %v1425 = vpack.c.b16 %v1169, %v1161
  %v1426 = vpack.c.b16 %v1170, %v1162
  %v1427 = vpack.c.b16 %v1171, %v1163
  %v1428 = vpack.c.b16 %v1172, %v1164
  %v1429 = vpack.c.b16 %v1173, %v1165
  %v1814 = vunpack.c.l.b16 %v271
  %v1815 = vunpack.c.l.b16 %v272
  %v1816 = vunpack.c.l.b16 %v273
  %v1817 = vunpack.c.l.b16 %v274
  %v1818 = vunpack.c.l.b16 %v275
  %v1819 = vunpack.c.l.b16 %v276
  %v1820 = vunpack.c.l.b16 %v277
  %v1821 = vunpack.c.l.b16 %v278
  %v1822 = vunpack.c.l.b16 %v279
  %v1823 = vunpack.c.l.b16 %v280
  %v1824 = vunpack.c.l.b16 %v281
  %v1825 = vunpack.c.l.b16 %v282
  %v1826 = vunpack.c.l.b16 %v283
  %v1827 = vunpack.c.l.b16 %v284
  %v1828 = vunpack.c.l.b16 %v285
  %v1829 = vunpack.c.l.b16 %v286
  %v1830 = vunpack.c.l.b16 %v287
  %v1831 = vunpack.c.l.b16 %v288
  %v1832 = vunpack.c.l.b16 %v289
  %v1833 = vunpack.c.l.b16 %v290
  %v1834 = vunpack.c.l.b16 %v291
  %v1835 = vunpack.c.l.b16 %v292
  %v1836 = vunpack.c.l.b16 %v293
  %v1837 = vunpack.c.l.b16 %v294
  %v1838 = vunpack.c.l.b16 %v295
  %v1839 = vunpack.c.l.b16 %v296
  %v1840 = vunpack.c.l.b16 %v297
  %v1841 = vunpack.c.l.b16 %v298
  %v1842 = vunpack.c.l.b16 %v299
  %v1843 = vunpack.c.l.b16 %v300
  %v1844 = vunpack.c.l.b16 %v301
  %v1845 = vunpack.c.l.b16 %v302
  %v1846 = vunpack.c.l.b16 %v303
  %v1847 = vunpack.c.l.b16 %v304
  %v1848 = vunpack.c.l.b16 %v305
  %v1849 = vunpack.c.l.b16 %v306
  %v1850 = vunpack.c.l.b16 %v307
  %v1851 = vunpack.c.l.b16 %v308
  %v1852 = vunpack.c.l.b16 %v309
  %v1853 = vunpack.c.l.b16 %v310
  %v1854 = vunpack.c.l.b16 %v311
  %v1855 = vunpack.c.l.b16 %v312
  %v1856 = vunpack.c.l.b16 %v313
  %v1857 = vunpack.c.l.b16 %v314
  %v1858 = vunpack.c.l.b16 %v315
  %v1859 = vunpack.c.l.b16 %v316
  %v1860 = vunpack.c.l.b16 %v317
  %v1861 = vunpack.c.l.b16 %v318
  %v1862 = vunpack.c.l.b16 %v319
  %v1863 = vunpack.c.l.b16 %v320
  %v1864 = vunpack.c.l.b16 %v321
  %v1865 = vunpack.c.l.b16 %v322
  %v1866 = vunpack.c.l.b16 %v323
  %v1867 = vunpack.c.l.b16 %v324
  %v1868 = vunpack.c.l.b16 %v325
  %v1869 = vunpack.c.l.b16 %v326
  %v1870 = vunpack.c.l.b16 %v327
  %v1871 = vunpack.c.l.b16 %v328
  %v1872 = vunpack.c.l.b16 %v329
  %v1873 = vunpack.c.l.b16 %v330
  %v1874 = vunpack.c.l.b16 %v331
  %v1875 = vunpack.c.l.b16 %v332
  %v1876 = vunpack.c.l.b16 %v333
  %v1877 = vunpack.c.l.b16 %v334
  %v1878 = vunpack.c.l.b16 %v335
  %v1879 = vunpack.c.l.b16 %v336
  %v1880 = vunpack.c.l.b16 %v337
  %v1881 = vunpack.c.l.b16 %v338
  %v1882 = vunpack.c.l.b16 %v339
  %v1883 = vunpack.c.l.b16 %v340
  %v1884 = vunpack.c.l.b16 %v341
  %v1885 = vunpack.c.l.b16 %v342
  %v1886 = vunpack.c.l.b16 %v343
  %v1887 = vunpack.c.l.b16 %v344
  %v1888 = vunpack.c.l.b16 %v345
  %v1889 = vunpack.c.l.b16 %v346
  %v1890 = vunpack.c.l.b16 %v347
  %v1891 = vunpack.c.l.b16 %v348
  %v1892 = vunpack.c.l.b16 %v349
  %v1893 = vunpack.c.l.b16 %v350
  %v1894 = vunpack.c.l.b16 %v351
  %v1895 = vunpack.c.l.b16 %v352
  %v1896 = vunpack.c.l.b16 %v353
  %v1897 = vunpack.c.l.b16 %v354
  %v1898 = vunpack.c.l.b16 %v355
  %v1899 = vunpack.c.l.b16 %v356
  %v1900 = vunpack.c.l.b16 %v357
  %v1901 = vunpack.c.l.b16 %v358
  %v1902 = vunpack.c.l.b16 %v359
  %v1903 = vunpack.c.l.b16 %v360
  %v1904 = vunpack.c.l.b16 %v361
  %v1905 = vunpack.c.l.b16 %v362
  %v1906 = vunpack.c.l.b16 %v363
  %v1907 = vunpack.c.l.b16 %v364
  %v1908 = vunpack.c.l.b16 %v365
  %v1909 = vunpack.c.l.b16 %v366
  %v1910 = vunpack.c.l.b16 %v367
  %v1911 = vunpack.c.l.b16 %v368
  %v1912 = vunpack.c.l.b16 %v369
  %v1913 = vunpack.c.l.b16 %v370
  %v1914 = vunpack.c.l.b16 %v371
  %v1915 = vunpack.c.l.b16 %v372
  %v1916 = vunpack.c.l.b16 %v373
  %v1917 = vunpack.c.l.b16 %v374
  %v1918 = vunpack.c.l.b16 %v375
  %v1919 = vunpack.c.l.b16 %v376
  %v1920 = vunpack.c.l.b16 %v377
  %v1921 = vunpack.c.l.b16 %v378
  %v1922 = vunpack.c.l.b16 %v379
  %v1923 = vunpack.c.l.b16 %v380
  %v1924 = vunpack.c.l.b16 %v381
  %v1925 = vunpack.c.l.b16 %v382
  %v1926 = vunpack.c.l.b16 %v383
  %v1927 = vunpack.c.l.b16 %v384
  %v1928 = vunpack.c.l.b16 %v385
  %v1929 = vunpack.c.l.b16 %v386
  %v1930 = vunpack.c.l.b16 %v387
  %v1931 = vunpack.c.l.b16 %v388
  %v1932 = vunpack.c.l.b16 %v389
  %v1933 = vunpack.c.l.b16 %v390
  %v1934 = vunpack.c.l.b16 %v391
  %v1935 = vunpack.c.l.b16 %v392
  %v1936 = vunpack.c.l.b16 %v393
  %v1937 = vunpack.c.l.b16 %v394
  %v1938 = vunpack.c.l.b16 %v395
  %v1939 = vunpack.c.l.b16 %v396
  %v1940 = vunpack.c.l.b16 %v397
  %v1941 = vunpack.c.l.b16 %v398
  %v1942 = vpack.c.b16 %v1815, %v1814
  %v1943 = vpack.c.b16 %v1817, %v1816
  %v1944 = vpack.c.b16 %v1819, %v1818
  %v1945 = vpack.c.b16 %v1821, %v1820
  %v1946 = vpack.c.b16 %v1823, %v1822
  %v1947 = vpack.c.b16 %v1825, %v1824
  %v1948 = vpack.c.b16 %v1827, %v1826
  %v1949 = vpack.c.b16 %v1829, %v1828
  %v1950 = vpack.c.b16 %v1831, %v1830
  %v1951 = vpack.c.b16 %v1833, %v1832
  %v1952 = vpack.c.b16 %v1835, %v1834
  %v1953 = vpack.c.b16 %v1837, %v1836
  %v1954 = vpack.c.b16 %v1839, %v1838
  %v1955 = vpack.c.b16 %v1841, %v1840
  %v1956 = vpack.c.b16 %v1843, %v1842
  %v1957 = vpack.c.b16 %v1845, %v1844
  %v1958 = vpack.c.b16 %v1847, %v1846
  %v1959 = vpack.c.b16 %v1849, %v1848
  %v1960 = vpack.c.b16 %v1851, %v1850
  %v1961 = vpack.c.b16 %v1853, %v1852
  %v1962 = vpack.c.b16 %v1855, %v1854
  %v1963 = vpack.c.b16 %v1857, %v1856
  %v1964 = vpack.c.b16 %v1859, %v1858
  %v1965 = vpack.c.b16 %v1861, %v1860
  %v1966 = vpack.c.b16 %v1863, %v1862
  %v1967 = vpack.c.b16 %v1865, %v1864
  %v1968 = vpack.c.b16 %v1867, %v1866
  %v1969 = vpack.c.b16 %v1869, %v1868
  %v1970 = vpack.c.b16 %v1871, %v1870
  %v1971 = vpack.c.b16 %v1873, %v1872
  %v1972 = vpack.c.b16 %v1875, %v1874
  %v1973 = vpack.c.b16 %v1877, %v1876
  %v1974 = vpack.c.b16 %v1879, %v1878
  %v1975 = vpack.c.b16 %v1881, %v1880
  %v1976 = vpack.c.b16 %v1883, %v1882
  %v1977 = vpack.c.b16 %v1885, %v1884
  %v1978 = vpack.c.b16 %v1887, %v1886
  %v1979 = vpack.c.b16 %v1889, %v1888
  %v1980 = vpack.c.b16 %v1891, %v1890
  %v1981 = vpack.c.b16 %v1893, %v1892
  %v1982 = vpack.c.b16 %v1895, %v1894
  %v1983 = vpack.c.b16 %v1897, %v1896
  %v1984 = vpack.c.b16 %v1899, %v1898
  %v1985 = vpack.c.b16 %v1901, %v1900
  %v1986 = vpack.c.b16 %v1903, %v1902
  %v1987 = vpack.c.b16 %v1905, %v1904
  %v1988 = vpack.c.b16 %v1907, %v1906
  %v1989 = vpack.c.b16 %v1909, %v1908
  %v1990 = vpack.c.b16 %v1911, %v1910
  %v1991 = vpack.c.b16 %v1913, %v1912
  %v1992 = vpack.c.b16 %v1915, %v1914
  %v1993 = vpack.c.b16 %v1917, %v1916
  %v1994 = vpack.c.b16 %v1919, %v1918
  %v1995 = vpack.c.b16 %v1921, %v1920
  %v1996 = vpack.c.b16 %v1923, %v1922
  %v1997 = vpack.c.b16 %v1925, %v1924
  %v1998 = vpack.c.b16 %v1927, %v1926
  %v1999 = vpack.c.b16 %v1929, %v1928
  %v2000 = vpack.c.b16 %v1931, %v1930
  %v2001 = vpack.c.b16 %v1933, %v1932
  %v2002 = vpack.c.b16 %v1935, %v1934
  %v2003 = vpack.c.b16 %v1937, %v1936
  %v2004 = vpack.c.b16 %v1939, %v1938
  %v2005 = vpack.c.b16 %v1941, %v1940
  %2070 = vmatprep.subr.bf16.mxu0 0
  %2071 = vmatpush1.bf16.msra.mxu0 %v1949
  %2072 = vmatprep.subr.bf16.mxu0 0
  %2073 = vmatpush1.bf16.msra.mxu0 %v1948
  %2074 = vmatprep.subr.bf16.mxu0 0
  %2075 = vmatpush1.bf16.msra.mxu0 %v1947
  %2076 = vmatprep.subr.bf16.mxu0 0
  %2077 = vmatpush1.bf16.msra.mxu0 %v1946
  %2078 = vmatprep.subr.bf16.mxu0 0
  %2079 = vmatpush1.bf16.msra.mxu0 %v1945
  %2080 = vmatprep.subr.bf16.mxu0 0
  %2081 = vmatpush1.bf16.msra.mxu0 %v1944
  %2082 = vmatprep.subr.bf16.mxu0 0
  %2083 = vmatpush1.bf16.msra.mxu0 %v1943
  %2084 = vmatprep.subr.bf16.mxu0 0
  %2085 = vmatpush1.bf16.msra.mxu0 %v1942
  %2086 = vmatprep.subr.bf16.mxu0 0
  %2087 = vmatpush2.bf16.msra.mxu0 %v1957
  %2088 = vmatprep.subr.bf16.mxu0 0
  %2089 = vmatpush2.bf16.msra.mxu0 %v1956
  %2090 = vmatprep.subr.bf16.mxu0 0
  %2091 = vmatpush2.bf16.msra.mxu0 %v1955
  %2092 = vmatprep.subr.bf16.mxu0 0
  %2093 = vmatpush2.bf16.msra.mxu0 %v1954
  %2094 = vmatprep.subr.bf16.mxu0 0
  %2095 = vmatpush2.bf16.msra.mxu0 %v1953
  %2096 = vmatprep.subr.bf16.mxu0 0
  %2097 = vmatpush2.bf16.msra.mxu0 %v1952
  %2098 = vmatprep.subr.bf16.mxu0 0
  %2099 = vmatpush2.bf16.msra.mxu0 %v1951
  %2100 = vmatprep.subr.bf16.mxu0 0
  %2101 = vmatpush2.bf16.msra.mxu0 %v1950
  %2102 = vmatprep.mubr.bf16.mxu0 %v1175
  %2103 = vmatmul.mubr.bf16.gmra.mxu0 %v1174
  %v2104 = vpop.f32.mrf.mxu0
  %v2105 = vadd.f32 %v404, %v2104
  %v2106 = vpop.f32.mrf.mxu0
  %v2107 = vpop.f32.mrf.mxu0
  %v2108 = vadd.f32 %v404, %v2107
  %v2109 = vpop.f32.mrf.mxu0
  %2110 = vmatprep.mubr.bf16.mxu0 %v1183
  %2111 = vmatmul.mubr.bf16.gmra.mxu0 %v1182
  %v2112 = vpop.f32.mrf.mxu0
  %v2113 = vadd.f32 %v404, %v2112
  %v2114 = vpop.f32.mrf.mxu0
  %v2115 = vpop.f32.mrf.mxu0
  %v2116 = vadd.f32 %v404, %v2115
  %v2117 = vpop.f32.mrf.mxu0
  %2118 = vmatprep.mubr.bf16.mxu0 %v1191
  %2119 = vmatmul.mubr.bf16.gmra.mxu0 %v1190
  %v2120 = vpop.f32.mrf.mxu0
  %v2121 = vadd.f32 %v404, %v2120
  %v2122 = vpop.f32.mrf.mxu0
  %v2123 = vpop.f32.mrf.mxu0
  %v2124 = vadd.f32 %v404, %v2123
  %v2125 = vpop.f32.mrf.mxu0
  %2126 = vmatprep.mubr.bf16.mxu0 %v1199
  %2127 = vmatmul.mubr.bf16.gmra.mxu0 %v1198
  %v2128 = vpop.f32.mrf.mxu0
  %v2129 = vadd.f32 %v404, %v2128
  %v2130 = vpop.f32.mrf.mxu0
  %v2131 = vpop.f32.mrf.mxu0
  %v2132 = vadd.f32 %v404, %v2131
  %v2133 = vpop.f32.mrf.mxu0
  %2134 = vmatprep.mubr.bf16.mxu0 %v1207
  %2135 = vmatmul.mubr.bf16.gmra.mxu0 %v1206
  %v2136 = vpop.f32.mrf.mxu0
  %v2137 = vadd.f32 %v404, %v2136
  %v2138 = vpop.f32.mrf.mxu0
  %v2139 = vpop.f32.mrf.mxu0
  %v2140 = vadd.f32 %v404, %v2139
  %v2141 = vpop.f32.mrf.mxu0
  %2142 = vmatprep.mubr.bf16.mxu0 %v1215
  %2143 = vmatmul.mubr.bf16.gmra.mxu0 %v1214
  %v2144 = vpop.f32.mrf.mxu0
  %v2145 = vadd.f32 %v404, %v2144
  %v2146 = vpop.f32.mrf.mxu0
  %v2147 = vpop.f32.mrf.mxu0
  %v2148 = vadd.f32 %v404, %v2147
  %v2149 = vpop.f32.mrf.mxu0
  %2150 = vmatprep.mubr.bf16.mxu0 %v1223
  %2151 = vmatmul.mubr.bf16.gmra.mxu0 %v1222
  %v2152 = vpop.f32.mrf.mxu0
  %v2153 = vadd.f32 %v404, %v2152
  %v2154 = vpop.f32.mrf.mxu0
  %v2155 = vpop.f32.mrf.mxu0
  %v2156 = vadd.f32 %v404, %v2155
  %v2157 = vpop.f32.mrf.mxu0
  %2158 = vmatprep.mubr.bf16.mxu0 %v1231
  %2159 = vmatmul.mubr.bf16.gmra.mxu0 %v1230
  %v2160 = vpop.f32.mrf.mxu0
  %v2161 = vadd.f32 %v404, %v2160
  %v2162 = vpop.f32.mrf.mxu0
  %v2163 = vpop.f32.mrf.mxu0
  %v2164 = vadd.f32 %v404, %v2163
  %v2165 = vpop.f32.mrf.mxu0
  %2166 = vmatprep.mubr.bf16.mxu0 %v1239
  %2167 = vmatmul.mubr.bf16.gmra.mxu0 %v1238
  %v2168 = vpop.f32.mrf.mxu0
  %v2169 = vadd.f32 %v404, %v2168
  %v2170 = vpop.f32.mrf.mxu0
  %v2171 = vpop.f32.mrf.mxu0
  %v2172 = vadd.f32 %v404, %v2171
  %v2173 = vpop.f32.mrf.mxu0
  %2174 = vmatprep.mubr.bf16.mxu0 %v1247
  %2175 = vmatmul.mubr.bf16.gmra.mxu0 %v1246
  %v2176 = vpop.f32.mrf.mxu0
  %v2177 = vadd.f32 %v404, %v2176
  %v2178 = vpop.f32.mrf.mxu0
  %v2179 = vpop.f32.mrf.mxu0
  %v2180 = vadd.f32 %v404, %v2179
  %v2181 = vpop.f32.mrf.mxu0
  %2182 = vmatprep.mubr.bf16.mxu0 %v1255
  %2183 = vmatmul.mubr.bf16.gmra.mxu0 %v1254
  %v2184 = vpop.f32.mrf.mxu0
  %v2185 = vadd.f32 %v404, %v2184
  %v2186 = vpop.f32.mrf.mxu0
  %v2187 = vpop.f32.mrf.mxu0
  %v2188 = vadd.f32 %v404, %v2187
  %v2189 = vpop.f32.mrf.mxu0
  %2190 = vmatprep.mubr.bf16.mxu0 %v1263
  %2191 = vmatmul.mubr.bf16.gmra.mxu0 %v1262
  %v2192 = vpop.f32.mrf.mxu0
  %v2193 = vadd.f32 %v404, %v2192
  %v2194 = vpop.f32.mrf.mxu0
  %v2195 = vpop.f32.mrf.mxu0
  %v2196 = vadd.f32 %v404, %v2195
  %v2197 = vpop.f32.mrf.mxu0
  %2198 = vmatprep.mubr.bf16.mxu0 %v1271
  %2199 = vmatmul.mubr.bf16.gmra.mxu0 %v1270
  %v2200 = vpop.f32.mrf.mxu0
  %v2201 = vadd.f32 %v404, %v2200
  %v2202 = vpop.f32.mrf.mxu0
  %v2203 = vpop.f32.mrf.mxu0
  %v2204 = vadd.f32 %v404, %v2203
  %v2205 = vpop.f32.mrf.mxu0
  %2206 = vmatprep.mubr.bf16.mxu0 %v1279
  %2207 = vmatmul.mubr.bf16.gmra.mxu0 %v1278
  %v2208 = vpop.f32.mrf.mxu0
  %v2209 = vadd.f32 %v404, %v2208
  %v2210 = vpop.f32.mrf.mxu0
  %v2211 = vpop.f32.mrf.mxu0
  %v2212 = vadd.f32 %v404, %v2211
  %v2213 = vpop.f32.mrf.mxu0
  %2214 = vmatprep.mubr.bf16.mxu0 %v1287
  %2215 = vmatmul.mubr.bf16.gmra.mxu0 %v1286
  %v2216 = vpop.f32.mrf.mxu0
  %v2217 = vadd.f32 %v404, %v2216
  %v2218 = vpop.f32.mrf.mxu0
  %v2219 = vpop.f32.mrf.mxu0
  %v2220 = vadd.f32 %v404, %v2219
  %v2221 = vpop.f32.mrf.mxu0
  %2222 = vmatprep.mubr.bf16.mxu0 %v1295
  %2223 = vmatmul.mubr.bf16.gmra.mxu0 %v1294
  %v2224 = vpop.f32.mrf.mxu0
  %v2225 = vadd.f32 %v404, %v2224
  %v2226 = vpop.f32.mrf.mxu0
  %v2227 = vpop.f32.mrf.mxu0
  %v2228 = vadd.f32 %v404, %v2227
  %v2229 = vpop.f32.mrf.mxu0
  %2230 = vmatprep.mubr.bf16.mxu0 %v1303
  %2231 = vmatmul.mubr.bf16.gmra.mxu0 %v1302
  %v2232 = vpop.f32.mrf.mxu0
  %v2233 = vadd.f32 %v404, %v2232
  %v2234 = vpop.f32.mrf.mxu0
  %v2235 = vpop.f32.mrf.mxu0
  %v2236 = vadd.f32 %v404, %v2235
  %v2237 = vpop.f32.mrf.mxu0
  %2238 = vmatprep.mubr.bf16.mxu0 %v1311
  %2239 = vmatmul.mubr.bf16.gmra.mxu0 %v1310
  %v2240 = vpop.f32.mrf.mxu0
  %v2241 = vadd.f32 %v404, %v2240
  %v2242 = vpop.f32.mrf.mxu0
  %v2243 = vpop.f32.mrf.mxu0
  %v2244 = vadd.f32 %v404, %v2243
  %v2245 = vpop.f32.mrf.mxu0
  %2246 = vmatprep.mubr.bf16.mxu0 %v1319
  %2247 = vmatmul.mubr.bf16.gmra.mxu0 %v1318
  %v2248 = vpop.f32.mrf.mxu0
  %v2249 = vadd.f32 %v404, %v2248
  %v2250 = vpop.f32.mrf.mxu0
  %v2251 = vpop.f32.mrf.mxu0
  %v2252 = vadd.f32 %v404, %v2251
  %v2253 = vpop.f32.mrf.mxu0
  %2254 = vmatprep.mubr.bf16.mxu0 %v1327
  %2255 = vmatmul.mubr.bf16.gmra.mxu0 %v1326
  %v2256 = vpop.f32.mrf.mxu0
  %v2257 = vadd.f32 %v404, %v2256
  %v2258 = vpop.f32.mrf.mxu0
  %v2259 = vpop.f32.mrf.mxu0
  %v2260 = vadd.f32 %v404, %v2259
  %v2261 = vpop.f32.mrf.mxu0
  %2262 = vmatprep.mubr.bf16.mxu0 %v1335
  %2263 = vmatmul.mubr.bf16.gmra.mxu0 %v1334
  %v2264 = vpop.f32.mrf.mxu0
  %v2265 = vadd.f32 %v404, %v2264
  %v2266 = vpop.f32.mrf.mxu0
  %v2267 = vpop.f32.mrf.mxu0
  %v2268 = vadd.f32 %v404, %v2267
  %v2269 = vpop.f32.mrf.mxu0
  %2270 = vmatprep.mubr.bf16.mxu0 %v1343
  %2271 = vmatmul.mubr.bf16.gmra.mxu0 %v1342
  %v2272 = vpop.f32.mrf.mxu0
  %v2273 = vadd.f32 %v404, %v2272
  %v2274 = vpop.f32.mrf.mxu0
  %v2275 = vpop.f32.mrf.mxu0
  %v2276 = vadd.f32 %v404, %v2275
  %v2277 = vpop.f32.mrf.mxu0
  %2278 = vmatprep.mubr.bf16.mxu0 %v1351
  %2279 = vmatmul.mubr.bf16.gmra.mxu0 %v1350
  %v2280 = vpop.f32.mrf.mxu0
  %v2281 = vadd.f32 %v404, %v2280
  %v2282 = vpop.f32.mrf.mxu0
  %v2283 = vpop.f32.mrf.mxu0
  %v2284 = vadd.f32 %v404, %v2283
  %v2285 = vpop.f32.mrf.mxu0
  %2286 = vmatprep.mubr.bf16.mxu0 %v1359
  %2287 = vmatmul.mubr.bf16.gmra.mxu0 %v1358
  %v2288 = vpop.f32.mrf.mxu0
  %v2289 = vadd.f32 %v404, %v2288
  %v2290 = vpop.f32.mrf.mxu0
  %v2291 = vpop.f32.mrf.mxu0
  %v2292 = vadd.f32 %v404, %v2291
  %v2293 = vpop.f32.mrf.mxu0
  %2294 = vmatprep.mubr.bf16.mxu0 %v1367
  %2295 = vmatmul.mubr.bf16.gmra.mxu0 %v1366
  %v2296 = vpop.f32.mrf.mxu0
  %v2297 = vadd.f32 %v404, %v2296
  %v2298 = vpop.f32.mrf.mxu0
  %v2299 = vpop.f32.mrf.mxu0
  %v2300 = vadd.f32 %v404, %v2299
  %v2301 = vpop.f32.mrf.mxu0
  %2302 = vmatprep.mubr.bf16.mxu0 %v1375
  %2303 = vmatmul.mubr.bf16.gmra.mxu0 %v1374
  %v2304 = vpop.f32.mrf.mxu0
  %v2305 = vadd.f32 %v404, %v2304
  %v2306 = vpop.f32.mrf.mxu0
  %v2307 = vpop.f32.mrf.mxu0
  %v2308 = vadd.f32 %v404, %v2307
  %v2309 = vpop.f32.mrf.mxu0
  %2310 = vmatprep.mubr.bf16.mxu0 %v1383
  %2311 = vmatmul.mubr.bf16.gmra.mxu0 %v1382
  %v2312 = vpop.f32.mrf.mxu0
  %v2313 = vadd.f32 %v404, %v2312
  %v2314 = vpop.f32.mrf.mxu0
  %v2315 = vpop.f32.mrf.mxu0
  %v2316 = vadd.f32 %v404, %v2315
  %v2317 = vpop.f32.mrf.mxu0
  %2318 = vmatprep.mubr.bf16.mxu0 %v1391
  %2319 = vmatmul.mubr.bf16.gmra.mxu0 %v1390
  %v2320 = vpop.f32.mrf.mxu0
  %v2321 = vadd.f32 %v404, %v2320
  %v2322 = vpop.f32.mrf.mxu0
  %v2323 = vpop.f32.mrf.mxu0
  %v2324 = vadd.f32 %v404, %v2323
  %v2325 = vpop.f32.mrf.mxu0
  %2326 = vmatprep.mubr.bf16.mxu0 %v1399
  %2327 = vmatmul.mubr.bf16.gmra.mxu0 %v1398
  %v2328 = vpop.f32.mrf.mxu0
  %v2329 = vadd.f32 %v404, %v2328
  %v2330 = vpop.f32.mrf.mxu0
  %v2331 = vpop.f32.mrf.mxu0
  %v2332 = vadd.f32 %v404, %v2331
  %v2333 = vpop.f32.mrf.mxu0
  %2334 = vmatprep.mubr.bf16.mxu0 %v1407
  %2335 = vmatmul.mubr.bf16.gmra.mxu0 %v1406
  %v2336 = vpop.f32.mrf.mxu0
  %v2337 = vadd.f32 %v404, %v2336
  %v2338 = vpop.f32.mrf.mxu0
  %v2339 = vpop.f32.mrf.mxu0
  %v2340 = vadd.f32 %v404, %v2339
  %v2341 = vpop.f32.mrf.mxu0
  %2342 = vmatprep.mubr.bf16.mxu0 %v1415
  %2343 = vmatmul.mubr.bf16.gmra.mxu0 %v1414
  %v2344 = vpop.f32.mrf.mxu0
  %v2345 = vadd.f32 %v404, %v2344
  %v2346 = vpop.f32.mrf.mxu0
  %v2347 = vpop.f32.mrf.mxu0
  %v2348 = vadd.f32 %v404, %v2347
  %v2349 = vpop.f32.mrf.mxu0
  %2350 = vmatprep.mubr.bf16.mxu0 %v1423
  %2351 = vmatmul.mubr.bf16.gmra.mxu0 %v1422
  %v2352 = vpop.f32.mrf.mxu0
  %v2353 = vadd.f32 %v404, %v2352
  %v2354 = vpop.f32.mrf.mxu0
  %v2355 = vpop.f32.mrf.mxu0
  %v2356 = vadd.f32 %v404, %v2355
  %v2357 = vpop.f32.mrf.mxu0
  %2358 = vdwg.mxu0
  %2359 = vmatprep.subr.bf16.mxu0 0
  %2360 = vmatpush1.bf16.msra.mxu0 %v1965
  %2361 = vmatprep.subr.bf16.mxu0 0
  %2362 = vmatpush1.bf16.msra.mxu0 %v1964
  %2363 = vmatprep.subr.bf16.mxu0 0
  %2364 = vmatpush1.bf16.msra.mxu0 %v1963
  %2365 = vmatprep.subr.bf16.mxu0 0
  %2366 = vmatpush1.bf16.msra.mxu0 %v1962
  %2367 = vmatprep.subr.bf16.mxu0 0
  %2368 = vmatpush1.bf16.msra.mxu0 %v1961
  %2369 = vmatprep.subr.bf16.mxu0 0
  %2370 = vmatpush1.bf16.msra.mxu0 %v1960
  %2371 = vmatprep.subr.bf16.mxu0 0
  %2372 = vmatpush1.bf16.msra.mxu0 %v1959
  %2373 = vmatprep.subr.bf16.mxu0 0
  %2374 = vmatpush1.bf16.msra.mxu0 %v1958
  %2375 = vmatprep.subr.bf16.mxu0 0
  %2376 = vmatpush2.bf16.msra.mxu0 %v1973
  %2377 = vmatprep.subr.bf16.mxu0 0
  %2378 = vmatpush2.bf16.msra.mxu0 %v1972
  %2379 = vmatprep.subr.bf16.mxu0 0
  %2380 = vmatpush2.bf16.msra.mxu0 %v1971
  %2381 = vmatprep.subr.bf16.mxu0 0
  %2382 = vmatpush2.bf16.msra.mxu0 %v1970
  %2383 = vmatprep.subr.bf16.mxu0 0
  %2384 = vmatpush2.bf16.msra.mxu0 %v1969
  %2385 = vmatprep.subr.bf16.mxu0 0
  %2386 = vmatpush2.bf16.msra.mxu0 %v1968
  %2387 = vmatprep.subr.bf16.mxu0 0
  %2388 = vmatpush2.bf16.msra.mxu0 %v1967
  %2389 = vmatprep.subr.bf16.mxu0 0
  %2390 = vmatpush2.bf16.msra.mxu0 %v1966
  %2391 = vmatprep.mubr.bf16.mxu0 %v1177
  %2392 = vmatmul.mubr.bf16.gmra.mxu0 %v1176
  %v2393 = vpop.f32.mrf.mxu0
  %v2394 = vadd.f32 %v2105, %v2393
  %v2395 = vpop.f32.mrf.mxu0
  %v2396 = vpop.f32.mrf.mxu0
  %v2397 = vadd.f32 %v2108, %v2396
  %v2398 = vpop.f32.mrf.mxu0
  %2399 = vmatprep.mubr.bf16.mxu0 %v1185
  %2400 = vmatmul.mubr.bf16.gmra.mxu0 %v1184
  %v2401 = vpop.f32.mrf.mxu0
  %v2402 = vadd.f32 %v2113, %v2401
  %v2403 = vpop.f32.mrf.mxu0
  %v2404 = vpop.f32.mrf.mxu0
  %v2405 = vadd.f32 %v2116, %v2404
  %v2406 = vpop.f32.mrf.mxu0
  %2407 = vmatprep.mubr.bf16.mxu0 %v1193
  %2408 = vmatmul.mubr.bf16.gmra.mxu0 %v1192
  %v2409 = vpop.f32.mrf.mxu0
  %v2410 = vadd.f32 %v2121, %v2409
  %v2411 = vpop.f32.mrf.mxu0
  %v2412 = vpop.f32.mrf.mxu0
  %v2413 = vadd.f32 %v2124, %v2412
  %v2414 = vpop.f32.mrf.mxu0
  %2415 = vmatprep.mubr.bf16.mxu0 %v1201
  %2416 = vmatmul.mubr.bf16.gmra.mxu0 %v1200
  %v2417 = vpop.f32.mrf.mxu0
  %v2418 = vadd.f32 %v2129, %v2417
  %v2419 = vpop.f32.mrf.mxu0
  %v2420 = vpop.f32.mrf.mxu0
  %v2421 = vadd.f32 %v2132, %v2420
  %v2422 = vpop.f32.mrf.mxu0
  %2423 = vmatprep.mubr.bf16.mxu0 %v1209
  %2424 = vmatmul.mubr.bf16.gmra.mxu0 %v1208
  %v2425 = vpop.f32.mrf.mxu0
  %v2426 = vadd.f32 %v2137, %v2425
  %v2427 = vpop.f32.mrf.mxu0
  %v2428 = vpop.f32.mrf.mxu0
  %v2429 = vadd.f32 %v2140, %v2428
  %v2430 = vpop.f32.mrf.mxu0
  %2431 = vmatprep.mubr.bf16.mxu0 %v1217
  %2432 = vmatmul.mubr.bf16.gmra.mxu0 %v1216
  %v2433 = vpop.f32.mrf.mxu0
  %v2434 = vadd.f32 %v2145, %v2433
  %v2435 = vpop.f32.mrf.mxu0
  %v2436 = vpop.f32.mrf.mxu0
  %v2437 = vadd.f32 %v2148, %v2436
  %v2438 = vpop.f32.mrf.mxu0
  %2439 = vmatprep.mubr.bf16.mxu0 %v1225
  %2440 = vmatmul.mubr.bf16.gmra.mxu0 %v1224
  %v2441 = vpop.f32.mrf.mxu0
  %v2442 = vadd.f32 %v2153, %v2441
  %v2443 = vpop.f32.mrf.mxu0
  %v2444 = vpop.f32.mrf.mxu0
  %v2445 = vadd.f32 %v2156, %v2444
  %v2446 = vpop.f32.mrf.mxu0
  %2447 = vmatprep.mubr.bf16.mxu0 %v1233
  %2448 = vmatmul.mubr.bf16.gmra.mxu0 %v1232
  %v2449 = vpop.f32.mrf.mxu0
  %v2450 = vadd.f32 %v2161, %v2449
  %v2451 = vpop.f32.mrf.mxu0
  %v2452 = vpop.f32.mrf.mxu0
  %v2453 = vadd.f32 %v2164, %v2452
  %v2454 = vpop.f32.mrf.mxu0
  %2455 = vmatprep.mubr.bf16.mxu0 %v1241
  %2456 = vmatmul.mubr.bf16.gmra.mxu0 %v1240
  %v2457 = vpop.f32.mrf.mxu0
  %v2458 = vadd.f32 %v2169, %v2457
  %v2459 = vpop.f32.mrf.mxu0
  %v2460 = vpop.f32.mrf.mxu0
  %v2461 = vadd.f32 %v2172, %v2460
  %v2462 = vpop.f32.mrf.mxu0
  %2463 = vmatprep.mubr.bf16.mxu0 %v1249
  %2464 = vmatmul.mubr.bf16.gmra.mxu0 %v1248
  %v2465 = vpop.f32.mrf.mxu0
  %v2466 = vadd.f32 %v2177, %v2465
  %v2467 = vpop.f32.mrf.mxu0
  %v2468 = vpop.f32.mrf.mxu0
  %v2469 = vadd.f32 %v2180, %v2468
  %v2470 = vpop.f32.mrf.mxu0
  %2471 = vmatprep.mubr.bf16.mxu0 %v1257
  %2472 = vmatmul.mubr.bf16.gmra.mxu0 %v1256
  %v2473 = vpop.f32.mrf.mxu0
  %v2474 = vadd.f32 %v2185, %v2473
  %v2475 = vpop.f32.mrf.mxu0
  %v2476 = vpop.f32.mrf.mxu0
  %v2477 = vadd.f32 %v2188, %v2476
  %v2478 = vpop.f32.mrf.mxu0
  %2479 = vmatprep.mubr.bf16.mxu0 %v1265
  %2480 = vmatmul.mubr.bf16.gmra.mxu0 %v1264
  %v2481 = vpop.f32.mrf.mxu0
  %v2482 = vadd.f32 %v2193, %v2481
  %v2483 = vpop.f32.mrf.mxu0
  %v2484 = vpop.f32.mrf.mxu0
  %v2485 = vadd.f32 %v2196, %v2484
  %v2486 = vpop.f32.mrf.mxu0
  %2487 = vmatprep.mubr.bf16.mxu0 %v1273
  %2488 = vmatmul.mubr.bf16.gmra.mxu0 %v1272
  %v2489 = vpop.f32.mrf.mxu0
  %v2490 = vadd.f32 %v2201, %v2489
  %v2491 = vpop.f32.mrf.mxu0
  %v2492 = vpop.f32.mrf.mxu0
  %v2493 = vadd.f32 %v2204, %v2492
  %v2494 = vpop.f32.mrf.mxu0
  %2495 = vmatprep.mubr.bf16.mxu0 %v1281
  %2496 = vmatmul.mubr.bf16.gmra.mxu0 %v1280
  %v2497 = vpop.f32.mrf.mxu0
  %v2498 = vadd.f32 %v2209, %v2497
  %v2499 = vpop.f32.mrf.mxu0
  %v2500 = vpop.f32.mrf.mxu0
  %v2501 = vadd.f32 %v2212, %v2500
  %v2502 = vpop.f32.mrf.mxu0
  %2503 = vmatprep.mubr.bf16.mxu0 %v1289
  %2504 = vmatmul.mubr.bf16.gmra.mxu0 %v1288
  %v2505 = vpop.f32.mrf.mxu0
  %v2506 = vadd.f32 %v2217, %v2505
  %v2507 = vpop.f32.mrf.mxu0
  %v2508 = vpop.f32.mrf.mxu0
  %v2509 = vadd.f32 %v2220, %v2508
  %v2510 = vpop.f32.mrf.mxu0
  %2511 = vmatprep.mubr.bf16.mxu0 %v1297
  %2512 = vmatmul.mubr.bf16.gmra.mxu0 %v1296
  %v2513 = vpop.f32.mrf.mxu0
  %v2514 = vadd.f32 %v2225, %v2513
  %v2515 = vpop.f32.mrf.mxu0
  %v2516 = vpop.f32.mrf.mxu0
  %v2517 = vadd.f32 %v2228, %v2516
  %v2518 = vpop.f32.mrf.mxu0
  %2519 = vmatprep.mubr.bf16.mxu0 %v1305
  %2520 = vmatmul.mubr.bf16.gmra.mxu0 %v1304
  %v2521 = vpop.f32.mrf.mxu0
  %v2522 = vadd.f32 %v2233, %v2521
  %v2523 = vpop.f32.mrf.mxu0
  %v2524 = vpop.f32.mrf.mxu0
  %v2525 = vadd.f32 %v2236, %v2524
  %v2526 = vpop.f32.mrf.mxu0
  %2527 = vmatprep.mubr.bf16.mxu0 %v1313
  %2528 = vmatmul.mubr.bf16.gmra.mxu0 %v1312
  %v2529 = vpop.f32.mrf.mxu0
  %v2530 = vadd.f32 %v2241, %v2529
  %v2531 = vpop.f32.mrf.mxu0
  %v2532 = vpop.f32.mrf.mxu0
  %v2533 = vadd.f32 %v2244, %v2532
  %v2534 = vpop.f32.mrf.mxu0
  %2535 = vmatprep.mubr.bf16.mxu0 %v1321
  %2536 = vmatmul.mubr.bf16.gmra.mxu0 %v1320
  %v2537 = vpop.f32.mrf.mxu0
  %v2538 = vadd.f32 %v2249, %v2537
  %v2539 = vpop.f32.mrf.mxu0
  %v2540 = vpop.f32.mrf.mxu0
  %v2541 = vadd.f32 %v2252, %v2540
  %v2542 = vpop.f32.mrf.mxu0
  %2543 = vmatprep.mubr.bf16.mxu0 %v1329
  %2544 = vmatmul.mubr.bf16.gmra.mxu0 %v1328
  %v2545 = vpop.f32.mrf.mxu0
  %v2546 = vadd.f32 %v2257, %v2545
  %v2547 = vpop.f32.mrf.mxu0
  %v2548 = vpop.f32.mrf.mxu0
  %v2549 = vadd.f32 %v2260, %v2548
  %v2550 = vpop.f32.mrf.mxu0
  %2551 = vmatprep.mubr.bf16.mxu0 %v1337
  %2552 = vmatmul.mubr.bf16.gmra.mxu0 %v1336
  %v2553 = vpop.f32.mrf.mxu0
  %v2554 = vadd.f32 %v2265, %v2553
  %v2555 = vpop.f32.mrf.mxu0
  %v2556 = vpop.f32.mrf.mxu0
  %v2557 = vadd.f32 %v2268, %v2556
  %v2558 = vpop.f32.mrf.mxu0
  %2559 = vmatprep.mubr.bf16.mxu0 %v1345
  %2560 = vmatmul.mubr.bf16.gmra.mxu0 %v1344
  %v2561 = vpop.f32.mrf.mxu0
  %v2562 = vadd.f32 %v2273, %v2561
  %v2563 = vpop.f32.mrf.mxu0
  %v2564 = vpop.f32.mrf.mxu0
  %v2565 = vadd.f32 %v2276, %v2564
  %v2566 = vpop.f32.mrf.mxu0
  %2567 = vmatprep.mubr.bf16.mxu0 %v1353
  %2568 = vmatmul.mubr.bf16.gmra.mxu0 %v1352
  %v2569 = vpop.f32.mrf.mxu0
  %v2570 = vadd.f32 %v2281, %v2569
  %v2571 = vpop.f32.mrf.mxu0
  %v2572 = vpop.f32.mrf.mxu0
  %v2573 = vadd.f32 %v2284, %v2572
  %v2574 = vpop.f32.mrf.mxu0
  %2575 = vmatprep.mubr.bf16.mxu0 %v1361
  %2576 = vmatmul.mubr.bf16.gmra.mxu0 %v1360
  %v2577 = vpop.f32.mrf.mxu0
  %v2578 = vadd.f32 %v2289, %v2577
  %v2579 = vpop.f32.mrf.mxu0
  %v2580 = vpop.f32.mrf.mxu0
  %v2581 = vadd.f32 %v2292, %v2580
  %v2582 = vpop.f32.mrf.mxu0
  %2583 = vmatprep.mubr.bf16.mxu0 %v1369
  %2584 = vmatmul.mubr.bf16.gmra.mxu0 %v1368
  %v2585 = vpop.f32.mrf.mxu0
  %v2586 = vadd.f32 %v2297, %v2585
  %v2587 = vpop.f32.mrf.mxu0
  %v2588 = vpop.f32.mrf.mxu0
  %v2589 = vadd.f32 %v2300, %v2588
  %v2590 = vpop.f32.mrf.mxu0
  %2591 = vmatprep.mubr.bf16.mxu0 %v1377
  %2592 = vmatmul.mubr.bf16.gmra.mxu0 %v1376
  %v2593 = vpop.f32.mrf.mxu0
  %v2594 = vadd.f32 %v2305, %v2593
  %v2595 = vpop.f32.mrf.mxu0
  %v2596 = vpop.f32.mrf.mxu0
  %v2597 = vadd.f32 %v2308, %v2596
  %v2598 = vpop.f32.mrf.mxu0
  %2599 = vmatprep.mubr.bf16.mxu0 %v1385
  %2600 = vmatmul.mubr.bf16.gmra.mxu0 %v1384
  %v2601 = vpop.f32.mrf.mxu0
  %v2602 = vadd.f32 %v2313, %v2601
  %v2603 = vpop.f32.mrf.mxu0
  %v2604 = vpop.f32.mrf.mxu0
  %v2605 = vadd.f32 %v2316, %v2604
  %v2606 = vpop.f32.mrf.mxu0
  %2607 = vmatprep.mubr.bf16.mxu0 %v1393
  %2608 = vmatmul.mubr.bf16.gmra.mxu0 %v1392
  %v2609 = vpop.f32.mrf.mxu0
  %v2610 = vadd.f32 %v2321, %v2609
  %v2611 = vpop.f32.mrf.mxu0
  %v2612 = vpop.f32.mrf.mxu0
  %v2613 = vadd.f32 %v2324, %v2612
  %v2614 = vpop.f32.mrf.mxu0
  %2615 = vmatprep.mubr.bf16.mxu0 %v1401
  %2616 = vmatmul.mubr.bf16.gmra.mxu0 %v1400
  %v2617 = vpop.f32.mrf.mxu0
  %v2618 = vadd.f32 %v2329, %v2617
  %v2619 = vpop.f32.mrf.mxu0
  %v2620 = vpop.f32.mrf.mxu0
  %v2621 = vadd.f32 %v2332, %v2620
  %v2622 = vpop.f32.mrf.mxu0
  %2623 = vmatprep.mubr.bf16.mxu0 %v1409
  %2624 = vmatmul.mubr.bf16.gmra.mxu0 %v1408
  %v2625 = vpop.f32.mrf.mxu0
  %v2626 = vadd.f32 %v2337, %v2625
  %v2627 = vpop.f32.mrf.mxu0
  %v2628 = vpop.f32.mrf.mxu0
  %v2629 = vadd.f32 %v2340, %v2628
  %v2630 = vpop.f32.mrf.mxu0
  %2631 = vmatprep.mubr.bf16.mxu0 %v1417
  %2632 = vmatmul.mubr.bf16.gmra.mxu0 %v1416
  %v2633 = vpop.f32.mrf.mxu0
  %v2634 = vadd.f32 %v2345, %v2633
  %v2635 = vpop.f32.mrf.mxu0
  %v2636 = vpop.f32.mrf.mxu0
  %v2637 = vadd.f32 %v2348, %v2636
  %v2638 = vpop.f32.mrf.mxu0
  %2639 = vmatprep.mubr.bf16.mxu0 %v1425
  %2640 = vmatmul.mubr.bf16.gmra.mxu0 %v1424
  %v2641 = vpop.f32.mrf.mxu0
  %v2642 = vadd.f32 %v2353, %v2641
  %v2643 = vpop.f32.mrf.mxu0
  %v2644 = vpop.f32.mrf.mxu0
  %v2645 = vadd.f32 %v2356, %v2644
  %v2646 = vpop.f32.mrf.mxu0
  %2647 = vdwg.mxu0
  %2648 = vmatprep.subr.bf16.mxu0 0
  %2649 = vmatpush1.bf16.msra.mxu0 %v1981
  %2650 = vmatprep.subr.bf16.mxu0 0
  %2651 = vmatpush1.bf16.msra.mxu0 %v1980
  %2652 = vmatprep.subr.bf16.mxu0 0
  %2653 = vmatpush1.bf16.msra.mxu0 %v1979
  %2654 = vmatprep.subr.bf16.mxu0 0
  %2655 = vmatpush1.bf16.msra.mxu0 %v1978
  %2656 = vmatprep.subr.bf16.mxu0 0
  %2657 = vmatpush1.bf16.msra.mxu0 %v1977
  %2658 = vmatprep.subr.bf16.mxu0 0
  %2659 = vmatpush1.bf16.msra.mxu0 %v1976
  %2660 = vmatprep.subr.bf16.mxu0 0
  %2661 = vmatpush1.bf16.msra.mxu0 %v1975
  %2662 = vmatprep.subr.bf16.mxu0 0
  %2663 = vmatpush1.bf16.msra.mxu0 %v1974
  %2664 = vmatprep.subr.bf16.mxu0 0
  %2665 = vmatpush2.bf16.msra.mxu0 %v1989
  %2666 = vmatprep.subr.bf16.mxu0 0
  %2667 = vmatpush2.bf16.msra.mxu0 %v1988
  %2668 = vmatprep.subr.bf16.mxu0 0
  %2669 = vmatpush2.bf16.msra.mxu0 %v1987
  %2670 = vmatprep.subr.bf16.mxu0 0
  %2671 = vmatpush2.bf16.msra.mxu0 %v1986
  %2672 = vmatprep.subr.bf16.mxu0 0
  %2673 = vmatpush2.bf16.msra.mxu0 %v1985
  %2674 = vmatprep.subr.bf16.mxu0 0
  %2675 = vmatpush2.bf16.msra.mxu0 %v1984
  %2676 = vmatprep.subr.bf16.mxu0 0
  %2677 = vmatpush2.bf16.msra.mxu0 %v1983
  %2678 = vmatprep.subr.bf16.mxu0 0
  %2679 = vmatpush2.bf16.msra.mxu0 %v1982
  %2680 = vmatprep.mubr.bf16.mxu0 %v1179
  %2681 = vmatmul.mubr.bf16.gmra.mxu0 %v1178
  %v2682 = vpop.f32.mrf.mxu0
  %v2683 = vadd.f32 %v2394, %v2682
  %v2684 = vpop.f32.mrf.mxu0
  %v2685 = vpop.f32.mrf.mxu0
  %v2686 = vadd.f32 %v2397, %v2685
  %v2687 = vpop.f32.mrf.mxu0
  %2688 = vmatprep.mubr.bf16.mxu0 %v1187
  %2689 = vmatmul.mubr.bf16.gmra.mxu0 %v1186
  %v2690 = vpop.f32.mrf.mxu0
  %v2691 = vadd.f32 %v2402, %v2690
  %v2692 = vpop.f32.mrf.mxu0
  %v2693 = vpop.f32.mrf.mxu0
  %v2694 = vadd.f32 %v2405, %v2693
  %v2695 = vpop.f32.mrf.mxu0
  %2696 = vmatprep.mubr.bf16.mxu0 %v1195
  %2697 = vmatmul.mubr.bf16.gmra.mxu0 %v1194
  %v2698 = vpop.f32.mrf.mxu0
  %v2699 = vadd.f32 %v2410, %v2698
  %v2700 = vpop.f32.mrf.mxu0
  %v2701 = vpop.f32.mrf.mxu0
  %v2702 = vadd.f32 %v2413, %v2701
  %v2703 = vpop.f32.mrf.mxu0
  %2704 = vmatprep.mubr.bf16.mxu0 %v1203
  %2705 = vmatmul.mubr.bf16.gmra.mxu0 %v1202
  %v2706 = vpop.f32.mrf.mxu0
  %v2707 = vadd.f32 %v2418, %v2706
  %v2708 = vpop.f32.mrf.mxu0
  %v2709 = vpop.f32.mrf.mxu0
  %v2710 = vadd.f32 %v2421, %v2709
  %v2711 = vpop.f32.mrf.mxu0
  %2712 = vmatprep.mubr.bf16.mxu0 %v1211
  %2713 = vmatmul.mubr.bf16.gmra.mxu0 %v1210
  %v2714 = vpop.f32.mrf.mxu0
  %v2715 = vadd.f32 %v2426, %v2714
  %v2716 = vpop.f32.mrf.mxu0
  %v2717 = vpop.f32.mrf.mxu0
  %v2718 = vadd.f32 %v2429, %v2717
  %v2719 = vpop.f32.mrf.mxu0
  %2720 = vmatprep.mubr.bf16.mxu0 %v1219
  %2721 = vmatmul.mubr.bf16.gmra.mxu0 %v1218
  %v2722 = vpop.f32.mrf.mxu0
  %v2723 = vadd.f32 %v2434, %v2722
  %v2724 = vpop.f32.mrf.mxu0
  %v2725 = vpop.f32.mrf.mxu0
  %v2726 = vadd.f32 %v2437, %v2725
  %v2727 = vpop.f32.mrf.mxu0
  %2728 = vmatprep.mubr.bf16.mxu0 %v1227
  %2729 = vmatmul.mubr.bf16.gmra.mxu0 %v1226
  %v2730 = vpop.f32.mrf.mxu0
  %v2731 = vadd.f32 %v2442, %v2730
  %v2732 = vpop.f32.mrf.mxu0
  %v2733 = vpop.f32.mrf.mxu0
  %v2734 = vadd.f32 %v2445, %v2733
  %v2735 = vpop.f32.mrf.mxu0
  %2736 = vmatprep.mubr.bf16.mxu0 %v1235
  %2737 = vmatmul.mubr.bf16.gmra.mxu0 %v1234
  %v2738 = vpop.f32.mrf.mxu0
  %v2739 = vadd.f32 %v2450, %v2738
  %v2740 = vpop.f32.mrf.mxu0
  %v2741 = vpop.f32.mrf.mxu0
  %v2742 = vadd.f32 %v2453, %v2741
  %v2743 = vpop.f32.mrf.mxu0
  %2744 = vmatprep.mubr.bf16.mxu0 %v1243
  %2745 = vmatmul.mubr.bf16.gmra.mxu0 %v1242
  %v2746 = vpop.f32.mrf.mxu0
  %v2747 = vadd.f32 %v2458, %v2746
  %v2748 = vpop.f32.mrf.mxu0
  %v2749 = vpop.f32.mrf.mxu0
  %v2750 = vadd.f32 %v2461, %v2749
  %v2751 = vpop.f32.mrf.mxu0
  %2752 = vmatprep.mubr.bf16.mxu0 %v1251
  %2753 = vmatmul.mubr.bf16.gmra.mxu0 %v1250
  %v2754 = vpop.f32.mrf.mxu0
  %v2755 = vadd.f32 %v2466, %v2754
  %v2756 = vpop.f32.mrf.mxu0
  %v2757 = vpop.f32.mrf.mxu0
  %v2758 = vadd.f32 %v2469, %v2757
  %v2759 = vpop.f32.mrf.mxu0
  %2760 = vmatprep.mubr.bf16.mxu0 %v1259
  %2761 = vmatmul.mubr.bf16.gmra.mxu0 %v1258
  %v2762 = vpop.f32.mrf.mxu0
  %v2763 = vadd.f32 %v2474, %v2762
  %v2764 = vpop.f32.mrf.mxu0
  %v2765 = vpop.f32.mrf.mxu0
  %v2766 = vadd.f32 %v2477, %v2765
  %v2767 = vpop.f32.mrf.mxu0
  %2768 = vmatprep.mubr.bf16.mxu0 %v1267
  %2769 = vmatmul.mubr.bf16.gmra.mxu0 %v1266
  %v2770 = vpop.f32.mrf.mxu0
  %v2771 = vadd.f32 %v2482, %v2770
  %v2772 = vpop.f32.mrf.mxu0
  %v2773 = vpop.f32.mrf.mxu0
  %v2774 = vadd.f32 %v2485, %v2773
  %v2775 = vpop.f32.mrf.mxu0
  %2776 = vmatprep.mubr.bf16.mxu0 %v1275
  %2777 = vmatmul.mubr.bf16.gmra.mxu0 %v1274
  %v2778 = vpop.f32.mrf.mxu0
  %v2779 = vadd.f32 %v2490, %v2778
  %v2780 = vpop.f32.mrf.mxu0
  %v2781 = vpop.f32.mrf.mxu0
  %v2782 = vadd.f32 %v2493, %v2781
  %v2783 = vpop.f32.mrf.mxu0
  %2784 = vmatprep.mubr.bf16.mxu0 %v1283
  %2785 = vmatmul.mubr.bf16.gmra.mxu0 %v1282
  %v2786 = vpop.f32.mrf.mxu0
  %v2787 = vadd.f32 %v2498, %v2786
  %v2788 = vpop.f32.mrf.mxu0
  %v2789 = vpop.f32.mrf.mxu0
  %v2790 = vadd.f32 %v2501, %v2789
  %v2791 = vpop.f32.mrf.mxu0
  %2792 = vmatprep.mubr.bf16.mxu0 %v1291
  %2793 = vmatmul.mubr.bf16.gmra.mxu0 %v1290
  %v2794 = vpop.f32.mrf.mxu0
  %v2795 = vadd.f32 %v2506, %v2794
  %v2796 = vpop.f32.mrf.mxu0
  %v2797 = vpop.f32.mrf.mxu0
  %v2798 = vadd.f32 %v2509, %v2797
  %v2799 = vpop.f32.mrf.mxu0
  %2800 = vmatprep.mubr.bf16.mxu0 %v1299
  %2801 = vmatmul.mubr.bf16.gmra.mxu0 %v1298
  %v2802 = vpop.f32.mrf.mxu0
  %v2803 = vadd.f32 %v2514, %v2802
  %v2804 = vpop.f32.mrf.mxu0
  %v2805 = vpop.f32.mrf.mxu0
  %v2806 = vadd.f32 %v2517, %v2805
  %v2807 = vpop.f32.mrf.mxu0
  %2808 = vmatprep.mubr.bf16.mxu0 %v1307
  %2809 = vmatmul.mubr.bf16.gmra.mxu0 %v1306
  %v2810 = vpop.f32.mrf.mxu0
  %v2811 = vadd.f32 %v2522, %v2810
  %v2812 = vpop.f32.mrf.mxu0
  %v2813 = vpop.f32.mrf.mxu0
  %v2814 = vadd.f32 %v2525, %v2813
  %v2815 = vpop.f32.mrf.mxu0
  %2816 = vmatprep.mubr.bf16.mxu0 %v1315
  %2817 = vmatmul.mubr.bf16.gmra.mxu0 %v1314
  %v2818 = vpop.f32.mrf.mxu0
  %v2819 = vadd.f32 %v2530, %v2818
  %v2820 = vpop.f32.mrf.mxu0
  %v2821 = vpop.f32.mrf.mxu0
  %v2822 = vadd.f32 %v2533, %v2821
  %v2823 = vpop.f32.mrf.mxu0
  %2824 = vmatprep.mubr.bf16.mxu0 %v1323
  %2825 = vmatmul.mubr.bf16.gmra.mxu0 %v1322
  %v2826 = vpop.f32.mrf.mxu0
  %v2827 = vadd.f32 %v2538, %v2826
  %v2828 = vpop.f32.mrf.mxu0
  %v2829 = vpop.f32.mrf.mxu0
  %v2830 = vadd.f32 %v2541, %v2829
  %v2831 = vpop.f32.mrf.mxu0
  %2832 = vmatprep.mubr.bf16.mxu0 %v1331
  %2833 = vmatmul.mubr.bf16.gmra.mxu0 %v1330
  %v2834 = vpop.f32.mrf.mxu0
  %v2835 = vadd.f32 %v2546, %v2834
  %v2836 = vpop.f32.mrf.mxu0
  %v2837 = vpop.f32.mrf.mxu0
  %v2838 = vadd.f32 %v2549, %v2837
  %v2839 = vpop.f32.mrf.mxu0
  %2840 = vmatprep.mubr.bf16.mxu0 %v1339
  %2841 = vmatmul.mubr.bf16.gmra.mxu0 %v1338
  %v2842 = vpop.f32.mrf.mxu0
  %v2843 = vadd.f32 %v2554, %v2842
  %v2844 = vpop.f32.mrf.mxu0
  %v2845 = vpop.f32.mrf.mxu0
  %v2846 = vadd.f32 %v2557, %v2845
  %v2847 = vpop.f32.mrf.mxu0
  %2848 = vmatprep.mubr.bf16.mxu0 %v1347
  %2849 = vmatmul.mubr.bf16.gmra.mxu0 %v1346
  %v2850 = vpop.f32.mrf.mxu0
  %v2851 = vadd.f32 %v2562, %v2850
  %v2852 = vpop.f32.mrf.mxu0
  %v2853 = vpop.f32.mrf.mxu0
  %v2854 = vadd.f32 %v2565, %v2853
  %v2855 = vpop.f32.mrf.mxu0
  %2856 = vmatprep.mubr.bf16.mxu0 %v1355
  %2857 = vmatmul.mubr.bf16.gmra.mxu0 %v1354
  %v2858 = vpop.f32.mrf.mxu0
  %v2859 = vadd.f32 %v2570, %v2858
  %v2860 = vpop.f32.mrf.mxu0
  %v2861 = vpop.f32.mrf.mxu0
  %v2862 = vadd.f32 %v2573, %v2861
  %v2863 = vpop.f32.mrf.mxu0
  %2864 = vmatprep.mubr.bf16.mxu0 %v1363
  %2865 = vmatmul.mubr.bf16.gmra.mxu0 %v1362
  %v2866 = vpop.f32.mrf.mxu0
  %v2867 = vadd.f32 %v2578, %v2866
  %v2868 = vpop.f32.mrf.mxu0
  %v2869 = vpop.f32.mrf.mxu0
  %v2870 = vadd.f32 %v2581, %v2869
  %v2871 = vpop.f32.mrf.mxu0
  %2872 = vmatprep.mubr.bf16.mxu0 %v1371
  %2873 = vmatmul.mubr.bf16.gmra.mxu0 %v1370
  %v2874 = vpop.f32.mrf.mxu0
  %v2875 = vadd.f32 %v2586, %v2874
  %v2876 = vpop.f32.mrf.mxu0
  %v2877 = vpop.f32.mrf.mxu0
  %v2878 = vadd.f32 %v2589, %v2877
  %v2879 = vpop.f32.mrf.mxu0
  %2880 = vmatprep.mubr.bf16.mxu0 %v1379
  %2881 = vmatmul.mubr.bf16.gmra.mxu0 %v1378
  %v2882 = vpop.f32.mrf.mxu0
  %v2883 = vadd.f32 %v2594, %v2882
  %v2884 = vpop.f32.mrf.mxu0
  %v2885 = vpop.f32.mrf.mxu0
  %v2886 = vadd.f32 %v2597, %v2885
  %v2887 = vpop.f32.mrf.mxu0
  %2888 = vmatprep.mubr.bf16.mxu0 %v1387
  %2889 = vmatmul.mubr.bf16.gmra.mxu0 %v1386
  %v2890 = vpop.f32.mrf.mxu0
  %v2891 = vadd.f32 %v2602, %v2890
  %v2892 = vpop.f32.mrf.mxu0
  %v2893 = vpop.f32.mrf.mxu0
  %v2894 = vadd.f32 %v2605, %v2893
  %v2895 = vpop.f32.mrf.mxu0
  %2896 = vmatprep.mubr.bf16.mxu0 %v1395
  %2897 = vmatmul.mubr.bf16.gmra.mxu0 %v1394
  %v2898 = vpop.f32.mrf.mxu0
  %v2899 = vadd.f32 %v2610, %v2898
  %v2900 = vpop.f32.mrf.mxu0
  %v2901 = vpop.f32.mrf.mxu0
  %v2902 = vadd.f32 %v2613, %v2901
  %v2903 = vpop.f32.mrf.mxu0
  %2904 = vmatprep.mubr.bf16.mxu0 %v1403
  %2905 = vmatmul.mubr.bf16.gmra.mxu0 %v1402
  %v2906 = vpop.f32.mrf.mxu0
  %v2907 = vadd.f32 %v2618, %v2906
  %v2908 = vpop.f32.mrf.mxu0
  %v2909 = vpop.f32.mrf.mxu0
  %v2910 = vadd.f32 %v2621, %v2909
  %v2911 = vpop.f32.mrf.mxu0
  %2912 = vmatprep.mubr.bf16.mxu0 %v1411
  %2913 = vmatmul.mubr.bf16.gmra.mxu0 %v1410
  %v2914 = vpop.f32.mrf.mxu0
  %v2915 = vadd.f32 %v2626, %v2914
  %v2916 = vpop.f32.mrf.mxu0
  %v2917 = vpop.f32.mrf.mxu0
  %v2918 = vadd.f32 %v2629, %v2917
  %v2919 = vpop.f32.mrf.mxu0
  %2920 = vmatprep.mubr.bf16.mxu0 %v1419
  %2921 = vmatmul.mubr.bf16.gmra.mxu0 %v1418
  %v2922 = vpop.f32.mrf.mxu0
  %v2923 = vadd.f32 %v2634, %v2922
  %v2924 = vpop.f32.mrf.mxu0
  %v2925 = vpop.f32.mrf.mxu0
  %v2926 = vadd.f32 %v2637, %v2925
  %v2927 = vpop.f32.mrf.mxu0
  %2928 = vmatprep.mubr.bf16.mxu0 %v1427
  %2929 = vmatmul.mubr.bf16.gmra.mxu0 %v1426
  %v2930 = vpop.f32.mrf.mxu0
  %v2931 = vadd.f32 %v2642, %v2930
  %v2932 = vpop.f32.mrf.mxu0
  %v2933 = vpop.f32.mrf.mxu0
  %v2934 = vadd.f32 %v2645, %v2933
  %v2935 = vpop.f32.mrf.mxu0
  %2936 = vdwg.mxu0
  %2937 = vmatprep.subr.bf16.mxu0 0
  %2938 = vmatpush1.bf16.msra.mxu0 %v1997
  %2939 = vmatprep.subr.bf16.mxu0 0
  %2940 = vmatpush1.bf16.msra.mxu0 %v1996
  %2941 = vmatprep.subr.bf16.mxu0 0
  %2942 = vmatpush1.bf16.msra.mxu0 %v1995
  %2943 = vmatprep.subr.bf16.mxu0 0
  %2944 = vmatpush1.bf16.msra.mxu0 %v1994
  %2945 = vmatprep.subr.bf16.mxu0 0
  %2946 = vmatpush1.bf16.msra.mxu0 %v1993
  %2947 = vmatprep.subr.bf16.mxu0 0
  %2948 = vmatpush1.bf16.msra.mxu0 %v1992
  %2949 = vmatprep.subr.bf16.mxu0 0
  %2950 = vmatpush1.bf16.msra.mxu0 %v1991
  %2951 = vmatprep.subr.bf16.mxu0 0
  %2952 = vmatpush1.bf16.msra.mxu0 %v1990
  %2953 = vmatprep.subr.bf16.mxu0 0
  %2954 = vmatpush2.bf16.msra.mxu0 %v2005
  %2955 = vmatprep.subr.bf16.mxu0 0
  %2956 = vmatpush2.bf16.msra.mxu0 %v2004
  %2957 = vmatprep.subr.bf16.mxu0 0
  %2958 = vmatpush2.bf16.msra.mxu0 %v2003
  %2959 = vmatprep.subr.bf16.mxu0 0
  %2960 = vmatpush2.bf16.msra.mxu0 %v2002
  %2961 = vmatprep.subr.bf16.mxu0 0
  %2962 = vmatpush2.bf16.msra.mxu0 %v2001
  %2963 = vmatprep.subr.bf16.mxu0 0
  %2964 = vmatpush2.bf16.msra.mxu0 %v2000
  %2965 = vmatprep.subr.bf16.mxu0 0
  %2966 = vmatpush2.bf16.msra.mxu0 %v1999
  %2967 = vmatprep.subr.bf16.mxu0 0
  %2968 = vmatpush2.bf16.msra.mxu0 %v1998
  %2969 = vmatprep.mubr.bf16.mxu0 %v1181
  %2970 = vmatmul.mubr.bf16.gmra.mxu0 %v1180
  %v2971 = vpop.f32.mrf.mxu0
  %v2972 = vadd.f32 %v2683, %v2971
  %v2973 = vpop.f32.mrf.mxu0
  %v2974 = vpop.f32.mrf.mxu0
  %v2975 = vadd.f32 %v2686, %v2974
  %v2976 = vpop.f32.mrf.mxu0
  %2977 = vmatprep.mubr.bf16.mxu0 %v1189
  %2978 = vmatmul.mubr.bf16.gmra.mxu0 %v1188
  %v2979 = vpop.f32.mrf.mxu0
  %v2980 = vadd.f32 %v2691, %v2979
  %v2981 = vpop.f32.mrf.mxu0
  %v2982 = vpop.f32.mrf.mxu0
  %v2983 = vadd.f32 %v2694, %v2982
  %v2984 = vpop.f32.mrf.mxu0
  %2985 = vmatprep.mubr.bf16.mxu0 %v1197
  %2986 = vmatmul.mubr.bf16.gmra.mxu0 %v1196
  %v2987 = vpop.f32.mrf.mxu0
  %v2988 = vadd.f32 %v2699, %v2987
  %v2989 = vpop.f32.mrf.mxu0
  %v2990 = vpop.f32.mrf.mxu0
  %v2991 = vadd.f32 %v2702, %v2990
  %v2992 = vpop.f32.mrf.mxu0
  %2993 = vmatprep.mubr.bf16.mxu0 %v1205
  %2994 = vmatmul.mubr.bf16.gmra.mxu0 %v1204
  %v2995 = vpop.f32.mrf.mxu0
  %v2996 = vadd.f32 %v2707, %v2995
  %v2997 = vpop.f32.mrf.mxu0
  %v2998 = vpop.f32.mrf.mxu0
  %v2999 = vadd.f32 %v2710, %v2998
  %v3000 = vpop.f32.mrf.mxu0
  %3001 = vmatprep.mubr.bf16.mxu0 %v1213
  %3002 = vmatmul.mubr.bf16.gmra.mxu0 %v1212
  %v3003 = vpop.f32.mrf.mxu0
  %v3004 = vadd.f32 %v2715, %v3003
  %v3005 = vpop.f32.mrf.mxu0
  %v3006 = vpop.f32.mrf.mxu0
  %v3007 = vadd.f32 %v2718, %v3006
  %v3008 = vpop.f32.mrf.mxu0
  %3009 = vmatprep.mubr.bf16.mxu0 %v1221
  %3010 = vmatmul.mubr.bf16.gmra.mxu0 %v1220
  %v3011 = vpop.f32.mrf.mxu0
  %v3012 = vadd.f32 %v2723, %v3011
  %v3013 = vpop.f32.mrf.mxu0
  %v3014 = vpop.f32.mrf.mxu0
  %v3015 = vadd.f32 %v2726, %v3014
  %v3016 = vpop.f32.mrf.mxu0
  %3017 = vmatprep.mubr.bf16.mxu0 %v1229
  %3018 = vmatmul.mubr.bf16.gmra.mxu0 %v1228
  %v3019 = vpop.f32.mrf.mxu0
  %v3020 = vadd.f32 %v2731, %v3019
  %v3021 = vpop.f32.mrf.mxu0
  %v3022 = vpop.f32.mrf.mxu0
  %v3023 = vadd.f32 %v2734, %v3022
  %v3024 = vpop.f32.mrf.mxu0
  %3025 = vmatprep.mubr.bf16.mxu0 %v1237
  %3026 = vmatmul.mubr.bf16.gmra.mxu0 %v1236
  %v3027 = vpop.f32.mrf.mxu0
  %v3028 = vadd.f32 %v2739, %v3027
  %v3029 = vpop.f32.mrf.mxu0
  %v3030 = vpop.f32.mrf.mxu0
  %v3031 = vadd.f32 %v2742, %v3030
  %v3032 = vpop.f32.mrf.mxu0
  %3033 = vmatprep.mubr.bf16.mxu0 %v1245
  %3034 = vmatmul.mubr.bf16.gmra.mxu0 %v1244
  %v3035 = vpop.f32.mrf.mxu0
  %v3036 = vadd.f32 %v2747, %v3035
  %v3037 = vpop.f32.mrf.mxu0
  %v3038 = vpop.f32.mrf.mxu0
  %v3039 = vadd.f32 %v2750, %v3038
  %v3040 = vpop.f32.mrf.mxu0
  %3041 = vmatprep.mubr.bf16.mxu0 %v1253
  %3042 = vmatmul.mubr.bf16.gmra.mxu0 %v1252
  %v3043 = vpop.f32.mrf.mxu0
  %v3044 = vadd.f32 %v2755, %v3043
  %v3045 = vpop.f32.mrf.mxu0
  %v3046 = vpop.f32.mrf.mxu0
  %v3047 = vadd.f32 %v2758, %v3046
  %v3048 = vpop.f32.mrf.mxu0
  %3049 = vmatprep.mubr.bf16.mxu0 %v1261
  %3050 = vmatmul.mubr.bf16.gmra.mxu0 %v1260
  %v3051 = vpop.f32.mrf.mxu0
  %v3052 = vadd.f32 %v2763, %v3051
  %v3053 = vpop.f32.mrf.mxu0
  %v3054 = vpop.f32.mrf.mxu0
  %v3055 = vadd.f32 %v2766, %v3054
  %v3056 = vpop.f32.mrf.mxu0
  %3057 = vmatprep.mubr.bf16.mxu0 %v1269
  %3058 = vmatmul.mubr.bf16.gmra.mxu0 %v1268
  %v3059 = vpop.f32.mrf.mxu0
  %v3060 = vadd.f32 %v2771, %v3059
  %v3061 = vpop.f32.mrf.mxu0
  %v3062 = vpop.f32.mrf.mxu0
  %v3063 = vadd.f32 %v2774, %v3062
  %v3064 = vpop.f32.mrf.mxu0
  %3065 = vmatprep.mubr.bf16.mxu0 %v1277
  %3066 = vmatmul.mubr.bf16.gmra.mxu0 %v1276
  %v3067 = vpop.f32.mrf.mxu0
  %v3068 = vadd.f32 %v2779, %v3067
  %v3069 = vpop.f32.mrf.mxu0
  %v3070 = vpop.f32.mrf.mxu0
  %v3071 = vadd.f32 %v2782, %v3070
  %v3072 = vpop.f32.mrf.mxu0
  %3073 = vmatprep.mubr.bf16.mxu0 %v1285
  %3074 = vmatmul.mubr.bf16.gmra.mxu0 %v1284
  %v3075 = vpop.f32.mrf.mxu0
  %v3076 = vadd.f32 %v2787, %v3075
  %v3077 = vpop.f32.mrf.mxu0
  %v3078 = vpop.f32.mrf.mxu0
  %v3079 = vadd.f32 %v2790, %v3078
  %v3080 = vpop.f32.mrf.mxu0
  %3081 = vmatprep.mubr.bf16.mxu0 %v1293
  %3082 = vmatmul.mubr.bf16.gmra.mxu0 %v1292
  %v3083 = vpop.f32.mrf.mxu0
  %v3084 = vadd.f32 %v2795, %v3083
  %v3085 = vpop.f32.mrf.mxu0
  %v3086 = vpop.f32.mrf.mxu0
  %v3087 = vadd.f32 %v2798, %v3086
  %v3088 = vpop.f32.mrf.mxu0
  %3089 = vmatprep.mubr.bf16.mxu0 %v1301
  %3090 = vmatmul.mubr.bf16.gmra.mxu0 %v1300
  %v3091 = vpop.f32.mrf.mxu0
  %v3092 = vadd.f32 %v2803, %v3091
  %v3093 = vpop.f32.mrf.mxu0
  %v3094 = vpop.f32.mrf.mxu0
  %v3095 = vadd.f32 %v2806, %v3094
  %v3096 = vpop.f32.mrf.mxu0
  %3097 = vmatprep.mubr.bf16.mxu0 %v1309
  %3098 = vmatmul.mubr.bf16.gmra.mxu0 %v1308
  %v3099 = vpop.f32.mrf.mxu0
  %v3100 = vadd.f32 %v2811, %v3099
  %v3101 = vpop.f32.mrf.mxu0
  %v3102 = vpop.f32.mrf.mxu0
  %v3103 = vadd.f32 %v2814, %v3102
  %v3104 = vpop.f32.mrf.mxu0
  %3105 = vmatprep.mubr.bf16.mxu0 %v1317
  %3106 = vmatmul.mubr.bf16.gmra.mxu0 %v1316
  %v3107 = vpop.f32.mrf.mxu0
  %v3108 = vadd.f32 %v2819, %v3107
  %v3109 = vpop.f32.mrf.mxu0
  %v3110 = vpop.f32.mrf.mxu0
  %v3111 = vadd.f32 %v2822, %v3110
  %v3112 = vpop.f32.mrf.mxu0
  %3113 = vmatprep.mubr.bf16.mxu0 %v1325
  %3114 = vmatmul.mubr.bf16.gmra.mxu0 %v1324
  %v3115 = vpop.f32.mrf.mxu0
  %v3116 = vadd.f32 %v2827, %v3115
  %v3117 = vpop.f32.mrf.mxu0
  %v3118 = vpop.f32.mrf.mxu0
  %v3119 = vadd.f32 %v2830, %v3118
  %v3120 = vpop.f32.mrf.mxu0
  %3121 = vmatprep.mubr.bf16.mxu0 %v1333
  %3122 = vmatmul.mubr.bf16.gmra.mxu0 %v1332
  %v3123 = vpop.f32.mrf.mxu0
  %v3124 = vadd.f32 %v2835, %v3123
  %v3125 = vpop.f32.mrf.mxu0
  %v3126 = vpop.f32.mrf.mxu0
  %v3127 = vadd.f32 %v2838, %v3126
  %v3128 = vpop.f32.mrf.mxu0
  %3129 = vmatprep.mubr.bf16.mxu0 %v1341
  %3130 = vmatmul.mubr.bf16.gmra.mxu0 %v1340
  %v3131 = vpop.f32.mrf.mxu0
  %v3132 = vadd.f32 %v2843, %v3131
  %v3133 = vpop.f32.mrf.mxu0
  %v3134 = vpop.f32.mrf.mxu0
  %v3135 = vadd.f32 %v2846, %v3134
  %v3136 = vpop.f32.mrf.mxu0
  %3137 = vmatprep.mubr.bf16.mxu0 %v1349
  %3138 = vmatmul.mubr.bf16.gmra.mxu0 %v1348
  %v3139 = vpop.f32.mrf.mxu0
  %v3140 = vadd.f32 %v2851, %v3139
  %v3141 = vpop.f32.mrf.mxu0
  %v3142 = vpop.f32.mrf.mxu0
  %v3143 = vadd.f32 %v2854, %v3142
  %v3144 = vpop.f32.mrf.mxu0
  %3145 = vmatprep.mubr.bf16.mxu0 %v1357
  %3146 = vmatmul.mubr.bf16.gmra.mxu0 %v1356
  %v3147 = vpop.f32.mrf.mxu0
  %v3148 = vadd.f32 %v2859, %v3147
  %v3149 = vpop.f32.mrf.mxu0
  %v3150 = vpop.f32.mrf.mxu0
  %v3151 = vadd.f32 %v2862, %v3150
  %v3152 = vpop.f32.mrf.mxu0
  %3153 = vmatprep.mubr.bf16.mxu0 %v1365
  %3154 = vmatmul.mubr.bf16.gmra.mxu0 %v1364
  %v3155 = vpop.f32.mrf.mxu0
  %v3156 = vadd.f32 %v2867, %v3155
  %v3157 = vpop.f32.mrf.mxu0
  %v3158 = vpop.f32.mrf.mxu0
  %v3159 = vadd.f32 %v2870, %v3158
  %v3160 = vpop.f32.mrf.mxu0
  %3161 = vmatprep.mubr.bf16.mxu0 %v1373
  %3162 = vmatmul.mubr.bf16.gmra.mxu0 %v1372
  %v3163 = vpop.f32.mrf.mxu0
  %v3164 = vadd.f32 %v2875, %v3163
  %v3165 = vpop.f32.mrf.mxu0
  %v3166 = vpop.f32.mrf.mxu0
  %v3167 = vadd.f32 %v2878, %v3166
  %v3168 = vpop.f32.mrf.mxu0
  %3169 = vmatprep.mubr.bf16.mxu0 %v1381
  %3170 = vmatmul.mubr.bf16.gmra.mxu0 %v1380
  %v3171 = vpop.f32.mrf.mxu0
  %v3172 = vadd.f32 %v2883, %v3171
  %v3173 = vpop.f32.mrf.mxu0
  %v3174 = vpop.f32.mrf.mxu0
  %v3175 = vadd.f32 %v2886, %v3174
  %v3176 = vpop.f32.mrf.mxu0
  %3177 = vmatprep.mubr.bf16.mxu0 %v1389
  %3178 = vmatmul.mubr.bf16.gmra.mxu0 %v1388
  %v3179 = vpop.f32.mrf.mxu0
  %v3180 = vadd.f32 %v2891, %v3179
  %v3181 = vpop.f32.mrf.mxu0
  %v3182 = vpop.f32.mrf.mxu0
  %v3183 = vadd.f32 %v2894, %v3182
  %v3184 = vpop.f32.mrf.mxu0
  %3185 = vmatprep.mubr.bf16.mxu0 %v1397
  %3186 = vmatmul.mubr.bf16.gmra.mxu0 %v1396
  %v3187 = vpop.f32.mrf.mxu0
  %v3188 = vadd.f32 %v2899, %v3187
  %v3189 = vpop.f32.mrf.mxu0
  %v3190 = vpop.f32.mrf.mxu0
  %v3191 = vadd.f32 %v2902, %v3190
  %v3192 = vpop.f32.mrf.mxu0
  %3193 = vmatprep.mubr.bf16.mxu0 %v1405
  %3194 = vmatmul.mubr.bf16.gmra.mxu0 %v1404
  %v3195 = vpop.f32.mrf.mxu0
  %v3196 = vadd.f32 %v2907, %v3195
  %v3197 = vpop.f32.mrf.mxu0
  %v3198 = vpop.f32.mrf.mxu0
  %v3199 = vadd.f32 %v2910, %v3198
  %v3200 = vpop.f32.mrf.mxu0
  %3201 = vmatprep.mubr.bf16.mxu0 %v1413
  %3202 = vmatmul.mubr.bf16.gmra.mxu0 %v1412
  %v3203 = vpop.f32.mrf.mxu0
  %v3204 = vadd.f32 %v2915, %v3203
  %v3205 = vpop.f32.mrf.mxu0
  %v3206 = vpop.f32.mrf.mxu0
  %v3207 = vadd.f32 %v2918, %v3206
  %v3208 = vpop.f32.mrf.mxu0
  %3209 = vmatprep.mubr.bf16.mxu0 %v1421
  %3210 = vmatmul.mubr.bf16.gmra.mxu0 %v1420
  %v3211 = vpop.f32.mrf.mxu0
  %v3212 = vadd.f32 %v2923, %v3211
  %v3213 = vpop.f32.mrf.mxu0
  %v3214 = vpop.f32.mrf.mxu0
  %v3215 = vadd.f32 %v2926, %v3214
  %v3216 = vpop.f32.mrf.mxu0
  %3217 = vmatprep.mubr.bf16.mxu0 %v1429
  %3218 = vmatmul.mubr.bf16.gmra.mxu0 %v1428
  %v3219 = vpop.f32.mrf.mxu0
  %v3220 = vadd.f32 %v2931, %v3219
  %v3221 = vpop.f32.mrf.mxu0
  %v3222 = vpop.f32.mrf.mxu0
  %v3223 = vadd.f32 %v2934, %v3222
  %v3224 = vpop.f32.mrf.mxu0
  %3225 = vdwg.mxu0
  %v3226 = vmax.f32 %v2972, 0.0
  %v3227 = vmax.f32 %v2975, 0.0
  %v3228 = vmax.f32 %v2980, 0.0
  %v3229 = vmax.f32 %v2983, 0.0
  %v3230 = vmax.f32 %v2988, 0.0
  %v3231 = vmax.f32 %v2991, 0.0
  %v3232 = vmax.f32 %v2996, 0.0
  %v3233 = vmax.f32 %v2999, 0.0
  %v3234 = vmax.f32 %v3004, 0.0
  %v3235 = vmax.f32 %v3007, 0.0
  %v3236 = vmax.f32 %v3012, 0.0
  %v3237 = vmax.f32 %v3015, 0.0
  %v3238 = vmax.f32 %v3020, 0.0
  %v3239 = vmax.f32 %v3023, 0.0
  %v3240 = vmax.f32 %v3028, 0.0
  %v3241 = vmax.f32 %v3031, 0.0
  %v3242 = vmax.f32 %v3036, 0.0
  %v3243 = vmax.f32 %v3039, 0.0
  %v3244 = vmax.f32 %v3044, 0.0
  %v3245 = vmax.f32 %v3047, 0.0
  %v3246 = vmax.f32 %v3052, 0.0
  %v3247 = vmax.f32 %v3055, 0.0
  %v3248 = vmax.f32 %v3060, 0.0
  %v3249 = vmax.f32 %v3063, 0.0
  %v3250 = vmax.f32 %v3068, 0.0
  %v3251 = vmax.f32 %v3071, 0.0
  %v3252 = vmax.f32 %v3076, 0.0
  %v3253 = vmax.f32 %v3079, 0.0
  %v3254 = vmax.f32 %v3084, 0.0
  %v3255 = vmax.f32 %v3087, 0.0
  %v3256 = vmax.f32 %v3092, 0.0
  %v3257 = vmax.f32 %v3095, 0.0
  %v3258 = vmax.f32 %v3100, 0.0
  %v3259 = vmax.f32 %v3103, 0.0
  %v3260 = vmax.f32 %v3108, 0.0
  %v3261 = vmax.f32 %v3111, 0.0
  %v3262 = vmax.f32 %v3116, 0.0
  %v3263 = vmax.f32 %v3119, 0.0
  %v3264 = vmax.f32 %v3124, 0.0
  %v3265 = vmax.f32 %v3127, 0.0
  %v3266 = vmax.f32 %v3132, 0.0
  %v3267 = vmax.f32 %v3135, 0.0
  %v3268 = vmax.f32 %v3140, 0.0
  %v3269 = vmax.f32 %v3143, 0.0
  %v3270 = vmax.f32 %v3148, 0.0
  %v3271 = vmax.f32 %v3151, 0.0
  %v3272 = vmax.f32 %v3156, 0.0
  %v3273 = vmax.f32 %v3159, 0.0
  %v3274 = vmax.f32 %v3164, 0.0
  %v3275 = vmax.f32 %v3167, 0.0
  %v3276 = vmax.f32 %v3172, 0.0
  %v3277 = vmax.f32 %v3175, 0.0
  %v3278 = vmax.f32 %v3180, 0.0
  %v3279 = vmax.f32 %v3183, 0.0
  %v3280 = vmax.f32 %v3188, 0.0
  %v3281 = vmax.f32 %v3191, 0.0
  %v3282 = vmax.f32 %v3196, 0.0
  %v3283 = vmax.f32 %v3199, 0.0
  %v3284 = vmax.f32 %v3204, 0.0
  %v3285 = vmax.f32 %v3207, 0.0
  %v3286 = vmax.f32 %v3212, 0.0
  %v3287 = vmax.f32 %v3215, 0.0
  %v3288 = vmax.f32 %v3220, 0.0
  %v3289 = vmax.f32 %v3223, 0.0
  %3290 = vst [vmem:[%s3] sm:$0xff] %v3226
  %3291 = vst [vmem:[%s3 + $0x8] sm:$0xff] %v3227
  %3292 = vst [vmem:[%s3 + $0x10] sm:$0xff] %v3228
  %3293 = vst [vmem:[%s3 + $0x18] sm:$0xff] %v3229
  %3294 = vst [vmem:[%s3 + $0x20] sm:$0xff] %v3230
  %3295 = vst [vmem:[%s3 + $0x28] sm:$0xff] %v3231
  %3296 = vst [vmem:[%s3 + $0x30] sm:$0xff] %v3232
  %3297 = vst [vmem:[%s3 + $0x38] sm:$0xff] %v3233
  %3298 = vst [vmem:[%s3 + $0x40] sm:$0xff] %v3234
  %3299 = vst [vmem:[%s3 + $0x48] sm:$0xff] %v3235
  %3300 = vst [vmem:[%s3 + $0x50] sm:$0xff] %v3236
  %3301 = vst [vmem:[%s3 + $0x58] sm:$0xff] %v3237
  %3302 = vst [vmem:[%s3 + $0x60] sm:$0xff] %v3238
  %3303 = vst [vmem:[%s3 + $0x68] sm:$0xff] %v3239
  %3304 = vst [vmem:[%s3 + $0x70] sm:$0xff] %v3240
  %3305 = vst [vmem:[%s3 + $0x78] sm:$0xff] %v3241
  %3306 = vst [vmem:[%s3 + $0x80] sm:$0xff] %v3242
  %3307 = vst [vmem:[%s3 + $0x88] sm:$0xff] %v3243
  %3308 = vst [vmem:[%s3 + $0x90] sm:$0xff] %v3244
  %3309 = vst [vmem:[%s3 + $0x98] sm:$0xff] %v3245
  %3310 = vst [vmem:[%s3 + $0xa0] sm:$0xff] %v3246
  %3311 = vst [vmem:[%s3 + $0xa8] sm:$0xff] %v3247
  %3312 = vst [vmem:[%s3 + $0xb0] sm:$0xff] %v3248
  %3313 = vst [vmem:[%s3 + $0xb8] sm:$0xff] %v3249
  %3314 = vst [vmem:[%s3 + $0xc0] sm:$0xff] %v3250
  %3315 = vst [vmem:[%s3 + $0xc8] sm:$0xff] %v3251
  %3316 = vst [vmem:[%s3 + $0xd0] sm:$0xff] %v3252
  %3317 = vst [vmem:[%s3 + $0xd8] sm:$0xff] %v3253
  %3318 = vst [vmem:[%s3 + $0xe0] sm:$0xff] %v3254
  %3319 = vst [vmem:[%s3 + $0xe8] sm:$0xff] %v3255
  %3320 = vst [vmem:[%s3 + $0xf0] sm:$0xff] %v3256
  %3321 = vst [vmem:[%s3 + $0xf8] sm:$0xff] %v3257
  %3322 = vst [vmem:[%s3 + $0x100] sm:$0xff] %v3258
  %3323 = vst [vmem:[%s3 + $0x108] sm:$0xff] %v3259
  %3324 = vst [vmem:[%s3 + $0x110] sm:$0xff] %v3260
  %3325 = vst [vmem:[%s3 + $0x118] sm:$0xff] %v3261
  %3326 = vst [vmem:[%s3 + $0x120] sm:$0xff] %v3262
  %3327 = vst [vmem:[%s3 + $0x128] sm:$0xff] %v3263
  %3328 = vst [vmem:[%s3 + $0x130] sm:$0xff] %v3264
  %3329 = vst [vmem:[%s3 + $0x138] sm:$0xff] %v3265
  %3330 = vst [vmem:[%s3 + $0x140] sm:$0xff] %v3266
  %3331 = vst [vmem:[%s3 + $0x148] sm:$0xff] %v3267
  %3332 = vst [vmem:[%s3 + $0x150] sm:$0xff] %v3268
  %3333 = vst [vmem:[%s3 + $0x158] sm:$0xff] %v3269
  %3334 = vst [vmem:[%s3 + $0x160] sm:$0xff] %v3270
  %3335 = vst [vmem:[%s3 + $0x168] sm:$0xff] %v3271
  %3336 = vst [vmem:[%s3 + $0x170] sm:$0xff] %v3272
  %3337 = vst [vmem:[%s3 + $0x178] sm:$0xff] %v3273
  %3338 = vst [vmem:[%s3 + $0x180] sm:$0xff] %v3274
  %3339 = vst [vmem:[%s3 + $0x188] sm:$0xff] %v3275
  %3340 = vst [vmem:[%s3 + $0x190] sm:$0xff] %v3276
  %3341 = vst [vmem:[%s3 + $0x198] sm:$0xff] %v3277
  %3342 = vst [vmem:[%s3 + $0x1a0] sm:$0xff] %v3278
  %3343 = vst [vmem:[%s3 + $0x1a8] sm:$0xff] %v3279
  %3344 = vst [vmem:[%s3 + $0x1b0] sm:$0xff] %v3280
  %3345 = vst [vmem:[%s3 + $0x1b8] sm:$0xff] %v3281
  %3346 = vst [vmem:[%s3 + $0x1c0] sm:$0xff] %v3282
  %3347 = vst [vmem:[%s3 + $0x1c8] sm:$0xff] %v3283
  %3348 = vst [vmem:[%s3 + $0x1d0] sm:$0xff] %v3284
  %3349 = vst [vmem:[%s3 + $0x1d8] sm:$0xff] %v3285
  %3350 = vst [vmem:[%s3 + $0x1e0] sm:$0xff] %v3286
  %3351 = vst [vmem:[%s3 + $0x1e8] sm:$0xff] %v3287
  %3352 = vst [vmem:[%s3 + $0x1f0] sm:$0xff] %v3288
  %3353 = vst [vmem:[%s3 + $0x1f8] sm:$0xff] %v3289
  // Predicated region
  $region14: #{_lambda_.13} parent=0 // pred_check
    _
  $region15: #{_lambda_.13} parent=0 // pred_check_branch
    %3355 = sbr.rel (0) target = $region17
  $region16: #{_lambda_.13} parent=0 // pred_region
    _
  $region17: #{_lambda_.13} parent=0 // pred_fallthru
    _
  // Predicated region
  $region18: #{_lambda_.13} parent=0 // pred_check
    _
  $region19: #{_lambda_.13} parent=0 // pred_check_branch
    %3357 = sbr.rel (0) target = $region21
  $region20: #{_lambda_.13} parent=0 // pred_region
    _
  $region21: #{_lambda_.13} parent=0 // pred_fallthru
    _

// kernel: _lambda_.14
$region0: #{_lambda_.14}
  #allocation0 [shape = 'u32[]', space=smem, size = 0x4, offset = 0x4, fixed_abs, tag = 'smem constant byte address 0x4 - core index']
  #allocation1 [shape = 'u32[144,128]{1,0:T(1,128)}', space=vmem, size = 0x12000, scoped, tag = 'internal scratch']
  %s0 = inlined_call_operand.vmem [shape: bf16[512,640], index: 0, kind: input, shape index: {}]
  %s1 = inlined_call_operand.vmem [shape: bf16[640,128], index: 1, kind: input, shape index: {}]
  %s2 = inlined_call_operand.vmem [shape: f32[1,128], index: 2, kind: input, shape index: {}]
  %s3 = inlined_call_operand.vmem [shape: f32[512,128], index: 3, kind: output, shape index: {}]
  %s4 = sld [smem:[#allocation0]]
  $region22: #{_lambda_.14} parent=0
    _
  %s6 = ssub.s32 1, %s4
  %s7 = scalar_select 0, %s6, %s4
  // Predicated region
  $region2: #{_lambda_.14} parent=0 // pred_check
    _
  $region3: #{_lambda_.14} parent=0 // pred_check_branch
    %9 = sbr.rel (0) target = $region5
  $region4: #{_lambda_.14} parent=0 // pred_region
    _
  $region5: #{_lambda_.14} parent=0 // pred_fallthru
    _
  // Predicated region
  $region6: #{_lambda_.14} parent=0 // pred_check
    _
  $region7: #{_lambda_.14} parent=0 // pred_check_branch
    %11 = sbr.rel (0) target = $region9
  $region8: #{_lambda_.14} parent=0 // pred_region
    _
  $region9: #{_lambda_.14} parent=0 // pred_fallthru
    _
  // Predicated region
  $region10: #{_lambda_.14} parent=0 // pred_check
    _
  $region11: #{_lambda_.14} parent=0 // pred_check_branch
    %13 = sbr.rel (0) target = $region13
  $region12: #{_lambda_.14} parent=0 // pred_region
    _
  $region13: #{_lambda_.14} parent=0 // pred_fallthru
    _
  %v15 = vld [vmem:[%s0] sm:$0xff]
  %v16 = vld [vmem:[%s0 + $0x8] sm:$0xff]
  %v17 = vld [vmem:[%s0 + $0x10] sm:$0xf]
  %v18 = vld [vmem:[%s0 + $0x14] sm:$0xff]
  %v19 = vld [vmem:[%s0 + $0x1c] sm:$0xff]
  %v20 = vld [vmem:[%s0 + $0x24] sm:$0xf]
  %v21 = vld [vmem:[%s0 + $0x28] sm:$0xff]
  %v22 = vld [vmem:[%s0 + $0x30] sm:$0xff]
  %v23 = vld [vmem:[%s0 + $0x38] sm:$0xf]
  %v24 = vld [vmem:[%s0 + $0x3c] sm:$0xff]
  %v25 = vld [vmem:[%s0 + $0x44] sm:$0xff]
  %v26 = vld [vmem:[%s0 + $0x4c] sm:$0xf]
  %v27 = vld [vmem:[%s0 + $0x50] sm:$0xff]
  %v28 = vld [vmem:[%s0 + $0x58] sm:$0xff]
  %v29 = vld [vmem:[%s0 + $0x60] sm:$0xf]
  %v30 = vld [vmem:[%s0 + $0x64] sm:$0xff]
  %v31 = vld [vmem:[%s0 + $0x6c] sm:$0xff]
  %v32 = vld [vmem:[%s0 + $0x74] sm:$0xf]
  %v33 = vld [vmem:[%s0 + $0x78] sm:$0xff]
  %v34 = vld [vmem:[%s0 + $0x80] sm:$0xff]
  %v35 = vld [vmem:[%s0 + $0x88] sm:$0xf]
  %v36 = vld [vmem:[%s0 + $0x8c] sm:$0xff]
  %v37 = vld [vmem:[%s0 + $0x94] sm:$0xff]
  %v38 = vld [vmem:[%s0 + $0x9c] sm:$0xf]
  %v39 = vld [vmem:[%s0 + $0xa0] sm:$0xff]
  %v40 = vld [vmem:[%s0 + $0xa8] sm:$0xff]
  %v41 = vld [vmem:[%s0 + $0xb0] sm:$0xf]
  %v42 = vld [vmem:[%s0 + $0xb4] sm:$0xff]
  %v43 = vld [vmem:[%s0 + $0xbc] sm:$0xff]
  %v44 = vld [vmem:[%s0 + $0xc4] sm:$0xf]
  %v45 = vld [vmem:[%s0 + $0xc8] sm:$0xff]
  %v46 = vld [vmem:[%s0 + $0xd0] sm:$0xff]
  %v47 = vld [vmem:[%s0 + $0xd8] sm:$0xf]
  %v48 = vld [vmem:[%s0 + $0xdc] sm:$0xff]
  %v49 = vld [vmem:[%s0 + $0xe4] sm:$0xff]
  %v50 = vld [vmem:[%s0 + $0xec] sm:$0xf]
  %v51 = vld [vmem:[%s0 + $0xf0] sm:$0xff]
  %v52 = vld [vmem:[%s0 + $0xf8] sm:$0xff]
  %v53 = vld [vmem:[%s0 + $0x100] sm:$0xf]
  %v54 = vld [vmem:[%s0 + $0x104] sm:$0xff]
  %v55 = vld [vmem:[%s0 + $0x10c] sm:$0xff]
  %v56 = vld [vmem:[%s0 + $0x114] sm:$0xf]
  %v57 = vld [vmem:[%s0 + $0x118] sm:$0xff]
  %v58 = vld [vmem:[%s0 + $0x120] sm:$0xff]
  %v59 = vld [vmem:[%s0 + $0x128] sm:$0xf]
  %v60 = vld [vmem:[%s0 + $0x12c] sm:$0xff]
  %v61 = vld [vmem:[%s0 + $0x134] sm:$0xff]
  %v62 = vld [vmem:[%s0 + $0x13c] sm:$0xf]
  %v63 = vld [vmem:[%s0 + $0x140] sm:$0xff]
  %v64 = vld [vmem:[%s0 + $0x148] sm:$0xff]
  %v65 = vld [vmem:[%s0 + $0x150] sm:$0xf]
  %v66 = vld [vmem:[%s0 + $0x154] sm:$0xff]
  %v67 = vld [vmem:[%s0 + $0x15c] sm:$0xff]
  %v68 = vld [vmem:[%s0 + $0x164] sm:$0xf]
  %v69 = vld [vmem:[%s0 + $0x168] sm:$0xff]
  %v70 = vld [vmem:[%s0 + $0x170] sm:$0xff]
  %v71 = vld [vmem:[%s0 + $0x178] sm:$0xf]
  %v72 = vld [vmem:[%s0 + $0x17c] sm:$0xff]
  %v73 = vld [vmem:[%s0 + $0x184] sm:$0xff]
  %v74 = vld [vmem:[%s0 + $0x18c] sm:$0xf]
  %v75 = vld [vmem:[%s0 + $0x190] sm:$0xff]
  %v76 = vld [vmem:[%s0 + $0x198] sm:$0xff]
  %v77 = vld [vmem:[%s0 + $0x1a0] sm:$0xf]
  %v78 = vld [vmem:[%s0 + $0x1a4] sm:$0xff]
  %v79 = vld [vmem:[%s0 + $0x1ac] sm:$0xff]
  %v80 = vld [vmem:[%s0 + $0x1b4] sm:$0xf]
  %v81 = vld [vmem:[%s0 + $0x1b8] sm:$0xff]
  %v82 = vld [vmem:[%s0 + $0x1c0] sm:$0xff]
  %v83 = vld [vmem:[%s0 + $0x1c8] sm:$0xf]
  %v84 = vld [vmem:[%s0 + $0x1cc] sm:$0xff]
  %v85 = vld [vmem:[%s0 + $0x1d4] sm:$0xff]
  %v86 = vld [vmem:[%s0 + $0x1dc] sm:$0xf]
  %v87 = vld [vmem:[%s0 + $0x1e0] sm:$0xff]
  %v88 = vld [vmem:[%s0 + $0x1e8] sm:$0xff]
  %v89 = vld [vmem:[%s0 + $0x1f0] sm:$0xf]
  %v90 = vld [vmem:[%s0 + $0x1f4] sm:$0xff]
  %v91 = vld [vmem:[%s0 + $0x1fc] sm:$0xff]
  %v92 = vld [vmem:[%s0 + $0x204] sm:$0xf]
  %v93 = vld [vmem:[%s0 + $0x208] sm:$0xff]
  %v94 = vld [vmem:[%s0 + $0x210] sm:$0xff]
  %v95 = vld [vmem:[%s0 + $0x218] sm:$0xf]
  %v96 = vld [vmem:[%s0 + $0x21c] sm:$0xff]
  %v97 = vld [vmem:[%s0 + $0x224] sm:$0xff]
  %v98 = vld [vmem:[%s0 + $0x22c] sm:$0xf]
  %v99 = vld [vmem:[%s0 + $0x230] sm:$0xff]
  %v100 = vld [vmem:[%s0 + $0x238] sm:$0xff]
  %v101 = vld [vmem:[%s0 + $0x240] sm:$0xf]
  %v102 = vld [vmem:[%s0 + $0x244] sm:$0xff]
  %v103 = vld [vmem:[%s0 + $0x24c] sm:$0xff]
  %v104 = vld [vmem:[%s0 + $0x254] sm:$0xf]
  %v105 = vld [vmem:[%s0 + $0x258] sm:$0xff]
  %v106 = vld [vmem:[%s0 + $0x260] sm:$0xff]
  %v107 = vld [vmem:[%s0 + $0x268] sm:$0xf]
  %v108 = vld [vmem:[%s0 + $0x26c] sm:$0xff]
  %v109 = vld [vmem:[%s0 + $0x274] sm:$0xff]
  %v110 = vld [vmem:[%s0 + $0x27c] sm:$0xf]
  %v111 = vld [vmem:[%s0 + $0x280] sm:$0xff]
  %v112 = vld [vmem:[%s0 + $0x288] sm:$0xff]
  %v113 = vld [vmem:[%s0 + $0x290] sm:$0xf]
  %v114 = vld [vmem:[%s0 + $0x294] sm:$0xff]
  %v115 = vld [vmem:[%s0 + $0x29c] sm:$0xff]
  %v116 = vld [vmem:[%s0 + $0x2a4] sm:$0xf]
  %v117 = vld [vmem:[%s0 + $0x2a8] sm:$0xff]
  %v118 = vld [vmem:[%s0 + $0x2b0] sm:$0xff]
  %v119 = vld [vmem:[%s0 + $0x2b8] sm:$0xf]
  %v120 = vld [vmem:[%s0 + $0x2bc] sm:$0xff]
  %v121 = vld [vmem:[%s0 + $0x2c4] sm:$0xff]
  %v122 = vld [vmem:[%s0 + $0x2cc] sm:$0xf]
  %v123 = vld [vmem:[%s0 + $0x2d0] sm:$0xff]
  %v124 = vld [vmem:[%s0 + $0x2d8] sm:$0xff]
  %v125 = vld [vmem:[%s0 + $0x2e0] sm:$0xf]
  %v126 = vld [vmem:[%s0 + $0x2e4] sm:$0xff]
  %v127 = vld [vmem:[%s0 + $0x2ec] sm:$0xff]
  %v128 = vld [vmem:[%s0 + $0x2f4] sm:$0xf]
  %v129 = vld [vmem:[%s0 + $0x2f8] sm:$0xff]
  %v130 = vld [vmem:[%s0 + $0x300] sm:$0xff]
  %v131 = vld [vmem:[%s0 + $0x308] sm:$0xf]
  %v132 = vld [vmem:[%s0 + $0x30c] sm:$0xff]
  %v133 = vld [vmem:[%s0 + $0x314] sm:$0xff]
  %v134 = vld [vmem:[%s0 + $0x31c] sm:$0xf]
  %v135 = vld [vmem:[%s0 + $0x320] sm:$0xff]
  %v136 = vld [vmem:[%s0 + $0x328] sm:$0xff]
  %v137 = vld [vmem:[%s0 + $0x330] sm:$0xf]
  %v138 = vld [vmem:[%s0 + $0x334] sm:$0xff]
  %v139 = vld [vmem:[%s0 + $0x33c] sm:$0xff]
  %v140 = vld [vmem:[%s0 + $0x344] sm:$0xf]
  %v141 = vld [vmem:[%s0 + $0x348] sm:$0xff]
  %v142 = vld [vmem:[%s0 + $0x350] sm:$0xff]
  %v143 = vld [vmem:[%s0 + $0x358] sm:$0xf]
  %v144 = vld [vmem:[%s0 + $0x35c] sm:$0xff]
  %v145 = vld [vmem:[%s0 + $0x364] sm:$0xff]
  %v146 = vld [vmem:[%s0 + $0x36c] sm:$0xf]
  %v147 = vld [vmem:[%s0 + $0x370] sm:$0xff]
  %v148 = vld [vmem:[%s0 + $0x378] sm:$0xff]
  %v149 = vld [vmem:[%s0 + $0x380] sm:$0xf]
  %v150 = vld [vmem:[%s0 + $0x384] sm:$0xff]
  %v151 = vld [vmem:[%s0 + $0x38c] sm:$0xff]
  %v152 = vld [vmem:[%s0 + $0x394] sm:$0xf]
  %v153 = vld [vmem:[%s0 + $0x398] sm:$0xff]
  %v154 = vld [vmem:[%s0 + $0x3a0] sm:$0xff]
  %v155 = vld [vmem:[%s0 + $0x3a8] sm:$0xf]
  %v156 = vld [vmem:[%s0 + $0x3ac] sm:$0xff]
  %v157 = vld [vmem:[%s0 + $0x3b4] sm:$0xff]
  %v158 = vld [vmem:[%s0 + $0x3bc] sm:$0xf]
  %v159 = vld [vmem:[%s0 + $0x3c0] sm:$0xff]
  %v160 = vld [vmem:[%s0 + $0x3c8] sm:$0xff]
  %v161 = vld [vmem:[%s0 + $0x3d0] sm:$0xf]
  %v162 = vld [vmem:[%s0 + $0x3d4] sm:$0xff]
  %v163 = vld [vmem:[%s0 + $0x3dc] sm:$0xff]
  %v164 = vld [vmem:[%s0 + $0x3e4] sm:$0xf]
  %v165 = vld [vmem:[%s0 + $0x3e8] sm:$0xff]
  %v166 = vld [vmem:[%s0 + $0x3f0] sm:$0xff]
  %v167 = vld [vmem:[%s0 + $0x3f8] sm:$0xf]
  %v168 = vld [vmem:[%s0 + $0x3fc] sm:$0xff]
  %v169 = vld [vmem:[%s0 + $0x404] sm:$0xff]
  %v170 = vld [vmem:[%s0 + $0x40c] sm:$0xf]
  %v171 = vld [vmem:[%s0 + $0x410] sm:$0xff]
  %v172 = vld [vmem:[%s0 + $0x418] sm:$0xff]
  %v173 = vld [vmem:[%s0 + $0x420] sm:$0xf]
  %v174 = vld [vmem:[%s0 + $0x424] sm:$0xff]
  %v175 = vld [vmem:[%s0 + $0x42c] sm:$0xff]
  %v176 = vld [vmem:[%s0 + $0x434] sm:$0xf]
  %v177 = vld [vmem:[%s0 + $0x438] sm:$0xff]
  %v178 = vld [vmem:[%s0 + $0x440] sm:$0xff]
  %v179 = vld [vmem:[%s0 + $0x448] sm:$0xf]
  %v180 = vld [vmem:[%s0 + $0x44c] sm:$0xff]
  %v181 = vld [vmem:[%s0 + $0x454] sm:$0xff]
  %v182 = vld [vmem:[%s0 + $0x45c] sm:$0xf]
  %v183 = vld [vmem:[%s0 + $0x460] sm:$0xff]
  %v184 = vld [vmem:[%s0 + $0x468] sm:$0xff]
  %v185 = vld [vmem:[%s0 + $0x470] sm:$0xf]
  %v186 = vld [vmem:[%s0 + $0x474] sm:$0xff]
  %v187 = vld [vmem:[%s0 + $0x47c] sm:$0xff]
  %v188 = vld [vmem:[%s0 + $0x484] sm:$0xf]
  %v189 = vld [vmem:[%s0 + $0x488] sm:$0xff]
  %v190 = vld [vmem:[%s0 + $0x490] sm:$0xff]
  %v191 = vld [vmem:[%s0 + $0x498] sm:$0xf]
  %v192 = vld [vmem:[%s0 + $0x49c] sm:$0xff]
  %v193 = vld [vmem:[%s0 + $0x4a4] sm:$0xff]
  %v194 = vld [vmem:[%s0 + $0x4ac] sm:$0xf]
  %v195 = vld [vmem:[%s0 + $0x4b0] sm:$0xff]
  %v196 = vld [vmem:[%s0 + $0x4b8] sm:$0xff]
  %v197 = vld [vmem:[%s0 + $0x4c0] sm:$0xf]
  %v198 = vld [vmem:[%s0 + $0x4c4] sm:$0xff]
  %v199 = vld [vmem:[%s0 + $0x4cc] sm:$0xff]
  %v200 = vld [vmem:[%s0 + $0x4d4] sm:$0xf]
  %v201 = vld [vmem:[%s0 + $0x4d8] sm:$0xff]
  %v202 = vld [vmem:[%s0 + $0x4e0] sm:$0xff]
  %v203 = vld [vmem:[%s0 + $0x4e8] sm:$0xf]
  %v204 = vld [vmem:[%s0 + $0x4ec] sm:$0xff]
  %v205 = vld [vmem:[%s0 + $0x4f4] sm:$0xff]
  %v206 = vld [vmem:[%s0 + $0x4fc] sm:$0xf]
  %v207 = vld [vmem:[%s1] sm:$0xf]
  %v208 = vld [vmem:[%s1 + $0x4] sm:$0xf]
  %v209 = vld [vmem:[%s1 + $0x8] sm:$0xf]
  %v210 = vld [vmem:[%s1 + $0xc] sm:$0xf]
  %v211 = vld [vmem:[%s1 + $0x10] sm:$0xf]
  %v212 = vld [vmem:[%s1 + $0x14] sm:$0xf]
  %v213 = vld [vmem:[%s1 + $0x18] sm:$0xf]
  %v214 = vld [vmem:[%s1 + $0x1c] sm:$0xf]
  %v215 = vld [vmem:[%s1 + $0x20] sm:$0xf]
  %v216 = vld [vmem:[%s1 + $0x24] sm:$0xf]
  %v217 = vld [vmem:[%s1 + $0x28] sm:$0xf]
  %v218 = vld [vmem:[%s1 + $0x2c] sm:$0xf]
  %v219 = vld [vmem:[%s1 + $0x30] sm:$0xf]
  %v220 = vld [vmem:[%s1 + $0x34] sm:$0xf]
  %v221 = vld [vmem:[%s1 + $0x38] sm:$0xf]
  %v222 = vld [vmem:[%s1 + $0x3c] sm:$0xf]
  %v223 = vld [vmem:[%s1 + $0x40] sm:$0xf]
  %v224 = vld [vmem:[%s1 + $0x44] sm:$0xf]
  %v225 = vld [vmem:[%s1 + $0x48] sm:$0xf]
  %v226 = vld [vmem:[%s1 + $0x4c] sm:$0xf]
  %v227 = vld [vmem:[%s1 + $0x50] sm:$0xf]
  %v228 = vld [vmem:[%s1 + $0x54] sm:$0xf]
  %v229 = vld [vmem:[%s1 + $0x58] sm:$0xf]
  %v230 = vld [vmem:[%s1 + $0x5c] sm:$0xf]
  %v231 = vld [vmem:[%s1 + $0x60] sm:$0xf]
  %v232 = vld [vmem:[%s1 + $0x64] sm:$0xf]
  %v233 = vld [vmem:[%s1 + $0x68] sm:$0xf]
  %v234 = vld [vmem:[%s1 + $0x6c] sm:$0xf]
  %v235 = vld [vmem:[%s1 + $0x70] sm:$0xf]
  %v236 = vld [vmem:[%s1 + $0x74] sm:$0xf]
  %v237 = vld [vmem:[%s1 + $0x78] sm:$0xf]
  %v238 = vld [vmem:[%s1 + $0x7c] sm:$0xf]
  %v239 = vld [vmem:[%s1 + $0x80] sm:$0xf]
  %v240 = vld [vmem:[%s1 + $0x84] sm:$0xf]
  %v241 = vld [vmem:[%s1 + $0x88] sm:$0xf]
  %v242 = vld [vmem:[%s1 + $0x8c] sm:$0xf]
  %v243 = vld [vmem:[%s1 + $0x90] sm:$0xf]
  %v244 = vld [vmem:[%s1 + $0x94] sm:$0xf]
  %v245 = vld [vmem:[%s1 + $0x98] sm:$0xf]
  %v246 = vld [vmem:[%s1 + $0x9c] sm:$0xf]
  %v247 = vld [vmem:[%s1 + $0xa0] sm:$0xf]
  %v248 = vld [vmem:[%s1 + $0xa4] sm:$0xf]
  %v249 = vld [vmem:[%s1 + $0xa8] sm:$0xf]
  %v250 = vld [vmem:[%s1 + $0xac] sm:$0xf]
  %v251 = vld [vmem:[%s1 + $0xb0] sm:$0xf]
  %v252 = vld [vmem:[%s1 + $0xb4] sm:$0xf]
  %v253 = vld [vmem:[%s1 + $0xb8] sm:$0xf]
  %v254 = vld [vmem:[%s1 + $0xbc] sm:$0xf]
  %v255 = vld [vmem:[%s1 + $0xc0] sm:$0xf]
  %v256 = vld [vmem:[%s1 + $0xc4] sm:$0xf]
  %v257 = vld [vmem:[%s1 + $0xc8] sm:$0xf]
  %v258 = vld [vmem:[%s1 + $0xcc] sm:$0xf]
  %v259 = vld [vmem:[%s1 + $0xd0] sm:$0xf]
  %v260 = vld [vmem:[%s1 + $0xd4] sm:$0xf]
  %v261 = vld [vmem:[%s1 + $0xd8] sm:$0xf]
  %v262 = vld [vmem:[%s1 + $0xdc] sm:$0xf]
  %v263 = vld [vmem:[%s1 + $0xe0] sm:$0xf]
  %v264 = vld [vmem:[%s1 + $0xe4] sm:$0xf]
  %v265 = vld [vmem:[%s1 + $0xe8] sm:$0xf]
  %v266 = vld [vmem:[%s1 + $0xec] sm:$0xf]
  %v267 = vld [vmem:[%s1 + $0xf0] sm:$0xf]
  %v268 = vld [vmem:[%s1 + $0xf4] sm:$0xf]
  %v269 = vld [vmem:[%s1 + $0xf8] sm:$0xf]
  %v270 = vld [vmem:[%s1 + $0xfc] sm:$0xf]
  %v271 = vld [vmem:[%s1 + $0x100] sm:$0xf]
  %v272 = vld [vmem:[%s1 + $0x104] sm:$0xf]
  %v273 = vld [vmem:[%s1 + $0x108] sm:$0xf]
  %v274 = vld [vmem:[%s1 + $0x10c] sm:$0xf]
  %v275 = vld [vmem:[%s1 + $0x110] sm:$0xf]
  %v276 = vld [vmem:[%s1 + $0x114] sm:$0xf]
  %v277 = vld [vmem:[%s1 + $0x118] sm:$0xf]
  %v278 = vld [vmem:[%s1 + $0x11c] sm:$0xf]
  %v279 = vld [vmem:[%s1 + $0x120] sm:$0xf]
  %v280 = vld [vmem:[%s1 + $0x124] sm:$0xf]
  %v281 = vld [vmem:[%s1 + $0x128] sm:$0xf]
  %v282 = vld [vmem:[%s1 + $0x12c] sm:$0xf]
  %v283 = vld [vmem:[%s1 + $0x130] sm:$0xf]
  %v284 = vld [vmem:[%s1 + $0x134] sm:$0xf]
  %v285 = vld [vmem:[%s1 + $0x138] sm:$0xf]
  %v286 = vld [vmem:[%s1 + $0x13c] sm:$0xf]
  %v287 = vld [vmem:[%s2] sm:$0x1]
  %v289 = vlaneseq
  %v290 = vshrl.u32 %v289, 7
  %v291 = vsub.s32 0, %v290
  %v292 = vrot.slane %v287, %v291
  %v486 = vunpack.c.l.b16 %v15
  %v487 = vunpack.c.h.b16 %v15
  %v488 = vunpack.c.l.b16 %v16
  %v489 = vunpack.c.h.b16 %v16
  %v490 = vunpack.c.l.b16 %v17
  %v491 = vunpack.c.l.b16 %v18
  %v492 = vunpack.c.h.b16 %v18
  %v493 = vunpack.c.l.b16 %v19
  %v494 = vunpack.c.h.b16 %v19
  %v495 = vunpack.c.l.b16 %v20
  %v496 = vunpack.c.l.b16 %v21
  %v497 = vunpack.c.h.b16 %v21
  %v498 = vunpack.c.l.b16 %v22
  %v499 = vunpack.c.h.b16 %v22
  %v500 = vunpack.c.l.b16 %v23
  %v501 = vunpack.c.l.b16 %v24
  %v502 = vunpack.c.h.b16 %v24
  %v503 = vunpack.c.l.b16 %v25
  %v504 = vunpack.c.h.b16 %v25
  %v505 = vunpack.c.l.b16 %v26
  %v506 = vunpack.c.l.b16 %v27
  %v507 = vunpack.c.h.b16 %v27
  %v508 = vunpack.c.l.b16 %v28
  %v509 = vunpack.c.h.b16 %v28
  %v510 = vunpack.c.l.b16 %v29
  %v511 = vunpack.c.l.b16 %v30
  %v512 = vunpack.c.h.b16 %v30
  %v513 = vunpack.c.l.b16 %v31
  %v514 = vunpack.c.h.b16 %v31
  %v515 = vunpack.c.l.b16 %v32
  %v516 = vunpack.c.l.b16 %v33
  %v517 = vunpack.c.h.b16 %v33
  %v518 = vunpack.c.l.b16 %v34
  %v519 = vunpack.c.h.b16 %v34
  %v520 = vunpack.c.l.b16 %v35
  %v521 = vunpack.c.l.b16 %v36
  %v522 = vunpack.c.h.b16 %v36
  %v523 = vunpack.c.l.b16 %v37
  %v524 = vunpack.c.h.b16 %v37
  %v525 = vunpack.c.l.b16 %v38
  %v526 = vunpack.c.l.b16 %v39
  %v527 = vunpack.c.h.b16 %v39
  %v528 = vunpack.c.l.b16 %v40
  %v529 = vunpack.c.h.b16 %v40
  %v530 = vunpack.c.l.b16 %v41
  %v531 = vunpack.c.l.b16 %v42
  %v532 = vunpack.c.h.b16 %v42
  %v533 = vunpack.c.l.b16 %v43
  %v534 = vunpack.c.h.b16 %v43
  %v535 = vunpack.c.l.b16 %v44
  %v536 = vunpack.c.l.b16 %v45
  %v537 = vunpack.c.h.b16 %v45
  %v538 = vunpack.c.l.b16 %v46
  %v539 = vunpack.c.h.b16 %v46
  %v540 = vunpack.c.l.b16 %v47
  %v541 = vunpack.c.l.b16 %v48
  %v542 = vunpack.c.h.b16 %v48
  %v543 = vunpack.c.l.b16 %v49
  %v544 = vunpack.c.h.b16 %v49
  %v545 = vunpack.c.l.b16 %v50
  %v546 = vunpack.c.l.b16 %v51
  %v547 = vunpack.c.h.b16 %v51
  %v548 = vunpack.c.l.b16 %v52
  %v549 = vunpack.c.h.b16 %v52
  %v550 = vunpack.c.l.b16 %v53
  %v551 = vunpack.c.l.b16 %v54
  %v552 = vunpack.c.h.b16 %v54
  %v553 = vunpack.c.l.b16 %v55
  %v554 = vunpack.c.h.b16 %v55
  %v555 = vunpack.c.l.b16 %v56
  %v556 = vunpack.c.l.b16 %v57
  %v557 = vunpack.c.h.b16 %v57
  %v558 = vunpack.c.l.b16 %v58
  %v559 = vunpack.c.h.b16 %v58
  %v560 = vunpack.c.l.b16 %v59
  %v561 = vunpack.c.l.b16 %v60
  %v562 = vunpack.c.h.b16 %v60
  %v563 = vunpack.c.l.b16 %v61
  %v564 = vunpack.c.h.b16 %v61
  %v565 = vunpack.c.l.b16 %v62
  %v566 = vunpack.c.l.b16 %v63
  %v567 = vunpack.c.h.b16 %v63
  %v568 = vunpack.c.l.b16 %v64
  %v569 = vunpack.c.h.b16 %v64
  %v570 = vunpack.c.l.b16 %v65
  %v571 = vunpack.c.l.b16 %v66
  %v572 = vunpack.c.h.b16 %v66
  %v573 = vunpack.c.l.b16 %v67
  %v574 = vunpack.c.h.b16 %v67
  %v575 = vunpack.c.l.b16 %v68
  %v576 = vunpack.c.l.b16 %v69
  %v577 = vunpack.c.h.b16 %v69
  %v578 = vunpack.c.l.b16 %v70
  %v579 = vunpack.c.h.b16 %v70
  %v580 = vunpack.c.l.b16 %v71
  %v581 = vunpack.c.l.b16 %v72
  %v582 = vunpack.c.h.b16 %v72
  %v583 = vunpack.c.l.b16 %v73
  %v584 = vunpack.c.h.b16 %v73
  %v585 = vunpack.c.l.b16 %v74
  %v586 = vunpack.c.l.b16 %v75
  %v587 = vunpack.c.h.b16 %v75
  %v588 = vunpack.c.l.b16 %v76
  %v589 = vunpack.c.h.b16 %v76
  %v590 = vunpack.c.l.b16 %v77
  %v591 = vunpack.c.l.b16 %v78
  %v592 = vunpack.c.h.b16 %v78
  %v593 = vunpack.c.l.b16 %v79
  %v594 = vunpack.c.h.b16 %v79
  %v595 = vunpack.c.l.b16 %v80
  %v596 = vunpack.c.l.b16 %v81
  %v597 = vunpack.c.h.b16 %v81
  %v598 = vunpack.c.l.b16 %v82
  %v599 = vunpack.c.h.b16 %v82
  %v600 = vunpack.c.l.b16 %v83
  %v601 = vunpack.c.l.b16 %v84
  %v602 = vunpack.c.h.b16 %v84
  %v603 = vunpack.c.l.b16 %v85
  %v604 = vunpack.c.h.b16 %v85
  %v605 = vunpack.c.l.b16 %v86
  %v606 = vunpack.c.l.b16 %v87
  %v607 = vunpack.c.h.b16 %v87
  %v608 = vunpack.c.l.b16 %v88
  %v609 = vunpack.c.h.b16 %v88
  %v610 = vunpack.c.l.b16 %v89
  %v611 = vunpack.c.l.b16 %v90
  %v612 = vunpack.c.h.b16 %v90
  %v613 = vunpack.c.l.b16 %v91
  %v614 = vunpack.c.h.b16 %v91
  %v615 = vunpack.c.l.b16 %v92
  %v616 = vunpack.c.l.b16 %v93
  %v617 = vunpack.c.h.b16 %v93
  %v618 = vunpack.c.l.b16 %v94
  %v619 = vunpack.c.h.b16 %v94
  %v620 = vunpack.c.l.b16 %v95
  %v621 = vunpack.c.l.b16 %v96
  %v622 = vunpack.c.h.b16 %v96
  %v623 = vunpack.c.l.b16 %v97
  %v624 = vunpack.c.h.b16 %v97
  %v625 = vunpack.c.l.b16 %v98
  %v626 = vunpack.c.l.b16 %v99
  %v627 = vunpack.c.h.b16 %v99
  %v628 = vunpack.c.l.b16 %v100
  %v629 = vunpack.c.h.b16 %v100
  %v630 = vunpack.c.l.b16 %v101
  %v631 = vunpack.c.l.b16 %v102
  %v632 = vunpack.c.h.b16 %v102
  %v633 = vunpack.c.l.b16 %v103
  %v634 = vunpack.c.h.b16 %v103
  %v635 = vunpack.c.l.b16 %v104
  %v636 = vunpack.c.l.b16 %v105
  %v637 = vunpack.c.h.b16 %v105
  %v638 = vunpack.c.l.b16 %v106
  %v639 = vunpack.c.h.b16 %v106
  %v640 = vunpack.c.l.b16 %v107
  %v641 = vunpack.c.l.b16 %v108
  %v642 = vunpack.c.h.b16 %v108
  %v643 = vunpack.c.l.b16 %v109
  %v644 = vunpack.c.h.b16 %v109
  %v645 = vunpack.c.l.b16 %v110
  %v646 = vunpack.c.l.b16 %v111
  %v647 = vunpack.c.h.b16 %v111
  %v648 = vunpack.c.l.b16 %v112
  %v649 = vunpack.c.h.b16 %v112
  %v650 = vunpack.c.l.b16 %v113
  %v651 = vunpack.c.l.b16 %v114
  %v652 = vunpack.c.h.b16 %v114
  %v653 = vunpack.c.l.b16 %v115
  %v654 = vunpack.c.h.b16 %v115
  %v655 = vunpack.c.l.b16 %v116
  %v656 = vunpack.c.l.b16 %v117
  %v657 = vunpack.c.h.b16 %v117
  %v658 = vunpack.c.l.b16 %v118
  %v659 = vunpack.c.h.b16 %v118
  %v660 = vunpack.c.l.b16 %v119
  %v661 = vunpack.c.l.b16 %v120
  %v662 = vunpack.c.h.b16 %v120
  %v663 = vunpack.c.l.b16 %v121
  %v664 = vunpack.c.h.b16 %v121
  %v665 = vunpack.c.l.b16 %v122
  %v666 = vunpack.c.l.b16 %v123
  %v667 = vunpack.c.h.b16 %v123
  %v668 = vunpack.c.l.b16 %v124
  %v669 = vunpack.c.h.b16 %v124
  %v670 = vunpack.c.l.b16 %v125
  %v671 = vunpack.c.l.b16 %v126
  %v672 = vunpack.c.h.b16 %v126
  %v673 = vunpack.c.l.b16 %v127
  %v674 = vunpack.c.h.b16 %v127
  %v675 = vunpack.c.l.b16 %v128
  %v676 = vunpack.c.l.b16 %v129
  %v677 = vunpack.c.h.b16 %v129
  %v678 = vunpack.c.l.b16 %v130
  %v679 = vunpack.c.h.b16 %v130
  %v680 = vunpack.c.l.b16 %v131
  %v681 = vunpack.c.l.b16 %v132
  %v682 = vunpack.c.h.b16 %v132
  %v683 = vunpack.c.l.b16 %v133
  %v684 = vunpack.c.h.b16 %v133
  %v685 = vunpack.c.l.b16 %v134
  %v686 = vunpack.c.l.b16 %v135
  %v687 = vunpack.c.h.b16 %v135
  %v688 = vunpack.c.l.b16 %v136
  %v689 = vunpack.c.h.b16 %v136
  %v690 = vunpack.c.l.b16 %v137
  %v691 = vunpack.c.l.b16 %v138
  %v692 = vunpack.c.h.b16 %v138
  %v693 = vunpack.c.l.b16 %v139
  %v694 = vunpack.c.h.b16 %v139
  %v695 = vunpack.c.l.b16 %v140
  %v696 = vunpack.c.l.b16 %v141
  %v697 = vunpack.c.h.b16 %v141
  %v698 = vunpack.c.l.b16 %v142
  %v699 = vunpack.c.h.b16 %v142
  %v700 = vunpack.c.l.b16 %v143
  %v701 = vunpack.c.l.b16 %v144
  %v702 = vunpack.c.h.b16 %v144
  %v703 = vunpack.c.l.b16 %v145
  %v704 = vunpack.c.h.b16 %v145
  %v705 = vunpack.c.l.b16 %v146
  %v706 = vunpack.c.l.b16 %v147
  %v707 = vunpack.c.h.b16 %v147
  %v708 = vunpack.c.l.b16 %v148
  %v709 = vunpack.c.h.b16 %v148
  %v710 = vunpack.c.l.b16 %v149
  %v711 = vunpack.c.l.b16 %v150
  %v712 = vunpack.c.h.b16 %v150
  %v713 = vunpack.c.l.b16 %v151
  %v714 = vunpack.c.h.b16 %v151
  %v715 = vunpack.c.l.b16 %v152
  %v716 = vunpack.c.l.b16 %v153
  %v717 = vunpack.c.h.b16 %v153
  %v718 = vunpack.c.l.b16 %v154
  %v719 = vunpack.c.h.b16 %v154
  %v720 = vunpack.c.l.b16 %v155
  %v721 = vunpack.c.l.b16 %v156
  %v722 = vunpack.c.h.b16 %v156
  %v723 = vunpack.c.l.b16 %v157
  %v724 = vunpack.c.h.b16 %v157
  %v725 = vunpack.c.l.b16 %v158
  %v726 = vunpack.c.l.b16 %v159
  %v727 = vunpack.c.h.b16 %v159
  %v728 = vunpack.c.l.b16 %v160
  %v729 = vunpack.c.h.b16 %v160
  %v730 = vunpack.c.l.b16 %v161
  %v731 = vunpack.c.l.b16 %v162
  %v732 = vunpack.c.h.b16 %v162
  %v733 = vunpack.c.l.b16 %v163
  %v734 = vunpack.c.h.b16 %v163
  %v735 = vunpack.c.l.b16 %v164
  %v736 = vunpack.c.l.b16 %v165
  %v737 = vunpack.c.h.b16 %v165
  %v738 = vunpack.c.l.b16 %v166
  %v739 = vunpack.c.h.b16 %v166
  %v740 = vunpack.c.l.b16 %v167
  %v741 = vunpack.c.l.b16 %v168
  %v742 = vunpack.c.h.b16 %v168
  %v743 = vunpack.c.l.b16 %v169
  %v744 = vunpack.c.h.b16 %v169
  %v745 = vunpack.c.l.b16 %v170
  %v746 = vunpack.c.l.b16 %v171
  %v747 = vunpack.c.h.b16 %v171
  %v748 = vunpack.c.l.b16 %v172
  %v749 = vunpack.c.h.b16 %v172
  %v750 = vunpack.c.l.b16 %v173
  %v751 = vunpack.c.l.b16 %v174
  %v752 = vunpack.c.h.b16 %v174
  %v753 = vunpack.c.l.b16 %v175
  %v754 = vunpack.c.h.b16 %v175
  %v755 = vunpack.c.l.b16 %v176
  %v756 = vunpack.c.l.b16 %v177
  %v757 = vunpack.c.h.b16 %v177
  %v758 = vunpack.c.l.b16 %v178
  %v759 = vunpack.c.h.b16 %v178
  %v760 = vunpack.c.l.b16 %v179
  %v761 = vunpack.c.l.b16 %v180
  %v762 = vunpack.c.h.b16 %v180
  %v763 = vunpack.c.l.b16 %v181
  %v764 = vunpack.c.h.b16 %v181
  %v765 = vunpack.c.l.b16 %v182
  %v766 = vunpack.c.l.b16 %v183
  %v767 = vunpack.c.h.b16 %v183
  %v768 = vunpack.c.l.b16 %v184
  %v769 = vunpack.c.h.b16 %v184
  %v770 = vunpack.c.l.b16 %v185
  %v771 = vunpack.c.l.b16 %v186
  %v772 = vunpack.c.h.b16 %v186
  %v773 = vunpack.c.l.b16 %v187
  %v774 = vunpack.c.h.b16 %v187
  %v775 = vunpack.c.l.b16 %v188
  %v776 = vunpack.c.l.b16 %v189
  %v777 = vunpack.c.h.b16 %v189
  %v778 = vunpack.c.l.b16 %v190
  %v779 = vunpack.c.h.b16 %v190
  %v780 = vunpack.c.l.b16 %v191
  %v781 = vunpack.c.l.b16 %v192
  %v782 = vunpack.c.h.b16 %v192
  %v783 = vunpack.c.l.b16 %v193
  %v784 = vunpack.c.h.b16 %v193
  %v785 = vunpack.c.l.b16 %v194
  %v786 = vunpack.c.l.b16 %v195
  %v787 = vunpack.c.h.b16 %v195
  %v788 = vunpack.c.l.b16 %v196
  %v789 = vunpack.c.h.b16 %v196
  %v790 = vunpack.c.l.b16 %v197
  %v791 = vunpack.c.l.b16 %v198
  %v792 = vunpack.c.h.b16 %v198
  %v793 = vunpack.c.l.b16 %v199
  %v794 = vunpack.c.h.b16 %v199
  %v795 = vunpack.c.l.b16 %v200
  %v796 = vunpack.c.l.b16 %v201
  %v797 = vunpack.c.h.b16 %v201
  %v798 = vunpack.c.l.b16 %v202
  %v799 = vunpack.c.h.b16 %v202
  %v800 = vunpack.c.l.b16 %v203
  %v801 = vunpack.c.l.b16 %v204
  %v802 = vunpack.c.h.b16 %v204
  %v803 = vunpack.c.l.b16 %v205
  %v804 = vunpack.c.h.b16 %v205
  %v805 = vunpack.c.l.b16 %v206
  %v806 = vpack.c.b16 %v491, %v486
  %v807 = vpack.c.b16 %v492, %v487
  %v808 = vpack.c.b16 %v493, %v488
  %v809 = vpack.c.b16 %v494, %v489
  %v810 = vpack.c.b16 %v495, %v490
  %v811 = vpack.c.b16 %v501, %v496
  %v812 = vpack.c.b16 %v502, %v497
  %v813 = vpack.c.b16 %v503, %v498
  %v814 = vpack.c.b16 %v504, %v499
  %v815 = vpack.c.b16 %v505, %v500
  %v816 = vpack.c.b16 %v511, %v506
  %v817 = vpack.c.b16 %v512, %v507
  %v818 = vpack.c.b16 %v513, %v508
  %v819 = vpack.c.b16 %v514, %v509
  %v820 = vpack.c.b16 %v515, %v510
  %v821 = vpack.c.b16 %v521, %v516
  %v822 = vpack.c.b16 %v522, %v517
  %v823 = vpack.c.b16 %v523, %v518
  %v824 = vpack.c.b16 %v524, %v519
  %v825 = vpack.c.b16 %v525, %v520
  %v826 = vpack.c.b16 %v531, %v526
  %v827 = vpack.c.b16 %v532, %v527
  %v828 = vpack.c.b16 %v533, %v528
  %v829 = vpack.c.b16 %v534, %v529
  %v830 = vpack.c.b16 %v535, %v530
  %v831 = vpack.c.b16 %v541, %v536
  %v832 = vpack.c.b16 %v542, %v537
  %v833 = vpack.c.b16 %v543, %v538
  %v834 = vpack.c.b16 %v544, %v539
  %v835 = vpack.c.b16 %v545, %v540
  %v836 = vpack.c.b16 %v551, %v546
  %v837 = vpack.c.b16 %v552, %v547
  %v838 = vpack.c.b16 %v553, %v548
  %v839 = vpack.c.b16 %v554, %v549
  %v840 = vpack.c.b16 %v555, %v550
  %v841 = vpack.c.b16 %v561, %v556
  %v842 = vpack.c.b16 %v562, %v557
  %v843 = vpack.c.b16 %v563, %v558
  %v844 = vpack.c.b16 %v564, %v559
  %v845 = vpack.c.b16 %v565, %v560
  %v846 = vpack.c.b16 %v571, %v566
  %v847 = vpack.c.b16 %v572, %v567
  %v848 = vpack.c.b16 %v573, %v568
  %v849 = vpack.c.b16 %v574, %v569
  %v850 = vpack.c.b16 %v575, %v570
  %v851 = vpack.c.b16 %v581, %v576
  %v852 = vpack.c.b16 %v582, %v577
  %v853 = vpack.c.b16 %v583, %v578
  %v854 = vpack.c.b16 %v584, %v579
  %v855 = vpack.c.b16 %v585, %v580
  %v856 = vpack.c.b16 %v591, %v586
  %v857 = vpack.c.b16 %v592, %v587
  %v858 = vpack.c.b16 %v593, %v588
  %v859 = vpack.c.b16 %v594, %v589
  %v860 = vpack.c.b16 %v595, %v590
  %v861 = vpack.c.b16 %v601, %v596
  %v862 = vpack.c.b16 %v602, %v597
  %v863 = vpack.c.b16 %v603, %v598
  %v864 = vpack.c.b16 %v604, %v599
  %v865 = vpack.c.b16 %v605, %v600
  %v866 = vpack.c.b16 %v611, %v606
  %v867 = vpack.c.b16 %v612, %v607
  %v868 = vpack.c.b16 %v613, %v608
  %v869 = vpack.c.b16 %v614, %v609
  %v870 = vpack.c.b16 %v615, %v610
  %v871 = vpack.c.b16 %v621, %v616
  %v872 = vpack.c.b16 %v622, %v617
  %v873 = vpack.c.b16 %v623, %v618
  %v874 = vpack.c.b16 %v624, %v619
  %v875 = vpack.c.b16 %v625, %v620
  %v876 = vpack.c.b16 %v631, %v626
  %v877 = vpack.c.b16 %v632, %v627
  %v878 = vpack.c.b16 %v633, %v628
  %v879 = vpack.c.b16 %v634, %v629
  %v880 = vpack.c.b16 %v635, %v630
  %v881 = vpack.c.b16 %v641, %v636
  %v882 = vpack.c.b16 %v642, %v637
  %v883 = vpack.c.b16 %v643, %v638
  %v884 = vpack.c.b16 %v644, %v639
  %v885 = vpack.c.b16 %v645, %v640
  %v886 = vpack.c.b16 %v651, %v646
  %v887 = vpack.c.b16 %v652, %v647
  %v888 = vpack.c.b16 %v653, %v648
  %v889 = vpack.c.b16 %v654, %v649
  %v890 = vpack.c.b16 %v655, %v650
  %v891 = vpack.c.b16 %v661, %v656
  %v892 = vpack.c.b16 %v662, %v657
  %v893 = vpack.c.b16 %v663, %v658
  %v894 = vpack.c.b16 %v664, %v659
  %v895 = vpack.c.b16 %v665, %v660
  %v896 = vpack.c.b16 %v671, %v666
  %v897 = vpack.c.b16 %v672, %v667
  %v898 = vpack.c.b16 %v673, %v668
  %v899 = vpack.c.b16 %v674, %v669
  %v900 = vpack.c.b16 %v675, %v670
  %v901 = vpack.c.b16 %v681, %v676
  %v902 = vpack.c.b16 %v682, %v677
  %v903 = vpack.c.b16 %v683, %v678
  %v904 = vpack.c.b16 %v684, %v679
  %v905 = vpack.c.b16 %v685, %v680
  %v906 = vpack.c.b16 %v691, %v686
  %v907 = vpack.c.b16 %v692, %v687
  %v908 = vpack.c.b16 %v693, %v688
  %v909 = vpack.c.b16 %v694, %v689
  %v910 = vpack.c.b16 %v695, %v690
  %v911 = vpack.c.b16 %v701, %v696
  %v912 = vpack.c.b16 %v702, %v697
  %v913 = vpack.c.b16 %v703, %v698
  %v914 = vpack.c.b16 %v704, %v699
  %v915 = vpack.c.b16 %v705, %v700
  %v916 = vpack.c.b16 %v711, %v706
  %v917 = vpack.c.b16 %v712, %v707
  %v918 = vpack.c.b16 %v713, %v708
  %v919 = vpack.c.b16 %v714, %v709
  %v920 = vpack.c.b16 %v715, %v710
  %v921 = vpack.c.b16 %v721, %v716
  %v922 = vpack.c.b16 %v722, %v717
  %v923 = vpack.c.b16 %v723, %v718
  %v924 = vpack.c.b16 %v724, %v719
  %v925 = vpack.c.b16 %v725, %v720
  %v926 = vpack.c.b16 %v731, %v726
  %v927 = vpack.c.b16 %v732, %v727
  %v928 = vpack.c.b16 %v733, %v728
  %v929 = vpack.c.b16 %v734, %v729
  %v930 = vpack.c.b16 %v735, %v730
  %v931 = vpack.c.b16 %v741, %v736
  %v932 = vpack.c.b16 %v742, %v737
  %v933 = vpack.c.b16 %v743, %v738
  %v934 = vpack.c.b16 %v744, %v739
  %v935 = vpack.c.b16 %v745, %v740
  %v936 = vpack.c.b16 %v751, %v746
  %v937 = vpack.c.b16 %v752, %v747
  %v938 = vpack.c.b16 %v753, %v748
  %v939 = vpack.c.b16 %v754, %v749
  %v940 = vpack.c.b16 %v755, %v750
  %v941 = vpack.c.b16 %v761, %v756
  %v942 = vpack.c.b16 %v762, %v757
  %v943 = vpack.c.b16 %v763, %v758
  %v944 = vpack.c.b16 %v764, %v759
  %v945 = vpack.c.b16 %v765, %v760
  %v946 = vpack.c.b16 %v771, %v766
  %v947 = vpack.c.b16 %v772, %v767
  %v948 = vpack.c.b16 %v773, %v768
  %v949 = vpack.c.b16 %v774, %v769
  %v950 = vpack.c.b16 %v775, %v770
  %v951 = vpack.c.b16 %v781, %v776
  %v952 = vpack.c.b16 %v782, %v777
  %v953 = vpack.c.b16 %v783, %v778
  %v954 = vpack.c.b16 %v784, %v779
  %v955 = vpack.c.b16 %v785, %v780
  %v956 = vpack.c.b16 %v791, %v786
  %v957 = vpack.c.b16 %v792, %v787
  %v958 = vpack.c.b16 %v793, %v788
  %v959 = vpack.c.b16 %v794, %v789
  %v960 = vpack.c.b16 %v795, %v790
  %v961 = vpack.c.b16 %v801, %v796
  %v962 = vpack.c.b16 %v802, %v797
  %v963 = vpack.c.b16 %v803, %v798
  %v964 = vpack.c.b16 %v804, %v799
  %v965 = vpack.c.b16 %v805, %v800
  %v1206 = vunpack.c.l.b16 %v207
  %v1207 = vunpack.c.l.b16 %v208
  %v1208 = vunpack.c.l.b16 %v209
  %v1209 = vunpack.c.l.b16 %v210
  %v1210 = vunpack.c.l.b16 %v211
  %v1211 = vunpack.c.l.b16 %v212
  %v1212 = vunpack.c.l.b16 %v213
  %v1213 = vunpack.c.l.b16 %v214
  %v1214 = vunpack.c.l.b16 %v215
  %v1215 = vunpack.c.l.b16 %v216
  %v1216 = vunpack.c.l.b16 %v217
  %v1217 = vunpack.c.l.b16 %v218
  %v1218 = vunpack.c.l.b16 %v219
  %v1219 = vunpack.c.l.b16 %v220
  %v1220 = vunpack.c.l.b16 %v221
  %v1221 = vunpack.c.l.b16 %v222
  %v1222 = vunpack.c.l.b16 %v223
  %v1223 = vunpack.c.l.b16 %v224
  %v1224 = vunpack.c.l.b16 %v225
  %v1225 = vunpack.c.l.b16 %v226
  %v1226 = vunpack.c.l.b16 %v227
  %v1227 = vunpack.c.l.b16 %v228
  %v1228 = vunpack.c.l.b16 %v229
  %v1229 = vunpack.c.l.b16 %v230
  %v1230 = vunpack.c.l.b16 %v231
  %v1231 = vunpack.c.l.b16 %v232
  %v1232 = vunpack.c.l.b16 %v233
  %v1233 = vunpack.c.l.b16 %v234
  %v1234 = vunpack.c.l.b16 %v235
  %v1235 = vunpack.c.l.b16 %v236
  %v1236 = vunpack.c.l.b16 %v237
  %v1237 = vunpack.c.l.b16 %v238
  %v1238 = vunpack.c.l.b16 %v239
  %v1239 = vunpack.c.l.b16 %v240
  %v1240 = vunpack.c.l.b16 %v241
  %v1241 = vunpack.c.l.b16 %v242
  %v1242 = vunpack.c.l.b16 %v243
  %v1243 = vunpack.c.l.b16 %v244
  %v1244 = vunpack.c.l.b16 %v245
  %v1245 = vunpack.c.l.b16 %v246
  %v1246 = vunpack.c.l.b16 %v247
  %v1247 = vunpack.c.l.b16 %v248
  %v1248 = vunpack.c.l.b16 %v249
  %v1249 = vunpack.c.l.b16 %v250
  %v1250 = vunpack.c.l.b16 %v251
  %v1251 = vunpack.c.l.b16 %v252
  %v1252 = vunpack.c.l.b16 %v253
  %v1253 = vunpack.c.l.b16 %v254
  %v1254 = vunpack.c.l.b16 %v255
  %v1255 = vunpack.c.l.b16 %v256
  %v1256 = vunpack.c.l.b16 %v257
  %v1257 = vunpack.c.l.b16 %v258
  %v1258 = vunpack.c.l.b16 %v259
  %v1259 = vunpack.c.l.b16 %v260
  %v1260 = vunpack.c.l.b16 %v261
  %v1261 = vunpack.c.l.b16 %v262
  %v1262 = vunpack.c.l.b16 %v263
  %v1263 = vunpack.c.l.b16 %v264
  %v1264 = vunpack.c.l.b16 %v265
  %v1265 = vunpack.c.l.b16 %v266
  %v1266 = vunpack.c.l.b16 %v267
  %v1267 = vunpack.c.l.b16 %v268
  %v1268 = vunpack.c.l.b16 %v269
  %v1269 = vunpack.c.l.b16 %v270
  %v1270 = vunpack.c.l.b16 %v271
  %v1271 = vunpack.c.l.b16 %v272
  %v1272 = vunpack.c.l.b16 %v273
  %v1273 = vunpack.c.l.b16 %v274
  %v1274 = vunpack.c.l.b16 %v275
  %v1275 = vunpack.c.l.b16 %v276
  %v1276 = vunpack.c.l.b16 %v277
  %v1277 = vunpack.c.l.b16 %v278
  %v1278 = vunpack.c.l.b16 %v279
  %v1279 = vunpack.c.l.b16 %v280
  %v1280 = vunpack.c.l.b16 %v281
  %v1281 = vunpack.c.l.b16 %v282
  %v1282 = vunpack.c.l.b16 %v283
  %v1283 = vunpack.c.l.b16 %v284
  %v1284 = vunpack.c.l.b16 %v285
  %v1285 = vunpack.c.l.b16 %v286
  %v1286 = vpack.c.b16 %v1207, %v1206
  %v1287 = vpack.c.b16 %v1209, %v1208
  %v1288 = vpack.c.b16 %v1211, %v1210
  %v1289 = vpack.c.b16 %v1213, %v1212
  %v1290 = vpack.c.b16 %v1215, %v1214
  %v1291 = vpack.c.b16 %v1217, %v1216
  %v1292 = vpack.c.b16 %v1219, %v1218
  %v1293 = vpack.c.b16 %v1221, %v1220
  %v1294 = vpack.c.b16 %v1223, %v1222
  %v1295 = vpack.c.b16 %v1225, %v1224
  %v1296 = vpack.c.b16 %v1227, %v1226
  %v1297 = vpack.c.b16 %v1229, %v1228
  %v1298 = vpack.c.b16 %v1231, %v1230
  %v1299 = vpack.c.b16 %v1233, %v1232
  %v1300 = vpack.c.b16 %v1235, %v1234
  %v1301 = vpack.c.b16 %v1237, %v1236
  %v1302 = vpack.c.b16 %v1239, %v1238
  %v1303 = vpack.c.b16 %v1241, %v1240
  %v1304 = vpack.c.b16 %v1243, %v1242
  %v1305 = vpack.c.b16 %v1245, %v1244
  %v1306 = vpack.c.b16 %v1247, %v1246
  %v1307 = vpack.c.b16 %v1249, %v1248
  %v1308 = vpack.c.b16 %v1251, %v1250
  %v1309 = vpack.c.b16 %v1253, %v1252
  %v1310 = vpack.c.b16 %v1255, %v1254
  %v1311 = vpack.c.b16 %v1257, %v1256
  %v1312 = vpack.c.b16 %v1259, %v1258
  %v1313 = vpack.c.b16 %v1261, %v1260
  %v1314 = vpack.c.b16 %v1263, %v1262
  %v1315 = vpack.c.b16 %v1265, %v1264
  %v1316 = vpack.c.b16 %v1267, %v1266
  %v1317 = vpack.c.b16 %v1269, %v1268
  %v1318 = vpack.c.b16 %v1271, %v1270
  %v1319 = vpack.c.b16 %v1273, %v1272
  %v1320 = vpack.c.b16 %v1275, %v1274
  %v1321 = vpack.c.b16 %v1277, %v1276
  %v1322 = vpack.c.b16 %v1279, %v1278
  %v1323 = vpack.c.b16 %v1281, %v1280
  %v1324 = vpack.c.b16 %v1283, %v1282
  %v1325 = vpack.c.b16 %v1285, %v1284
  %1366 = vmatprep.subr.bf16.mxu0 0
  %1367 = vmatpush1.bf16.msra.mxu0 %v1293
  %1368 = vmatprep.subr.bf16.mxu0 0
  %1369 = vmatpush1.bf16.msra.mxu0 %v1292
  %1370 = vmatprep.subr.bf16.mxu0 0
  %1371 = vmatpush1.bf16.msra.mxu0 %v1291
  %1372 = vmatprep.subr.bf16.mxu0 0
  %1373 = vmatpush1.bf16.msra.mxu0 %v1290
  %1374 = vmatprep.subr.bf16.mxu0 0
  %1375 = vmatpush1.bf16.msra.mxu0 %v1289
  %1376 = vmatprep.subr.bf16.mxu0 0
  %1377 = vmatpush1.bf16.msra.mxu0 %v1288
  %1378 = vmatprep.subr.bf16.mxu0 0
  %1379 = vmatpush1.bf16.msra.mxu0 %v1287
  %1380 = vmatprep.subr.bf16.mxu0 0
  %1381 = vmatpush1.bf16.msra.mxu0 %v1286
  %1382 = vmatprep.subr.bf16.mxu0 0
  %1383 = vmatpush2.bf16.msra.mxu0 %v1301
  %1384 = vmatprep.subr.bf16.mxu0 0
  %1385 = vmatpush2.bf16.msra.mxu0 %v1300
  %1386 = vmatprep.subr.bf16.mxu0 0
  %1387 = vmatpush2.bf16.msra.mxu0 %v1299
  %1388 = vmatprep.subr.bf16.mxu0 0
  %1389 = vmatpush2.bf16.msra.mxu0 %v1298
  %1390 = vmatprep.subr.bf16.mxu0 0
  %1391 = vmatpush2.bf16.msra.mxu0 %v1297
  %1392 = vmatprep.subr.bf16.mxu0 0
  %1393 = vmatpush2.bf16.msra.mxu0 %v1296
  %1394 = vmatprep.subr.bf16.mxu0 0
  %1395 = vmatpush2.bf16.msra.mxu0 %v1295
  %1396 = vmatprep.subr.bf16.mxu0 0
  %1397 = vmatpush2.bf16.msra.mxu0 %v1294
  %1398 = vmatprep.mubr.bf16.mxu0 %v807
  %1399 = vmatmul.mubr.bf16.gmra.mxu0 %v806
  %v1400 = vpop.f32.mrf.mxu0
  %v1401 = vadd.f32 %v292, %v1400
  %v1402 = vpop.f32.mrf.mxu0
  %v1403 = vpop.f32.mrf.mxu0
  %v1404 = vadd.f32 %v292, %v1403
  %v1405 = vpop.f32.mrf.mxu0
  %1406 = vmatprep.mubr.bf16.mxu0 %v812
  %1407 = vmatmul.mubr.bf16.gmra.mxu0 %v811
  %v1408 = vpop.f32.mrf.mxu0
  %v1409 = vadd.f32 %v292, %v1408
  %v1410 = vpop.f32.mrf.mxu0
  %v1411 = vpop.f32.mrf.mxu0
  %v1412 = vadd.f32 %v292, %v1411
  %v1413 = vpop.f32.mrf.mxu0
  %1414 = vmatprep.mubr.bf16.mxu0 %v817
  %1415 = vmatmul.mubr.bf16.gmra.mxu0 %v816
  %v1416 = vpop.f32.mrf.mxu0
  %v1417 = vadd.f32 %v292, %v1416
  %v1418 = vpop.f32.mrf.mxu0
  %v1419 = vpop.f32.mrf.mxu0
  %v1420 = vadd.f32 %v292, %v1419
  %v1421 = vpop.f32.mrf.mxu0
  %1422 = vmatprep.mubr.bf16.mxu0 %v822
  %1423 = vmatmul.mubr.bf16.gmra.mxu0 %v821
  %v1424 = vpop.f32.mrf.mxu0
  %v1425 = vadd.f32 %v292, %v1424
  %v1426 = vpop.f32.mrf.mxu0
  %v1427 = vpop.f32.mrf.mxu0
  %v1428 = vadd.f32 %v292, %v1427
  %v1429 = vpop.f32.mrf.mxu0
  %1430 = vmatprep.mubr.bf16.mxu0 %v827
  %1431 = vmatmul.mubr.bf16.gmra.mxu0 %v826
  %v1432 = vpop.f32.mrf.mxu0
  %v1433 = vadd.f32 %v292, %v1432
  %v1434 = vpop.f32.mrf.mxu0
  %v1435 = vpop.f32.mrf.mxu0
  %v1436 = vadd.f32 %v292, %v1435
  %v1437 = vpop.f32.mrf.mxu0
  %1438 = vmatprep.mubr.bf16.mxu0 %v832
  %1439 = vmatmul.mubr.bf16.gmra.mxu0 %v831
  %v1440 = vpop.f32.mrf.mxu0
  %v1441 = vadd.f32 %v292, %v1440
  %v1442 = vpop.f32.mrf.mxu0
  %v1443 = vpop.f32.mrf.mxu0
  %v1444 = vadd.f32 %v292, %v1443
  %v1445 = vpop.f32.mrf.mxu0
  %1446 = vmatprep.mubr.bf16.mxu0 %v837
  %1447 = vmatmul.mubr.bf16.gmra.mxu0 %v836
  %v1448 = vpop.f32.mrf.mxu0
  %v1449 = vadd.f32 %v292, %v1448
  %v1450 = vpop.f32.mrf.mxu0
  %v1451 = vpop.f32.mrf.mxu0
  %v1452 = vadd.f32 %v292, %v1451
  %v1453 = vpop.f32.mrf.mxu0
  %1454 = vmatprep.mubr.bf16.mxu0 %v842
  %1455 = vmatmul.mubr.bf16.gmra.mxu0 %v841
  %v1456 = vpop.f32.mrf.mxu0
  %v1457 = vadd.f32 %v292, %v1456
  %v1458 = vpop.f32.mrf.mxu0
  %v1459 = vpop.f32.mrf.mxu0
  %v1460 = vadd.f32 %v292, %v1459
  %v1461 = vpop.f32.mrf.mxu0
  %1462 = vmatprep.mubr.bf16.mxu0 %v847
  %1463 = vmatmul.mubr.bf16.gmra.mxu0 %v846
  %v1464 = vpop.f32.mrf.mxu0
  %v1465 = vadd.f32 %v292, %v1464
  %v1466 = vpop.f32.mrf.mxu0
  %v1467 = vpop.f32.mrf.mxu0
  %v1468 = vadd.f32 %v292, %v1467
  %v1469 = vpop.f32.mrf.mxu0
  %1470 = vmatprep.mubr.bf16.mxu0 %v852
  %1471 = vmatmul.mubr.bf16.gmra.mxu0 %v851
  %v1472 = vpop.f32.mrf.mxu0
  %v1473 = vadd.f32 %v292, %v1472
  %v1474 = vpop.f32.mrf.mxu0
  %v1475 = vpop.f32.mrf.mxu0
  %v1476 = vadd.f32 %v292, %v1475
  %v1477 = vpop.f32.mrf.mxu0
  %1478 = vmatprep.mubr.bf16.mxu0 %v857
  %1479 = vmatmul.mubr.bf16.gmra.mxu0 %v856
  %v1480 = vpop.f32.mrf.mxu0
  %v1481 = vadd.f32 %v292, %v1480
  %v1482 = vpop.f32.mrf.mxu0
  %v1483 = vpop.f32.mrf.mxu0
  %v1484 = vadd.f32 %v292, %v1483
  %v1485 = vpop.f32.mrf.mxu0
  %1486 = vmatprep.mubr.bf16.mxu0 %v862
  %1487 = vmatmul.mubr.bf16.gmra.mxu0 %v861
  %v1488 = vpop.f32.mrf.mxu0
  %v1489 = vadd.f32 %v292, %v1488
  %v1490 = vpop.f32.mrf.mxu0
  %v1491 = vpop.f32.mrf.mxu0
  %v1492 = vadd.f32 %v292, %v1491
  %v1493 = vpop.f32.mrf.mxu0
  %1494 = vmatprep.mubr.bf16.mxu0 %v867
  %1495 = vmatmul.mubr.bf16.gmra.mxu0 %v866
  %v1496 = vpop.f32.mrf.mxu0
  %v1497 = vadd.f32 %v292, %v1496
  %v1498 = vpop.f32.mrf.mxu0
  %v1499 = vpop.f32.mrf.mxu0
  %v1500 = vadd.f32 %v292, %v1499
  %v1501 = vpop.f32.mrf.mxu0
  %1502 = vmatprep.mubr.bf16.mxu0 %v872
  %1503 = vmatmul.mubr.bf16.gmra.mxu0 %v871
  %v1504 = vpop.f32.mrf.mxu0
  %v1505 = vadd.f32 %v292, %v1504
  %v1506 = vpop.f32.mrf.mxu0
  %v1507 = vpop.f32.mrf.mxu0
  %v1508 = vadd.f32 %v292, %v1507
  %v1509 = vpop.f32.mrf.mxu0
  %1510 = vmatprep.mubr.bf16.mxu0 %v877
  %1511 = vmatmul.mubr.bf16.gmra.mxu0 %v876
  %v1512 = vpop.f32.mrf.mxu0
  %v1513 = vadd.f32 %v292, %v1512
  %v1514 = vpop.f32.mrf.mxu0
  %v1515 = vpop.f32.mrf.mxu0
  %v1516 = vadd.f32 %v292, %v1515
  %v1517 = vpop.f32.mrf.mxu0
  %1518 = vmatprep.mubr.bf16.mxu0 %v882
  %1519 = vmatmul.mubr.bf16.gmra.mxu0 %v881
  %v1520 = vpop.f32.mrf.mxu0
  %v1521 = vadd.f32 %v292, %v1520
  %v1522 = vpop.f32.mrf.mxu0
  %v1523 = vpop.f32.mrf.mxu0
  %v1524 = vadd.f32 %v292, %v1523
  %v1525 = vpop.f32.mrf.mxu0
  %1526 = vmatprep.mubr.bf16.mxu0 %v887
  %1527 = vmatmul.mubr.bf16.gmra.mxu0 %v886
  %v1528 = vpop.f32.mrf.mxu0
  %v1529 = vadd.f32 %v292, %v1528
  %v1530 = vpop.f32.mrf.mxu0
  %v1531 = vpop.f32.mrf.mxu0
  %v1532 = vadd.f32 %v292, %v1531
  %v1533 = vpop.f32.mrf.mxu0
  %1534 = vmatprep.mubr.bf16.mxu0 %v892
  %1535 = vmatmul.mubr.bf16.gmra.mxu0 %v891
  %v1536 = vpop.f32.mrf.mxu0
  %v1537 = vadd.f32 %v292, %v1536
  %v1538 = vpop.f32.mrf.mxu0
  %v1539 = vpop.f32.mrf.mxu0
  %v1540 = vadd.f32 %v292, %v1539
  %v1541 = vpop.f32.mrf.mxu0
  %1542 = vmatprep.mubr.bf16.mxu0 %v897
  %1543 = vmatmul.mubr.bf16.gmra.mxu0 %v896
  %v1544 = vpop.f32.mrf.mxu0
  %v1545 = vadd.f32 %v292, %v1544
  %v1546 = vpop.f32.mrf.mxu0
  %v1547 = vpop.f32.mrf.mxu0
  %v1548 = vadd.f32 %v292, %v1547
  %v1549 = vpop.f32.mrf.mxu0
  %1550 = vmatprep.mubr.bf16.mxu0 %v902
  %1551 = vmatmul.mubr.bf16.gmra.mxu0 %v901
  %v1552 = vpop.f32.mrf.mxu0
  %v1553 = vadd.f32 %v292, %v1552
  %v1554 = vpop.f32.mrf.mxu0
  %v1555 = vpop.f32.mrf.mxu0
  %v1556 = vadd.f32 %v292, %v1555
  %v1557 = vpop.f32.mrf.mxu0
  %1558 = vmatprep.mubr.bf16.mxu0 %v907
  %1559 = vmatmul.mubr.bf16.gmra.mxu0 %v906
  %v1560 = vpop.f32.mrf.mxu0
  %v1561 = vadd.f32 %v292, %v1560
  %v1562 = vpop.f32.mrf.mxu0
  %v1563 = vpop.f32.mrf.mxu0
  %v1564 = vadd.f32 %v292, %v1563
  %v1565 = vpop.f32.mrf.mxu0
  %1566 = vmatprep.mubr.bf16.mxu0 %v912
  %1567 = vmatmul.mubr.bf16.gmra.mxu0 %v911
  %v1568 = vpop.f32.mrf.mxu0
  %v1569 = vadd.f32 %v292, %v1568
  %v1570 = vpop.f32.mrf.mxu0
  %v1571 = vpop.f32.mrf.mxu0
  %v1572 = vadd.f32 %v292, %v1571
  %v1573 = vpop.f32.mrf.mxu0
  %1574 = vmatprep.mubr.bf16.mxu0 %v917
  %1575 = vmatmul.mubr.bf16.gmra.mxu0 %v916
  %v1576 = vpop.f32.mrf.mxu0
  %v1577 = vadd.f32 %v292, %v1576
  %v1578 = vpop.f32.mrf.mxu0
  %v1579 = vpop.f32.mrf.mxu0
  %v1580 = vadd.f32 %v292, %v1579
  %v1581 = vpop.f32.mrf.mxu0
  %1582 = vmatprep.mubr.bf16.mxu0 %v922
  %1583 = vmatmul.mubr.bf16.gmra.mxu0 %v921
  %v1584 = vpop.f32.mrf.mxu0
  %v1585 = vadd.f32 %v292, %v1584
  %v1586 = vpop.f32.mrf.mxu0
  %v1587 = vpop.f32.mrf.mxu0
  %v1588 = vadd.f32 %v292, %v1587
  %v1589 = vpop.f32.mrf.mxu0
  %1590 = vmatprep.mubr.bf16.mxu0 %v927
  %1591 = vmatmul.mubr.bf16.gmra.mxu0 %v926
  %v1592 = vpop.f32.mrf.mxu0
  %v1593 = vadd.f32 %v292, %v1592
  %v1594 = vpop.f32.mrf.mxu0
  %v1595 = vpop.f32.mrf.mxu0
  %v1596 = vadd.f32 %v292, %v1595
  %v1597 = vpop.f32.mrf.mxu0
  %1598 = vmatprep.mubr.bf16.mxu0 %v932
  %1599 = vmatmul.mubr.bf16.gmra.mxu0 %v931
  %v1600 = vpop.f32.mrf.mxu0
  %v1601 = vadd.f32 %v292, %v1600
  %v1602 = vpop.f32.mrf.mxu0
  %v1603 = vpop.f32.mrf.mxu0
  %v1604 = vadd.f32 %v292, %v1603
  %v1605 = vpop.f32.mrf.mxu0
  %1606 = vmatprep.mubr.bf16.mxu0 %v937
  %1607 = vmatmul.mubr.bf16.gmra.mxu0 %v936
  %v1608 = vpop.f32.mrf.mxu0
  %v1609 = vadd.f32 %v292, %v1608
  %v1610 = vpop.f32.mrf.mxu0
  %v1611 = vpop.f32.mrf.mxu0
  %v1612 = vadd.f32 %v292, %v1611
  %v1613 = vpop.f32.mrf.mxu0
  %1614 = vmatprep.mubr.bf16.mxu0 %v942
  %1615 = vmatmul.mubr.bf16.gmra.mxu0 %v941
  %v1616 = vpop.f32.mrf.mxu0
  %v1617 = vadd.f32 %v292, %v1616
  %v1618 = vpop.f32.mrf.mxu0
  %v1619 = vpop.f32.mrf.mxu0
  %v1620 = vadd.f32 %v292, %v1619
  %v1621 = vpop.f32.mrf.mxu0
  %1622 = vmatprep.mubr.bf16.mxu0 %v947
  %1623 = vmatmul.mubr.bf16.gmra.mxu0 %v946
  %v1624 = vpop.f32.mrf.mxu0
  %v1625 = vadd.f32 %v292, %v1624
  %v1626 = vpop.f32.mrf.mxu0
  %v1627 = vpop.f32.mrf.mxu0
  %v1628 = vadd.f32 %v292, %v1627
  %v1629 = vpop.f32.mrf.mxu0
  %1630 = vmatprep.mubr.bf16.mxu0 %v952
  %1631 = vmatmul.mubr.bf16.gmra.mxu0 %v951
  %v1632 = vpop.f32.mrf.mxu0
  %v1633 = vadd.f32 %v292, %v1632
  %v1634 = vpop.f32.mrf.mxu0
  %v1635 = vpop.f32.mrf.mxu0
  %v1636 = vadd.f32 %v292, %v1635
  %v1637 = vpop.f32.mrf.mxu0
  %1638 = vmatprep.mubr.bf16.mxu0 %v957
  %1639 = vmatmul.mubr.bf16.gmra.mxu0 %v956
  %v1640 = vpop.f32.mrf.mxu0
  %v1641 = vadd.f32 %v292, %v1640
  %v1642 = vpop.f32.mrf.mxu0
  %v1643 = vpop.f32.mrf.mxu0
  %v1644 = vadd.f32 %v292, %v1643
  %v1645 = vpop.f32.mrf.mxu0
  %1646 = vmatprep.mubr.bf16.mxu0 %v962
  %1647 = vmatmul.mubr.bf16.gmra.mxu0 %v961
  %v1648 = vpop.f32.mrf.mxu0
  %v1649 = vadd.f32 %v292, %v1648
  %v1650 = vpop.f32.mrf.mxu0
  %v1651 = vpop.f32.mrf.mxu0
  %v1652 = vadd.f32 %v292, %v1651
  %v1653 = vpop.f32.mrf.mxu0
  %1654 = vdwg.mxu0
  %1655 = vmatprep.subr.bf16.mxu0 0
  %1656 = vmatpush1.bf16.msra.mxu0 %v1309
  %1657 = vmatprep.subr.bf16.mxu0 0
  %1658 = vmatpush1.bf16.msra.mxu0 %v1308
  %1659 = vmatprep.subr.bf16.mxu0 0
  %1660 = vmatpush1.bf16.msra.mxu0 %v1307
  %1661 = vmatprep.subr.bf16.mxu0 0
  %1662 = vmatpush1.bf16.msra.mxu0 %v1306
  %1663 = vmatprep.subr.bf16.mxu0 0
  %1664 = vmatpush1.bf16.msra.mxu0 %v1305
  %1665 = vmatprep.subr.bf16.mxu0 0
  %1666 = vmatpush1.bf16.msra.mxu0 %v1304
  %1667 = vmatprep.subr.bf16.mxu0 0
  %1668 = vmatpush1.bf16.msra.mxu0 %v1303
  %1669 = vmatprep.subr.bf16.mxu0 0
  %1670 = vmatpush1.bf16.msra.mxu0 %v1302
  %1671 = vmatprep.subr.bf16.mxu0 0
  %1672 = vmatpush2.bf16.msra.mxu0 %v1317
  %1673 = vmatprep.subr.bf16.mxu0 0
  %1674 = vmatpush2.bf16.msra.mxu0 %v1316
  %1675 = vmatprep.subr.bf16.mxu0 0
  %1676 = vmatpush2.bf16.msra.mxu0 %v1315
  %1677 = vmatprep.subr.bf16.mxu0 0
  %1678 = vmatpush2.bf16.msra.mxu0 %v1314
  %1679 = vmatprep.subr.bf16.mxu0 0
  %1680 = vmatpush2.bf16.msra.mxu0 %v1313
  %1681 = vmatprep.subr.bf16.mxu0 0
  %1682 = vmatpush2.bf16.msra.mxu0 %v1312
  %1683 = vmatprep.subr.bf16.mxu0 0
  %1684 = vmatpush2.bf16.msra.mxu0 %v1311
  %1685 = vmatprep.subr.bf16.mxu0 0
  %1686 = vmatpush2.bf16.msra.mxu0 %v1310
  %1687 = vmatprep.mubr.bf16.mxu0 %v809
  %1688 = vmatmul.mubr.bf16.gmra.mxu0 %v808
  %v1689 = vpop.f32.mrf.mxu0
  %v1690 = vadd.f32 %v1401, %v1689
  %v1691 = vpop.f32.mrf.mxu0
  %v1692 = vpop.f32.mrf.mxu0
  %v1693 = vadd.f32 %v1404, %v1692
  %v1694 = vpop.f32.mrf.mxu0
  %1695 = vmatprep.mubr.bf16.mxu0 %v814
  %1696 = vmatmul.mubr.bf16.gmra.mxu0 %v813
  %v1697 = vpop.f32.mrf.mxu0
  %v1698 = vadd.f32 %v1409, %v1697
  %v1699 = vpop.f32.mrf.mxu0
  %v1700 = vpop.f32.mrf.mxu0
  %v1701 = vadd.f32 %v1412, %v1700
  %v1702 = vpop.f32.mrf.mxu0
  %1703 = vmatprep.mubr.bf16.mxu0 %v819
  %1704 = vmatmul.mubr.bf16.gmra.mxu0 %v818
  %v1705 = vpop.f32.mrf.mxu0
  %v1706 = vadd.f32 %v1417, %v1705
  %v1707 = vpop.f32.mrf.mxu0
  %v1708 = vpop.f32.mrf.mxu0
  %v1709 = vadd.f32 %v1420, %v1708
  %v1710 = vpop.f32.mrf.mxu0
  %1711 = vmatprep.mubr.bf16.mxu0 %v824
  %1712 = vmatmul.mubr.bf16.gmra.mxu0 %v823
  %v1713 = vpop.f32.mrf.mxu0
  %v1714 = vadd.f32 %v1425, %v1713
  %v1715 = vpop.f32.mrf.mxu0
  %v1716 = vpop.f32.mrf.mxu0
  %v1717 = vadd.f32 %v1428, %v1716
  %v1718 = vpop.f32.mrf.mxu0
  %1719 = vmatprep.mubr.bf16.mxu0 %v829
  %1720 = vmatmul.mubr.bf16.gmra.mxu0 %v828
  %v1721 = vpop.f32.mrf.mxu0
  %v1722 = vadd.f32 %v1433, %v1721
  %v1723 = vpop.f32.mrf.mxu0
  %v1724 = vpop.f32.mrf.mxu0
  %v1725 = vadd.f32 %v1436, %v1724
  %v1726 = vpop.f32.mrf.mxu0
  %1727 = vmatprep.mubr.bf16.mxu0 %v834
  %1728 = vmatmul.mubr.bf16.gmra.mxu0 %v833
  %v1729 = vpop.f32.mrf.mxu0
  %v1730 = vadd.f32 %v1441, %v1729
  %v1731 = vpop.f32.mrf.mxu0
  %v1732 = vpop.f32.mrf.mxu0
  %v1733 = vadd.f32 %v1444, %v1732
  %v1734 = vpop.f32.mrf.mxu0
  %1735 = vmatprep.mubr.bf16.mxu0 %v839
  %1736 = vmatmul.mubr.bf16.gmra.mxu0 %v838
  %v1737 = vpop.f32.mrf.mxu0
  %v1738 = vadd.f32 %v1449, %v1737
  %v1739 = vpop.f32.mrf.mxu0
  %v1740 = vpop.f32.mrf.mxu0
  %v1741 = vadd.f32 %v1452, %v1740
  %v1742 = vpop.f32.mrf.mxu0
  %1743 = vmatprep.mubr.bf16.mxu0 %v844
  %1744 = vmatmul.mubr.bf16.gmra.mxu0 %v843
  %v1745 = vpop.f32.mrf.mxu0
  %v1746 = vadd.f32 %v1457, %v1745
  %v1747 = vpop.f32.mrf.mxu0
  %v1748 = vpop.f32.mrf.mxu0
  %v1749 = vadd.f32 %v1460, %v1748
  %v1750 = vpop.f32.mrf.mxu0
  %1751 = vmatprep.mubr.bf16.mxu0 %v849
  %1752 = vmatmul.mubr.bf16.gmra.mxu0 %v848
  %v1753 = vpop.f32.mrf.mxu0
  %v1754 = vadd.f32 %v1465, %v1753
  %v1755 = vpop.f32.mrf.mxu0
  %v1756 = vpop.f32.mrf.mxu0
  %v1757 = vadd.f32 %v1468, %v1756
  %v1758 = vpop.f32.mrf.mxu0
  %1759 = vmatprep.mubr.bf16.mxu0 %v854
  %1760 = vmatmul.mubr.bf16.gmra.mxu0 %v853
  %v1761 = vpop.f32.mrf.mxu0
  %v1762 = vadd.f32 %v1473, %v1761
  %v1763 = vpop.f32.mrf.mxu0
  %v1764 = vpop.f32.mrf.mxu0
  %v1765 = vadd.f32 %v1476, %v1764
  %v1766 = vpop.f32.mrf.mxu0
  %1767 = vmatprep.mubr.bf16.mxu0 %v859
  %1768 = vmatmul.mubr.bf16.gmra.mxu0 %v858
  %v1769 = vpop.f32.mrf.mxu0
  %v1770 = vadd.f32 %v1481, %v1769
  %v1771 = vpop.f32.mrf.mxu0
  %v1772 = vpop.f32.mrf.mxu0
  %v1773 = vadd.f32 %v1484, %v1772
  %v1774 = vpop.f32.mrf.mxu0
  %1775 = vmatprep.mubr.bf16.mxu0 %v864
  %1776 = vmatmul.mubr.bf16.gmra.mxu0 %v863
  %v1777 = vpop.f32.mrf.mxu0
  %v1778 = vadd.f32 %v1489, %v1777
  %v1779 = vpop.f32.mrf.mxu0
  %v1780 = vpop.f32.mrf.mxu0
  %v1781 = vadd.f32 %v1492, %v1780
  %v1782 = vpop.f32.mrf.mxu0
  %1783 = vmatprep.mubr.bf16.mxu0 %v869
  %1784 = vmatmul.mubr.bf16.gmra.mxu0 %v868
  %v1785 = vpop.f32.mrf.mxu0
  %v1786 = vadd.f32 %v1497, %v1785
  %v1787 = vpop.f32.mrf.mxu0
  %v1788 = vpop.f32.mrf.mxu0
  %v1789 = vadd.f32 %v1500, %v1788
  %v1790 = vpop.f32.mrf.mxu0
  %1791 = vmatprep.mubr.bf16.mxu0 %v874
  %1792 = vmatmul.mubr.bf16.gmra.mxu0 %v873
  %v1793 = vpop.f32.mrf.mxu0
  %v1794 = vadd.f32 %v1505, %v1793
  %v1795 = vpop.f32.mrf.mxu0
  %v1796 = vpop.f32.mrf.mxu0
  %v1797 = vadd.f32 %v1508, %v1796
  %v1798 = vpop.f32.mrf.mxu0
  %1799 = vmatprep.mubr.bf16.mxu0 %v879
  %1800 = vmatmul.mubr.bf16.gmra.mxu0 %v878
  %v1801 = vpop.f32.mrf.mxu0
  %v1802 = vadd.f32 %v1513, %v1801
  %v1803 = vpop.f32.mrf.mxu0
  %v1804 = vpop.f32.mrf.mxu0
  %v1805 = vadd.f32 %v1516, %v1804
  %v1806 = vpop.f32.mrf.mxu0
  %1807 = vmatprep.mubr.bf16.mxu0 %v884
  %1808 = vmatmul.mubr.bf16.gmra.mxu0 %v883
  %v1809 = vpop.f32.mrf.mxu0
  %v1810 = vadd.f32 %v1521, %v1809
  %v1811 = vpop.f32.mrf.mxu0
  %v1812 = vpop.f32.mrf.mxu0
  %v1813 = vadd.f32 %v1524, %v1812
  %v1814 = vpop.f32.mrf.mxu0
  %1815 = vmatprep.mubr.bf16.mxu0 %v889
  %1816 = vmatmul.mubr.bf16.gmra.mxu0 %v888
  %v1817 = vpop.f32.mrf.mxu0
  %v1818 = vadd.f32 %v1529, %v1817
  %v1819 = vpop.f32.mrf.mxu0
  %v1820 = vpop.f32.mrf.mxu0
  %v1821 = vadd.f32 %v1532, %v1820
  %v1822 = vpop.f32.mrf.mxu0
  %1823 = vmatprep.mubr.bf16.mxu0 %v894
  %1824 = vmatmul.mubr.bf16.gmra.mxu0 %v893
  %v1825 = vpop.f32.mrf.mxu0
  %v1826 = vadd.f32 %v1537, %v1825
  %v1827 = vpop.f32.mrf.mxu0
  %v1828 = vpop.f32.mrf.mxu0
  %v1829 = vadd.f32 %v1540, %v1828
  %v1830 = vpop.f32.mrf.mxu0
  %1831 = vmatprep.mubr.bf16.mxu0 %v899
  %1832 = vmatmul.mubr.bf16.gmra.mxu0 %v898
  %v1833 = vpop.f32.mrf.mxu0
  %v1834 = vadd.f32 %v1545, %v1833
  %v1835 = vpop.f32.mrf.mxu0
  %v1836 = vpop.f32.mrf.mxu0
  %v1837 = vadd.f32 %v1548, %v1836
  %v1838 = vpop.f32.mrf.mxu0
  %1839 = vmatprep.mubr.bf16.mxu0 %v904
  %1840 = vmatmul.mubr.bf16.gmra.mxu0 %v903
  %v1841 = vpop.f32.mrf.mxu0
  %v1842 = vadd.f32 %v1553, %v1841
  %v1843 = vpop.f32.mrf.mxu0
  %v1844 = vpop.f32.mrf.mxu0
  %v1845 = vadd.f32 %v1556, %v1844
  %v1846 = vpop.f32.mrf.mxu0
  %1847 = vmatprep.mubr.bf16.mxu0 %v909
  %1848 = vmatmul.mubr.bf16.gmra.mxu0 %v908
  %v1849 = vpop.f32.mrf.mxu0
  %v1850 = vadd.f32 %v1561, %v1849
  %v1851 = vpop.f32.mrf.mxu0
  %v1852 = vpop.f32.mrf.mxu0
  %v1853 = vadd.f32 %v1564, %v1852
  %v1854 = vpop.f32.mrf.mxu0
  %1855 = vmatprep.mubr.bf16.mxu0 %v914
  %1856 = vmatmul.mubr.bf16.gmra.mxu0 %v913
  %v1857 = vpop.f32.mrf.mxu0
  %v1858 = vadd.f32 %v1569, %v1857
  %v1859 = vpop.f32.mrf.mxu0
  %v1860 = vpop.f32.mrf.mxu0
  %v1861 = vadd.f32 %v1572, %v1860
  %v1862 = vpop.f32.mrf.mxu0
  %1863 = vmatprep.mubr.bf16.mxu0 %v919
  %1864 = vmatmul.mubr.bf16.gmra.mxu0 %v918
  %v1865 = vpop.f32.mrf.mxu0
  %v1866 = vadd.f32 %v1577, %v1865
  %v1867 = vpop.f32.mrf.mxu0
  %v1868 = vpop.f32.mrf.mxu0
  %v1869 = vadd.f32 %v1580, %v1868
  %v1870 = vpop.f32.mrf.mxu0
  %1871 = vmatprep.mubr.bf16.mxu0 %v924
  %1872 = vmatmul.mubr.bf16.gmra.mxu0 %v923
  %v1873 = vpop.f32.mrf.mxu0
  %v1874 = vadd.f32 %v1585, %v1873
  %v1875 = vpop.f32.mrf.mxu0
  %v1876 = vpop.f32.mrf.mxu0
  %v1877 = vadd.f32 %v1588, %v1876
  %v1878 = vpop.f32.mrf.mxu0
  %1879 = vmatprep.mubr.bf16.mxu0 %v929
  %1880 = vmatmul.mubr.bf16.gmra.mxu0 %v928
  %v1881 = vpop.f32.mrf.mxu0
  %v1882 = vadd.f32 %v1593, %v1881
  %v1883 = vpop.f32.mrf.mxu0
  %v1884 = vpop.f32.mrf.mxu0
  %v1885 = vadd.f32 %v1596, %v1884
  %v1886 = vpop.f32.mrf.mxu0
  %1887 = vmatprep.mubr.bf16.mxu0 %v934
  %1888 = vmatmul.mubr.bf16.gmra.mxu0 %v933
  %v1889 = vpop.f32.mrf.mxu0
  %v1890 = vadd.f32 %v1601, %v1889
  %v1891 = vpop.f32.mrf.mxu0
  %v1892 = vpop.f32.mrf.mxu0
  %v1893 = vadd.f32 %v1604, %v1892
  %v1894 = vpop.f32.mrf.mxu0
  %1895 = vmatprep.mubr.bf16.mxu0 %v939
  %1896 = vmatmul.mubr.bf16.gmra.mxu0 %v938
  %v1897 = vpop.f32.mrf.mxu0
  %v1898 = vadd.f32 %v1609, %v1897
  %v1899 = vpop.f32.mrf.mxu0
  %v1900 = vpop.f32.mrf.mxu0
  %v1901 = vadd.f32 %v1612, %v1900
  %v1902 = vpop.f32.mrf.mxu0
  %1903 = vmatprep.mubr.bf16.mxu0 %v944
  %1904 = vmatmul.mubr.bf16.gmra.mxu0 %v943
  %v1905 = vpop.f32.mrf.mxu0
  %v1906 = vadd.f32 %v1617, %v1905
  %v1907 = vpop.f32.mrf.mxu0
  %v1908 = vpop.f32.mrf.mxu0
  %v1909 = vadd.f32 %v1620, %v1908
  %v1910 = vpop.f32.mrf.mxu0
  %1911 = vmatprep.mubr.bf16.mxu0 %v949
  %1912 = vmatmul.mubr.bf16.gmra.mxu0 %v948
  %v1913 = vpop.f32.mrf.mxu0
  %v1914 = vadd.f32 %v1625, %v1913
  %v1915 = vpop.f32.mrf.mxu0
  %v1916 = vpop.f32.mrf.mxu0
  %v1917 = vadd.f32 %v1628, %v1916
  %v1918 = vpop.f32.mrf.mxu0
  %1919 = vmatprep.mubr.bf16.mxu0 %v954
  %1920 = vmatmul.mubr.bf16.gmra.mxu0 %v953
  %v1921 = vpop.f32.mrf.mxu0
  %v1922 = vadd.f32 %v1633, %v1921
  %v1923 = vpop.f32.mrf.mxu0
  %v1924 = vpop.f32.mrf.mxu0
  %v1925 = vadd.f32 %v1636, %v1924
  %v1926 = vpop.f32.mrf.mxu0
  %1927 = vmatprep.mubr.bf16.mxu0 %v959
  %1928 = vmatmul.mubr.bf16.gmra.mxu0 %v958
  %v1929 = vpop.f32.mrf.mxu0
  %v1930 = vadd.f32 %v1641, %v1929
  %v1931 = vpop.f32.mrf.mxu0
  %v1932 = vpop.f32.mrf.mxu0
  %v1933 = vadd.f32 %v1644, %v1932
  %v1934 = vpop.f32.mrf.mxu0
  %1935 = vmatprep.mubr.bf16.mxu0 %v964
  %1936 = vmatmul.mubr.bf16.gmra.mxu0 %v963
  %v1937 = vpop.f32.mrf.mxu0
  %v1938 = vadd.f32 %v1649, %v1937
  %v1939 = vpop.f32.mrf.mxu0
  %v1940 = vpop.f32.mrf.mxu0
  %v1941 = vadd.f32 %v1652, %v1940
  %v1942 = vpop.f32.mrf.mxu0
  %1943 = vdwg.mxu0
  %1944 = vmatprep.subr.bf16.mxu0 0
  %1945 = vmatpush1.bf16.msra.mxu0 %v1325
  %1946 = vmatprep.subr.bf16.mxu0 0
  %1947 = vmatpush1.bf16.msra.mxu0 %v1324
  %1948 = vmatprep.subr.bf16.mxu0 0
  %1949 = vmatpush1.bf16.msra.mxu0 %v1323
  %1950 = vmatprep.subr.bf16.mxu0 0
  %1951 = vmatpush1.bf16.msra.mxu0 %v1322
  %1952 = vmatprep.subr.bf16.mxu0 0
  %1953 = vmatpush1.bf16.msra.mxu0 %v1321
  %1954 = vmatprep.subr.bf16.mxu0 0
  %1955 = vmatpush1.bf16.msra.mxu0 %v1320
  %1956 = vmatprep.subr.bf16.mxu0 0
  %1957 = vmatpush1.bf16.msra.mxu0 %v1319
  %1958 = vmatprep.subr.bf16.mxu0 0
  %1959 = vmatpush1.bf16.msra.mxu0 %v1318
  %1960 = vmatprep.subr.bf16.mxu0 0
  %1961 = vmatpush2.bf16.msra.mxu0 0
  %1962 = vmatprep.subr.bf16.mxu0 0
  %1963 = vmatpush2.bf16.msra.mxu0 0
  %1964 = vmatprep.subr.bf16.mxu0 0
  %1965 = vmatpush2.bf16.msra.mxu0 0
  %1966 = vmatprep.subr.bf16.mxu0 0
  %1967 = vmatpush2.bf16.msra.mxu0 0
  %1968 = vmatprep.subr.bf16.mxu0 0
  %1969 = vmatpush2.bf16.msra.mxu0 0
  %1970 = vmatprep.subr.bf16.mxu0 0
  %1971 = vmatpush2.bf16.msra.mxu0 0
  %1972 = vmatprep.subr.bf16.mxu0 0
  %1973 = vmatpush2.bf16.msra.mxu0 0
  %1974 = vmatprep.subr.bf16.mxu0 0
  %1975 = vmatpush2.bf16.msra.mxu0 0
  %1976 = vmatprep.mubr.bf16.mxu0 0
  %1977 = vmatmul.mubr.bf16.gmra.mxu0 %v810
  %v1978 = vpop.f32.mrf.mxu0
  %v1979 = vadd.f32 %v1690, %v1978
  %v1980 = vpop.f32.mrf.mxu0
  %v1981 = vpop.f32.mrf.mxu0
  %v1982 = vadd.f32 %v1693, %v1981
  %v1983 = vpop.f32.mrf.mxu0
  %1984 = vmatprep.mubr.bf16.mxu0 0
  %1985 = vmatmul.mubr.bf16.gmra.mxu0 %v815
  %v1986 = vpop.f32.mrf.mxu0
  %v1987 = vadd.f32 %v1698, %v1986
  %v1988 = vpop.f32.mrf.mxu0
  %v1989 = vpop.f32.mrf.mxu0
  %v1990 = vadd.f32 %v1701, %v1989
  %v1991 = vpop.f32.mrf.mxu0
  %1992 = vmatprep.mubr.bf16.mxu0 0
  %1993 = vmatmul.mubr.bf16.gmra.mxu0 %v820
  %v1994 = vpop.f32.mrf.mxu0
  %v1995 = vadd.f32 %v1706, %v1994
  %v1996 = vpop.f32.mrf.mxu0
  %v1997 = vpop.f32.mrf.mxu0
  %v1998 = vadd.f32 %v1709, %v1997
  %v1999 = vpop.f32.mrf.mxu0
  %2000 = vmatprep.mubr.bf16.mxu0 0
  %2001 = vmatmul.mubr.bf16.gmra.mxu0 %v825
  %v2002 = vpop.f32.mrf.mxu0
  %v2003 = vadd.f32 %v1714, %v2002
  %v2004 = vpop.f32.mrf.mxu0
  %v2005 = vpop.f32.mrf.mxu0
  %v2006 = vadd.f32 %v1717, %v2005
  %v2007 = vpop.f32.mrf.mxu0
  %2008 = vmatprep.mubr.bf16.mxu0 0
  %2009 = vmatmul.mubr.bf16.gmra.mxu0 %v830
  %v2010 = vpop.f32.mrf.mxu0
  %v2011 = vadd.f32 %v1722, %v2010
  %v2012 = vpop.f32.mrf.mxu0
  %v2013 = vpop.f32.mrf.mxu0
  %v2014 = vadd.f32 %v1725, %v2013
  %v2015 = vpop.f32.mrf.mxu0
  %2016 = vmatprep.mubr.bf16.mxu0 0
  %2017 = vmatmul.mubr.bf16.gmra.mxu0 %v835
  %v2018 = vpop.f32.mrf.mxu0
  %v2019 = vadd.f32 %v1730, %v2018
  %v2020 = vpop.f32.mrf.mxu0
  %v2021 = vpop.f32.mrf.mxu0
  %v2022 = vadd.f32 %v1733, %v2021
  %v2023 = vpop.f32.mrf.mxu0
  %2024 = vmatprep.mubr.bf16.mxu0 0
  %2025 = vmatmul.mubr.bf16.gmra.mxu0 %v840
  %v2026 = vpop.f32.mrf.mxu0
  %v2027 = vadd.f32 %v1738, %v2026
  %v2028 = vpop.f32.mrf.mxu0
  %v2029 = vpop.f32.mrf.mxu0
  %v2030 = vadd.f32 %v1741, %v2029
  %v2031 = vpop.f32.mrf.mxu0
  %2032 = vmatprep.mubr.bf16.mxu0 0
  %2033 = vmatmul.mubr.bf16.gmra.mxu0 %v845
  %v2034 = vpop.f32.mrf.mxu0
  %v2035 = vadd.f32 %v1746, %v2034
  %v2036 = vpop.f32.mrf.mxu0
  %v2037 = vpop.f32.mrf.mxu0
  %v2038 = vadd.f32 %v1749, %v2037
  %v2039 = vpop.f32.mrf.mxu0
  %2040 = vmatprep.mubr.bf16.mxu0 0
  %2041 = vmatmul.mubr.bf16.gmra.mxu0 %v850
  %v2042 = vpop.f32.mrf.mxu0
  %v2043 = vadd.f32 %v1754, %v2042
  %v2044 = vpop.f32.mrf.mxu0
  %v2045 = vpop.f32.mrf.mxu0
  %v2046 = vadd.f32 %v1757, %v2045
  %v2047 = vpop.f32.mrf.mxu0
  %2048 = vmatprep.mubr.bf16.mxu0 0
  %2049 = vmatmul.mubr.bf16.gmra.mxu0 %v855
  %v2050 = vpop.f32.mrf.mxu0
  %v2051 = vadd.f32 %v1762, %v2050
  %v2052 = vpop.f32.mrf.mxu0
  %v2053 = vpop.f32.mrf.mxu0
  %v2054 = vadd.f32 %v1765, %v2053
  %v2055 = vpop.f32.mrf.mxu0
  %2056 = vmatprep.mubr.bf16.mxu0 0
  %2057 = vmatmul.mubr.bf16.gmra.mxu0 %v860
  %v2058 = vpop.f32.mrf.mxu0
  %v2059 = vadd.f32 %v1770, %v2058
  %v2060 = vpop.f32.mrf.mxu0
  %v2061 = vpop.f32.mrf.mxu0
  %v2062 = vadd.f32 %v1773, %v2061
  %v2063 = vpop.f32.mrf.mxu0
  %2064 = vmatprep.mubr.bf16.mxu0 0
  %2065 = vmatmul.mubr.bf16.gmra.mxu0 %v865
  %v2066 = vpop.f32.mrf.mxu0
  %v2067 = vadd.f32 %v1778, %v2066
  %v2068 = vpop.f32.mrf.mxu0
  %v2069 = vpop.f32.mrf.mxu0
  %v2070 = vadd.f32 %v1781, %v2069
  %v2071 = vpop.f32.mrf.mxu0
  %2072 = vmatprep.mubr.bf16.mxu0 0
  %2073 = vmatmul.mubr.bf16.gmra.mxu0 %v870
  %v2074 = vpop.f32.mrf.mxu0
  %v2075 = vadd.f32 %v1786, %v2074
  %v2076 = vpop.f32.mrf.mxu0
  %v2077 = vpop.f32.mrf.mxu0
  %v2078 = vadd.f32 %v1789, %v2077
  %v2079 = vpop.f32.mrf.mxu0
  %2080 = vmatprep.mubr.bf16.mxu0 0
  %2081 = vmatmul.mubr.bf16.gmra.mxu0 %v875
  %v2082 = vpop.f32.mrf.mxu0
  %v2083 = vadd.f32 %v1794, %v2082
  %v2084 = vpop.f32.mrf.mxu0
  %v2085 = vpop.f32.mrf.mxu0
  %v2086 = vadd.f32 %v1797, %v2085
  %v2087 = vpop.f32.mrf.mxu0
  %2088 = vmatprep.mubr.bf16.mxu0 0
  %2089 = vmatmul.mubr.bf16.gmra.mxu0 %v880
  %v2090 = vpop.f32.mrf.mxu0
  %v2091 = vadd.f32 %v1802, %v2090
  %v2092 = vpop.f32.mrf.mxu0
  %v2093 = vpop.f32.mrf.mxu0
  %v2094 = vadd.f32 %v1805, %v2093
  %v2095 = vpop.f32.mrf.mxu0
  %2096 = vmatprep.mubr.bf16.mxu0 0
  %2097 = vmatmul.mubr.bf16.gmra.mxu0 %v885
  %v2098 = vpop.f32.mrf.mxu0
  %v2099 = vadd.f32 %v1810, %v2098
  %v2100 = vpop.f32.mrf.mxu0
  %v2101 = vpop.f32.mrf.mxu0
  %v2102 = vadd.f32 %v1813, %v2101
  %v2103 = vpop.f32.mrf.mxu0
  %2104 = vmatprep.mubr.bf16.mxu0 0
  %2105 = vmatmul.mubr.bf16.gmra.mxu0 %v890
  %v2106 = vpop.f32.mrf.mxu0
  %v2107 = vadd.f32 %v1818, %v2106
  %v2108 = vpop.f32.mrf.mxu0
  %v2109 = vpop.f32.mrf.mxu0
  %v2110 = vadd.f32 %v1821, %v2109
  %v2111 = vpop.f32.mrf.mxu0
  %2112 = vmatprep.mubr.bf16.mxu0 0
  %2113 = vmatmul.mubr.bf16.gmra.mxu0 %v895
  %v2114 = vpop.f32.mrf.mxu0
  %v2115 = vadd.f32 %v1826, %v2114
  %v2116 = vpop.f32.mrf.mxu0
  %v2117 = vpop.f32.mrf.mxu0
  %v2118 = vadd.f32 %v1829, %v2117
  %v2119 = vpop.f32.mrf.mxu0
  %2120 = vmatprep.mubr.bf16.mxu0 0
  %2121 = vmatmul.mubr.bf16.gmra.mxu0 %v900
  %v2122 = vpop.f32.mrf.mxu0
  %v2123 = vadd.f32 %v1834, %v2122
  %v2124 = vpop.f32.mrf.mxu0
  %v2125 = vpop.f32.mrf.mxu0
  %v2126 = vadd.f32 %v1837, %v2125
  %v2127 = vpop.f32.mrf.mxu0
  %2128 = vmatprep.mubr.bf16.mxu0 0
  %2129 = vmatmul.mubr.bf16.gmra.mxu0 %v905
  %v2130 = vpop.f32.mrf.mxu0
  %v2131 = vadd.f32 %v1842, %v2130
  %v2132 = vpop.f32.mrf.mxu0
  %v2133 = vpop.f32.mrf.mxu0
  %v2134 = vadd.f32 %v1845, %v2133
  %v2135 = vpop.f32.mrf.mxu0
  %2136 = vmatprep.mubr.bf16.mxu0 0
  %2137 = vmatmul.mubr.bf16.gmra.mxu0 %v910
  %v2138 = vpop.f32.mrf.mxu0
  %v2139 = vadd.f32 %v1850, %v2138
  %v2140 = vpop.f32.mrf.mxu0
  %v2141 = vpop.f32.mrf.mxu0
  %v2142 = vadd.f32 %v1853, %v2141
  %v2143 = vpop.f32.mrf.mxu0
  %2144 = vmatprep.mubr.bf16.mxu0 0
  %2145 = vmatmul.mubr.bf16.gmra.mxu0 %v915
  %v2146 = vpop.f32.mrf.mxu0
  %v2147 = vadd.f32 %v1858, %v2146
  %v2148 = vpop.f32.mrf.mxu0
  %v2149 = vpop.f32.mrf.mxu0
  %v2150 = vadd.f32 %v1861, %v2149
  %v2151 = vpop.f32.mrf.mxu0
  %2152 = vmatprep.mubr.bf16.mxu0 0
  %2153 = vmatmul.mubr.bf16.gmra.mxu0 %v920
  %v2154 = vpop.f32.mrf.mxu0
  %v2155 = vadd.f32 %v1866, %v2154
  %v2156 = vpop.f32.mrf.mxu0
  %v2157 = vpop.f32.mrf.mxu0
  %v2158 = vadd.f32 %v1869, %v2157
  %v2159 = vpop.f32.mrf.mxu0
  %2160 = vmatprep.mubr.bf16.mxu0 0
  %2161 = vmatmul.mubr.bf16.gmra.mxu0 %v925
  %v2162 = vpop.f32.mrf.mxu0
  %v2163 = vadd.f32 %v1874, %v2162
  %v2164 = vpop.f32.mrf.mxu0
  %v2165 = vpop.f32.mrf.mxu0
  %v2166 = vadd.f32 %v1877, %v2165
  %v2167 = vpop.f32.mrf.mxu0
  %2168 = vmatprep.mubr.bf16.mxu0 0
  %2169 = vmatmul.mubr.bf16.gmra.mxu0 %v930
  %v2170 = vpop.f32.mrf.mxu0
  %v2171 = vadd.f32 %v1882, %v2170
  %v2172 = vpop.f32.mrf.mxu0
  %v2173 = vpop.f32.mrf.mxu0
  %v2174 = vadd.f32 %v1885, %v2173
  %v2175 = vpop.f32.mrf.mxu0
  %2176 = vmatprep.mubr.bf16.mxu0 0
  %2177 = vmatmul.mubr.bf16.gmra.mxu0 %v935
  %v2178 = vpop.f32.mrf.mxu0
  %v2179 = vadd.f32 %v1890, %v2178
  %v2180 = vpop.f32.mrf.mxu0
  %v2181 = vpop.f32.mrf.mxu0
  %v2182 = vadd.f32 %v1893, %v2181
  %v2183 = vpop.f32.mrf.mxu0
  %2184 = vmatprep.mubr.bf16.mxu0 0
  %2185 = vmatmul.mubr.bf16.gmra.mxu0 %v940
  %v2186 = vpop.f32.mrf.mxu0
  %v2187 = vadd.f32 %v1898, %v2186
  %v2188 = vpop.f32.mrf.mxu0
  %v2189 = vpop.f32.mrf.mxu0
  %v2190 = vadd.f32 %v1901, %v2189
  %v2191 = vpop.f32.mrf.mxu0
  %2192 = vmatprep.mubr.bf16.mxu0 0
  %2193 = vmatmul.mubr.bf16.gmra.mxu0 %v945
  %v2194 = vpop.f32.mrf.mxu0
  %v2195 = vadd.f32 %v1906, %v2194
  %v2196 = vpop.f32.mrf.mxu0
  %v2197 = vpop.f32.mrf.mxu0
  %v2198 = vadd.f32 %v1909, %v2197
  %v2199 = vpop.f32.mrf.mxu0
  %2200 = vmatprep.mubr.bf16.mxu0 0
  %2201 = vmatmul.mubr.bf16.gmra.mxu0 %v950
  %v2202 = vpop.f32.mrf.mxu0
  %v2203 = vadd.f32 %v1914, %v2202
  %v2204 = vpop.f32.mrf.mxu0
  %v2205 = vpop.f32.mrf.mxu0
  %v2206 = vadd.f32 %v1917, %v2205
  %v2207 = vpop.f32.mrf.mxu0
  %2208 = vmatprep.mubr.bf16.mxu0 0
  %2209 = vmatmul.mubr.bf16.gmra.mxu0 %v955
  %v2210 = vpop.f32.mrf.mxu0
  %v2211 = vadd.f32 %v1922, %v2210
  %v2212 = vpop.f32.mrf.mxu0
  %v2213 = vpop.f32.mrf.mxu0
  %v2214 = vadd.f32 %v1925, %v2213
  %v2215 = vpop.f32.mrf.mxu0
  %2216 = vmatprep.mubr.bf16.mxu0 0
  %2217 = vmatmul.mubr.bf16.gmra.mxu0 %v960
  %v2218 = vpop.f32.mrf.mxu0
  %v2219 = vadd.f32 %v1930, %v2218
  %v2220 = vpop.f32.mrf.mxu0
  %v2221 = vpop.f32.mrf.mxu0
  %v2222 = vadd.f32 %v1933, %v2221
  %v2223 = vpop.f32.mrf.mxu0
  %2224 = vmatprep.mubr.bf16.mxu0 0
  %2225 = vmatmul.mubr.bf16.gmra.mxu0 %v965
  %v2226 = vpop.f32.mrf.mxu0
  %v2227 = vadd.f32 %v1938, %v2226
  %v2228 = vpop.f32.mrf.mxu0
  %v2229 = vpop.f32.mrf.mxu0
  %v2230 = vadd.f32 %v1941, %v2229
  %v2231 = vpop.f32.mrf.mxu0
  %2232 = vdwg.mxu0
  %v2233 = vmax.f32 %v1979, 0.0
  %v2234 = vmax.f32 %v1982, 0.0
  %v2235 = vmax.f32 %v1987, 0.0
  %v2236 = vmax.f32 %v1990, 0.0
  %v2237 = vmax.f32 %v1995, 0.0
  %v2238 = vmax.f32 %v1998, 0.0
  %v2239 = vmax.f32 %v2003, 0.0
  %v2240 = vmax.f32 %v2006, 0.0
  %v2241 = vmax.f32 %v2011, 0.0
  %v2242 = vmax.f32 %v2014, 0.0
  %v2243 = vmax.f32 %v2019, 0.0
  %v2244 = vmax.f32 %v2022, 0.0
  %v2245 = vmax.f32 %v2027, 0.0
  %v2246 = vmax.f32 %v2030, 0.0
  %v2247 = vmax.f32 %v2035, 0.0
  %v2248 = vmax.f32 %v2038, 0.0
  %v2249 = vmax.f32 %v2043, 0.0
  %v2250 = vmax.f32 %v2046, 0.0
  %v2251 = vmax.f32 %v2051, 0.0
  %v2252 = vmax.f32 %v2054, 0.0
  %v2253 = vmax.f32 %v2059, 0.0
  %v2254 = vmax.f32 %v2062, 0.0
  %v2255 = vmax.f32 %v2067, 0.0
  %v2256 = vmax.f32 %v2070, 0.0
  %v2257 = vmax.f32 %v2075, 0.0
  %v2258 = vmax.f32 %v2078, 0.0
  %v2259 = vmax.f32 %v2083, 0.0
  %v2260 = vmax.f32 %v2086, 0.0
  %v2261 = vmax.f32 %v2091, 0.0
  %v2262 = vmax.f32 %v2094, 0.0
  %v2263 = vmax.f32 %v2099, 0.0
  %v2264 = vmax.f32 %v2102, 0.0
  %v2265 = vmax.f32 %v2107, 0.0
  %v2266 = vmax.f32 %v2110, 0.0
  %v2267 = vmax.f32 %v2115, 0.0
  %v2268 = vmax.f32 %v2118, 0.0
  %v2269 = vmax.f32 %v2123, 0.0
  %v2270 = vmax.f32 %v2126, 0.0
  %v2271 = vmax.f32 %v2131, 0.0
  %v2272 = vmax.f32 %v2134, 0.0
  %v2273 = vmax.f32 %v2139, 0.0
  %v2274 = vmax.f32 %v2142, 0.0
  %v2275 = vmax.f32 %v2147, 0.0
  %v2276 = vmax.f32 %v2150, 0.0
  %v2277 = vmax.f32 %v2155, 0.0
  %v2278 = vmax.f32 %v2158, 0.0
  %v2279 = vmax.f32 %v2163, 0.0
  %v2280 = vmax.f32 %v2166, 0.0
  %v2281 = vmax.f32 %v2171, 0.0
  %v2282 = vmax.f32 %v2174, 0.0
  %v2283 = vmax.f32 %v2179, 0.0
  %v2284 = vmax.f32 %v2182, 0.0
  %v2285 = vmax.f32 %v2187, 0.0
  %v2286 = vmax.f32 %v2190, 0.0
  %v2287 = vmax.f32 %v2195, 0.0
  %v2288 = vmax.f32 %v2198, 0.0
  %v2289 = vmax.f32 %v2203, 0.0
  %v2290 = vmax.f32 %v2206, 0.0
  %v2291 = vmax.f32 %v2211, 0.0
  %v2292 = vmax.f32 %v2214, 0.0
  %v2293 = vmax.f32 %v2219, 0.0
  %v2294 = vmax.f32 %v2222, 0.0
  %v2295 = vmax.f32 %v2227, 0.0
  %v2296 = vmax.f32 %v2230, 0.0
  %2297 = vst [vmem:[%s3] sm:$0xff] %v2233
  %2298 = vst [vmem:[%s3 + $0x8] sm:$0xff] %v2234
  %2299 = vst [vmem:[%s3 + $0x10] sm:$0xff] %v2235
  %2300 = vst [vmem:[%s3 + $0x18] sm:$0xff] %v2236
  %2301 = vst [vmem:[%s3 + $0x20] sm:$0xff] %v2237
  %2302 = vst [vmem:[%s3 + $0x28] sm:$0xff] %v2238
  %2303 = vst [vmem:[%s3 + $0x30] sm:$0xff] %v2239
  %2304 = vst [vmem:[%s3 + $0x38] sm:$0xff] %v2240
  %2305 = vst [vmem:[%s3 + $0x40] sm:$0xff] %v2241
  %2306 = vst [vmem:[%s3 + $0x48] sm:$0xff] %v2242
  %2307 = vst [vmem:[%s3 + $0x50] sm:$0xff] %v2243
  %2308 = vst [vmem:[%s3 + $0x58] sm:$0xff] %v2244
  %2309 = vst [vmem:[%s3 + $0x60] sm:$0xff] %v2245
  %2310 = vst [vmem:[%s3 + $0x68] sm:$0xff] %v2246
  %2311 = vst [vmem:[%s3 + $0x70] sm:$0xff] %v2247
  %2312 = vst [vmem:[%s3 + $0x78] sm:$0xff] %v2248
  %2313 = vst [vmem:[%s3 + $0x80] sm:$0xff] %v2249
  %2314 = vst [vmem:[%s3 + $0x88] sm:$0xff] %v2250
  %2315 = vst [vmem:[%s3 + $0x90] sm:$0xff] %v2251
  %2316 = vst [vmem:[%s3 + $0x98] sm:$0xff] %v2252
  %2317 = vst [vmem:[%s3 + $0xa0] sm:$0xff] %v2253
  %2318 = vst [vmem:[%s3 + $0xa8] sm:$0xff] %v2254
  %2319 = vst [vmem:[%s3 + $0xb0] sm:$0xff] %v2255
  %2320 = vst [vmem:[%s3 + $0xb8] sm:$0xff] %v2256
  %2321 = vst [vmem:[%s3 + $0xc0] sm:$0xff] %v2257
  %2322 = vst [vmem:[%s3 + $0xc8] sm:$0xff] %v2258
  %2323 = vst [vmem:[%s3 + $0xd0] sm:$0xff] %v2259
  %2324 = vst [vmem:[%s3 + $0xd8] sm:$0xff] %v2260
  %2325 = vst [vmem:[%s3 + $0xe0] sm:$0xff] %v2261
  %2326 = vst [vmem:[%s3 + $0xe8] sm:$0xff] %v2262
  %2327 = vst [vmem:[%s3 + $0xf0] sm:$0xff] %v2263
  %2328 = vst [vmem:[%s3 + $0xf8] sm:$0xff] %v2264
  %2329 = vst [vmem:[%s3 + $0x100] sm:$0xff] %v2265
  %2330 = vst [vmem:[%s3 + $0x108] sm:$0xff] %v2266
  %2331 = vst [vmem:[%s3 + $0x110] sm:$0xff] %v2267
  %2332 = vst [vmem:[%s3 + $0x118] sm:$0xff] %v2268
  %2333 = vst [vmem:[%s3 + $0x120] sm:$0xff] %v2269
  %2334 = vst [vmem:[%s3 + $0x128] sm:$0xff] %v2270
  %2335 = vst [vmem:[%s3 + $0x130] sm:$0xff] %v2271
  %2336 = vst [vmem:[%s3 + $0x138] sm:$0xff] %v2272
  %2337 = vst [vmem:[%s3 + $0x140] sm:$0xff] %v2273
  %2338 = vst [vmem:[%s3 + $0x148] sm:$0xff] %v2274
  %2339 = vst [vmem:[%s3 + $0x150] sm:$0xff] %v2275
  %2340 = vst [vmem:[%s3 + $0x158] sm:$0xff] %v2276
  %2341 = vst [vmem:[%s3 + $0x160] sm:$0xff] %v2277
  %2342 = vst [vmem:[%s3 + $0x168] sm:$0xff] %v2278
  %2343 = vst [vmem:[%s3 + $0x170] sm:$0xff] %v2279
  %2344 = vst [vmem:[%s3 + $0x178] sm:$0xff] %v2280
  %2345 = vst [vmem:[%s3 + $0x180] sm:$0xff] %v2281
  %2346 = vst [vmem:[%s3 + $0x188] sm:$0xff] %v2282
  %2347 = vst [vmem:[%s3 + $0x190] sm:$0xff] %v2283
  %2348 = vst [vmem:[%s3 + $0x198] sm:$0xff] %v2284
  %2349 = vst [vmem:[%s3 + $0x1a0] sm:$0xff] %v2285
  %2350 = vst [vmem:[%s3 + $0x1a8] sm:$0xff] %v2286
  %2351 = vst [vmem:[%s3 + $0x1b0] sm:$0xff] %v2287
  %2352 = vst [vmem:[%s3 + $0x1b8] sm:$0xff] %v2288
  %2353 = vst [vmem:[%s3 + $0x1c0] sm:$0xff] %v2289
  %2354 = vst [vmem:[%s3 + $0x1c8] sm:$0xff] %v2290
  %2355 = vst [vmem:[%s3 + $0x1d0] sm:$0xff] %v2291
  %2356 = vst [vmem:[%s3 + $0x1d8] sm:$0xff] %v2292
  %2357 = vst [vmem:[%s3 + $0x1e0] sm:$0xff] %v2293
  %2358 = vst [vmem:[%s3 + $0x1e8] sm:$0xff] %v2294
  %2359 = vst [vmem:[%s3 + $0x1f0] sm:$0xff] %v2295
  %2360 = vst [vmem:[%s3 + $0x1f8] sm:$0xff] %v2296
  // Predicated region
  $region14: #{_lambda_.14} parent=0 // pred_check
    _
  $region15: #{_lambda_.14} parent=0 // pred_check_branch
    %2362 = sbr.rel (0) target = $region17
  $region16: #{_lambda_.14} parent=0 // pred_region
    _
  $region17: #{_lambda_.14} parent=0 // pred_fallthru
    _
  // Predicated region
  $region18: #{_lambda_.14} parent=0 // pred_check
    _
  $region19: #{_lambda_.14} parent=0 // pred_check_branch
    %2364 = sbr.rel (0) target = $region21
  $region20: #{_lambda_.14} parent=0 // pred_region
    _
  $region21: #{_lambda_.14} parent=0 // pred_fallthru
    _

// kernel: _lambda_.15
$region0: #{_lambda_.15}
  #allocation0 [shape = 'u32[]', space=smem, size = 0x4, offset = 0x4, fixed_abs, tag = 'smem constant byte address 0x4 - core index']
  #allocation1 [shape = 'u32[144,128]{1,0:T(1,128)}', space=vmem, size = 0x12000, scoped, tag = 'internal scratch']
  %s0 = inlined_call_operand.vmem [shape: bf16[128,512], index: 0, kind: input, shape index: {}]
  %s1 = inlined_call_operand.vmem [shape: bf16[512,128], index: 1, kind: input, shape index: {}]
  %s2 = inlined_call_operand.vmem [shape: f32[1,128], index: 2, kind: input, shape index: {}]
  %s3 = inlined_call_operand.vmem [shape: f32[128,128], index: 3, kind: output, shape index: {}]
  %s4 = sld [smem:[#allocation0]]
  $region22: #{_lambda_.15} parent=0
    _
  %s6 = ssub.s32 1, %s4
  %s7 = scalar_select 0, %s6, %s4
  // Predicated region
  $region2: #{_lambda_.15} parent=0 // pred_check
    _
  $region3: #{_lambda_.15} parent=0 // pred_check_branch
    %9 = sbr.rel (0) target = $region5
  $region4: #{_lambda_.15} parent=0 // pred_region
    _
  $region5: #{_lambda_.15} parent=0 // pred_fallthru
    _
  // Predicated region
  $region6: #{_lambda_.15} parent=0 // pred_check
    _
  $region7: #{_lambda_.15} parent=0 // pred_check_branch
    %11 = sbr.rel (0) target = $region9
  $region8: #{_lambda_.15} parent=0 // pred_region
    _
  $region9: #{_lambda_.15} parent=0 // pred_fallthru
    _
  // Predicated region
  $region10: #{_lambda_.15} parent=0 // pred_check
    _
  $region11: #{_lambda_.15} parent=0 // pred_check_branch
    %13 = sbr.rel (0) target = $region13
  $region12: #{_lambda_.15} parent=0 // pred_region
    _
  $region13: #{_lambda_.15} parent=0 // pred_fallthru
    _
  %v15 = vld [vmem:[%s0] sm:$0xff]
  %v16 = vld [vmem:[%s0 + $0x8] sm:$0xff]
  %v17 = vld [vmem:[%s0 + $0x10] sm:$0xff]
  %v18 = vld [vmem:[%s0 + $0x18] sm:$0xff]
  %v19 = vld [vmem:[%s0 + $0x20] sm:$0xff]
  %v20 = vld [vmem:[%s0 + $0x28] sm:$0xff]
  %v21 = vld [vmem:[%s0 + $0x30] sm:$0xff]
  %v22 = vld [vmem:[%s0 + $0x38] sm:$0xff]
  %v23 = vld [vmem:[%s0 + $0x40] sm:$0xff]
  %v24 = vld [vmem:[%s0 + $0x48] sm:$0xff]
  %v25 = vld [vmem:[%s0 + $0x50] sm:$0xff]
  %v26 = vld [vmem:[%s0 + $0x58] sm:$0xff]
  %v27 = vld [vmem:[%s0 + $0x60] sm:$0xff]
  %v28 = vld [vmem:[%s0 + $0x68] sm:$0xff]
  %v29 = vld [vmem:[%s0 + $0x70] sm:$0xff]
  %v30 = vld [vmem:[%s0 + $0x78] sm:$0xff]
  %v31 = vld [vmem:[%s0 + $0x80] sm:$0xff]
  %v32 = vld [vmem:[%s0 + $0x88] sm:$0xff]
  %v33 = vld [vmem:[%s0 + $0x90] sm:$0xff]
  %v34 = vld [vmem:[%s0 + $0x98] sm:$0xff]
  %v35 = vld [vmem:[%s0 + $0xa0] sm:$0xff]
  %v36 = vld [vmem:[%s0 + $0xa8] sm:$0xff]
  %v37 = vld [vmem:[%s0 + $0xb0] sm:$0xff]
  %v38 = vld [vmem:[%s0 + $0xb8] sm:$0xff]
  %v39 = vld [vmem:[%s0 + $0xc0] sm:$0xff]
  %v40 = vld [vmem:[%s0 + $0xc8] sm:$0xff]
  %v41 = vld [vmem:[%s0 + $0xd0] sm:$0xff]
  %v42 = vld [vmem:[%s0 + $0xd8] sm:$0xff]
  %v43 = vld [vmem:[%s0 + $0xe0] sm:$0xff]
  %v44 = vld [vmem:[%s0 + $0xe8] sm:$0xff]
  %v45 = vld [vmem:[%s0 + $0xf0] sm:$0xff]
  %v46 = vld [vmem:[%s0 + $0xf8] sm:$0xff]
  %v47 = vld [vmem:[%s1] sm:$0xf]
  %v48 = vld [vmem:[%s1 + $0x4] sm:$0xf]
  %v49 = vld [vmem:[%s1 + $0x8] sm:$0xf]
  %v50 = vld [vmem:[%s1 + $0xc] sm:$0xf]
  %v51 = vld [vmem:[%s1 + $0x10] sm:$0xf]
  %v52 = vld [vmem:[%s1 + $0x14] sm:$0xf]
  %v53 = vld [vmem:[%s1 + $0x18] sm:$0xf]
  %v54 = vld [vmem:[%s1 + $0x1c] sm:$0xf]
  %v55 = vld [vmem:[%s1 + $0x20] sm:$0xf]
  %v56 = vld [vmem:[%s1 + $0x24] sm:$0xf]
  %v57 = vld [vmem:[%s1 + $0x28] sm:$0xf]
  %v58 = vld [vmem:[%s1 + $0x2c] sm:$0xf]
  %v59 = vld [vmem:[%s1 + $0x30] sm:$0xf]
  %v60 = vld [vmem:[%s1 + $0x34] sm:$0xf]
  %v61 = vld [vmem:[%s1 + $0x38] sm:$0xf]
  %v62 = vld [vmem:[%s1 + $0x3c] sm:$0xf]
  %v63 = vld [vmem:[%s1 + $0x40] sm:$0xf]
  %v64 = vld [vmem:[%s1 + $0x44] sm:$0xf]
  %v65 = vld [vmem:[%s1 + $0x48] sm:$0xf]
  %v66 = vld [vmem:[%s1 + $0x4c] sm:$0xf]
  %v67 = vld [vmem:[%s1 + $0x50] sm:$0xf]
  %v68 = vld [vmem:[%s1 + $0x54] sm:$0xf]
  %v69 = vld [vmem:[%s1 + $0x58] sm:$0xf]
  %v70 = vld [vmem:[%s1 + $0x5c] sm:$0xf]
  %v71 = vld [vmem:[%s1 + $0x60] sm:$0xf]
  %v72 = vld [vmem:[%s1 + $0x64] sm:$0xf]
  %v73 = vld [vmem:[%s1 + $0x68] sm:$0xf]
  %v74 = vld [vmem:[%s1 + $0x6c] sm:$0xf]
  %v75 = vld [vmem:[%s1 + $0x70] sm:$0xf]
  %v76 = vld [vmem:[%s1 + $0x74] sm:$0xf]
  %v77 = vld [vmem:[%s1 + $0x78] sm:$0xf]
  %v78 = vld [vmem:[%s1 + $0x7c] sm:$0xf]
  %v79 = vld [vmem:[%s1 + $0x80] sm:$0xf]
  %v80 = vld [vmem:[%s1 + $0x84] sm:$0xf]
  %v81 = vld [vmem:[%s1 + $0x88] sm:$0xf]
  %v82 = vld [vmem:[%s1 + $0x8c] sm:$0xf]
  %v83 = vld [vmem:[%s1 + $0x90] sm:$0xf]
  %v84 = vld [vmem:[%s1 + $0x94] sm:$0xf]
  %v85 = vld [vmem:[%s1 + $0x98] sm:$0xf]
  %v86 = vld [vmem:[%s1 + $0x9c] sm:$0xf]
  %v87 = vld [vmem:[%s1 + $0xa0] sm:$0xf]
  %v88 = vld [vmem:[%s1 + $0xa4] sm:$0xf]
  %v89 = vld [vmem:[%s1 + $0xa8] sm:$0xf]
  %v90 = vld [vmem:[%s1 + $0xac] sm:$0xf]
  %v91 = vld [vmem:[%s1 + $0xb0] sm:$0xf]
  %v92 = vld [vmem:[%s1 + $0xb4] sm:$0xf]
  %v93 = vld [vmem:[%s1 + $0xb8] sm:$0xf]
  %v94 = vld [vmem:[%s1 + $0xbc] sm:$0xf]
  %v95 = vld [vmem:[%s1 + $0xc0] sm:$0xf]
  %v96 = vld [vmem:[%s1 + $0xc4] sm:$0xf]
  %v97 = vld [vmem:[%s1 + $0xc8] sm:$0xf]
  %v98 = vld [vmem:[%s1 + $0xcc] sm:$0xf]
  %v99 = vld [vmem:[%s1 + $0xd0] sm:$0xf]
  %v100 = vld [vmem:[%s1 + $0xd4] sm:$0xf]
  %v101 = vld [vmem:[%s1 + $0xd8] sm:$0xf]
  %v102 = vld [vmem:[%s1 + $0xdc] sm:$0xf]
  %v103 = vld [vmem:[%s1 + $0xe0] sm:$0xf]
  %v104 = vld [vmem:[%s1 + $0xe4] sm:$0xf]
  %v105 = vld [vmem:[%s1 + $0xe8] sm:$0xf]
  %v106 = vld [vmem:[%s1 + $0xec] sm:$0xf]
  %v107 = vld [vmem:[%s1 + $0xf0] sm:$0xf]
  %v108 = vld [vmem:[%s1 + $0xf4] sm:$0xf]
  %v109 = vld [vmem:[%s1 + $0xf8] sm:$0xf]
  %v110 = vld [vmem:[%s1 + $0xfc] sm:$0xf]
  %v111 = vld [vmem:[%s2] sm:$0x1]
  %v113 = vlaneseq
  %v114 = vshrl.u32 %v113, 7
  %v115 = vsub.s32 0, %v114
  %v116 = vrot.slane %v111, %v115
  %v150 = vunpack.c.l.b16 %v15
  %v151 = vunpack.c.h.b16 %v15
  %v152 = vunpack.c.l.b16 %v16
  %v153 = vunpack.c.h.b16 %v16
  %v154 = vunpack.c.l.b16 %v17
  %v155 = vunpack.c.h.b16 %v17
  %v156 = vunpack.c.l.b16 %v18
  %v157 = vunpack.c.h.b16 %v18
  %v158 = vunpack.c.l.b16 %v19
  %v159 = vunpack.c.h.b16 %v19
  %v160 = vunpack.c.l.b16 %v20
  %v161 = vunpack.c.h.b16 %v20
  %v162 = vunpack.c.l.b16 %v21
  %v163 = vunpack.c.h.b16 %v21
  %v164 = vunpack.c.l.b16 %v22
  %v165 = vunpack.c.h.b16 %v22
  %v166 = vunpack.c.l.b16 %v23
  %v167 = vunpack.c.h.b16 %v23
  %v168 = vunpack.c.l.b16 %v24
  %v169 = vunpack.c.h.b16 %v24
  %v170 = vunpack.c.l.b16 %v25
  %v171 = vunpack.c.h.b16 %v25
  %v172 = vunpack.c.l.b16 %v26
  %v173 = vunpack.c.h.b16 %v26
  %v174 = vunpack.c.l.b16 %v27
  %v175 = vunpack.c.h.b16 %v27
  %v176 = vunpack.c.l.b16 %v28
  %v177 = vunpack.c.h.b16 %v28
  %v178 = vunpack.c.l.b16 %v29
  %v179 = vunpack.c.h.b16 %v29
  %v180 = vunpack.c.l.b16 %v30
  %v181 = vunpack.c.h.b16 %v30
  %v182 = vunpack.c.l.b16 %v31
  %v183 = vunpack.c.h.b16 %v31
  %v184 = vunpack.c.l.b16 %v32
  %v185 = vunpack.c.h.b16 %v32
  %v186 = vunpack.c.l.b16 %v33
  %v187 = vunpack.c.h.b16 %v33
  %v188 = vunpack.c.l.b16 %v34
  %v189 = vunpack.c.h.b16 %v34
  %v190 = vunpack.c.l.b16 %v35
  %v191 = vunpack.c.h.b16 %v35
  %v192 = vunpack.c.l.b16 %v36
  %v193 = vunpack.c.h.b16 %v36
  %v194 = vunpack.c.l.b16 %v37
  %v195 = vunpack.c.h.b16 %v37
  %v196 = vunpack.c.l.b16 %v38
  %v197 = vunpack.c.h.b16 %v38
  %v198 = vunpack.c.l.b16 %v39
  %v199 = vunpack.c.h.b16 %v39
  %v200 = vunpack.c.l.b16 %v40
  %v201 = vunpack.c.h.b16 %v40
  %v202 = vunpack.c.l.b16 %v41
  %v203 = vunpack.c.h.b16 %v41
  %v204 = vunpack.c.l.b16 %v42
  %v205 = vunpack.c.h.b16 %v42
  %v206 = vunpack.c.l.b16 %v43
  %v207 = vunpack.c.h.b16 %v43
  %v208 = vunpack.c.l.b16 %v44
  %v209 = vunpack.c.h.b16 %v44
  %v210 = vunpack.c.l.b16 %v45
  %v211 = vunpack.c.h.b16 %v45
  %v212 = vunpack.c.l.b16 %v46
  %v213 = vunpack.c.h.b16 %v46
  %v214 = vpack.c.b16 %v154, %v150
  %v215 = vpack.c.b16 %v155, %v151
  %v216 = vpack.c.b16 %v156, %v152
  %v217 = vpack.c.b16 %v157, %v153
  %v218 = vpack.c.b16 %v162, %v158
  %v219 = vpack.c.b16 %v163, %v159
  %v220 = vpack.c.b16 %v164, %v160
  %v221 = vpack.c.b16 %v165, %v161
  %v222 = vpack.c.b16 %v170, %v166
  %v223 = vpack.c.b16 %v171, %v167
  %v224 = vpack.c.b16 %v172, %v168
  %v225 = vpack.c.b16 %v173, %v169
  %v226 = vpack.c.b16 %v178, %v174
  %v227 = vpack.c.b16 %v179, %v175
  %v228 = vpack.c.b16 %v180, %v176
  %v229 = vpack.c.b16 %v181, %v177
  %v230 = vpack.c.b16 %v186, %v182
  %v231 = vpack.c.b16 %v187, %v183
  %v232 = vpack.c.b16 %v188, %v184
  %v233 = vpack.c.b16 %v189, %v185
  %v234 = vpack.c.b16 %v194, %v190
  %v235 = vpack.c.b16 %v195, %v191
  %v236 = vpack.c.b16 %v196, %v192
  %v237 = vpack.c.b16 %v197, %v193
  %v238 = vpack.c.b16 %v202, %v198
  %v239 = vpack.c.b16 %v203, %v199
  %v240 = vpack.c.b16 %v204, %v200
  %v241 = vpack.c.b16 %v205, %v201
  %v242 = vpack.c.b16 %v210, %v206
  %v243 = vpack.c.b16 %v211, %v207
  %v244 = vpack.c.b16 %v212, %v208
  %v245 = vpack.c.b16 %v213, %v209
  %v342 = vunpack.c.l.b16 %v47
  %v343 = vunpack.c.l.b16 %v48
  %v344 = vunpack.c.l.b16 %v49
  %v345 = vunpack.c.l.b16 %v50
  %v346 = vunpack.c.l.b16 %v51
  %v347 = vunpack.c.l.b16 %v52
  %v348 = vunpack.c.l.b16 %v53
  %v349 = vunpack.c.l.b16 %v54
  %v350 = vunpack.c.l.b16 %v55
  %v351 = vunpack.c.l.b16 %v56
  %v352 = vunpack.c.l.b16 %v57
  %v353 = vunpack.c.l.b16 %v58
  %v354 = vunpack.c.l.b16 %v59
  %v355 = vunpack.c.l.b16 %v60
  %v356 = vunpack.c.l.b16 %v61
  %v357 = vunpack.c.l.b16 %v62
  %v358 = vunpack.c.l.b16 %v63
  %v359 = vunpack.c.l.b16 %v64
  %v360 = vunpack.c.l.b16 %v65
  %v361 = vunpack.c.l.b16 %v66
  %v362 = vunpack.c.l.b16 %v67
  %v363 = vunpack.c.l.b16 %v68
  %v364 = vunpack.c.l.b16 %v69
  %v365 = vunpack.c.l.b16 %v70
  %v366 = vunpack.c.l.b16 %v71
  %v367 = vunpack.c.l.b16 %v72
  %v368 = vunpack.c.l.b16 %v73
  %v369 = vunpack.c.l.b16 %v74
  %v370 = vunpack.c.l.b16 %v75
  %v371 = vunpack.c.l.b16 %v76
  %v372 = vunpack.c.l.b16 %v77
  %v373 = vunpack.c.l.b16 %v78
  %v374 = vunpack.c.l.b16 %v79
  %v375 = vunpack.c.l.b16 %v80
  %v376 = vunpack.c.l.b16 %v81
  %v377 = vunpack.c.l.b16 %v82
  %v378 = vunpack.c.l.b16 %v83
  %v379 = vunpack.c.l.b16 %v84
  %v380 = vunpack.c.l.b16 %v85
  %v381 = vunpack.c.l.b16 %v86
  %v382 = vunpack.c.l.b16 %v87
  %v383 = vunpack.c.l.b16 %v88
  %v384 = vunpack.c.l.b16 %v89
  %v385 = vunpack.c.l.b16 %v90
  %v386 = vunpack.c.l.b16 %v91
  %v387 = vunpack.c.l.b16 %v92
  %v388 = vunpack.c.l.b16 %v93
  %v389 = vunpack.c.l.b16 %v94
  %v390 = vunpack.c.l.b16 %v95
  %v391 = vunpack.c.l.b16 %v96
  %v392 = vunpack.c.l.b16 %v97
  %v393 = vunpack.c.l.b16 %v98
  %v394 = vunpack.c.l.b16 %v99
  %v395 = vunpack.c.l.b16 %v100
  %v396 = vunpack.c.l.b16 %v101
  %v397 = vunpack.c.l.b16 %v102
  %v398 = vunpack.c.l.b16 %v103
  %v399 = vunpack.c.l.b16 %v104
  %v400 = vunpack.c.l.b16 %v105
  %v401 = vunpack.c.l.b16 %v106
  %v402 = vunpack.c.l.b16 %v107
  %v403 = vunpack.c.l.b16 %v108
  %v404 = vunpack.c.l.b16 %v109
  %v405 = vunpack.c.l.b16 %v110
  %v406 = vpack.c.b16 %v343, %v342
  %v407 = vpack.c.b16 %v345, %v344
  %v408 = vpack.c.b16 %v347, %v346
  %v409 = vpack.c.b16 %v349, %v348
  %v410 = vpack.c.b16 %v351, %v350
  %v411 = vpack.c.b16 %v353, %v352
  %v412 = vpack.c.b16 %v355, %v354
  %v413 = vpack.c.b16 %v357, %v356
  %v414 = vpack.c.b16 %v359, %v358
  %v415 = vpack.c.b16 %v361, %v360
  %v416 = vpack.c.b16 %v363, %v362
  %v417 = vpack.c.b16 %v365, %v364
  %v418 = vpack.c.b16 %v367, %v366
  %v419 = vpack.c.b16 %v369, %v368
  %v420 = vpack.c.b16 %v371, %v370
  %v421 = vpack.c.b16 %v373, %v372
  %v422 = vpack.c.b16 %v375, %v374
  %v423 = vpack.c.b16 %v377, %v376
  %v424 = vpack.c.b16 %v379, %v378
  %v425 = vpack.c.b16 %v381, %v380
  %v426 = vpack.c.b16 %v383, %v382
  %v427 = vpack.c.b16 %v385, %v384
  %v428 = vpack.c.b16 %v387, %v386
  %v429 = vpack.c.b16 %v389, %v388
  %v430 = vpack.c.b16 %v391, %v390
  %v431 = vpack.c.b16 %v393, %v392
  %v432 = vpack.c.b16 %v395, %v394
  %v433 = vpack.c.b16 %v397, %v396
  %v434 = vpack.c.b16 %v399, %v398
  %v435 = vpack.c.b16 %v401, %v400
  %v436 = vpack.c.b16 %v403, %v402
  %v437 = vpack.c.b16 %v405, %v404
  %470 = vmatprep.subr.bf16.mxu0 0
  %471 = vmatpush1.bf16.msra.mxu0 %v413
  %472 = vmatprep.subr.bf16.mxu0 0
  %473 = vmatpush1.bf16.msra.mxu0 %v412
  %474 = vmatprep.subr.bf16.mxu0 0
  %475 = vmatpush1.bf16.msra.mxu0 %v411
  %476 = vmatprep.subr.bf16.mxu0 0
  %477 = vmatpush1.bf16.msra.mxu0 %v410
  %478 = vmatprep.subr.bf16.mxu0 0
  %479 = vmatpush1.bf16.msra.mxu0 %v409
  %480 = vmatprep.subr.bf16.mxu0 0
  %481 = vmatpush1.bf16.msra.mxu0 %v408
  %482 = vmatprep.subr.bf16.mxu0 0
  %483 = vmatpush1.bf16.msra.mxu0 %v407
  %484 = vmatprep.subr.bf16.mxu0 0
  %485 = vmatpush1.bf16.msra.mxu0 %v406
  %486 = vmatprep.subr.bf16.mxu0 0
  %487 = vmatpush2.bf16.msra.mxu0 %v421
  %488 = vmatprep.subr.bf16.mxu0 0
  %489 = vmatpush2.bf16.msra.mxu0 %v420
  %490 = vmatprep.subr.bf16.mxu0 0
  %491 = vmatpush2.bf16.msra.mxu0 %v419
  %492 = vmatprep.subr.bf16.mxu0 0
  %493 = vmatpush2.bf16.msra.mxu0 %v418
  %494 = vmatprep.subr.bf16.mxu0 0
  %495 = vmatpush2.bf16.msra.mxu0 %v417
  %496 = vmatprep.subr.bf16.mxu0 0
  %497 = vmatpush2.bf16.msra.mxu0 %v416
  %498 = vmatprep.subr.bf16.mxu0 0
  %499 = vmatpush2.bf16.msra.mxu0 %v415
  %500 = vmatprep.subr.bf16.mxu0 0
  %501 = vmatpush2.bf16.msra.mxu0 %v414
  %502 = vmatprep.mubr.bf16.mxu0 %v215
  %503 = vmatmul.mubr.bf16.gmra.mxu0 %v214
  %v504 = vpop.f32.mrf.mxu0
  %v505 = vadd.f32 %v116, %v504
  %v506 = vpop.f32.mrf.mxu0
  %v507 = vpop.f32.mrf.mxu0
  %v508 = vadd.f32 %v116, %v507
  %v509 = vpop.f32.mrf.mxu0
  %510 = vmatprep.mubr.bf16.mxu0 %v219
  %511 = vmatmul.mubr.bf16.gmra.mxu0 %v218
  %v512 = vpop.f32.mrf.mxu0
  %v513 = vadd.f32 %v116, %v512
  %v514 = vpop.f32.mrf.mxu0
  %v515 = vpop.f32.mrf.mxu0
  %v516 = vadd.f32 %v116, %v515
  %v517 = vpop.f32.mrf.mxu0
  %518 = vmatprep.mubr.bf16.mxu0 %v223
  %519 = vmatmul.mubr.bf16.gmra.mxu0 %v222
  %v520 = vpop.f32.mrf.mxu0
  %v521 = vadd.f32 %v116, %v520
  %v522 = vpop.f32.mrf.mxu0
  %v523 = vpop.f32.mrf.mxu0
  %v524 = vadd.f32 %v116, %v523
  %v525 = vpop.f32.mrf.mxu0
  %526 = vmatprep.mubr.bf16.mxu0 %v227
  %527 = vmatmul.mubr.bf16.gmra.mxu0 %v226
  %v528 = vpop.f32.mrf.mxu0
  %v529 = vadd.f32 %v116, %v528
  %v530 = vpop.f32.mrf.mxu0
  %v531 = vpop.f32.mrf.mxu0
  %v532 = vadd.f32 %v116, %v531
  %v533 = vpop.f32.mrf.mxu0
  %534 = vmatprep.mubr.bf16.mxu0 %v231
  %535 = vmatmul.mubr.bf16.gmra.mxu0 %v230
  %v536 = vpop.f32.mrf.mxu0
  %v537 = vadd.f32 %v116, %v536
  %v538 = vpop.f32.mrf.mxu0
  %v539 = vpop.f32.mrf.mxu0
  %v540 = vadd.f32 %v116, %v539
  %v541 = vpop.f32.mrf.mxu0
  %542 = vmatprep.mubr.bf16.mxu0 %v235
  %543 = vmatmul.mubr.bf16.gmra.mxu0 %v234
  %v544 = vpop.f32.mrf.mxu0
  %v545 = vadd.f32 %v116, %v544
  %v546 = vpop.f32.mrf.mxu0
  %v547 = vpop.f32.mrf.mxu0
  %v548 = vadd.f32 %v116, %v547
  %v549 = vpop.f32.mrf.mxu0
  %550 = vmatprep.mubr.bf16.mxu0 %v239
  %551 = vmatmul.mubr.bf16.gmra.mxu0 %v238
  %v552 = vpop.f32.mrf.mxu0
  %v553 = vadd.f32 %v116, %v552
  %v554 = vpop.f32.mrf.mxu0
  %v555 = vpop.f32.mrf.mxu0
  %v556 = vadd.f32 %v116, %v555
  %v557 = vpop.f32.mrf.mxu0
  %558 = vmatprep.mubr.bf16.mxu0 %v243
  %559 = vmatmul.mubr.bf16.gmra.mxu0 %v242
  %v560 = vpop.f32.mrf.mxu0
  %v561 = vadd.f32 %v116, %v560
  %v562 = vpop.f32.mrf.mxu0
  %v563 = vpop.f32.mrf.mxu0
  %v564 = vadd.f32 %v116, %v563
  %v565 = vpop.f32.mrf.mxu0
  %566 = vdwg.mxu0
  %567 = vmatprep.subr.bf16.mxu0 0
  %568 = vmatpush1.bf16.msra.mxu0 %v429
  %569 = vmatprep.subr.bf16.mxu0 0
  %570 = vmatpush1.bf16.msra.mxu0 %v428
  %571 = vmatprep.subr.bf16.mxu0 0
  %572 = vmatpush1.bf16.msra.mxu0 %v427
  %573 = vmatprep.subr.bf16.mxu0 0
  %574 = vmatpush1.bf16.msra.mxu0 %v426
  %575 = vmatprep.subr.bf16.mxu0 0
  %576 = vmatpush1.bf16.msra.mxu0 %v425
  %577 = vmatprep.subr.bf16.mxu0 0
  %578 = vmatpush1.bf16.msra.mxu0 %v424
  %579 = vmatprep.subr.bf16.mxu0 0
  %580 = vmatpush1.bf16.msra.mxu0 %v423
  %581 = vmatprep.subr.bf16.mxu0 0
  %582 = vmatpush1.bf16.msra.mxu0 %v422
  %583 = vmatprep.subr.bf16.mxu0 0
  %584 = vmatpush2.bf16.msra.mxu0 %v437
  %585 = vmatprep.subr.bf16.mxu0 0
  %586 = vmatpush2.bf16.msra.mxu0 %v436
  %587 = vmatprep.subr.bf16.mxu0 0
  %588 = vmatpush2.bf16.msra.mxu0 %v435
  %589 = vmatprep.subr.bf16.mxu0 0
  %590 = vmatpush2.bf16.msra.mxu0 %v434
  %591 = vmatprep.subr.bf16.mxu0 0
  %592 = vmatpush2.bf16.msra.mxu0 %v433
  %593 = vmatprep.subr.bf16.mxu0 0
  %594 = vmatpush2.bf16.msra.mxu0 %v432
  %595 = vmatprep.subr.bf16.mxu0 0
  %596 = vmatpush2.bf16.msra.mxu0 %v431
  %597 = vmatprep.subr.bf16.mxu0 0
  %598 = vmatpush2.bf16.msra.mxu0 %v430
  %599 = vmatprep.mubr.bf16.mxu0 %v217
  %600 = vmatmul.mubr.bf16.gmra.mxu0 %v216
  %v601 = vpop.f32.mrf.mxu0
  %v602 = vadd.f32 %v505, %v601
  %v603 = vpop.f32.mrf.mxu0
  %v604 = vpop.f32.mrf.mxu0
  %v605 = vadd.f32 %v508, %v604
  %v606 = vpop.f32.mrf.mxu0
  %607 = vmatprep.mubr.bf16.mxu0 %v221
  %608 = vmatmul.mubr.bf16.gmra.mxu0 %v220
  %v609 = vpop.f32.mrf.mxu0
  %v610 = vadd.f32 %v513, %v609
  %v611 = vpop.f32.mrf.mxu0
  %v612 = vpop.f32.mrf.mxu0
  %v613 = vadd.f32 %v516, %v612
  %v614 = vpop.f32.mrf.mxu0
  %615 = vmatprep.mubr.bf16.mxu0 %v225
  %616 = vmatmul.mubr.bf16.gmra.mxu0 %v224
  %v617 = vpop.f32.mrf.mxu0
  %v618 = vadd.f32 %v521, %v617
  %v619 = vpop.f32.mrf.mxu0
  %v620 = vpop.f32.mrf.mxu0
  %v621 = vadd.f32 %v524, %v620
  %v622 = vpop.f32.mrf.mxu0
  %623 = vmatprep.mubr.bf16.mxu0 %v229
  %624 = vmatmul.mubr.bf16.gmra.mxu0 %v228
  %v625 = vpop.f32.mrf.mxu0
  %v626 = vadd.f32 %v529, %v625
  %v627 = vpop.f32.mrf.mxu0
  %v628 = vpop.f32.mrf.mxu0
  %v629 = vadd.f32 %v532, %v628
  %v630 = vpop.f32.mrf.mxu0
  %631 = vmatprep.mubr.bf16.mxu0 %v233
  %632 = vmatmul.mubr.bf16.gmra.mxu0 %v232
  %v633 = vpop.f32.mrf.mxu0
  %v634 = vadd.f32 %v537, %v633
  %v635 = vpop.f32.mrf.mxu0
  %v636 = vpop.f32.mrf.mxu0
  %v637 = vadd.f32 %v540, %v636
  %v638 = vpop.f32.mrf.mxu0
  %639 = vmatprep.mubr.bf16.mxu0 %v237
  %640 = vmatmul.mubr.bf16.gmra.mxu0 %v236
  %v641 = vpop.f32.mrf.mxu0
  %v642 = vadd.f32 %v545, %v641
  %v643 = vpop.f32.mrf.mxu0
  %v644 = vpop.f32.mrf.mxu0
  %v645 = vadd.f32 %v548, %v644
  %v646 = vpop.f32.mrf.mxu0
  %647 = vmatprep.mubr.bf16.mxu0 %v241
  %648 = vmatmul.mubr.bf16.gmra.mxu0 %v240
  %v649 = vpop.f32.mrf.mxu0
  %v650 = vadd.f32 %v553, %v649
  %v651 = vpop.f32.mrf.mxu0
  %v652 = vpop.f32.mrf.mxu0
  %v653 = vadd.f32 %v556, %v652
  %v654 = vpop.f32.mrf.mxu0
  %655 = vmatprep.mubr.bf16.mxu0 %v245
  %656 = vmatmul.mubr.bf16.gmra.mxu0 %v244
  %v657 = vpop.f32.mrf.mxu0
  %v658 = vadd.f32 %v561, %v657
  %v659 = vpop.f32.mrf.mxu0
  %v660 = vpop.f32.mrf.mxu0
  %v661 = vadd.f32 %v564, %v660
  %v662 = vpop.f32.mrf.mxu0
  %663 = vdwg.mxu0
  %v664 = vmax.f32 %v602, 0.0
  %v665 = vmax.f32 %v605, 0.0
  %v666 = vmax.f32 %v610, 0.0
  %v667 = vmax.f32 %v613, 0.0
  %v668 = vmax.f32 %v618, 0.0
  %v669 = vmax.f32 %v621, 0.0
  %v670 = vmax.f32 %v626, 0.0
  %v671 = vmax.f32 %v629, 0.0
  %v672 = vmax.f32 %v634, 0.0
  %v673 = vmax.f32 %v637, 0.0
  %v674 = vmax.f32 %v642, 0.0
  %v675 = vmax.f32 %v645, 0.0
  %v676 = vmax.f32 %v650, 0.0
  %v677 = vmax.f32 %v653, 0.0
  %v678 = vmax.f32 %v658, 0.0
  %v679 = vmax.f32 %v661, 0.0
  %680 = vst [vmem:[%s3] sm:$0xff] %v664
  %681 = vst [vmem:[%s3 + $0x8] sm:$0xff] %v665
  %682 = vst [vmem:[%s3 + $0x10] sm:$0xff] %v666
  %683 = vst [vmem:[%s3 + $0x18] sm:$0xff] %v667
  %684 = vst [vmem:[%s3 + $0x20] sm:$0xff] %v668
  %685 = vst [vmem:[%s3 + $0x28] sm:$0xff] %v669
  %686 = vst [vmem:[%s3 + $0x30] sm:$0xff] %v670
  %687 = vst [vmem:[%s3 + $0x38] sm:$0xff] %v671
  %688 = vst [vmem:[%s3 + $0x40] sm:$0xff] %v672
  %689 = vst [vmem:[%s3 + $0x48] sm:$0xff] %v673
  %690 = vst [vmem:[%s3 + $0x50] sm:$0xff] %v674
  %691 = vst [vmem:[%s3 + $0x58] sm:$0xff] %v675
  %692 = vst [vmem:[%s3 + $0x60] sm:$0xff] %v676
  %693 = vst [vmem:[%s3 + $0x68] sm:$0xff] %v677
  %694 = vst [vmem:[%s3 + $0x70] sm:$0xff] %v678
  %695 = vst [vmem:[%s3 + $0x78] sm:$0xff] %v679
  // Predicated region
  $region14: #{_lambda_.15} parent=0 // pred_check
    _
  $region15: #{_lambda_.15} parent=0 // pred_check_branch
    %697 = sbr.rel (0) target = $region17
  $region16: #{_lambda_.15} parent=0 // pred_region
    _
  $region17: #{_lambda_.15} parent=0 // pred_fallthru
    _
  // Predicated region
  $region18: #{_lambda_.15} parent=0 // pred_check
    _
  $region19: #{_lambda_.15} parent=0 // pred_check_branch
    %699 = sbr.rel (0) target = $region21
  $region20: #{_lambda_.15} parent=0 // pred_region
    _
  $region21: #{_lambda_.15} parent=0 // pred_fallthru
    _

// kernel: _lambda_.16
$region0: #{_lambda_.16}
  #allocation0 [shape = 'u32[]', space=smem, size = 0x4, offset = 0x4, fixed_abs, tag = 'smem constant byte address 0x4 - core index']
  #allocation1 [shape = 'u32[144,128]{1,0:T(1,128)}', space=vmem, size = 0x12000, scoped, tag = 'internal scratch']
  %s0 = inlined_call_operand.vmem [shape: bf16[128,384], index: 0, kind: input, shape index: {}]
  %s1 = inlined_call_operand.vmem [shape: bf16[384,128], index: 1, kind: input, shape index: {}]
  %s2 = inlined_call_operand.vmem [shape: f32[1,128], index: 2, kind: input, shape index: {}]
  %s3 = inlined_call_operand.vmem [shape: f32[128,128], index: 3, kind: output, shape index: {}]
  %s4 = sld [smem:[#allocation0]]
  $region22: #{_lambda_.16} parent=0
    _
  %s6 = ssub.s32 1, %s4
  %s7 = scalar_select 0, %s6, %s4
  // Predicated region
  $region2: #{_lambda_.16} parent=0 // pred_check
    _
  $region3: #{_lambda_.16} parent=0 // pred_check_branch
    %9 = sbr.rel (0) target = $region5
  $region4: #{_lambda_.16} parent=0 // pred_region
    _
  $region5: #{_lambda_.16} parent=0 // pred_fallthru
    _
  // Predicated region
  $region6: #{_lambda_.16} parent=0 // pred_check
    _
  $region7: #{_lambda_.16} parent=0 // pred_check_branch
    %11 = sbr.rel (0) target = $region9
  $region8: #{_lambda_.16} parent=0 // pred_region
    _
  $region9: #{_lambda_.16} parent=0 // pred_fallthru
    _
  // Predicated region
  $region10: #{_lambda_.16} parent=0 // pred_check
    _
  $region11: #{_lambda_.16} parent=0 // pred_check_branch
    %13 = sbr.rel (0) target = $region13
  $region12: #{_lambda_.16} parent=0 // pred_region
    _
  $region13: #{_lambda_.16} parent=0 // pred_fallthru
    _
  %v15 = vld [vmem:[%s0] sm:$0xff]
  %v16 = vld [vmem:[%s0 + $0x8] sm:$0xf]
  %v17 = vld [vmem:[%s0 + $0xc] sm:$0xff]
  %v18 = vld [vmem:[%s0 + $0x14] sm:$0xf]
  %v19 = vld [vmem:[%s0 + $0x18] sm:$0xff]
  %v20 = vld [vmem:[%s0 + $0x20] sm:$0xf]
  %v21 = vld [vmem:[%s0 + $0x24] sm:$0xff]
  %v22 = vld [vmem:[%s0 + $0x2c] sm:$0xf]
  %v23 = vld [vmem:[%s0 + $0x30] sm:$0xff]
  %v24 = vld [vmem:[%s0 + $0x38] sm:$0xf]
  %v25 = vld [vmem:[%s0 + $0x3c] sm:$0xff]
  %v26 = vld [vmem:[%s0 + $0x44] sm:$0xf]
  %v27 = vld [vmem:[%s0 + $0x48] sm:$0xff]
  %v28 = vld [vmem:[%s0 + $0x50] sm:$0xf]
  %v29 = vld [vmem:[%s0 + $0x54] sm:$0xff]
  %v30 = vld [vmem:[%s0 + $0x5c] sm:$0xf]
  %v31 = vld [vmem:[%s0 + $0x60] sm:$0xff]
  %v32 = vld [vmem:[%s0 + $0x68] sm:$0xf]
  %v33 = vld [vmem:[%s0 + $0x6c] sm:$0xff]
  %v34 = vld [vmem:[%s0 + $0x74] sm:$0xf]
  %v35 = vld [vmem:[%s0 + $0x78] sm:$0xff]
  %v36 = vld [vmem:[%s0 + $0x80] sm:$0xf]
  %v37 = vld [vmem:[%s0 + $0x84] sm:$0xff]
  %v38 = vld [vmem:[%s0 + $0x8c] sm:$0xf]
  %v39 = vld [vmem:[%s0 + $0x90] sm:$0xff]
  %v40 = vld [vmem:[%s0 + $0x98] sm:$0xf]
  %v41 = vld [vmem:[%s0 + $0x9c] sm:$0xff]
  %v42 = vld [vmem:[%s0 + $0xa4] sm:$0xf]
  %v43 = vld [vmem:[%s0 + $0xa8] sm:$0xff]
  %v44 = vld [vmem:[%s0 + $0xb0] sm:$0xf]
  %v45 = vld [vmem:[%s0 + $0xb4] sm:$0xff]
  %v46 = vld [vmem:[%s0 + $0xbc] sm:$0xf]
  %v47 = vld [vmem:[%s1] sm:$0xf]
  %v48 = vld [vmem:[%s1 + $0x4] sm:$0xf]
  %v49 = vld [vmem:[%s1 + $0x8] sm:$0xf]
  %v50 = vld [vmem:[%s1 + $0xc] sm:$0xf]
  %v51 = vld [vmem:[%s1 + $0x10] sm:$0xf]
  %v52 = vld [vmem:[%s1 + $0x14] sm:$0xf]
  %v53 = vld [vmem:[%s1 + $0x18] sm:$0xf]
  %v54 = vld [vmem:[%s1 + $0x1c] sm:$0xf]
  %v55 = vld [vmem:[%s1 + $0x20] sm:$0xf]
  %v56 = vld [vmem:[%s1 + $0x24] sm:$0xf]
  %v57 = vld [vmem:[%s1 + $0x28] sm:$0xf]
  %v58 = vld [vmem:[%s1 + $0x2c] sm:$0xf]
  %v59 = vld [vmem:[%s1 + $0x30] sm:$0xf]
  %v60 = vld [vmem:[%s1 + $0x34] sm:$0xf]
  %v61 = vld [vmem:[%s1 + $0x38] sm:$0xf]
  %v62 = vld [vmem:[%s1 + $0x3c] sm:$0xf]
  %v63 = vld [vmem:[%s1 + $0x40] sm:$0xf]
  %v64 = vld [vmem:[%s1 + $0x44] sm:$0xf]
  %v65 = vld [vmem:[%s1 + $0x48] sm:$0xf]
  %v66 = vld [vmem:[%s1 + $0x4c] sm:$0xf]
  %v67 = vld [vmem:[%s1 + $0x50] sm:$0xf]
  %v68 = vld [vmem:[%s1 + $0x54] sm:$0xf]
  %v69 = vld [vmem:[%s1 + $0x58] sm:$0xf]
  %v70 = vld [vmem:[%s1 + $0x5c] sm:$0xf]
  %v71 = vld [vmem:[%s1 + $0x60] sm:$0xf]
  %v72 = vld [vmem:[%s1 + $0x64] sm:$0xf]
  %v73 = vld [vmem:[%s1 + $0x68] sm:$0xf]
  %v74 = vld [vmem:[%s1 + $0x6c] sm:$0xf]
  %v75 = vld [vmem:[%s1 + $0x70] sm:$0xf]
  %v76 = vld [vmem:[%s1 + $0x74] sm:$0xf]
  %v77 = vld [vmem:[%s1 + $0x78] sm:$0xf]
  %v78 = vld [vmem:[%s1 + $0x7c] sm:$0xf]
  %v79 = vld [vmem:[%s1 + $0x80] sm:$0xf]
  %v80 = vld [vmem:[%s1 + $0x84] sm:$0xf]
  %v81 = vld [vmem:[%s1 + $0x88] sm:$0xf]
  %v82 = vld [vmem:[%s1 + $0x8c] sm:$0xf]
  %v83 = vld [vmem:[%s1 + $0x90] sm:$0xf]
  %v84 = vld [vmem:[%s1 + $0x94] sm:$0xf]
  %v85 = vld [vmem:[%s1 + $0x98] sm:$0xf]
  %v86 = vld [vmem:[%s1 + $0x9c] sm:$0xf]
  %v87 = vld [vmem:[%s1 + $0xa0] sm:$0xf]
  %v88 = vld [vmem:[%s1 + $0xa4] sm:$0xf]
  %v89 = vld [vmem:[%s1 + $0xa8] sm:$0xf]
  %v90 = vld [vmem:[%s1 + $0xac] sm:$0xf]
  %v91 = vld [vmem:[%s1 + $0xb0] sm:$0xf]
  %v92 = vld [vmem:[%s1 + $0xb4] sm:$0xf]
  %v93 = vld [vmem:[%s1 + $0xb8] sm:$0xf]
  %v94 = vld [vmem:[%s1 + $0xbc] sm:$0xf]
  %v95 = vld [vmem:[%s2] sm:$0x1]
  %v97 = vlaneseq
  %v98 = vshrl.u32 %v97, 7
  %v99 = vsub.s32 0, %v98
  %v100 = vrot.slane %v95, %v99
  %v134 = vunpack.c.l.b16 %v15
  %v135 = vunpack.c.h.b16 %v15
  %v136 = vunpack.c.l.b16 %v16
  %v137 = vunpack.c.l.b16 %v17
  %v138 = vunpack.c.h.b16 %v17
  %v139 = vunpack.c.l.b16 %v18
  %v140 = vunpack.c.l.b16 %v19
  %v141 = vunpack.c.h.b16 %v19
  %v142 = vunpack.c.l.b16 %v20
  %v143 = vunpack.c.l.b16 %v21
  %v144 = vunpack.c.h.b16 %v21
  %v145 = vunpack.c.l.b16 %v22
  %v146 = vunpack.c.l.b16 %v23
  %v147 = vunpack.c.h.b16 %v23
  %v148 = vunpack.c.l.b16 %v24
  %v149 = vunpack.c.l.b16 %v25
  %v150 = vunpack.c.h.b16 %v25
  %v151 = vunpack.c.l.b16 %v26
  %v152 = vunpack.c.l.b16 %v27
  %v153 = vunpack.c.h.b16 %v27
  %v154 = vunpack.c.l.b16 %v28
  %v155 = vunpack.c.l.b16 %v29
  %v156 = vunpack.c.h.b16 %v29
  %v157 = vunpack.c.l.b16 %v30
  %v158 = vunpack.c.l.b16 %v31
  %v159 = vunpack.c.h.b16 %v31
  %v160 = vunpack.c.l.b16 %v32
  %v161 = vunpack.c.l.b16 %v33
  %v162 = vunpack.c.h.b16 %v33
  %v163 = vunpack.c.l.b16 %v34
  %v164 = vunpack.c.l.b16 %v35
  %v165 = vunpack.c.h.b16 %v35
  %v166 = vunpack.c.l.b16 %v36
  %v167 = vunpack.c.l.b16 %v37
  %v168 = vunpack.c.h.b16 %v37
  %v169 = vunpack.c.l.b16 %v38
  %v170 = vunpack.c.l.b16 %v39
  %v171 = vunpack.c.h.b16 %v39
  %v172 = vunpack.c.l.b16 %v40
  %v173 = vunpack.c.l.b16 %v41
  %v174 = vunpack.c.h.b16 %v41
  %v175 = vunpack.c.l.b16 %v42
  %v176 = vunpack.c.l.b16 %v43
  %v177 = vunpack.c.h.b16 %v43
  %v178 = vunpack.c.l.b16 %v44
  %v179 = vunpack.c.l.b16 %v45
  %v180 = vunpack.c.h.b16 %v45
  %v181 = vunpack.c.l.b16 %v46
  %v182 = vpack.c.b16 %v137, %v134
  %v183 = vpack.c.b16 %v138, %v135
  %v184 = vpack.c.b16 %v139, %v136
  %v185 = vpack.c.b16 %v143, %v140
  %v186 = vpack.c.b16 %v144, %v141
  %v187 = vpack.c.b16 %v145, %v142
  %v188 = vpack.c.b16 %v149, %v146
  %v189 = vpack.c.b16 %v150, %v147
  %v190 = vpack.c.b16 %v151, %v148
  %v191 = vpack.c.b16 %v155, %v152
  %v192 = vpack.c.b16 %v156, %v153
  %v193 = vpack.c.b16 %v157, %v154
  %v194 = vpack.c.b16 %v161, %v158
  %v195 = vpack.c.b16 %v162, %v159
  %v196 = vpack.c.b16 %v163, %v160
  %v197 = vpack.c.b16 %v167, %v164
  %v198 = vpack.c.b16 %v168, %v165
  %v199 = vpack.c.b16 %v169, %v166
  %v200 = vpack.c.b16 %v173, %v170
  %v201 = vpack.c.b16 %v174, %v171
  %v202 = vpack.c.b16 %v175, %v172
  %v203 = vpack.c.b16 %v179, %v176
  %v204 = vpack.c.b16 %v180, %v177
  %v205 = vpack.c.b16 %v181, %v178
  %v278 = vunpack.c.l.b16 %v47
  %v279 = vunpack.c.l.b16 %v48
  %v280 = vunpack.c.l.b16 %v49
  %v281 = vunpack.c.l.b16 %v50
  %v282 = vunpack.c.l.b16 %v51
  %v283 = vunpack.c.l.b16 %v52
  %v284 = vunpack.c.l.b16 %v53
  %v285 = vunpack.c.l.b16 %v54
  %v286 = vunpack.c.l.b16 %v55
  %v287 = vunpack.c.l.b16 %v56
  %v288 = vunpack.c.l.b16 %v57
  %v289 = vunpack.c.l.b16 %v58
  %v290 = vunpack.c.l.b16 %v59
  %v291 = vunpack.c.l.b16 %v60
  %v292 = vunpack.c.l.b16 %v61
  %v293 = vunpack.c.l.b16 %v62
  %v294 = vunpack.c.l.b16 %v63
  %v295 = vunpack.c.l.b16 %v64
  %v296 = vunpack.c.l.b16 %v65
  %v297 = vunpack.c.l.b16 %v66
  %v298 = vunpack.c.l.b16 %v67
  %v299 = vunpack.c.l.b16 %v68
  %v300 = vunpack.c.l.b16 %v69
  %v301 = vunpack.c.l.b16 %v70
  %v302 = vunpack.c.l.b16 %v71
  %v303 = vunpack.c.l.b16 %v72
  %v304 = vunpack.c.l.b16 %v73
  %v305 = vunpack.c.l.b16 %v74
  %v306 = vunpack.c.l.b16 %v75
  %v307 = vunpack.c.l.b16 %v76
  %v308 = vunpack.c.l.b16 %v77
  %v309 = vunpack.c.l.b16 %v78
  %v310 = vunpack.c.l.b16 %v79
  %v311 = vunpack.c.l.b16 %v80
  %v312 = vunpack.c.l.b16 %v81
  %v313 = vunpack.c.l.b16 %v82
  %v314 = vunpack.c.l.b16 %v83
  %v315 = vunpack.c.l.b16 %v84
  %v316 = vunpack.c.l.b16 %v85
  %v317 = vunpack.c.l.b16 %v86
  %v318 = vunpack.c.l.b16 %v87
  %v319 = vunpack.c.l.b16 %v88
  %v320 = vunpack.c.l.b16 %v89
  %v321 = vunpack.c.l.b16 %v90
  %v322 = vunpack.c.l.b16 %v91
  %v323 = vunpack.c.l.b16 %v92
  %v324 = vunpack.c.l.b16 %v93
  %v325 = vunpack.c.l.b16 %v94
  %v326 = vpack.c.b16 %v279, %v278
  %v327 = vpack.c.b16 %v281, %v280
  %v328 = vpack.c.b16 %v283, %v282
  %v329 = vpack.c.b16 %v285, %v284
  %v330 = vpack.c.b16 %v287, %v286
  %v331 = vpack.c.b16 %v289, %v288
  %v332 = vpack.c.b16 %v291, %v290
  %v333 = vpack.c.b16 %v293, %v292
  %v334 = vpack.c.b16 %v295, %v294
  %v335 = vpack.c.b16 %v297, %v296
  %v336 = vpack.c.b16 %v299, %v298
  %v337 = vpack.c.b16 %v301, %v300
  %v338 = vpack.c.b16 %v303, %v302
  %v339 = vpack.c.b16 %v305, %v304
  %v340 = vpack.c.b16 %v307, %v306
  %v341 = vpack.c.b16 %v309, %v308
  %v342 = vpack.c.b16 %v311, %v310
  %v343 = vpack.c.b16 %v313, %v312
  %v344 = vpack.c.b16 %v315, %v314
  %v345 = vpack.c.b16 %v317, %v316
  %v346 = vpack.c.b16 %v319, %v318
  %v347 = vpack.c.b16 %v321, %v320
  %v348 = vpack.c.b16 %v323, %v322
  %v349 = vpack.c.b16 %v325, %v324
  %374 = vmatprep.subr.bf16.mxu0 0
  %375 = vmatpush1.bf16.msra.mxu0 %v333
  %376 = vmatprep.subr.bf16.mxu0 0
  %377 = vmatpush1.bf16.msra.mxu0 %v332
  %378 = vmatprep.subr.bf16.mxu0 0
  %379 = vmatpush1.bf16.msra.mxu0 %v331
  %380 = vmatprep.subr.bf16.mxu0 0
  %381 = vmatpush1.bf16.msra.mxu0 %v330
  %382 = vmatprep.subr.bf16.mxu0 0
  %383 = vmatpush1.bf16.msra.mxu0 %v329
  %384 = vmatprep.subr.bf16.mxu0 0
  %385 = vmatpush1.bf16.msra.mxu0 %v328
  %386 = vmatprep.subr.bf16.mxu0 0
  %387 = vmatpush1.bf16.msra.mxu0 %v327
  %388 = vmatprep.subr.bf16.mxu0 0
  %389 = vmatpush1.bf16.msra.mxu0 %v326
  %390 = vmatprep.subr.bf16.mxu0 0
  %391 = vmatpush2.bf16.msra.mxu0 %v341
  %392 = vmatprep.subr.bf16.mxu0 0
  %393 = vmatpush2.bf16.msra.mxu0 %v340
  %394 = vmatprep.subr.bf16.mxu0 0
  %395 = vmatpush2.bf16.msra.mxu0 %v339
  %396 = vmatprep.subr.bf16.mxu0 0
  %397 = vmatpush2.bf16.msra.mxu0 %v338
  %398 = vmatprep.subr.bf16.mxu0 0
  %399 = vmatpush2.bf16.msra.mxu0 %v337
  %400 = vmatprep.subr.bf16.mxu0 0
  %401 = vmatpush2.bf16.msra.mxu0 %v336
  %402 = vmatprep.subr.bf16.mxu0 0
  %403 = vmatpush2.bf16.msra.mxu0 %v335
  %404 = vmatprep.subr.bf16.mxu0 0
  %405 = vmatpush2.bf16.msra.mxu0 %v334
  %406 = vmatprep.mubr.bf16.mxu0 %v183
  %407 = vmatmul.mubr.bf16.gmra.mxu0 %v182
  %v408 = vpop.f32.mrf.mxu0
  %v409 = vadd.f32 %v100, %v408
  %v410 = vpop.f32.mrf.mxu0
  %v411 = vpop.f32.mrf.mxu0
  %v412 = vadd.f32 %v100, %v411
  %v413 = vpop.f32.mrf.mxu0
  %414 = vmatprep.mubr.bf16.mxu0 %v186
  %415 = vmatmul.mubr.bf16.gmra.mxu0 %v185
  %v416 = vpop.f32.mrf.mxu0
  %v417 = vadd.f32 %v100, %v416
  %v418 = vpop.f32.mrf.mxu0
  %v419 = vpop.f32.mrf.mxu0
  %v420 = vadd.f32 %v100, %v419
  %v421 = vpop.f32.mrf.mxu0
  %422 = vmatprep.mubr.bf16.mxu0 %v189
  %423 = vmatmul.mubr.bf16.gmra.mxu0 %v188
  %v424 = vpop.f32.mrf.mxu0
  %v425 = vadd.f32 %v100, %v424
  %v426 = vpop.f32.mrf.mxu0
  %v427 = vpop.f32.mrf.mxu0
  %v428 = vadd.f32 %v100, %v427
  %v429 = vpop.f32.mrf.mxu0
  %430 = vmatprep.mubr.bf16.mxu0 %v192
  %431 = vmatmul.mubr.bf16.gmra.mxu0 %v191
  %v432 = vpop.f32.mrf.mxu0
  %v433 = vadd.f32 %v100, %v432
  %v434 = vpop.f32.mrf.mxu0
  %v435 = vpop.f32.mrf.mxu0
  %v436 = vadd.f32 %v100, %v435
  %v437 = vpop.f32.mrf.mxu0
  %438 = vmatprep.mubr.bf16.mxu0 %v195
  %439 = vmatmul.mubr.bf16.gmra.mxu0 %v194
  %v440 = vpop.f32.mrf.mxu0
  %v441 = vadd.f32 %v100, %v440
  %v442 = vpop.f32.mrf.mxu0
  %v443 = vpop.f32.mrf.mxu0
  %v444 = vadd.f32 %v100, %v443
  %v445 = vpop.f32.mrf.mxu0
  %446 = vmatprep.mubr.bf16.mxu0 %v198
  %447 = vmatmul.mubr.bf16.gmra.mxu0 %v197
  %v448 = vpop.f32.mrf.mxu0
  %v449 = vadd.f32 %v100, %v448
  %v450 = vpop.f32.mrf.mxu0
  %v451 = vpop.f32.mrf.mxu0
  %v452 = vadd.f32 %v100, %v451
  %v453 = vpop.f32.mrf.mxu0
  %454 = vmatprep.mubr.bf16.mxu0 %v201
  %455 = vmatmul.mubr.bf16.gmra.mxu0 %v200
  %v456 = vpop.f32.mrf.mxu0
  %v457 = vadd.f32 %v100, %v456
  %v458 = vpop.f32.mrf.mxu0
  %v459 = vpop.f32.mrf.mxu0
  %v460 = vadd.f32 %v100, %v459
  %v461 = vpop.f32.mrf.mxu0
  %462 = vmatprep.mubr.bf16.mxu0 %v204
  %463 = vmatmul.mubr.bf16.gmra.mxu0 %v203
  %v464 = vpop.f32.mrf.mxu0
  %v465 = vadd.f32 %v100, %v464
  %v466 = vpop.f32.mrf.mxu0
  %v467 = vpop.f32.mrf.mxu0
  %v468 = vadd.f32 %v100, %v467
  %v469 = vpop.f32.mrf.mxu0
  %470 = vdwg.mxu0
  %471 = vmatprep.subr.bf16.mxu0 0
  %472 = vmatpush1.bf16.msra.mxu0 %v349
  %473 = vmatprep.subr.bf16.mxu0 0
  %474 = vmatpush1.bf16.msra.mxu0 %v348
  %475 = vmatprep.subr.bf16.mxu0 0
  %476 = vmatpush1.bf16.msra.mxu0 %v347
  %477 = vmatprep.subr.bf16.mxu0 0
  %478 = vmatpush1.bf16.msra.mxu0 %v346
  %479 = vmatprep.subr.bf16.mxu0 0
  %480 = vmatpush1.bf16.msra.mxu0 %v345
  %481 = vmatprep.subr.bf16.mxu0 0
  %482 = vmatpush1.bf16.msra.mxu0 %v344
  %483 = vmatprep.subr.bf16.mxu0 0
  %484 = vmatpush1.bf16.msra.mxu0 %v343
  %485 = vmatprep.subr.bf16.mxu0 0
  %486 = vmatpush1.bf16.msra.mxu0 %v342
  %487 = vmatprep.subr.bf16.mxu0 0
  %488 = vmatpush2.bf16.msra.mxu0 0
  %489 = vmatprep.subr.bf16.mxu0 0
  %490 = vmatpush2.bf16.msra.mxu0 0
  %491 = vmatprep.subr.bf16.mxu0 0
  %492 = vmatpush2.bf16.msra.mxu0 0
  %493 = vmatprep.subr.bf16.mxu0 0
  %494 = vmatpush2.bf16.msra.mxu0 0
  %495 = vmatprep.subr.bf16.mxu0 0
  %496 = vmatpush2.bf16.msra.mxu0 0
  %497 = vmatprep.subr.bf16.mxu0 0
  %498 = vmatpush2.bf16.msra.mxu0 0
  %499 = vmatprep.subr.bf16.mxu0 0
  %500 = vmatpush2.bf16.msra.mxu0 0
  %501 = vmatprep.subr.bf16.mxu0 0
  %502 = vmatpush2.bf16.msra.mxu0 0
  %503 = vmatprep.mubr.bf16.mxu0 0
  %504 = vmatmul.mubr.bf16.gmra.mxu0 %v184
  %v505 = vpop.f32.mrf.mxu0
  %v506 = vadd.f32 %v409, %v505
  %v507 = vpop.f32.mrf.mxu0
  %v508 = vpop.f32.mrf.mxu0
  %v509 = vadd.f32 %v412, %v508
  %v510 = vpop.f32.mrf.mxu0
  %511 = vmatprep.mubr.bf16.mxu0 0
  %512 = vmatmul.mubr.bf16.gmra.mxu0 %v187
  %v513 = vpop.f32.mrf.mxu0
  %v514 = vadd.f32 %v417, %v513
  %v515 = vpop.f32.mrf.mxu0
  %v516 = vpop.f32.mrf.mxu0
  %v517 = vadd.f32 %v420, %v516
  %v518 = vpop.f32.mrf.mxu0
  %519 = vmatprep.mubr.bf16.mxu0 0
  %520 = vmatmul.mubr.bf16.gmra.mxu0 %v190
  %v521 = vpop.f32.mrf.mxu0
  %v522 = vadd.f32 %v425, %v521
  %v523 = vpop.f32.mrf.mxu0
  %v524 = vpop.f32.mrf.mxu0
  %v525 = vadd.f32 %v428, %v524
  %v526 = vpop.f32.mrf.mxu0
  %527 = vmatprep.mubr.bf16.mxu0 0
  %528 = vmatmul.mubr.bf16.gmra.mxu0 %v193
  %v529 = vpop.f32.mrf.mxu0
  %v530 = vadd.f32 %v433, %v529
  %v531 = vpop.f32.mrf.mxu0
  %v532 = vpop.f32.mrf.mxu0
  %v533 = vadd.f32 %v436, %v532
  %v534 = vpop.f32.mrf.mxu0
  %535 = vmatprep.mubr.bf16.mxu0 0
  %536 = vmatmul.mubr.bf16.gmra.mxu0 %v196
  %v537 = vpop.f32.mrf.mxu0
  %v538 = vadd.f32 %v441, %v537
  %v539 = vpop.f32.mrf.mxu0
  %v540 = vpop.f32.mrf.mxu0
  %v541 = vadd.f32 %v444, %v540
  %v542 = vpop.f32.mrf.mxu0
  %543 = vmatprep.mubr.bf16.mxu0 0
  %544 = vmatmul.mubr.bf16.gmra.mxu0 %v199
  %v545 = vpop.f32.mrf.mxu0
  %v546 = vadd.f32 %v449, %v545
  %v547 = vpop.f32.mrf.mxu0
  %v548 = vpop.f32.mrf.mxu0
  %v549 = vadd.f32 %v452, %v548
  %v550 = vpop.f32.mrf.mxu0
  %551 = vmatprep.mubr.bf16.mxu0 0
  %552 = vmatmul.mubr.bf16.gmra.mxu0 %v202
  %v553 = vpop.f32.mrf.mxu0
  %v554 = vadd.f32 %v457, %v553
  %v555 = vpop.f32.mrf.mxu0
  %v556 = vpop.f32.mrf.mxu0
  %v557 = vadd.f32 %v460, %v556
  %v558 = vpop.f32.mrf.mxu0
  %559 = vmatprep.mubr.bf16.mxu0 0
  %560 = vmatmul.mubr.bf16.gmra.mxu0 %v205
  %v561 = vpop.f32.mrf.mxu0
  %v562 = vadd.f32 %v465, %v561
  %v563 = vpop.f32.mrf.mxu0
  %v564 = vpop.f32.mrf.mxu0
  %v565 = vadd.f32 %v468, %v564
  %v566 = vpop.f32.mrf.mxu0
  %567 = vdwg.mxu0
  %v568 = vmax.f32 %v506, 0.0
  %v569 = vmax.f32 %v509, 0.0
  %v570 = vmax.f32 %v514, 0.0
  %v571 = vmax.f32 %v517, 0.0
  %v572 = vmax.f32 %v522, 0.0
  %v573 = vmax.f32 %v525, 0.0
  %v574 = vmax.f32 %v530, 0.0
  %v575 = vmax.f32 %v533, 0.0
  %v576 = vmax.f32 %v538, 0.0
  %v577 = vmax.f32 %v541, 0.0
  %v578 = vmax.f32 %v546, 0.0
  %v579 = vmax.f32 %v549, 0.0
  %v580 = vmax.f32 %v554, 0.0
  %v581 = vmax.f32 %v557, 0.0
  %v582 = vmax.f32 %v562, 0.0
  %v583 = vmax.f32 %v565, 0.0
  %584 = vst [vmem:[%s3] sm:$0xff] %v568
  %585 = vst [vmem:[%s3 + $0x8] sm:$0xff] %v569
  %586 = vst [vmem:[%s3 + $0x10] sm:$0xff] %v570
  %587 = vst [vmem:[%s3 + $0x18] sm:$0xff] %v571
  %588 = vst [vmem:[%s3 + $0x20] sm:$0xff] %v572
  %589 = vst [vmem:[%s3 + $0x28] sm:$0xff] %v573
  %590 = vst [vmem:[%s3 + $0x30] sm:$0xff] %v574
  %591 = vst [vmem:[%s3 + $0x38] sm:$0xff] %v575
  %592 = vst [vmem:[%s3 + $0x40] sm:$0xff] %v576
  %593 = vst [vmem:[%s3 + $0x48] sm:$0xff] %v577
  %594 = vst [vmem:[%s3 + $0x50] sm:$0xff] %v578
  %595 = vst [vmem:[%s3 + $0x58] sm:$0xff] %v579
  %596 = vst [vmem:[%s3 + $0x60] sm:$0xff] %v580
  %597 = vst [vmem:[%s3 + $0x68] sm:$0xff] %v581
  %598 = vst [vmem:[%s3 + $0x70] sm:$0xff] %v582
  %599 = vst [vmem:[%s3 + $0x78] sm:$0xff] %v583
  // Predicated region
  $region14: #{_lambda_.16} parent=0 // pred_check
    _
  $region15: #{_lambda_.16} parent=0 // pred_check_branch
    %601 = sbr.rel (0) target = $region17
  $region16: #{_lambda_.16} parent=0 // pred_region
    _
  $region17: #{_lambda_.16} parent=0 // pred_fallthru
    _
  // Predicated region
  $region18: #{_lambda_.16} parent=0 // pred_check
    _
  $region19: #{_lambda_.16} parent=0 // pred_check_branch
    %603 = sbr.rel (0) target = $region21
  $region20: #{_lambda_.16} parent=0 // pred_region
    _
  $region21: #{_lambda_.16} parent=0 // pred_fallthru
    _

// kernel: _lambda_.17
$region0: #{_lambda_.17}
  #allocation0 [shape = 'u32[]', space=smem, size = 0x4, offset = 0x4, fixed_abs, tag = 'smem constant byte address 0x4 - core index']
  #allocation1 [shape = 'u32[144,128]{1,0:T(1,128)}', space=vmem, size = 0x12000, scoped, tag = 'internal scratch']
  %s0 = inlined_call_operand.vmem [shape: bf16[32,256], index: 0, kind: input, shape index: {}]
  %s1 = inlined_call_operand.vmem [shape: bf16[256,128], index: 1, kind: input, shape index: {}]
  %s2 = inlined_call_operand.vmem [shape: f32[1,128], index: 2, kind: input, shape index: {}]
  %s3 = inlined_call_operand.vmem [shape: f32[32,128], index: 3, kind: output, shape index: {}]
  %s4 = sld [smem:[#allocation0]]
  $region22: #{_lambda_.17} parent=0
    _
  %s6 = ssub.s32 1, %s4
  %s7 = scalar_select 0, %s6, %s4
  // Predicated region
  $region2: #{_lambda_.17} parent=0 // pred_check
    _
  $region3: #{_lambda_.17} parent=0 // pred_check_branch
    %9 = sbr.rel (0) target = $region5
  $region4: #{_lambda_.17} parent=0 // pred_region
    _
  $region5: #{_lambda_.17} parent=0 // pred_fallthru
    _
  // Predicated region
  $region6: #{_lambda_.17} parent=0 // pred_check
    _
  $region7: #{_lambda_.17} parent=0 // pred_check_branch
    %11 = sbr.rel (0) target = $region9
  $region8: #{_lambda_.17} parent=0 // pred_region
    _
  $region9: #{_lambda_.17} parent=0 // pred_fallthru
    _
  // Predicated region
  $region10: #{_lambda_.17} parent=0 // pred_check
    _
  $region11: #{_lambda_.17} parent=0 // pred_check_branch
    %13 = sbr.rel (0) target = $region13
  $region12: #{_lambda_.17} parent=0 // pred_region
    _
  $region13: #{_lambda_.17} parent=0 // pred_fallthru
    _
  %v15 = vld [vmem:[%s0] sm:$0xff]
  %v16 = vld [vmem:[%s0 + $0x8] sm:$0xff]
  %v17 = vld [vmem:[%s0 + $0x10] sm:$0xff]
  %v18 = vld [vmem:[%s0 + $0x18] sm:$0xff]
  %v19 = vld [vmem:[%s1] sm:$0xf]
  %v20 = vld [vmem:[%s1 + $0x4] sm:$0xf]
  %v21 = vld [vmem:[%s1 + $0x8] sm:$0xf]
  %v22 = vld [vmem:[%s1 + $0xc] sm:$0xf]
  %v23 = vld [vmem:[%s1 + $0x10] sm:$0xf]
  %v24 = vld [vmem:[%s1 + $0x14] sm:$0xf]
  %v25 = vld [vmem:[%s1 + $0x18] sm:$0xf]
  %v26 = vld [vmem:[%s1 + $0x1c] sm:$0xf]
  %v27 = vld [vmem:[%s1 + $0x20] sm:$0xf]
  %v28 = vld [vmem:[%s1 + $0x24] sm:$0xf]
  %v29 = vld [vmem:[%s1 + $0x28] sm:$0xf]
  %v30 = vld [vmem:[%s1 + $0x2c] sm:$0xf]
  %v31 = vld [vmem:[%s1 + $0x30] sm:$0xf]
  %v32 = vld [vmem:[%s1 + $0x34] sm:$0xf]
  %v33 = vld [vmem:[%s1 + $0x38] sm:$0xf]
  %v34 = vld [vmem:[%s1 + $0x3c] sm:$0xf]
  %v35 = vld [vmem:[%s1 + $0x40] sm:$0xf]
  %v36 = vld [vmem:[%s1 + $0x44] sm:$0xf]
  %v37 = vld [vmem:[%s1 + $0x48] sm:$0xf]
  %v38 = vld [vmem:[%s1 + $0x4c] sm:$0xf]
  %v39 = vld [vmem:[%s1 + $0x50] sm:$0xf]
  %v40 = vld [vmem:[%s1 + $0x54] sm:$0xf]
  %v41 = vld [vmem:[%s1 + $0x58] sm:$0xf]
  %v42 = vld [vmem:[%s1 + $0x5c] sm:$0xf]
  %v43 = vld [vmem:[%s1 + $0x60] sm:$0xf]
  %v44 = vld [vmem:[%s1 + $0x64] sm:$0xf]
  %v45 = vld [vmem:[%s1 + $0x68] sm:$0xf]
  %v46 = vld [vmem:[%s1 + $0x6c] sm:$0xf]
  %v47 = vld [vmem:[%s1 + $0x70] sm:$0xf]
  %v48 = vld [vmem:[%s1 + $0x74] sm:$0xf]
  %v49 = vld [vmem:[%s1 + $0x78] sm:$0xf]
  %v50 = vld [vmem:[%s1 + $0x7c] sm:$0xf]
  %v51 = vld [vmem:[%s2] sm:$0x1]
  %v53 = vlaneseq
  %v54 = vshrl.u32 %v53, 7
  %v55 = vsub.s32 0, %v54
  %v56 = vrot.slane %v51, %v55
  %v62 = vunpack.c.l.b16 %v15
  %v63 = vunpack.c.h.b16 %v15
  %v64 = vunpack.c.l.b16 %v16
  %v65 = vunpack.c.h.b16 %v16
  %v66 = vunpack.c.l.b16 %v17
  %v67 = vunpack.c.h.b16 %v17
  %v68 = vunpack.c.l.b16 %v18
  %v69 = vunpack.c.h.b16 %v18
  %v70 = vpack.c.b16 %v64, %v62
  %v71 = vpack.c.b16 %v65, %v63
  %v72 = vpack.c.b16 %v68, %v66
  %v73 = vpack.c.b16 %v69, %v67
  %v110 = vunpack.c.l.b16 %v19
  %v111 = vunpack.c.l.b16 %v20
  %v112 = vunpack.c.l.b16 %v21
  %v113 = vunpack.c.l.b16 %v22
  %v114 = vunpack.c.l.b16 %v23
  %v115 = vunpack.c.l.b16 %v24
  %v116 = vunpack.c.l.b16 %v25
  %v117 = vunpack.c.l.b16 %v26
  %v118 = vunpack.c.l.b16 %v27
  %v119 = vunpack.c.l.b16 %v28
  %v120 = vunpack.c.l.b16 %v29
  %v121 = vunpack.c.l.b16 %v30
  %v122 = vunpack.c.l.b16 %v31
  %v123 = vunpack.c.l.b16 %v32
  %v124 = vunpack.c.l.b16 %v33
  %v125 = vunpack.c.l.b16 %v34
  %v126 = vunpack.c.l.b16 %v35
  %v127 = vunpack.c.l.b16 %v36
  %v128 = vunpack.c.l.b16 %v37
  %v129 = vunpack.c.l.b16 %v38
  %v130 = vunpack.c.l.b16 %v39
  %v131 = vunpack.c.l.b16 %v40
  %v132 = vunpack.c.l.b16 %v41
  %v133 = vunpack.c.l.b16 %v42
  %v134 = vunpack.c.l.b16 %v43
  %v135 = vunpack.c.l.b16 %v44
  %v136 = vunpack.c.l.b16 %v45
  %v137 = vunpack.c.l.b16 %v46
  %v138 = vunpack.c.l.b16 %v47
  %v139 = vunpack.c.l.b16 %v48
  %v140 = vunpack.c.l.b16 %v49
  %v141 = vunpack.c.l.b16 %v50
  %v142 = vpack.c.b16 %v111, %v110
  %v143 = vpack.c.b16 %v113, %v112
  %v144 = vpack.c.b16 %v115, %v114
  %v145 = vpack.c.b16 %v117, %v116
  %v146 = vpack.c.b16 %v119, %v118
  %v147 = vpack.c.b16 %v121, %v120
  %v148 = vpack.c.b16 %v123, %v122
  %v149 = vpack.c.b16 %v125, %v124
  %v150 = vpack.c.b16 %v127, %v126
  %v151 = vpack.c.b16 %v129, %v128
  %v152 = vpack.c.b16 %v131, %v130
  %v153 = vpack.c.b16 %v133, %v132
  %v154 = vpack.c.b16 %v135, %v134
  %v155 = vpack.c.b16 %v137, %v136
  %v156 = vpack.c.b16 %v139, %v138
  %v157 = vpack.c.b16 %v141, %v140
  %174 = vmatprep.subr.bf16.mxu0 0
  %175 = vmatpush1.bf16.msra.mxu0 %v149
  %176 = vmatprep.subr.bf16.mxu0 0
  %177 = vmatpush1.bf16.msra.mxu0 %v148
  %178 = vmatprep.subr.bf16.mxu0 0
  %179 = vmatpush1.bf16.msra.mxu0 %v147
  %180 = vmatprep.subr.bf16.mxu0 0
  %181 = vmatpush1.bf16.msra.mxu0 %v146
  %182 = vmatprep.subr.bf16.mxu0 0
  %183 = vmatpush1.bf16.msra.mxu0 %v145
  %184 = vmatprep.subr.bf16.mxu0 0
  %185 = vmatpush1.bf16.msra.mxu0 %v144
  %186 = vmatprep.subr.bf16.mxu0 0
  %187 = vmatpush1.bf16.msra.mxu0 %v143
  %188 = vmatprep.subr.bf16.mxu0 0
  %189 = vmatpush1.bf16.msra.mxu0 %v142
  %190 = vmatprep.subr.bf16.mxu0 0
  %191 = vmatpush2.bf16.msra.mxu0 %v157
  %192 = vmatprep.subr.bf16.mxu0 0
  %193 = vmatpush2.bf16.msra.mxu0 %v156
  %194 = vmatprep.subr.bf16.mxu0 0
  %195 = vmatpush2.bf16.msra.mxu0 %v155
  %196 = vmatprep.subr.bf16.mxu0 0
  %197 = vmatpush2.bf16.msra.mxu0 %v154
  %198 = vmatprep.subr.bf16.mxu0 0
  %199 = vmatpush2.bf16.msra.mxu0 %v153
  %200 = vmatprep.subr.bf16.mxu0 0
  %201 = vmatpush2.bf16.msra.mxu0 %v152
  %202 = vmatprep.subr.bf16.mxu0 0
  %203 = vmatpush2.bf16.msra.mxu0 %v151
  %204 = vmatprep.subr.bf16.mxu0 0
  %205 = vmatpush2.bf16.msra.mxu0 %v150
  %206 = vmatprep.mubr.bf16.mxu0 %v71
  %207 = vmatmul.mubr.bf16.gmra.mxu0 %v70
  %v208 = vpop.f32.mrf.mxu0
  %v209 = vadd.f32 %v56, %v208
  %v210 = vpop.f32.mrf.mxu0
  %v211 = vpop.f32.mrf.mxu0
  %v212 = vadd.f32 %v56, %v211
  %v213 = vpop.f32.mrf.mxu0
  %214 = vmatprep.mubr.bf16.mxu0 %v73
  %215 = vmatmul.mubr.bf16.gmra.mxu0 %v72
  %v216 = vpop.f32.mrf.mxu0
  %v217 = vadd.f32 %v56, %v216
  %v218 = vpop.f32.mrf.mxu0
  %v219 = vpop.f32.mrf.mxu0
  %v220 = vadd.f32 %v56, %v219
  %v221 = vpop.f32.mrf.mxu0
  %222 = vdwg.mxu0
  %v223 = vmax.f32 %v209, 0.0
  %v224 = vmax.f32 %v212, 0.0
  %v225 = vmax.f32 %v217, 0.0
  %v226 = vmax.f32 %v220, 0.0
  %227 = vst [vmem:[%s3] sm:$0xff] %v223
  %228 = vst [vmem:[%s3 + $0x8] sm:$0xff] %v224
  %229 = vst [vmem:[%s3 + $0x10] sm:$0xff] %v225
  %230 = vst [vmem:[%s3 + $0x18] sm:$0xff] %v226
  // Predicated region
  $region14: #{_lambda_.17} parent=0 // pred_check
    _
  $region15: #{_lambda_.17} parent=0 // pred_check_branch
    %232 = sbr.rel (0) target = $region17
  $region16: #{_lambda_.17} parent=0 // pred_region
    _
  $region17: #{_lambda_.17} parent=0 // pred_fallthru
    _
  // Predicated region
  $region18: #{_lambda_.17} parent=0 // pred_check
    _
  $region19: #{_lambda_.17} parent=0 // pred_check_branch
    %234 = sbr.rel (0) target = $region21
  $region20: #{_lambda_.17} parent=0 // pred_region
    _
  $region21: #{_lambda_.17} parent=0 // pred_fallthru
    _

// kernel: _lambda_.18
$region0: #{_lambda_.18}
  #allocation0 [shape = 'u32[]', space=smem, size = 0x4, offset = 0x4, fixed_abs, tag = 'smem constant byte address 0x4 - core index']
  #allocation1 [shape = 'u32[144,128]{1,0:T(1,128)}', space=vmem, size = 0x12000, scoped, tag = 'internal scratch']
  %s0 = inlined_call_operand.vmem [shape: bf16[16,256], index: 0, kind: input, shape index: {}]
  %s1 = inlined_call_operand.vmem [shape: bf16[256,128], index: 1, kind: input, shape index: {}]
  %s2 = inlined_call_operand.vmem [shape: f32[1,128], index: 2, kind: input, shape index: {}]
  %s3 = inlined_call_operand.vmem [shape: bf16[128,256], index: 3, kind: input, shape index: {}]
  %s4 = inlined_call_operand.vmem [shape: f32[1,256], index: 4, kind: input, shape index: {}]
  %s5 = inlined_call_operand.vmem [shape: f32[16,256], index: 5, kind: output, shape index: {}]
  %s6 = sld [smem:[#allocation0]]
  $region30: #{_lambda_.18} parent=0
    _
  %s8 = ssub.s32 1, %s6
  %s9 = scalar_select 0, %s8, %s6
  // Predicated region
  $region2: #{_lambda_.18} parent=0 // pred_check
    _
  $region3: #{_lambda_.18} parent=0 // pred_check_branch
    %11 = sbr.rel (0) target = $region5
  $region4: #{_lambda_.18} parent=0 // pred_region
    _
  $region5: #{_lambda_.18} parent=0 // pred_fallthru
    _
  // Predicated region
  $region6: #{_lambda_.18} parent=0 // pred_check
    _
  $region7: #{_lambda_.18} parent=0 // pred_check_branch
    %13 = sbr.rel (0) target = $region9
  $region8: #{_lambda_.18} parent=0 // pred_region
    _
  $region9: #{_lambda_.18} parent=0 // pred_fallthru
    _
  // Predicated region
  $region10: #{_lambda_.18} parent=0 // pred_check
    _
  $region11: #{_lambda_.18} parent=0 // pred_check_branch
    %15 = sbr.rel (0) target = $region13
  $region12: #{_lambda_.18} parent=0 // pred_region
    _
  $region13: #{_lambda_.18} parent=0 // pred_fallthru
    _
  // Predicated region
  $region14: #{_lambda_.18} parent=0 // pred_check
    _
  $region15: #{_lambda_.18} parent=0 // pred_check_branch
    %17 = sbr.rel (0) target = $region17
  $region16: #{_lambda_.18} parent=0 // pred_region
    _
  $region17: #{_lambda_.18} parent=0 // pred_fallthru
    _
  // Predicated region
  $region18: #{_lambda_.18} parent=0 // pred_check
    _
  $region19: #{_lambda_.18} parent=0 // pred_check_branch
    %19 = sbr.rel (0) target = $region21
  $region20: #{_lambda_.18} parent=0 // pred_region
    _
  $region21: #{_lambda_.18} parent=0 // pred_fallthru
    _
  %v21 = vld [vmem:[%s0] sm:$0xff]
  %v22 = vld [vmem:[%s0 + $0x8] sm:$0xff]
  %v23 = vld [vmem:[%s1] sm:$0xf]
  %v24 = vld [vmem:[%s1 + $0x4] sm:$0xf]
  %v25 = vld [vmem:[%s1 + $0x8] sm:$0xf]
  %v26 = vld [vmem:[%s1 + $0xc] sm:$0xf]
  %v27 = vld [vmem:[%s1 + $0x10] sm:$0xf]
  %v28 = vld [vmem:[%s1 + $0x14] sm:$0xf]
  %v29 = vld [vmem:[%s1 + $0x18] sm:$0xf]
  %v30 = vld [vmem:[%s1 + $0x1c] sm:$0xf]
  %v31 = vld [vmem:[%s1 + $0x20] sm:$0xf]
  %v32 = vld [vmem:[%s1 + $0x24] sm:$0xf]
  %v33 = vld [vmem:[%s1 + $0x28] sm:$0xf]
  %v34 = vld [vmem:[%s1 + $0x2c] sm:$0xf]
  %v35 = vld [vmem:[%s1 + $0x30] sm:$0xf]
  %v36 = vld [vmem:[%s1 + $0x34] sm:$0xf]
  %v37 = vld [vmem:[%s1 + $0x38] sm:$0xf]
  %v38 = vld [vmem:[%s1 + $0x3c] sm:$0xf]
  %v39 = vld [vmem:[%s1 + $0x40] sm:$0xf]
  %v40 = vld [vmem:[%s1 + $0x44] sm:$0xf]
  %v41 = vld [vmem:[%s1 + $0x48] sm:$0xf]
  %v42 = vld [vmem:[%s1 + $0x4c] sm:$0xf]
  %v43 = vld [vmem:[%s1 + $0x50] sm:$0xf]
  %v44 = vld [vmem:[%s1 + $0x54] sm:$0xf]
  %v45 = vld [vmem:[%s1 + $0x58] sm:$0xf]
  %v46 = vld [vmem:[%s1 + $0x5c] sm:$0xf]
  %v47 = vld [vmem:[%s1 + $0x60] sm:$0xf]
  %v48 = vld [vmem:[%s1 + $0x64] sm:$0xf]
  %v49 = vld [vmem:[%s1 + $0x68] sm:$0xf]
  %v50 = vld [vmem:[%s1 + $0x6c] sm:$0xf]
  %v51 = vld [vmem:[%s1 + $0x70] sm:$0xf]
  %v52 = vld [vmem:[%s1 + $0x74] sm:$0xf]
  %v53 = vld [vmem:[%s1 + $0x78] sm:$0xf]
  %v54 = vld [vmem:[%s1 + $0x7c] sm:$0xf]
  %v55 = vld [vmem:[%s2] sm:$0x1]
  %v57 = vlaneseq
  %v58 = vshrl.u32 %v57, 7
  %v59 = vsub.s32 0, %v58
  %v60 = vrot.slane %v55, %v59
  %v64 = vunpack.c.l.b16 %v21
  %v65 = vunpack.c.h.b16 %v21
  %v66 = vunpack.c.l.b16 %v22
  %v67 = vunpack.c.h.b16 %v22
  %v68 = vpack.c.b16 %v66, %v64
  %v69 = vpack.c.b16 %v67, %v65
  %v104 = vunpack.c.l.b16 %v23
  %v105 = vunpack.c.l.b16 %v24
  %v106 = vunpack.c.l.b16 %v25
  %v107 = vunpack.c.l.b16 %v26
  %v108 = vunpack.c.l.b16 %v27
  %v109 = vunpack.c.l.b16 %v28
  %v110 = vunpack.c.l.b16 %v29
  %v111 = vunpack.c.l.b16 %v30
  %v112 = vunpack.c.l.b16 %v31
  %v113 = vunpack.c.l.b16 %v32
  %v114 = vunpack.c.l.b16 %v33
  %v115 = vunpack.c.l.b16 %v34
  %v116 = vunpack.c.l.b16 %v35
  %v117 = vunpack.c.l.b16 %v36
  %v118 = vunpack.c.l.b16 %v37
  %v119 = vunpack.c.l.b16 %v38
  %v120 = vunpack.c.l.b16 %v39
  %v121 = vunpack.c.l.b16 %v40
  %v122 = vunpack.c.l.b16 %v41
  %v123 = vunpack.c.l.b16 %v42
  %v124 = vunpack.c.l.b16 %v43
  %v125 = vunpack.c.l.b16 %v44
  %v126 = vunpack.c.l.b16 %v45
  %v127 = vunpack.c.l.b16 %v46
  %v128 = vunpack.c.l.b16 %v47
  %v129 = vunpack.c.l.b16 %v48
  %v130 = vunpack.c.l.b16 %v49
  %v131 = vunpack.c.l.b16 %v50
  %v132 = vunpack.c.l.b16 %v51
  %v133 = vunpack.c.l.b16 %v52
  %v134 = vunpack.c.l.b16 %v53
  %v135 = vunpack.c.l.b16 %v54
  %v136 = vpack.c.b16 %v105, %v104
  %v137 = vpack.c.b16 %v107, %v106
  %v138 = vpack.c.b16 %v109, %v108
  %v139 = vpack.c.b16 %v111, %v110
  %v140 = vpack.c.b16 %v113, %v112
  %v141 = vpack.c.b16 %v115, %v114
  %v142 = vpack.c.b16 %v117, %v116
  %v143 = vpack.c.b16 %v119, %v118
  %v144 = vpack.c.b16 %v121, %v120
  %v145 = vpack.c.b16 %v123, %v122
  %v146 = vpack.c.b16 %v125, %v124
  %v147 = vpack.c.b16 %v127, %v126
  %v148 = vpack.c.b16 %v129, %v128
  %v149 = vpack.c.b16 %v131, %v130
  %v150 = vpack.c.b16 %v133, %v132
  %v151 = vpack.c.b16 %v135, %v134
  %168 = vmatprep.subr.bf16.mxu0 0
  %169 = vmatpush1.bf16.msra.mxu0 %v143
  %170 = vmatprep.subr.bf16.mxu0 0
  %171 = vmatpush1.bf16.msra.mxu0 %v142
  %172 = vmatprep.subr.bf16.mxu0 0
  %173 = vmatpush1.bf16.msra.mxu0 %v141
  %174 = vmatprep.subr.bf16.mxu0 0
  %175 = vmatpush1.bf16.msra.mxu0 %v140
  %176 = vmatprep.subr.bf16.mxu0 0
  %177 = vmatpush1.bf16.msra.mxu0 %v139
  %178 = vmatprep.subr.bf16.mxu0 0
  %179 = vmatpush1.bf16.msra.mxu0 %v138
  %180 = vmatprep.subr.bf16.mxu0 0
  %181 = vmatpush1.bf16.msra.mxu0 %v137
  %182 = vmatprep.subr.bf16.mxu0 0
  %183 = vmatpush1.bf16.msra.mxu0 %v136
  %184 = vmatprep.subr.bf16.mxu0 0
  %185 = vmatpush2.bf16.msra.mxu0 %v151
  %186 = vmatprep.subr.bf16.mxu0 0
  %187 = vmatpush2.bf16.msra.mxu0 %v150
  %188 = vmatprep.subr.bf16.mxu0 0
  %189 = vmatpush2.bf16.msra.mxu0 %v149
  %190 = vmatprep.subr.bf16.mxu0 0
  %191 = vmatpush2.bf16.msra.mxu0 %v148
  %192 = vmatprep.subr.bf16.mxu0 0
  %193 = vmatpush2.bf16.msra.mxu0 %v147
  %194 = vmatprep.subr.bf16.mxu0 0
  %195 = vmatpush2.bf16.msra.mxu0 %v146
  %196 = vmatprep.subr.bf16.mxu0 0
  %197 = vmatpush2.bf16.msra.mxu0 %v145
  %198 = vmatprep.subr.bf16.mxu0 0
  %199 = vmatpush2.bf16.msra.mxu0 %v144
  %200 = vmatprep.mubr.bf16.mxu0 %v69
  %201 = vmatmul.mubr.bf16.gmra.mxu0 %v68
  %v202 = vpop.f32.mrf.mxu0
  %v203 = vadd.f32 %v60, %v202
  %v204 = vpop.f32.mrf.mxu0
  %v205 = vpop.f32.mrf.mxu0
  %v206 = vadd.f32 %v60, %v205
  %v207 = vpop.f32.mrf.mxu0
  %208 = vdwg.mxu0
  %v209 = vpack.c.bf16 %v206, %v203
  %v210 = vld [vmem:[%s3] sm:$0xff]
  %v211 = vld [vmem:[%s3 + $0x8] sm:$0xff]
  %v212 = vld [vmem:[%s3 + $0x10] sm:$0xff]
  %v213 = vld [vmem:[%s3 + $0x18] sm:$0xff]
  %v214 = vld [vmem:[%s3 + $0x20] sm:$0xff]
  %v215 = vld [vmem:[%s3 + $0x28] sm:$0xff]
  %v216 = vld [vmem:[%s3 + $0x30] sm:$0xff]
  %v217 = vld [vmem:[%s3 + $0x38] sm:$0xff]
  %v218 = vld [vmem:[%s3 + $0x40] sm:$0xff]
  %v219 = vld [vmem:[%s3 + $0x48] sm:$0xff]
  %v220 = vld [vmem:[%s3 + $0x50] sm:$0xff]
  %v221 = vld [vmem:[%s3 + $0x58] sm:$0xff]
  %v222 = vld [vmem:[%s3 + $0x60] sm:$0xff]
  %v223 = vld [vmem:[%s3 + $0x68] sm:$0xff]
  %v224 = vld [vmem:[%s3 + $0x70] sm:$0xff]
  %v225 = vld [vmem:[%s3 + $0x78] sm:$0xff]
  %v226 = vld [vmem:[%s4] sm:$0x3]
  %v228 = vlaneseq
  %v229 = vshrl.u32 %v228, 7
  %v230 = vsub.s32 0, %v229
  %v231 = vrot.slane %v226, %v230
  %v232 = vlaneseq
  %v233 = vshrl.u32 %v232, 7
  %v234 = vsub.s32 1, %v233
  %v235 = vrot.slane %v226, %v234
  %v254 = vunpack.c.l.b16 %v210
  %v255 = vunpack.c.h.b16 %v210
  %v256 = vunpack.c.l.b16 %v211
  %v257 = vunpack.c.h.b16 %v211
  %v258 = vunpack.c.l.b16 %v212
  %v259 = vunpack.c.h.b16 %v212
  %v260 = vunpack.c.l.b16 %v213
  %v261 = vunpack.c.h.b16 %v213
  %v262 = vunpack.c.l.b16 %v214
  %v263 = vunpack.c.h.b16 %v214
  %v264 = vunpack.c.l.b16 %v215
  %v265 = vunpack.c.h.b16 %v215
  %v266 = vunpack.c.l.b16 %v216
  %v267 = vunpack.c.h.b16 %v216
  %v268 = vunpack.c.l.b16 %v217
  %v269 = vunpack.c.h.b16 %v217
  %v270 = vunpack.c.l.b16 %v218
  %v271 = vunpack.c.h.b16 %v218
  %v272 = vunpack.c.l.b16 %v219
  %v273 = vunpack.c.h.b16 %v219
  %v274 = vunpack.c.l.b16 %v220
  %v275 = vunpack.c.h.b16 %v220
  %v276 = vunpack.c.l.b16 %v221
  %v277 = vunpack.c.h.b16 %v221
  %v278 = vunpack.c.l.b16 %v222
  %v279 = vunpack.c.h.b16 %v222
  %v280 = vunpack.c.l.b16 %v223
  %v281 = vunpack.c.h.b16 %v223
  %v282 = vunpack.c.l.b16 %v224
  %v283 = vunpack.c.h.b16 %v224
  %v284 = vunpack.c.l.b16 %v225
  %v285 = vunpack.c.h.b16 %v225
  %v286 = vpack.c.b16 %v256, %v254
  %v287 = vpack.c.b16 %v257, %v255
  %v288 = vpack.c.b16 %v260, %v258
  %v289 = vpack.c.b16 %v261, %v259
  %v290 = vpack.c.b16 %v264, %v262
  %v291 = vpack.c.b16 %v265, %v263
  %v292 = vpack.c.b16 %v268, %v266
  %v293 = vpack.c.b16 %v269, %v267
  %v294 = vpack.c.b16 %v272, %v270
  %v295 = vpack.c.b16 %v273, %v271
  %v296 = vpack.c.b16 %v276, %v274
  %v297 = vpack.c.b16 %v277, %v275
  %v298 = vpack.c.b16 %v280, %v278
  %v299 = vpack.c.b16 %v281, %v279
  %v300 = vpack.c.b16 %v284, %v282
  %v301 = vpack.c.b16 %v285, %v283
  %318 = vmatprep.subr.bf16.mxu0 %v301
  %319 = vmatpush1.bf16.msra.mxu0 %v300
  %320 = vmatprep.subr.bf16.mxu0 %v299
  %321 = vmatpush1.bf16.msra.mxu0 %v298
  %322 = vmatprep.subr.bf16.mxu0 %v297
  %323 = vmatpush1.bf16.msra.mxu0 %v296
  %324 = vmatprep.subr.bf16.mxu0 %v295
  %325 = vmatpush1.bf16.msra.mxu0 %v294
  %326 = vmatprep.subr.bf16.mxu0 %v293
  %327 = vmatpush1.bf16.msra.mxu0 %v292
  %328 = vmatprep.subr.bf16.mxu0 %v291
  %329 = vmatpush1.bf16.msra.mxu0 %v290
  %330 = vmatprep.subr.bf16.mxu0 %v289
  %331 = vmatpush1.bf16.msra.mxu0 %v288
  %332 = vmatprep.subr.bf16.mxu0 %v287
  %333 = vmatpush1.bf16.msra.mxu0 %v286
  %334 = vmatprep.subr.bf16.mxu0 0
  %335 = vmatpush2.bf16.msra.mxu0 0
  %336 = vmatprep.subr.bf16.mxu0 0
  %337 = vmatpush2.bf16.msra.mxu0 0
  %338 = vmatprep.subr.bf16.mxu0 0
  %339 = vmatpush2.bf16.msra.mxu0 0
  %340 = vmatprep.subr.bf16.mxu0 0
  %341 = vmatpush2.bf16.msra.mxu0 0
  %342 = vmatprep.subr.bf16.mxu0 0
  %343 = vmatpush2.bf16.msra.mxu0 0
  %344 = vmatprep.subr.bf16.mxu0 0
  %345 = vmatpush2.bf16.msra.mxu0 0
  %346 = vmatprep.subr.bf16.mxu0 0
  %347 = vmatpush2.bf16.msra.mxu0 0
  %348 = vmatprep.subr.bf16.mxu0 0
  %349 = vmatpush2.bf16.msra.mxu0 0
  %350 = vmatprep.mubr.bf16.mxu0 0
  %351 = vmatmul.mubr.bf16.gmra.mxu0 %v209
  %v352 = vpop.f32.mrf.mxu0
  %v353 = vadd.f32 %v231, %v352
  %v354 = vpop.f32.mrf.mxu0
  %v355 = vadd.f32 %v235, %v354
  %v356 = vpop.f32.mrf.mxu0
  %v357 = vadd.f32 %v231, %v356
  %v358 = vpop.f32.mrf.mxu0
  %v359 = vadd.f32 %v235, %v358
  %360 = vdwg.mxu0
  %v361 = vmax.f32 %v353, 0.0
  %v362 = vmax.f32 %v355, 0.0
  %v363 = vmax.f32 %v357, 0.0
  %v364 = vmax.f32 %v359, 0.0
  %365 = vst [vmem:[%s5] sm:$0xff] %v361
  %366 = vst [vmem:[%s5 + $0x8] sm:$0xff] %v362
  %367 = vst [vmem:[%s5 + $0x10] sm:$0xff] %v363
  %368 = vst [vmem:[%s5 + $0x18] sm:$0xff] %v364
  // Predicated region
  $region22: #{_lambda_.18} parent=0 // pred_check
    _
  $region23: #{_lambda_.18} parent=0 // pred_check_branch
    %370 = sbr.rel (0) target = $region25
  $region24: #{_lambda_.18} parent=0 // pred_region
    _
  $region25: #{_lambda_.18} parent=0 // pred_fallthru
    _
  // Predicated region
  $region26: #{_lambda_.18} parent=0 // pred_check
    _
  $region27: #{_lambda_.18} parent=0 // pred_check_branch
    %372 = sbr.rel (0) target = $region29
  $region28: #{_lambda_.18} parent=0 // pred_region
    _
  $region29: #{_lambda_.18} parent=0 // pred_fallthru
    _

// kernel: _lambda_.19
$region0: #{_lambda_.19}
  #allocation0 [shape = 'u32[]', space=smem, size = 0x4, offset = 0x4, fixed_abs, tag = 'smem constant byte address 0x4 - core index']
  #allocation1 [shape = 'u32[144,128]{1,0:T(1,128)}', space=vmem, size = 0x12000, scoped, tag = 'internal scratch']
  %s0 = inlined_call_operand.vmem [shape: bf16[64,128], index: 0, kind: input, shape index: {}]
  %s1 = inlined_call_operand.vmem [shape: bf16[128,128], index: 1, kind: input, shape index: {}]
  %s2 = inlined_call_operand.vmem [shape: f32[1,128], index: 2, kind: input, shape index: {}]
  %s3 = inlined_call_operand.vmem [shape: f32[64,128], index: 3, kind: output, shape index: {}]
  %s4 = sld [smem:[#allocation0]]
  $region22: #{_lambda_.19} parent=0
    _
  %s6 = ssub.s32 1, %s4
  %s7 = scalar_select 0, %s6, %s4
  // Predicated region
  $region2: #{_lambda_.19} parent=0 // pred_check
    _
  $region3: #{_lambda_.19} parent=0 // pred_check_branch
    %9 = sbr.rel (0) target = $region5
  $region4: #{_lambda_.19} parent=0 // pred_region
    _
  $region5: #{_lambda_.19} parent=0 // pred_fallthru
    _
  // Predicated region
  $region6: #{_lambda_.19} parent=0 // pred_check
    _
  $region7: #{_lambda_.19} parent=0 // pred_check_branch
    %11 = sbr.rel (0) target = $region9
  $region8: #{_lambda_.19} parent=0 // pred_region
    _
  $region9: #{_lambda_.19} parent=0 // pred_fallthru
    _
  // Predicated region
  $region10: #{_lambda_.19} parent=0 // pred_check
    _
  $region11: #{_lambda_.19} parent=0 // pred_check_branch
    %13 = sbr.rel (0) target = $region13
  $region12: #{_lambda_.19} parent=0 // pred_region
    _
  $region13: #{_lambda_.19} parent=0 // pred_fallthru
    _
  %v15 = vld [vmem:[%s0] sm:$0xf]
  %v16 = vld [vmem:[%s0 + $0x4] sm:$0xf]
  %v17 = vld [vmem:[%s0 + $0x8] sm:$0xf]
  %v18 = vld [vmem:[%s0 + $0xc] sm:$0xf]
  %v19 = vld [vmem:[%s0 + $0x10] sm:$0xf]
  %v20 = vld [vmem:[%s0 + $0x14] sm:$0xf]
  %v21 = vld [vmem:[%s0 + $0x18] sm:$0xf]
  %v22 = vld [vmem:[%s0 + $0x1c] sm:$0xf]
  %v23 = vld [vmem:[%s1] sm:$0xf]
  %v24 = vld [vmem:[%s1 + $0x4] sm:$0xf]
  %v25 = vld [vmem:[%s1 + $0x8] sm:$0xf]
  %v26 = vld [vmem:[%s1 + $0xc] sm:$0xf]
  %v27 = vld [vmem:[%s1 + $0x10] sm:$0xf]
  %v28 = vld [vmem:[%s1 + $0x14] sm:$0xf]
  %v29 = vld [vmem:[%s1 + $0x18] sm:$0xf]
  %v30 = vld [vmem:[%s1 + $0x1c] sm:$0xf]
  %v31 = vld [vmem:[%s1 + $0x20] sm:$0xf]
  %v32 = vld [vmem:[%s1 + $0x24] sm:$0xf]
  %v33 = vld [vmem:[%s1 + $0x28] sm:$0xf]
  %v34 = vld [vmem:[%s1 + $0x2c] sm:$0xf]
  %v35 = vld [vmem:[%s1 + $0x30] sm:$0xf]
  %v36 = vld [vmem:[%s1 + $0x34] sm:$0xf]
  %v37 = vld [vmem:[%s1 + $0x38] sm:$0xf]
  %v38 = vld [vmem:[%s1 + $0x3c] sm:$0xf]
  %v39 = vld [vmem:[%s2] sm:$0x1]
  %v41 = vlaneseq
  %v42 = vshrl.u32 %v41, 7
  %v43 = vsub.s32 0, %v42
  %v44 = vrot.slane %v39, %v43
  %v54 = vunpack.c.l.b16 %v15
  %v55 = vunpack.c.l.b16 %v16
  %v56 = vunpack.c.l.b16 %v17
  %v57 = vunpack.c.l.b16 %v18
  %v58 = vunpack.c.l.b16 %v19
  %v59 = vunpack.c.l.b16 %v20
  %v60 = vunpack.c.l.b16 %v21
  %v61 = vunpack.c.l.b16 %v22
  %v62 = vpack.c.b16 %v55, %v54
  %v63 = vpack.c.b16 %v57, %v56
  %v64 = vpack.c.b16 %v59, %v58
  %v65 = vpack.c.b16 %v61, %v60
  %v86 = vunpack.c.l.b16 %v23
  %v87 = vunpack.c.l.b16 %v24
  %v88 = vunpack.c.l.b16 %v25
  %v89 = vunpack.c.l.b16 %v26
  %v90 = vunpack.c.l.b16 %v27
  %v91 = vunpack.c.l.b16 %v28
  %v92 = vunpack.c.l.b16 %v29
  %v93 = vunpack.c.l.b16 %v30
  %v94 = vunpack.c.l.b16 %v31
  %v95 = vunpack.c.l.b16 %v32
  %v96 = vunpack.c.l.b16 %v33
  %v97 = vunpack.c.l.b16 %v34
  %v98 = vunpack.c.l.b16 %v35
  %v99 = vunpack.c.l.b16 %v36
  %v100 = vunpack.c.l.b16 %v37
  %v101 = vunpack.c.l.b16 %v38
  %v102 = vpack.c.b16 %v87, %v86
  %v103 = vpack.c.b16 %v89, %v88
  %v104 = vpack.c.b16 %v91, %v90
  %v105 = vpack.c.b16 %v93, %v92
  %v106 = vpack.c.b16 %v95, %v94
  %v107 = vpack.c.b16 %v97, %v96
  %v108 = vpack.c.b16 %v99, %v98
  %v109 = vpack.c.b16 %v101, %v100
  %118 = vmatprep.subr.bf16.mxu0 0
  %119 = vmatpush1.bf16.msra.mxu0 %v109
  %120 = vmatprep.subr.bf16.mxu0 0
  %121 = vmatpush1.bf16.msra.mxu0 %v108
  %122 = vmatprep.subr.bf16.mxu0 0
  %123 = vmatpush1.bf16.msra.mxu0 %v107
  %124 = vmatprep.subr.bf16.mxu0 0
  %125 = vmatpush1.bf16.msra.mxu0 %v106
  %126 = vmatprep.subr.bf16.mxu0 0
  %127 = vmatpush1.bf16.msra.mxu0 %v105
  %128 = vmatprep.subr.bf16.mxu0 0
  %129 = vmatpush1.bf16.msra.mxu0 %v104
  %130 = vmatprep.subr.bf16.mxu0 0
  %131 = vmatpush1.bf16.msra.mxu0 %v103
  %132 = vmatprep.subr.bf16.mxu0 0
  %133 = vmatpush1.bf16.msra.mxu0 %v102
  %134 = vmatprep.subr.bf16.mxu0 0
  %135 = vmatpush2.bf16.msra.mxu0 0
  %136 = vmatprep.subr.bf16.mxu0 0
  %137 = vmatpush2.bf16.msra.mxu0 0
  %138 = vmatprep.subr.bf16.mxu0 0
  %139 = vmatpush2.bf16.msra.mxu0 0
  %140 = vmatprep.subr.bf16.mxu0 0
  %141 = vmatpush2.bf16.msra.mxu0 0
  %142 = vmatprep.subr.bf16.mxu0 0
  %143 = vmatpush2.bf16.msra.mxu0 0
  %144 = vmatprep.subr.bf16.mxu0 0
  %145 = vmatpush2.bf16.msra.mxu0 0
  %146 = vmatprep.subr.bf16.mxu0 0
  %147 = vmatpush2.bf16.msra.mxu0 0
  %148 = vmatprep.subr.bf16.mxu0 0
  %149 = vmatpush2.bf16.msra.mxu0 0
  %150 = vmatprep.mubr.bf16.mxu0 0
  %151 = vmatmul.mubr.bf16.gmra.mxu0 %v62
  %v152 = vpop.f32.mrf.mxu0
  %v153 = vadd.f32 %v44, %v152
  %v154 = vpop.f32.mrf.mxu0
  %v155 = vpop.f32.mrf.mxu0
  %v156 = vadd.f32 %v44, %v155
  %v157 = vpop.f32.mrf.mxu0
  %158 = vmatprep.mubr.bf16.mxu0 0
  %159 = vmatmul.mubr.bf16.gmra.mxu0 %v63
  %v160 = vpop.f32.mrf.mxu0
  %v161 = vadd.f32 %v44, %v160
  %v162 = vpop.f32.mrf.mxu0
  %v163 = vpop.f32.mrf.mxu0
  %v164 = vadd.f32 %v44, %v163
  %v165 = vpop.f32.mrf.mxu0
  %166 = vmatprep.mubr.bf16.mxu0 0
  %167 = vmatmul.mubr.bf16.gmra.mxu0 %v64
  %v168 = vpop.f32.mrf.mxu0
  %v169 = vadd.f32 %v44, %v168
  %v170 = vpop.f32.mrf.mxu0
  %v171 = vpop.f32.mrf.mxu0
  %v172 = vadd.f32 %v44, %v171
  %v173 = vpop.f32.mrf.mxu0
  %174 = vmatprep.mubr.bf16.mxu0 0
  %175 = vmatmul.mubr.bf16.gmra.mxu0 %v65
  %v176 = vpop.f32.mrf.mxu0
  %v177 = vadd.f32 %v44, %v176
  %v178 = vpop.f32.mrf.mxu0
  %v179 = vpop.f32.mrf.mxu0
  %v180 = vadd.f32 %v44, %v179
  %v181 = vpop.f32.mrf.mxu0
  %182 = vdwg.mxu0
  %v183 = vmax.f32 %v153, 0.0
  %v184 = vmax.f32 %v156, 0.0
  %v185 = vmax.f32 %v161, 0.0
  %v186 = vmax.f32 %v164, 0.0
  %v187 = vmax.f32 %v169, 0.0
  %v188 = vmax.f32 %v172, 0.0
  %v189 = vmax.f32 %v177, 0.0
  %v190 = vmax.f32 %v180, 0.0
  %191 = vst [vmem:[%s3] sm:$0xff] %v183
  %192 = vst [vmem:[%s3 + $0x8] sm:$0xff] %v184
  %193 = vst [vmem:[%s3 + $0x10] sm:$0xff] %v185
  %194 = vst [vmem:[%s3 + $0x18] sm:$0xff] %v186
  %195 = vst [vmem:[%s3 + $0x20] sm:$0xff] %v187
  %196 = vst [vmem:[%s3 + $0x28] sm:$0xff] %v188
  %197 = vst [vmem:[%s3 + $0x30] sm:$0xff] %v189
  %198 = vst [vmem:[%s3 + $0x38] sm:$0xff] %v190
  // Predicated region
  $region14: #{_lambda_.19} parent=0 // pred_check
    _
  $region15: #{_lambda_.19} parent=0 // pred_check_branch
    %200 = sbr.rel (0) target = $region17
  $region16: #{_lambda_.19} parent=0 // pred_region
    _
  $region17: #{_lambda_.19} parent=0 // pred_fallthru
    _
  // Predicated region
  $region18: #{_lambda_.19} parent=0 // pred_check
    _
  $region19: #{_lambda_.19} parent=0 // pred_check_branch
    %202 = sbr.rel (0) target = $region21
  $region20: #{_lambda_.19} parent=0 // pred_region
    _
  $region21: #{_lambda_.19} parent=0 // pred_fallthru
    _

// kernel: _lambda_.21
$region0: #{_lambda_.21}
  #allocation0 [shape = 'u32[]', space=smem, size = 0x4, offset = 0x4, fixed_abs, tag = 'smem constant byte address 0x4 - core index']
  #allocation1 [shape = 'u32[144,128]{1,0:T(1,128)}', space=vmem, size = 0x12000, scoped, tag = 'internal scratch']
  %s0 = inlined_call_operand.vmem [shape: bf16[176,128], index: 0, kind: input, shape index: {}]
  %s1 = inlined_call_operand.vmem [shape: bf16[128,256], index: 1, kind: input, shape index: {}]
  %s2 = inlined_call_operand.vmem [shape: f32[1,256], index: 2, kind: input, shape index: {}]
  %s3 = inlined_call_operand.vmem [shape: f32[176,256], index: 3, kind: output, shape index: {}]
  %s4 = sld [smem:[#allocation0]]
  $region22: #{_lambda_.21} parent=0
    _
  %s6 = ssub.s32 1, %s4
  %s7 = scalar_select 0, %s6, %s4
  // Predicated region
  $region2: #{_lambda_.21} parent=0 // pred_check
    _
  $region3: #{_lambda_.21} parent=0 // pred_check_branch
    %9 = sbr.rel (0) target = $region5
  $region4: #{_lambda_.21} parent=0 // pred_region
    _
  $region5: #{_lambda_.21} parent=0 // pred_fallthru
    _
  // Predicated region
  $region6: #{_lambda_.21} parent=0 // pred_check
    _
  $region7: #{_lambda_.21} parent=0 // pred_check_branch
    %11 = sbr.rel (0) target = $region9
  $region8: #{_lambda_.21} parent=0 // pred_region
    _
  $region9: #{_lambda_.21} parent=0 // pred_fallthru
    _
  // Predicated region
  $region10: #{_lambda_.21} parent=0 // pred_check
    _
  $region11: #{_lambda_.21} parent=0 // pred_check_branch
    %13 = sbr.rel (0) target = $region13
  $region12: #{_lambda_.21} parent=0 // pred_region
    _
  $region13: #{_lambda_.21} parent=0 // pred_fallthru
    _
  %v15 = vld [vmem:[%s0] sm:$0xf]
  %v16 = vld [vmem:[%s0 + $0x4] sm:$0xf]
  %v17 = vld [vmem:[%s0 + $0x8] sm:$0xf]
  %v18 = vld [vmem:[%s0 + $0xc] sm:$0xf]
  %v19 = vld [vmem:[%s0 + $0x10] sm:$0xf]
  %v20 = vld [vmem:[%s0 + $0x14] sm:$0xf]
  %v21 = vld [vmem:[%s0 + $0x18] sm:$0xf]
  %v22 = vld [vmem:[%s0 + $0x1c] sm:$0xf]
  %v23 = vld [vmem:[%s0 + $0x20] sm:$0xf]
  %v24 = vld [vmem:[%s0 + $0x24] sm:$0xf]
  %v25 = vld [vmem:[%s0 + $0x28] sm:$0xf]
  %v26 = vld [vmem:[%s0 + $0x2c] sm:$0xf]
  %v27 = vld [vmem:[%s0 + $0x30] sm:$0xf]
  %v28 = vld [vmem:[%s0 + $0x34] sm:$0xf]
  %v29 = vld [vmem:[%s0 + $0x38] sm:$0xf]
  %v30 = vld [vmem:[%s0 + $0x3c] sm:$0xf]
  %v31 = vld [vmem:[%s0 + $0x40] sm:$0xf]
  %v32 = vld [vmem:[%s0 + $0x44] sm:$0xf]
  %v33 = vld [vmem:[%s0 + $0x48] sm:$0xf]
  %v34 = vld [vmem:[%s0 + $0x4c] sm:$0xf]
  %v35 = vld [vmem:[%s0 + $0x50] sm:$0xf]
  %v36 = vld [vmem:[%s0 + $0x54] sm:$0xf]
  %v37 = vld [vmem:[%s1] sm:$0xff]
  %v38 = vld [vmem:[%s1 + $0x8] sm:$0xff]
  %v39 = vld [vmem:[%s1 + $0x10] sm:$0xff]
  %v40 = vld [vmem:[%s1 + $0x18] sm:$0xff]
  %v41 = vld [vmem:[%s1 + $0x20] sm:$0xff]
  %v42 = vld [vmem:[%s1 + $0x28] sm:$0xff]
  %v43 = vld [vmem:[%s1 + $0x30] sm:$0xff]
  %v44 = vld [vmem:[%s1 + $0x38] sm:$0xff]
  %v45 = vld [vmem:[%s1 + $0x40] sm:$0xff]
  %v46 = vld [vmem:[%s1 + $0x48] sm:$0xff]
  %v47 = vld [vmem:[%s1 + $0x50] sm:$0xff]
  %v48 = vld [vmem:[%s1 + $0x58] sm:$0xff]
  %v49 = vld [vmem:[%s1 + $0x60] sm:$0xff]
  %v50 = vld [vmem:[%s1 + $0x68] sm:$0xff]
  %v51 = vld [vmem:[%s1 + $0x70] sm:$0xff]
  %v52 = vld [vmem:[%s1 + $0x78] sm:$0xff]
  %v53 = vld [vmem:[%s2] sm:$0x3]
  %v55 = vlaneseq
  %v56 = vshrl.u32 %v55, 7
  %v57 = vsub.s32 0, %v56
  %v58 = vrot.slane %v53, %v57
  %v59 = vlaneseq
  %v60 = vshrl.u32 %v59, 7
  %v61 = vsub.s32 1, %v60
  %v62 = vrot.slane %v53, %v61
  %v87 = vunpack.c.l.b16 %v15
  %v88 = vunpack.c.l.b16 %v16
  %v89 = vunpack.c.l.b16 %v17
  %v90 = vunpack.c.l.b16 %v18
  %v91 = vunpack.c.l.b16 %v19
  %v92 = vunpack.c.l.b16 %v20
  %v93 = vunpack.c.l.b16 %v21
  %v94 = vunpack.c.l.b16 %v22
  %v95 = vunpack.c.l.b16 %v23
  %v96 = vunpack.c.l.b16 %v24
  %v97 = vunpack.c.l.b16 %v25
  %v98 = vunpack.c.l.b16 %v26
  %v99 = vunpack.c.l.b16 %v27
  %v100 = vunpack.c.l.b16 %v28
  %v101 = vunpack.c.l.b16 %v29
  %v102 = vunpack.c.l.b16 %v30
  %v103 = vunpack.c.l.b16 %v31
  %v104 = vunpack.c.l.b16 %v32
  %v105 = vunpack.c.l.b16 %v33
  %v106 = vunpack.c.l.b16 %v34
  %v107 = vunpack.c.l.b16 %v35
  %v108 = vunpack.c.l.b16 %v36
  %v109 = vpack.c.b16 %v88, %v87
  %v110 = vpack.c.b16 %v90, %v89
  %v111 = vpack.c.b16 %v92, %v91
  %v112 = vpack.c.b16 %v94, %v93
  %v113 = vpack.c.b16 %v96, %v95
  %v114 = vpack.c.b16 %v98, %v97
  %v115 = vpack.c.b16 %v100, %v99
  %v116 = vpack.c.b16 %v102, %v101
  %v117 = vpack.c.b16 %v104, %v103
  %v118 = vpack.c.b16 %v106, %v105
  %v119 = vpack.c.b16 %v108, %v107
  %v147 = vunpack.c.l.b16 %v37
  %v148 = vunpack.c.h.b16 %v37
  %v149 = vunpack.c.l.b16 %v38
  %v150 = vunpack.c.h.b16 %v38
  %v151 = vunpack.c.l.b16 %v39
  %v152 = vunpack.c.h.b16 %v39
  %v153 = vunpack.c.l.b16 %v40
  %v154 = vunpack.c.h.b16 %v40
  %v155 = vunpack.c.l.b16 %v41
  %v156 = vunpack.c.h.b16 %v41
  %v157 = vunpack.c.l.b16 %v42
  %v158 = vunpack.c.h.b16 %v42
  %v159 = vunpack.c.l.b16 %v43
  %v160 = vunpack.c.h.b16 %v43
  %v161 = vunpack.c.l.b16 %v44
  %v162 = vunpack.c.h.b16 %v44
  %v163 = vunpack.c.l.b16 %v45
  %v164 = vunpack.c.h.b16 %v45
  %v165 = vunpack.c.l.b16 %v46
  %v166 = vunpack.c.h.b16 %v46
  %v167 = vunpack.c.l.b16 %v47
  %v168 = vunpack.c.h.b16 %v47
  %v169 = vunpack.c.l.b16 %v48
  %v170 = vunpack.c.h.b16 %v48
  %v171 = vunpack.c.l.b16 %v49
  %v172 = vunpack.c.h.b16 %v49
  %v173 = vunpack.c.l.b16 %v50
  %v174 = vunpack.c.h.b16 %v50
  %v175 = vunpack.c.l.b16 %v51
  %v176 = vunpack.c.h.b16 %v51
  %v177 = vunpack.c.l.b16 %v52
  %v178 = vunpack.c.h.b16 %v52
  %v179 = vpack.c.b16 %v149, %v147
  %v180 = vpack.c.b16 %v150, %v148
  %v181 = vpack.c.b16 %v153, %v151
  %v182 = vpack.c.b16 %v154, %v152
  %v183 = vpack.c.b16 %v157, %v155
  %v184 = vpack.c.b16 %v158, %v156
  %v185 = vpack.c.b16 %v161, %v159
  %v186 = vpack.c.b16 %v162, %v160
  %v187 = vpack.c.b16 %v165, %v163
  %v188 = vpack.c.b16 %v166, %v164
  %v189 = vpack.c.b16 %v169, %v167
  %v190 = vpack.c.b16 %v170, %v168
  %v191 = vpack.c.b16 %v173, %v171
  %v192 = vpack.c.b16 %v174, %v172
  %v193 = vpack.c.b16 %v177, %v175
  %v194 = vpack.c.b16 %v178, %v176
  %211 = vmatprep.subr.bf16.mxu0 %v194
  %212 = vmatpush1.bf16.msra.mxu0 %v193
  %213 = vmatprep.subr.bf16.mxu0 %v192
  %214 = vmatpush1.bf16.msra.mxu0 %v191
  %215 = vmatprep.subr.bf16.mxu0 %v190
  %216 = vmatpush1.bf16.msra.mxu0 %v189
  %217 = vmatprep.subr.bf16.mxu0 %v188
  %218 = vmatpush1.bf16.msra.mxu0 %v187
  %219 = vmatprep.subr.bf16.mxu0 %v186
  %220 = vmatpush1.bf16.msra.mxu0 %v185
  %221 = vmatprep.subr.bf16.mxu0 %v184
  %222 = vmatpush1.bf16.msra.mxu0 %v183
  %223 = vmatprep.subr.bf16.mxu0 %v182
  %224 = vmatpush1.bf16.msra.mxu0 %v181
  %225 = vmatprep.subr.bf16.mxu0 %v180
  %226 = vmatpush1.bf16.msra.mxu0 %v179
  %227 = vmatprep.subr.bf16.mxu0 0
  %228 = vmatpush2.bf16.msra.mxu0 0
  %229 = vmatprep.subr.bf16.mxu0 0
  %230 = vmatpush2.bf16.msra.mxu0 0
  %231 = vmatprep.subr.bf16.mxu0 0
  %232 = vmatpush2.bf16.msra.mxu0 0
  %233 = vmatprep.subr.bf16.mxu0 0
  %234 = vmatpush2.bf16.msra.mxu0 0
  %235 = vmatprep.subr.bf16.mxu0 0
  %236 = vmatpush2.bf16.msra.mxu0 0
  %237 = vmatprep.subr.bf16.mxu0 0
  %238 = vmatpush2.bf16.msra.mxu0 0
  %239 = vmatprep.subr.bf16.mxu0 0
  %240 = vmatpush2.bf16.msra.mxu0 0
  %241 = vmatprep.subr.bf16.mxu0 0
  %242 = vmatpush2.bf16.msra.mxu0 0
  %243 = vmatprep.mubr.bf16.mxu0 0
  %244 = vmatmul.mubr.bf16.gmra.mxu0 %v109
  %v245 = vpop.f32.mrf.mxu0
  %v246 = vadd.f32 %v58, %v245
  %v247 = vpop.f32.mrf.mxu0
  %v248 = vadd.f32 %v62, %v247
  %v249 = vpop.f32.mrf.mxu0
  %v250 = vadd.f32 %v58, %v249
  %v251 = vpop.f32.mrf.mxu0
  %v252 = vadd.f32 %v62, %v251
  %253 = vmatprep.mubr.bf16.mxu0 0
  %254 = vmatmul.mubr.bf16.gmra.mxu0 %v110
  %v255 = vpop.f32.mrf.mxu0
  %v256 = vadd.f32 %v58, %v255
  %v257 = vpop.f32.mrf.mxu0
  %v258 = vadd.f32 %v62, %v257
  %v259 = vpop.f32.mrf.mxu0
  %v260 = vadd.f32 %v58, %v259
  %v261 = vpop.f32.mrf.mxu0
  %v262 = vadd.f32 %v62, %v261
  %263 = vmatprep.mubr.bf16.mxu0 0
  %264 = vmatmul.mubr.bf16.gmra.mxu0 %v111
  %v265 = vpop.f32.mrf.mxu0
  %v266 = vadd.f32 %v58, %v265
  %v267 = vpop.f32.mrf.mxu0
  %v268 = vadd.f32 %v62, %v267
  %v269 = vpop.f32.mrf.mxu0
  %v270 = vadd.f32 %v58, %v269
  %v271 = vpop.f32.mrf.mxu0
  %v272 = vadd.f32 %v62, %v271
  %273 = vmatprep.mubr.bf16.mxu0 0
  %274 = vmatmul.mubr.bf16.gmra.mxu0 %v112
  %v275 = vpop.f32.mrf.mxu0
  %v276 = vadd.f32 %v58, %v275
  %v277 = vpop.f32.mrf.mxu0
  %v278 = vadd.f32 %v62, %v277
  %v279 = vpop.f32.mrf.mxu0
  %v280 = vadd.f32 %v58, %v279
  %v281 = vpop.f32.mrf.mxu0
  %v282 = vadd.f32 %v62, %v281
  %283 = vmatprep.mubr.bf16.mxu0 0
  %284 = vmatmul.mubr.bf16.gmra.mxu0 %v113
  %v285 = vpop.f32.mrf.mxu0
  %v286 = vadd.f32 %v58, %v285
  %v287 = vpop.f32.mrf.mxu0
  %v288 = vadd.f32 %v62, %v287
  %v289 = vpop.f32.mrf.mxu0
  %v290 = vadd.f32 %v58, %v289
  %v291 = vpop.f32.mrf.mxu0
  %v292 = vadd.f32 %v62, %v291
  %293 = vmatprep.mubr.bf16.mxu0 0
  %294 = vmatmul.mubr.bf16.gmra.mxu0 %v114
  %v295 = vpop.f32.mrf.mxu0
  %v296 = vadd.f32 %v58, %v295
  %v297 = vpop.f32.mrf.mxu0
  %v298 = vadd.f32 %v62, %v297
  %v299 = vpop.f32.mrf.mxu0
  %v300 = vadd.f32 %v58, %v299
  %v301 = vpop.f32.mrf.mxu0
  %v302 = vadd.f32 %v62, %v301
  %303 = vmatprep.mubr.bf16.mxu0 0
  %304 = vmatmul.mubr.bf16.gmra.mxu0 %v115
  %v305 = vpop.f32.mrf.mxu0
  %v306 = vadd.f32 %v58, %v305
  %v307 = vpop.f32.mrf.mxu0
  %v308 = vadd.f32 %v62, %v307
  %v309 = vpop.f32.mrf.mxu0
  %v310 = vadd.f32 %v58, %v309
  %v311 = vpop.f32.mrf.mxu0
  %v312 = vadd.f32 %v62, %v311
  %313 = vmatprep.mubr.bf16.mxu0 0
  %314 = vmatmul.mubr.bf16.gmra.mxu0 %v116
  %v315 = vpop.f32.mrf.mxu0
  %v316 = vadd.f32 %v58, %v315
  %v317 = vpop.f32.mrf.mxu0
  %v318 = vadd.f32 %v62, %v317
  %v319 = vpop.f32.mrf.mxu0
  %v320 = vadd.f32 %v58, %v319
  %v321 = vpop.f32.mrf.mxu0
  %v322 = vadd.f32 %v62, %v321
  %323 = vmatprep.mubr.bf16.mxu0 0
  %324 = vmatmul.mubr.bf16.gmra.mxu0 %v117
  %v325 = vpop.f32.mrf.mxu0
  %v326 = vadd.f32 %v58, %v325
  %v327 = vpop.f32.mrf.mxu0
  %v328 = vadd.f32 %v62, %v327
  %v329 = vpop.f32.mrf.mxu0
  %v330 = vadd.f32 %v58, %v329
  %v331 = vpop.f32.mrf.mxu0
  %v332 = vadd.f32 %v62, %v331
  %333 = vmatprep.mubr.bf16.mxu0 0
  %334 = vmatmul.mubr.bf16.gmra.mxu0 %v118
  %v335 = vpop.f32.mrf.mxu0
  %v336 = vadd.f32 %v58, %v335
  %v337 = vpop.f32.mrf.mxu0
  %v338 = vadd.f32 %v62, %v337
  %v339 = vpop.f32.mrf.mxu0
  %v340 = vadd.f32 %v58, %v339
  %v341 = vpop.f32.mrf.mxu0
  %v342 = vadd.f32 %v62, %v341
  %343 = vmatprep.mubr.bf16.mxu0 0
  %344 = vmatmul.mubr.bf16.gmra.mxu0 %v119
  %v345 = vpop.f32.mrf.mxu0
  %v346 = vadd.f32 %v58, %v345
  %v347 = vpop.f32.mrf.mxu0
  %v348 = vadd.f32 %v62, %v347
  %v349 = vpop.f32.mrf.mxu0
  %v350 = vadd.f32 %v58, %v349
  %v351 = vpop.f32.mrf.mxu0
  %v352 = vadd.f32 %v62, %v351
  %353 = vdwg.mxu0
  %v354 = vmax.f32 %v246, 0.0
  %v355 = vmax.f32 %v248, 0.0
  %v356 = vmax.f32 %v250, 0.0
  %v357 = vmax.f32 %v252, 0.0
  %v358 = vmax.f32 %v256, 0.0
  %v359 = vmax.f32 %v258, 0.0
  %v360 = vmax.f32 %v260, 0.0
  %v361 = vmax.f32 %v262, 0.0
  %v362 = vmax.f32 %v266, 0.0
  %v363 = vmax.f32 %v268, 0.0
  %v364 = vmax.f32 %v270, 0.0
  %v365 = vmax.f32 %v272, 0.0
  %v366 = vmax.f32 %v276, 0.0
  %v367 = vmax.f32 %v278, 0.0
  %v368 = vmax.f32 %v280, 0.0
  %v369 = vmax.f32 %v282, 0.0
  %v370 = vmax.f32 %v286, 0.0
  %v371 = vmax.f32 %v288, 0.0
  %v372 = vmax.f32 %v290, 0.0
  %v373 = vmax.f32 %v292, 0.0
  %v374 = vmax.f32 %v296, 0.0
  %v375 = vmax.f32 %v298, 0.0
  %v376 = vmax.f32 %v300, 0.0
  %v377 = vmax.f32 %v302, 0.0
  %v378 = vmax.f32 %v306, 0.0
  %v379 = vmax.f32 %v308, 0.0
  %v380 = vmax.f32 %v310, 0.0
  %v381 = vmax.f32 %v312, 0.0
  %v382 = vmax.f32 %v316, 0.0
  %v383 = vmax.f32 %v318, 0.0
  %v384 = vmax.f32 %v320, 0.0
  %v385 = vmax.f32 %v322, 0.0
  %v386 = vmax.f32 %v326, 0.0
  %v387 = vmax.f32 %v328, 0.0
  %v388 = vmax.f32 %v330, 0.0
  %v389 = vmax.f32 %v332, 0.0
  %v390 = vmax.f32 %v336, 0.0
  %v391 = vmax.f32 %v338, 0.0
  %v392 = vmax.f32 %v340, 0.0
  %v393 = vmax.f32 %v342, 0.0
  %v394 = vmax.f32 %v346, 0.0
  %v395 = vmax.f32 %v348, 0.0
  %v396 = vmax.f32 %v350, 0.0
  %v397 = vmax.f32 %v352, 0.0
  %398 = vst [vmem:[%s3] sm:$0xff] %v354
  %399 = vst [vmem:[%s3 + $0x8] sm:$0xff] %v355
  %400 = vst [vmem:[%s3 + $0x10] sm:$0xff] %v356
  %401 = vst [vmem:[%s3 + $0x18] sm:$0xff] %v357
  %402 = vst [vmem:[%s3 + $0x20] sm:$0xff] %v358
  %403 = vst [vmem:[%s3 + $0x28] sm:$0xff] %v359
  %404 = vst [vmem:[%s3 + $0x30] sm:$0xff] %v360
  %405 = vst [vmem:[%s3 + $0x38] sm:$0xff] %v361
  %406 = vst [vmem:[%s3 + $0x40] sm:$0xff] %v362
  %407 = vst [vmem:[%s3 + $0x48] sm:$0xff] %v363
  %408 = vst [vmem:[%s3 + $0x50] sm:$0xff] %v364
  %409 = vst [vmem:[%s3 + $0x58] sm:$0xff] %v365
  %410 = vst [vmem:[%s3 + $0x60] sm:$0xff] %v366
  %411 = vst [vmem:[%s3 + $0x68] sm:$0xff] %v367
  %412 = vst [vmem:[%s3 + $0x70] sm:$0xff] %v368
  %413 = vst [vmem:[%s3 + $0x78] sm:$0xff] %v369
  %414 = vst [vmem:[%s3 + $0x80] sm:$0xff] %v370
  %415 = vst [vmem:[%s3 + $0x88] sm:$0xff] %v371
  %416 = vst [vmem:[%s3 + $0x90] sm:$0xff] %v372
  %417 = vst [vmem:[%s3 + $0x98] sm:$0xff] %v373
  %418 = vst [vmem:[%s3 + $0xa0] sm:$0xff] %v374
  %419 = vst [vmem:[%s3 + $0xa8] sm:$0xff] %v375
  %420 = vst [vmem:[%s3 + $0xb0] sm:$0xff] %v376
  %421 = vst [vmem:[%s3 + $0xb8] sm:$0xff] %v377
  %422 = vst [vmem:[%s3 + $0xc0] sm:$0xff] %v378
  %423 = vst [vmem:[%s3 + $0xc8] sm:$0xff] %v379
  %424 = vst [vmem:[%s3 + $0xd0] sm:$0xff] %v380
  %425 = vst [vmem:[%s3 + $0xd8] sm:$0xff] %v381
  %426 = vst [vmem:[%s3 + $0xe0] sm:$0xff] %v382
  %427 = vst [vmem:[%s3 + $0xe8] sm:$0xff] %v383
  %428 = vst [vmem:[%s3 + $0xf0] sm:$0xff] %v384
  %429 = vst [vmem:[%s3 + $0xf8] sm:$0xff] %v385
  %430 = vst [vmem:[%s3 + $0x100] sm:$0xff] %v386
  %431 = vst [vmem:[%s3 + $0x108] sm:$0xff] %v387
  %432 = vst [vmem:[%s3 + $0x110] sm:$0xff] %v388
  %433 = vst [vmem:[%s3 + $0x118] sm:$0xff] %v389
  %434 = vst [vmem:[%s3 + $0x120] sm:$0xff] %v390
  %435 = vst [vmem:[%s3 + $0x128] sm:$0xff] %v391
  %436 = vst [vmem:[%s3 + $0x130] sm:$0xff] %v392
  %437 = vst [vmem:[%s3 + $0x138] sm:$0xff] %v393
  %438 = vst [vmem:[%s3 + $0x140] sm:$0xff] %v394
  %439 = vst [vmem:[%s3 + $0x148] sm:$0xff] %v395
  %440 = vst [vmem:[%s3 + $0x150] sm:$0xff] %v396
  %441 = vst [vmem:[%s3 + $0x158] sm:$0xff] %v397
  // Predicated region
  $region14: #{_lambda_.21} parent=0 // pred_check
    _
  $region15: #{_lambda_.21} parent=0 // pred_check_branch
    %443 = sbr.rel (0) target = $region17
  $region16: #{_lambda_.21} parent=0 // pred_region
    _
  $region17: #{_lambda_.21} parent=0 // pred_fallthru
    _
  // Predicated region
  $region18: #{_lambda_.21} parent=0 // pred_check
    _
  $region19: #{_lambda_.21} parent=0 // pred_check_branch
    %445 = sbr.rel (0) target = $region21
  $region20: #{_lambda_.21} parent=0 // pred_region
    _
  $region21: #{_lambda_.21} parent=0 // pred_fallthru
    _

// kernel: _lambda_.23
$region0: #{_lambda_.23}
  #allocation0 [shape = 'u32[]', space=smem, size = 0x4, offset = 0x4, fixed_abs, tag = 'smem constant byte address 0x4 - core index']
  #allocation1 [shape = 'u32[144,128]{1,0:T(1,128)}', space=vmem, size = 0x12000, scoped, tag = 'internal scratch']
  %s0 = inlined_call_operand.vmem [shape: bf16[592,256], index: 0, kind: input, shape index: {}]
  %s1 = inlined_call_operand.vmem [shape: bf16[256,128], index: 1, kind: input, shape index: {}]
  %s2 = inlined_call_operand.vmem [shape: f32[1,128], index: 2, kind: input, shape index: {}]
  %s3 = inlined_call_operand.vmem [shape: f32[592,128], index: 3, kind: output, shape index: {}]
  %s4 = sld [smem:[#allocation0]]
  $region22: #{_lambda_.23} parent=0
    _
  %s6 = ssub.s32 1, %s4
  %s7 = scalar_select 0, %s6, %s4
  // Predicated region
  $region2: #{_lambda_.23} parent=0 // pred_check
    _
  $region3: #{_lambda_.23} parent=0 // pred_check_branch
    %9 = sbr.rel (0) target = $region5
  $region4: #{_lambda_.23} parent=0 // pred_region
    _
  $region5: #{_lambda_.23} parent=0 // pred_fallthru
    _
  // Predicated region
  $region6: #{_lambda_.23} parent=0 // pred_check
    _
  $region7: #{_lambda_.23} parent=0 // pred_check_branch
    %11 = sbr.rel (0) target = $region9
  $region8: #{_lambda_.23} parent=0 // pred_region
    _
  $region9: #{_lambda_.23} parent=0 // pred_fallthru
    _
  // Predicated region
  $region10: #{_lambda_.23} parent=0 // pred_check
    _
  $region11: #{_lambda_.23} parent=0 // pred_check_branch
    %13 = sbr.rel (0) target = $region13
  $region12: #{_lambda_.23} parent=0 // pred_region
    _
  $region13: #{_lambda_.23} parent=0 // pred_fallthru
    _
  %v15 = vld [vmem:[%s0] sm:$0xff]
  %v16 = vld [vmem:[%s0 + $0x8] sm:$0xff]
  %v17 = vld [vmem:[%s0 + $0x10] sm:$0xff]
  %v18 = vld [vmem:[%s0 + $0x18] sm:$0xff]
  %v19 = vld [vmem:[%s0 + $0x20] sm:$0xff]
  %v20 = vld [vmem:[%s0 + $0x28] sm:$0xff]
  %v21 = vld [vmem:[%s0 + $0x30] sm:$0xff]
  %v22 = vld [vmem:[%s0 + $0x38] sm:$0xff]
  %v23 = vld [vmem:[%s0 + $0x40] sm:$0xff]
  %v24 = vld [vmem:[%s0 + $0x48] sm:$0xff]
  %v25 = vld [vmem:[%s0 + $0x50] sm:$0xff]
  %v26 = vld [vmem:[%s0 + $0x58] sm:$0xff]
  %v27 = vld [vmem:[%s0 + $0x60] sm:$0xff]
  %v28 = vld [vmem:[%s0 + $0x68] sm:$0xff]
  %v29 = vld [vmem:[%s0 + $0x70] sm:$0xff]
  %v30 = vld [vmem:[%s0 + $0x78] sm:$0xff]
  %v31 = vld [vmem:[%s0 + $0x80] sm:$0xff]
  %v32 = vld [vmem:[%s0 + $0x88] sm:$0xff]
  %v33 = vld [vmem:[%s0 + $0x90] sm:$0xff]
  %v34 = vld [vmem:[%s0 + $0x98] sm:$0xff]
  %v35 = vld [vmem:[%s0 + $0xa0] sm:$0xff]
  %v36 = vld [vmem:[%s0 + $0xa8] sm:$0xff]
  %v37 = vld [vmem:[%s0 + $0xb0] sm:$0xff]
  %v38 = vld [vmem:[%s0 + $0xb8] sm:$0xff]
  %v39 = vld [vmem:[%s0 + $0xc0] sm:$0xff]
  %v40 = vld [vmem:[%s0 + $0xc8] sm:$0xff]
  %v41 = vld [vmem:[%s0 + $0xd0] sm:$0xff]
  %v42 = vld [vmem:[%s0 + $0xd8] sm:$0xff]
  %v43 = vld [vmem:[%s0 + $0xe0] sm:$0xff]
  %v44 = vld [vmem:[%s0 + $0xe8] sm:$0xff]
  %v45 = vld [vmem:[%s0 + $0xf0] sm:$0xff]
  %v46 = vld [vmem:[%s0 + $0xf8] sm:$0xff]
  %v47 = vld [vmem:[%s0 + $0x100] sm:$0xff]
  %v48 = vld [vmem:[%s0 + $0x108] sm:$0xff]
  %v49 = vld [vmem:[%s0 + $0x110] sm:$0xff]
  %v50 = vld [vmem:[%s0 + $0x118] sm:$0xff]
  %v51 = vld [vmem:[%s0 + $0x120] sm:$0xff]
  %v52 = vld [vmem:[%s0 + $0x128] sm:$0xff]
  %v53 = vld [vmem:[%s0 + $0x130] sm:$0xff]
  %v54 = vld [vmem:[%s0 + $0x138] sm:$0xff]
  %v55 = vld [vmem:[%s0 + $0x140] sm:$0xff]
  %v56 = vld [vmem:[%s0 + $0x148] sm:$0xff]
  %v57 = vld [vmem:[%s0 + $0x150] sm:$0xff]
  %v58 = vld [vmem:[%s0 + $0x158] sm:$0xff]
  %v59 = vld [vmem:[%s0 + $0x160] sm:$0xff]
  %v60 = vld [vmem:[%s0 + $0x168] sm:$0xff]
  %v61 = vld [vmem:[%s0 + $0x170] sm:$0xff]
  %v62 = vld [vmem:[%s0 + $0x178] sm:$0xff]
  %v63 = vld [vmem:[%s0 + $0x180] sm:$0xff]
  %v64 = vld [vmem:[%s0 + $0x188] sm:$0xff]
  %v65 = vld [vmem:[%s0 + $0x190] sm:$0xff]
  %v66 = vld [vmem:[%s0 + $0x198] sm:$0xff]
  %v67 = vld [vmem:[%s0 + $0x1a0] sm:$0xff]
  %v68 = vld [vmem:[%s0 + $0x1a8] sm:$0xff]
  %v69 = vld [vmem:[%s0 + $0x1b0] sm:$0xff]
  %v70 = vld [vmem:[%s0 + $0x1b8] sm:$0xff]
  %v71 = vld [vmem:[%s0 + $0x1c0] sm:$0xff]
  %v72 = vld [vmem:[%s0 + $0x1c8] sm:$0xff]
  %v73 = vld [vmem:[%s0 + $0x1d0] sm:$0xff]
  %v74 = vld [vmem:[%s0 + $0x1d8] sm:$0xff]
  %v75 = vld [vmem:[%s0 + $0x1e0] sm:$0xff]
  %v76 = vld [vmem:[%s0 + $0x1e8] sm:$0xff]
  %v77 = vld [vmem:[%s0 + $0x1f0] sm:$0xff]
  %v78 = vld [vmem:[%s0 + $0x1f8] sm:$0xff]
  %v79 = vld [vmem:[%s0 + $0x200] sm:$0xff]
  %v80 = vld [vmem:[%s0 + $0x208] sm:$0xff]
  %v81 = vld [vmem:[%s0 + $0x210] sm:$0xff]
  %v82 = vld [vmem:[%s0 + $0x218] sm:$0xff]
  %v83 = vld [vmem:[%s0 + $0x220] sm:$0xff]
  %v84 = vld [vmem:[%s0 + $0x228] sm:$0xff]
  %v85 = vld [vmem:[%s0 + $0x230] sm:$0xff]
  %v86 = vld [vmem:[%s0 + $0x238] sm:$0xff]
  %v87 = vld [vmem:[%s0 + $0x240] sm:$0xff]
  %v88 = vld [vmem:[%s0 + $0x248] sm:$0xff]
  %v89 = vld [vmem:[%s1] sm:$0xf]
  %v90 = vld [vmem:[%s1 + $0x4] sm:$0xf]
  %v91 = vld [vmem:[%s1 + $0x8] sm:$0xf]
  %v92 = vld [vmem:[%s1 + $0xc] sm:$0xf]
  %v93 = vld [vmem:[%s1 + $0x10] sm:$0xf]
  %v94 = vld [vmem:[%s1 + $0x14] sm:$0xf]
  %v95 = vld [vmem:[%s1 + $0x18] sm:$0xf]
  %v96 = vld [vmem:[%s1 + $0x1c] sm:$0xf]
  %v97 = vld [vmem:[%s1 + $0x20] sm:$0xf]
  %v98 = vld [vmem:[%s1 + $0x24] sm:$0xf]
  %v99 = vld [vmem:[%s1 + $0x28] sm:$0xf]
  %v100 = vld [vmem:[%s1 + $0x2c] sm:$0xf]
  %v101 = vld [vmem:[%s1 + $0x30] sm:$0xf]
  %v102 = vld [vmem:[%s1 + $0x34] sm:$0xf]
  %v103 = vld [vmem:[%s1 + $0x38] sm:$0xf]
  %v104 = vld [vmem:[%s1 + $0x3c] sm:$0xf]
  %v105 = vld [vmem:[%s1 + $0x40] sm:$0xf]
  %v106 = vld [vmem:[%s1 + $0x44] sm:$0xf]
  %v107 = vld [vmem:[%s1 + $0x48] sm:$0xf]
  %v108 = vld [vmem:[%s1 + $0x4c] sm:$0xf]
  %v109 = vld [vmem:[%s1 + $0x50] sm:$0xf]
  %v110 = vld [vmem:[%s1 + $0x54] sm:$0xf]
  %v111 = vld [vmem:[%s1 + $0x58] sm:$0xf]
  %v112 = vld [vmem:[%s1 + $0x5c] sm:$0xf]
  %v113 = vld [vmem:[%s1 + $0x60] sm:$0xf]
  %v114 = vld [vmem:[%s1 + $0x64] sm:$0xf]
  %v115 = vld [vmem:[%s1 + $0x68] sm:$0xf]
  %v116 = vld [vmem:[%s1 + $0x6c] sm:$0xf]
  %v117 = vld [vmem:[%s1 + $0x70] sm:$0xf]
  %v118 = vld [vmem:[%s1 + $0x74] sm:$0xf]
  %v119 = vld [vmem:[%s1 + $0x78] sm:$0xf]
  %v120 = vld [vmem:[%s1 + $0x7c] sm:$0xf]
  %v121 = vld [vmem:[%s2] sm:$0x1]
  %v123 = vlaneseq
  %v124 = vshrl.u32 %v123, 7
  %v125 = vsub.s32 0, %v124
  %v126 = vrot.slane %v121, %v125
  %v202 = vunpack.c.l.b16 %v15
  %v203 = vunpack.c.h.b16 %v15
  %v204 = vunpack.c.l.b16 %v16
  %v205 = vunpack.c.h.b16 %v16
  %v206 = vunpack.c.l.b16 %v17
  %v207 = vunpack.c.h.b16 %v17
  %v208 = vunpack.c.l.b16 %v18
  %v209 = vunpack.c.h.b16 %v18
  %v210 = vunpack.c.l.b16 %v19
  %v211 = vunpack.c.h.b16 %v19
  %v212 = vunpack.c.l.b16 %v20
  %v213 = vunpack.c.h.b16 %v20
  %v214 = vunpack.c.l.b16 %v21
  %v215 = vunpack.c.h.b16 %v21
  %v216 = vunpack.c.l.b16 %v22
  %v217 = vunpack.c.h.b16 %v22
  %v218 = vunpack.c.l.b16 %v23
  %v219 = vunpack.c.h.b16 %v23
  %v220 = vunpack.c.l.b16 %v24
  %v221 = vunpack.c.h.b16 %v24
  %v222 = vunpack.c.l.b16 %v25
  %v223 = vunpack.c.h.b16 %v25
  %v224 = vunpack.c.l.b16 %v26
  %v225 = vunpack.c.h.b16 %v26
  %v226 = vunpack.c.l.b16 %v27
  %v227 = vunpack.c.h.b16 %v27
  %v228 = vunpack.c.l.b16 %v28
  %v229 = vunpack.c.h.b16 %v28
  %v230 = vunpack.c.l.b16 %v29
  %v231 = vunpack.c.h.b16 %v29
  %v232 = vunpack.c.l.b16 %v30
  %v233 = vunpack.c.h.b16 %v30
  %v234 = vunpack.c.l.b16 %v31
  %v235 = vunpack.c.h.b16 %v31
  %v236 = vunpack.c.l.b16 %v32
  %v237 = vunpack.c.h.b16 %v32
  %v238 = vunpack.c.l.b16 %v33
  %v239 = vunpack.c.h.b16 %v33
  %v240 = vunpack.c.l.b16 %v34
  %v241 = vunpack.c.h.b16 %v34
  %v242 = vunpack.c.l.b16 %v35
  %v243 = vunpack.c.h.b16 %v35
  %v244 = vunpack.c.l.b16 %v36
  %v245 = vunpack.c.h.b16 %v36
  %v246 = vunpack.c.l.b16 %v37
  %v247 = vunpack.c.h.b16 %v37
  %v248 = vunpack.c.l.b16 %v38
  %v249 = vunpack.c.h.b16 %v38
  %v250 = vunpack.c.l.b16 %v39
  %v251 = vunpack.c.h.b16 %v39
  %v252 = vunpack.c.l.b16 %v40
  %v253 = vunpack.c.h.b16 %v40
  %v254 = vunpack.c.l.b16 %v41
  %v255 = vunpack.c.h.b16 %v41
  %v256 = vunpack.c.l.b16 %v42
  %v257 = vunpack.c.h.b16 %v42
  %v258 = vunpack.c.l.b16 %v43
  %v259 = vunpack.c.h.b16 %v43
  %v260 = vunpack.c.l.b16 %v44
  %v261 = vunpack.c.h.b16 %v44
  %v262 = vunpack.c.l.b16 %v45
  %v263 = vunpack.c.h.b16 %v45
  %v264 = vunpack.c.l.b16 %v46
  %v265 = vunpack.c.h.b16 %v46
  %v266 = vunpack.c.l.b16 %v47
  %v267 = vunpack.c.h.b16 %v47
  %v268 = vunpack.c.l.b16 %v48
  %v269 = vunpack.c.h.b16 %v48
  %v270 = vunpack.c.l.b16 %v49
  %v271 = vunpack.c.h.b16 %v49
  %v272 = vunpack.c.l.b16 %v50
  %v273 = vunpack.c.h.b16 %v50
  %v274 = vunpack.c.l.b16 %v51
  %v275 = vunpack.c.h.b16 %v51
  %v276 = vunpack.c.l.b16 %v52
  %v277 = vunpack.c.h.b16 %v52
  %v278 = vunpack.c.l.b16 %v53
  %v279 = vunpack.c.h.b16 %v53
  %v280 = vunpack.c.l.b16 %v54
  %v281 = vunpack.c.h.b16 %v54
  %v282 = vunpack.c.l.b16 %v55
  %v283 = vunpack.c.h.b16 %v55
  %v284 = vunpack.c.l.b16 %v56
  %v285 = vunpack.c.h.b16 %v56
  %v286 = vunpack.c.l.b16 %v57
  %v287 = vunpack.c.h.b16 %v57
  %v288 = vunpack.c.l.b16 %v58
  %v289 = vunpack.c.h.b16 %v58
  %v290 = vunpack.c.l.b16 %v59
  %v291 = vunpack.c.h.b16 %v59
  %v292 = vunpack.c.l.b16 %v60
  %v293 = vunpack.c.h.b16 %v60
  %v294 = vunpack.c.l.b16 %v61
  %v295 = vunpack.c.h.b16 %v61
  %v296 = vunpack.c.l.b16 %v62
  %v297 = vunpack.c.h.b16 %v62
  %v298 = vunpack.c.l.b16 %v63
  %v299 = vunpack.c.h.b16 %v63
  %v300 = vunpack.c.l.b16 %v64
  %v301 = vunpack.c.h.b16 %v64
  %v302 = vunpack.c.l.b16 %v65
  %v303 = vunpack.c.h.b16 %v65
  %v304 = vunpack.c.l.b16 %v66
  %v305 = vunpack.c.h.b16 %v66
  %v306 = vunpack.c.l.b16 %v67
  %v307 = vunpack.c.h.b16 %v67
  %v308 = vunpack.c.l.b16 %v68
  %v309 = vunpack.c.h.b16 %v68
  %v310 = vunpack.c.l.b16 %v69
  %v311 = vunpack.c.h.b16 %v69
  %v312 = vunpack.c.l.b16 %v70
  %v313 = vunpack.c.h.b16 %v70
  %v314 = vunpack.c.l.b16 %v71
  %v315 = vunpack.c.h.b16 %v71
  %v316 = vunpack.c.l.b16 %v72
  %v317 = vunpack.c.h.b16 %v72
  %v318 = vunpack.c.l.b16 %v73
  %v319 = vunpack.c.h.b16 %v73
  %v320 = vunpack.c.l.b16 %v74
  %v321 = vunpack.c.h.b16 %v74
  %v322 = vunpack.c.l.b16 %v75
  %v323 = vunpack.c.h.b16 %v75
  %v324 = vunpack.c.l.b16 %v76
  %v325 = vunpack.c.h.b16 %v76
  %v326 = vunpack.c.l.b16 %v77
  %v327 = vunpack.c.h.b16 %v77
  %v328 = vunpack.c.l.b16 %v78
  %v329 = vunpack.c.h.b16 %v78
  %v330 = vunpack.c.l.b16 %v79
  %v331 = vunpack.c.h.b16 %v79
  %v332 = vunpack.c.l.b16 %v80
  %v333 = vunpack.c.h.b16 %v80
  %v334 = vunpack.c.l.b16 %v81
  %v335 = vunpack.c.h.b16 %v81
  %v336 = vunpack.c.l.b16 %v82
  %v337 = vunpack.c.h.b16 %v82
  %v338 = vunpack.c.l.b16 %v83
  %v339 = vunpack.c.h.b16 %v83
  %v340 = vunpack.c.l.b16 %v84
  %v341 = vunpack.c.h.b16 %v84
  %v342 = vunpack.c.l.b16 %v85
  %v343 = vunpack.c.h.b16 %v85
  %v344 = vunpack.c.l.b16 %v86
  %v345 = vunpack.c.h.b16 %v86
  %v346 = vunpack.c.l.b16 %v87
  %v347 = vunpack.c.h.b16 %v87
  %v348 = vunpack.c.l.b16 %v88
  %v349 = vunpack.c.h.b16 %v88
  %v350 = vpack.c.b16 %v204, %v202
  %v351 = vpack.c.b16 %v205, %v203
  %v352 = vpack.c.b16 %v208, %v206
  %v353 = vpack.c.b16 %v209, %v207
  %v354 = vpack.c.b16 %v212, %v210
  %v355 = vpack.c.b16 %v213, %v211
  %v356 = vpack.c.b16 %v216, %v214
  %v357 = vpack.c.b16 %v217, %v215
  %v358 = vpack.c.b16 %v220, %v218
  %v359 = vpack.c.b16 %v221, %v219
  %v360 = vpack.c.b16 %v224, %v222
  %v361 = vpack.c.b16 %v225, %v223
  %v362 = vpack.c.b16 %v228, %v226
  %v363 = vpack.c.b16 %v229, %v227
  %v364 = vpack.c.b16 %v232, %v230
  %v365 = vpack.c.b16 %v233, %v231
  %v366 = vpack.c.b16 %v236, %v234
  %v367 = vpack.c.b16 %v237, %v235
  %v368 = vpack.c.b16 %v240, %v238
  %v369 = vpack.c.b16 %v241, %v239
  %v370 = vpack.c.b16 %v244, %v242
  %v371 = vpack.c.b16 %v245, %v243
  %v372 = vpack.c.b16 %v248, %v246
  %v373 = vpack.c.b16 %v249, %v247
  %v374 = vpack.c.b16 %v252, %v250
  %v375 = vpack.c.b16 %v253, %v251
  %v376 = vpack.c.b16 %v256, %v254
  %v377 = vpack.c.b16 %v257, %v255
  %v378 = vpack.c.b16 %v260, %v258
  %v379 = vpack.c.b16 %v261, %v259
  %v380 = vpack.c.b16 %v264, %v262
  %v381 = vpack.c.b16 %v265, %v263
  %v382 = vpack.c.b16 %v268, %v266
  %v383 = vpack.c.b16 %v269, %v267
  %v384 = vpack.c.b16 %v272, %v270
  %v385 = vpack.c.b16 %v273, %v271
  %v386 = vpack.c.b16 %v276, %v274
  %v387 = vpack.c.b16 %v277, %v275
  %v388 = vpack.c.b16 %v280, %v278
  %v389 = vpack.c.b16 %v281, %v279
  %v390 = vpack.c.b16 %v284, %v282
  %v391 = vpack.c.b16 %v285, %v283
  %v392 = vpack.c.b16 %v288, %v286
  %v393 = vpack.c.b16 %v289, %v287
  %v394 = vpack.c.b16 %v292, %v290
  %v395 = vpack.c.b16 %v293, %v291
  %v396 = vpack.c.b16 %v296, %v294
  %v397 = vpack.c.b16 %v297, %v295
  %v398 = vpack.c.b16 %v300, %v298
  %v399 = vpack.c.b16 %v301, %v299
  %v400 = vpack.c.b16 %v304, %v302
  %v401 = vpack.c.b16 %v305, %v303
  %v402 = vpack.c.b16 %v308, %v306
  %v403 = vpack.c.b16 %v309, %v307
  %v404 = vpack.c.b16 %v312, %v310
  %v405 = vpack.c.b16 %v313, %v311
  %v406 = vpack.c.b16 %v316, %v314
  %v407 = vpack.c.b16 %v317, %v315
  %v408 = vpack.c.b16 %v320, %v318
  %v409 = vpack.c.b16 %v321, %v319
  %v410 = vpack.c.b16 %v324, %v322
  %v411 = vpack.c.b16 %v325, %v323
  %v412 = vpack.c.b16 %v328, %v326
  %v413 = vpack.c.b16 %v329, %v327
  %v414 = vpack.c.b16 %v332, %v330
  %v415 = vpack.c.b16 %v333, %v331
  %v416 = vpack.c.b16 %v336, %v334
  %v417 = vpack.c.b16 %v337, %v335
  %v418 = vpack.c.b16 %v340, %v338
  %v419 = vpack.c.b16 %v341, %v339
  %v420 = vpack.c.b16 %v344, %v342
  %v421 = vpack.c.b16 %v345, %v343
  %v422 = vpack.c.b16 %v348, %v346
  %v423 = vpack.c.b16 %v349, %v347
  %v530 = vunpack.c.l.b16 %v89
  %v531 = vunpack.c.l.b16 %v90
  %v532 = vunpack.c.l.b16 %v91
  %v533 = vunpack.c.l.b16 %v92
  %v534 = vunpack.c.l.b16 %v93
  %v535 = vunpack.c.l.b16 %v94
  %v536 = vunpack.c.l.b16 %v95
  %v537 = vunpack.c.l.b16 %v96
  %v538 = vunpack.c.l.b16 %v97
  %v539 = vunpack.c.l.b16 %v98
  %v540 = vunpack.c.l.b16 %v99
  %v541 = vunpack.c.l.b16 %v100
  %v542 = vunpack.c.l.b16 %v101
  %v543 = vunpack.c.l.b16 %v102
  %v544 = vunpack.c.l.b16 %v103
  %v545 = vunpack.c.l.b16 %v104
  %v546 = vunpack.c.l.b16 %v105
  %v547 = vunpack.c.l.b16 %v106
  %v548 = vunpack.c.l.b16 %v107
  %v549 = vunpack.c.l.b16 %v108
  %v550 = vunpack.c.l.b16 %v109
  %v551 = vunpack.c.l.b16 %v110
  %v552 = vunpack.c.l.b16 %v111
  %v553 = vunpack.c.l.b16 %v112
  %v554 = vunpack.c.l.b16 %v113
  %v555 = vunpack.c.l.b16 %v114
  %v556 = vunpack.c.l.b16 %v115
  %v557 = vunpack.c.l.b16 %v116
  %v558 = vunpack.c.l.b16 %v117
  %v559 = vunpack.c.l.b16 %v118
  %v560 = vunpack.c.l.b16 %v119
  %v561 = vunpack.c.l.b16 %v120
  %v562 = vpack.c.b16 %v531, %v530
  %v563 = vpack.c.b16 %v533, %v532
  %v564 = vpack.c.b16 %v535, %v534
  %v565 = vpack.c.b16 %v537, %v536
  %v566 = vpack.c.b16 %v539, %v538
  %v567 = vpack.c.b16 %v541, %v540
  %v568 = vpack.c.b16 %v543, %v542
  %v569 = vpack.c.b16 %v545, %v544
  %v570 = vpack.c.b16 %v547, %v546
  %v571 = vpack.c.b16 %v549, %v548
  %v572 = vpack.c.b16 %v551, %v550
  %v573 = vpack.c.b16 %v553, %v552
  %v574 = vpack.c.b16 %v555, %v554
  %v575 = vpack.c.b16 %v557, %v556
  %v576 = vpack.c.b16 %v559, %v558
  %v577 = vpack.c.b16 %v561, %v560
  %594 = vmatprep.subr.bf16.mxu0 0
  %595 = vmatpush1.bf16.msra.mxu0 %v569
  %596 = vmatprep.subr.bf16.mxu0 0
  %597 = vmatpush1.bf16.msra.mxu0 %v568
  %598 = vmatprep.subr.bf16.mxu0 0
  %599 = vmatpush1.bf16.msra.mxu0 %v567
  %600 = vmatprep.subr.bf16.mxu0 0
  %601 = vmatpush1.bf16.msra.mxu0 %v566
  %602 = vmatprep.subr.bf16.mxu0 0
  %603 = vmatpush1.bf16.msra.mxu0 %v565
  %604 = vmatprep.subr.bf16.mxu0 0
  %605 = vmatpush1.bf16.msra.mxu0 %v564
  %606 = vmatprep.subr.bf16.mxu0 0
  %607 = vmatpush1.bf16.msra.mxu0 %v563
  %608 = vmatprep.subr.bf16.mxu0 0
  %609 = vmatpush1.bf16.msra.mxu0 %v562
  %610 = vmatprep.subr.bf16.mxu0 0
  %611 = vmatpush2.bf16.msra.mxu0 %v577
  %612 = vmatprep.subr.bf16.mxu0 0
  %613 = vmatpush2.bf16.msra.mxu0 %v576
  %614 = vmatprep.subr.bf16.mxu0 0
  %615 = vmatpush2.bf16.msra.mxu0 %v575
  %616 = vmatprep.subr.bf16.mxu0 0
  %617 = vmatpush2.bf16.msra.mxu0 %v574
  %618 = vmatprep.subr.bf16.mxu0 0
  %619 = vmatpush2.bf16.msra.mxu0 %v573
  %620 = vmatprep.subr.bf16.mxu0 0
  %621 = vmatpush2.bf16.msra.mxu0 %v572
  %622 = vmatprep.subr.bf16.mxu0 0
  %623 = vmatpush2.bf16.msra.mxu0 %v571
  %624 = vmatprep.subr.bf16.mxu0 0
  %625 = vmatpush2.bf16.msra.mxu0 %v570
  %626 = vmatprep.mubr.bf16.mxu0 %v351
  %627 = vmatmul.mubr.bf16.gmra.mxu0 %v350
  %v628 = vpop.f32.mrf.mxu0
  %v629 = vadd.f32 %v126, %v628
  %v630 = vpop.f32.mrf.mxu0
  %v631 = vpop.f32.mrf.mxu0
  %v632 = vadd.f32 %v126, %v631
  %v633 = vpop.f32.mrf.mxu0
  %634 = vmatprep.mubr.bf16.mxu0 %v353
  %635 = vmatmul.mubr.bf16.gmra.mxu0 %v352
  %v636 = vpop.f32.mrf.mxu0
  %v637 = vadd.f32 %v126, %v636
  %v638 = vpop.f32.mrf.mxu0
  %v639 = vpop.f32.mrf.mxu0
  %v640 = vadd.f32 %v126, %v639
  %v641 = vpop.f32.mrf.mxu0
  %642 = vmatprep.mubr.bf16.mxu0 %v355
  %643 = vmatmul.mubr.bf16.gmra.mxu0 %v354
  %v644 = vpop.f32.mrf.mxu0
  %v645 = vadd.f32 %v126, %v644
  %v646 = vpop.f32.mrf.mxu0
  %v647 = vpop.f32.mrf.mxu0
  %v648 = vadd.f32 %v126, %v647
  %v649 = vpop.f32.mrf.mxu0
  %650 = vmatprep.mubr.bf16.mxu0 %v357
  %651 = vmatmul.mubr.bf16.gmra.mxu0 %v356
  %v652 = vpop.f32.mrf.mxu0
  %v653 = vadd.f32 %v126, %v652
  %v654 = vpop.f32.mrf.mxu0
  %v655 = vpop.f32.mrf.mxu0
  %v656 = vadd.f32 %v126, %v655
  %v657 = vpop.f32.mrf.mxu0
  %658 = vmatprep.mubr.bf16.mxu0 %v359
  %659 = vmatmul.mubr.bf16.gmra.mxu0 %v358
  %v660 = vpop.f32.mrf.mxu0
  %v661 = vadd.f32 %v126, %v660
  %v662 = vpop.f32.mrf.mxu0
  %v663 = vpop.f32.mrf.mxu0
  %v664 = vadd.f32 %v126, %v663
  %v665 = vpop.f32.mrf.mxu0
  %666 = vmatprep.mubr.bf16.mxu0 %v361
  %667 = vmatmul.mubr.bf16.gmra.mxu0 %v360
  %v668 = vpop.f32.mrf.mxu0
  %v669 = vadd.f32 %v126, %v668
  %v670 = vpop.f32.mrf.mxu0
  %v671 = vpop.f32.mrf.mxu0
  %v672 = vadd.f32 %v126, %v671
  %v673 = vpop.f32.mrf.mxu0
  %674 = vmatprep.mubr.bf16.mxu0 %v363
  %675 = vmatmul.mubr.bf16.gmra.mxu0 %v362
  %v676 = vpop.f32.mrf.mxu0
  %v677 = vadd.f32 %v126, %v676
  %v678 = vpop.f32.mrf.mxu0
  %v679 = vpop.f32.mrf.mxu0
  %v680 = vadd.f32 %v126, %v679
  %v681 = vpop.f32.mrf.mxu0
  %682 = vmatprep.mubr.bf16.mxu0 %v365
  %683 = vmatmul.mubr.bf16.gmra.mxu0 %v364
  %v684 = vpop.f32.mrf.mxu0
  %v685 = vadd.f32 %v126, %v684
  %v686 = vpop.f32.mrf.mxu0
  %v687 = vpop.f32.mrf.mxu0
  %v688 = vadd.f32 %v126, %v687
  %v689 = vpop.f32.mrf.mxu0
  %690 = vmatprep.mubr.bf16.mxu0 %v367
  %691 = vmatmul.mubr.bf16.gmra.mxu0 %v366
  %v692 = vpop.f32.mrf.mxu0
  %v693 = vadd.f32 %v126, %v692
  %v694 = vpop.f32.mrf.mxu0
  %v695 = vpop.f32.mrf.mxu0
  %v696 = vadd.f32 %v126, %v695
  %v697 = vpop.f32.mrf.mxu0
  %698 = vmatprep.mubr.bf16.mxu0 %v369
  %699 = vmatmul.mubr.bf16.gmra.mxu0 %v368
  %v700 = vpop.f32.mrf.mxu0
  %v701 = vadd.f32 %v126, %v700
  %v702 = vpop.f32.mrf.mxu0
  %v703 = vpop.f32.mrf.mxu0
  %v704 = vadd.f32 %v126, %v703
  %v705 = vpop.f32.mrf.mxu0
  %706 = vmatprep.mubr.bf16.mxu0 %v371
  %707 = vmatmul.mubr.bf16.gmra.mxu0 %v370
  %v708 = vpop.f32.mrf.mxu0
  %v709 = vadd.f32 %v126, %v708
  %v710 = vpop.f32.mrf.mxu0
  %v711 = vpop.f32.mrf.mxu0
  %v712 = vadd.f32 %v126, %v711
  %v713 = vpop.f32.mrf.mxu0
  %714 = vmatprep.mubr.bf16.mxu0 %v373
  %715 = vmatmul.mubr.bf16.gmra.mxu0 %v372
  %v716 = vpop.f32.mrf.mxu0
  %v717 = vadd.f32 %v126, %v716
  %v718 = vpop.f32.mrf.mxu0
  %v719 = vpop.f32.mrf.mxu0
  %v720 = vadd.f32 %v126, %v719
  %v721 = vpop.f32.mrf.mxu0
  %722 = vmatprep.mubr.bf16.mxu0 %v375
  %723 = vmatmul.mubr.bf16.gmra.mxu0 %v374
  %v724 = vpop.f32.mrf.mxu0
  %v725 = vadd.f32 %v126, %v724
  %v726 = vpop.f32.mrf.mxu0
  %v727 = vpop.f32.mrf.mxu0
  %v728 = vadd.f32 %v126, %v727
  %v729 = vpop.f32.mrf.mxu0
  %730 = vmatprep.mubr.bf16.mxu0 %v377
  %731 = vmatmul.mubr.bf16.gmra.mxu0 %v376
  %v732 = vpop.f32.mrf.mxu0
  %v733 = vadd.f32 %v126, %v732
  %v734 = vpop.f32.mrf.mxu0
  %v735 = vpop.f32.mrf.mxu0
  %v736 = vadd.f32 %v126, %v735
  %v737 = vpop.f32.mrf.mxu0
  %738 = vmatprep.mubr.bf16.mxu0 %v379
  %739 = vmatmul.mubr.bf16.gmra.mxu0 %v378
  %v740 = vpop.f32.mrf.mxu0
  %v741 = vadd.f32 %v126, %v740
  %v742 = vpop.f32.mrf.mxu0
  %v743 = vpop.f32.mrf.mxu0
  %v744 = vadd.f32 %v126, %v743
  %v745 = vpop.f32.mrf.mxu0
  %746 = vmatprep.mubr.bf16.mxu0 %v381
  %747 = vmatmul.mubr.bf16.gmra.mxu0 %v380
  %v748 = vpop.f32.mrf.mxu0
  %v749 = vadd.f32 %v126, %v748
  %v750 = vpop.f32.mrf.mxu0
  %v751 = vpop.f32.mrf.mxu0
  %v752 = vadd.f32 %v126, %v751
  %v753 = vpop.f32.mrf.mxu0
  %754 = vmatprep.mubr.bf16.mxu0 %v383
  %755 = vmatmul.mubr.bf16.gmra.mxu0 %v382
  %v756 = vpop.f32.mrf.mxu0
  %v757 = vadd.f32 %v126, %v756
  %v758 = vpop.f32.mrf.mxu0
  %v759 = vpop.f32.mrf.mxu0
  %v760 = vadd.f32 %v126, %v759
  %v761 = vpop.f32.mrf.mxu0
  %762 = vmatprep.mubr.bf16.mxu0 %v385
  %763 = vmatmul.mubr.bf16.gmra.mxu0 %v384
  %v764 = vpop.f32.mrf.mxu0
  %v765 = vadd.f32 %v126, %v764
  %v766 = vpop.f32.mrf.mxu0
  %v767 = vpop.f32.mrf.mxu0
  %v768 = vadd.f32 %v126, %v767
  %v769 = vpop.f32.mrf.mxu0
  %770 = vmatprep.mubr.bf16.mxu0 %v387
  %771 = vmatmul.mubr.bf16.gmra.mxu0 %v386
  %v772 = vpop.f32.mrf.mxu0
  %v773 = vadd.f32 %v126, %v772
  %v774 = vpop.f32.mrf.mxu0
  %v775 = vpop.f32.mrf.mxu0
  %v776 = vadd.f32 %v126, %v775
  %v777 = vpop.f32.mrf.mxu0
  %778 = vmatprep.mubr.bf16.mxu0 %v389
  %779 = vmatmul.mubr.bf16.gmra.mxu0 %v388
  %v780 = vpop.f32.mrf.mxu0
  %v781 = vadd.f32 %v126, %v780
  %v782 = vpop.f32.mrf.mxu0
  %v783 = vpop.f32.mrf.mxu0
  %v784 = vadd.f32 %v126, %v783
  %v785 = vpop.f32.mrf.mxu0
  %786 = vmatprep.mubr.bf16.mxu0 %v391
  %787 = vmatmul.mubr.bf16.gmra.mxu0 %v390
  %v788 = vpop.f32.mrf.mxu0
  %v789 = vadd.f32 %v126, %v788
  %v790 = vpop.f32.mrf.mxu0
  %v791 = vpop.f32.mrf.mxu0
  %v792 = vadd.f32 %v126, %v791
  %v793 = vpop.f32.mrf.mxu0
  %794 = vmatprep.mubr.bf16.mxu0 %v393
  %795 = vmatmul.mubr.bf16.gmra.mxu0 %v392
  %v796 = vpop.f32.mrf.mxu0
  %v797 = vadd.f32 %v126, %v796
  %v798 = vpop.f32.mrf.mxu0
  %v799 = vpop.f32.mrf.mxu0
  %v800 = vadd.f32 %v126, %v799
  %v801 = vpop.f32.mrf.mxu0
  %802 = vmatprep.mubr.bf16.mxu0 %v395
  %803 = vmatmul.mubr.bf16.gmra.mxu0 %v394
  %v804 = vpop.f32.mrf.mxu0
  %v805 = vadd.f32 %v126, %v804
  %v806 = vpop.f32.mrf.mxu0
  %v807 = vpop.f32.mrf.mxu0
  %v808 = vadd.f32 %v126, %v807
  %v809 = vpop.f32.mrf.mxu0
  %810 = vmatprep.mubr.bf16.mxu0 %v397
  %811 = vmatmul.mubr.bf16.gmra.mxu0 %v396
  %v812 = vpop.f32.mrf.mxu0
  %v813 = vadd.f32 %v126, %v812
  %v814 = vpop.f32.mrf.mxu0
  %v815 = vpop.f32.mrf.mxu0
  %v816 = vadd.f32 %v126, %v815
  %v817 = vpop.f32.mrf.mxu0
  %818 = vmatprep.mubr.bf16.mxu0 %v399
  %819 = vmatmul.mubr.bf16.gmra.mxu0 %v398
  %v820 = vpop.f32.mrf.mxu0
  %v821 = vadd.f32 %v126, %v820
  %v822 = vpop.f32.mrf.mxu0
  %v823 = vpop.f32.mrf.mxu0
  %v824 = vadd.f32 %v126, %v823
  %v825 = vpop.f32.mrf.mxu0
  %826 = vmatprep.mubr.bf16.mxu0 %v401
  %827 = vmatmul.mubr.bf16.gmra.mxu0 %v400
  %v828 = vpop.f32.mrf.mxu0
  %v829 = vadd.f32 %v126, %v828
  %v830 = vpop.f32.mrf.mxu0
  %v831 = vpop.f32.mrf.mxu0
  %v832 = vadd.f32 %v126, %v831
  %v833 = vpop.f32.mrf.mxu0
  %834 = vmatprep.mubr.bf16.mxu0 %v403
  %835 = vmatmul.mubr.bf16.gmra.mxu0 %v402
  %v836 = vpop.f32.mrf.mxu0
  %v837 = vadd.f32 %v126, %v836
  %v838 = vpop.f32.mrf.mxu0
  %v839 = vpop.f32.mrf.mxu0
  %v840 = vadd.f32 %v126, %v839
  %v841 = vpop.f32.mrf.mxu0
  %842 = vmatprep.mubr.bf16.mxu0 %v405
  %843 = vmatmul.mubr.bf16.gmra.mxu0 %v404
  %v844 = vpop.f32.mrf.mxu0
  %v845 = vadd.f32 %v126, %v844
  %v846 = vpop.f32.mrf.mxu0
  %v847 = vpop.f32.mrf.mxu0
  %v848 = vadd.f32 %v126, %v847
  %v849 = vpop.f32.mrf.mxu0
  %850 = vmatprep.mubr.bf16.mxu0 %v407
  %851 = vmatmul.mubr.bf16.gmra.mxu0 %v406
  %v852 = vpop.f32.mrf.mxu0
  %v853 = vadd.f32 %v126, %v852
  %v854 = vpop.f32.mrf.mxu0
  %v855 = vpop.f32.mrf.mxu0
  %v856 = vadd.f32 %v126, %v855
  %v857 = vpop.f32.mrf.mxu0
  %858 = vmatprep.mubr.bf16.mxu0 %v409
  %859 = vmatmul.mubr.bf16.gmra.mxu0 %v408
  %v860 = vpop.f32.mrf.mxu0
  %v861 = vadd.f32 %v126, %v860
  %v862 = vpop.f32.mrf.mxu0
  %v863 = vpop.f32.mrf.mxu0
  %v864 = vadd.f32 %v126, %v863
  %v865 = vpop.f32.mrf.mxu0
  %866 = vmatprep.mubr.bf16.mxu0 %v411
  %867 = vmatmul.mubr.bf16.gmra.mxu0 %v410
  %v868 = vpop.f32.mrf.mxu0
  %v869 = vadd.f32 %v126, %v868
  %v870 = vpop.f32.mrf.mxu0
  %v871 = vpop.f32.mrf.mxu0
  %v872 = vadd.f32 %v126, %v871
  %v873 = vpop.f32.mrf.mxu0
  %874 = vmatprep.mubr.bf16.mxu0 %v413
  %875 = vmatmul.mubr.bf16.gmra.mxu0 %v412
  %v876 = vpop.f32.mrf.mxu0
  %v877 = vadd.f32 %v126, %v876
  %v878 = vpop.f32.mrf.mxu0
  %v879 = vpop.f32.mrf.mxu0
  %v880 = vadd.f32 %v126, %v879
  %v881 = vpop.f32.mrf.mxu0
  %882 = vmatprep.mubr.bf16.mxu0 %v415
  %883 = vmatmul.mubr.bf16.gmra.mxu0 %v414
  %v884 = vpop.f32.mrf.mxu0
  %v885 = vadd.f32 %v126, %v884
  %v886 = vpop.f32.mrf.mxu0
  %v887 = vpop.f32.mrf.mxu0
  %v888 = vadd.f32 %v126, %v887
  %v889 = vpop.f32.mrf.mxu0
  %890 = vmatprep.mubr.bf16.mxu0 %v417
  %891 = vmatmul.mubr.bf16.gmra.mxu0 %v416
  %v892 = vpop.f32.mrf.mxu0
  %v893 = vadd.f32 %v126, %v892
  %v894 = vpop.f32.mrf.mxu0
  %v895 = vpop.f32.mrf.mxu0
  %v896 = vadd.f32 %v126, %v895
  %v897 = vpop.f32.mrf.mxu0
  %898 = vmatprep.mubr.bf16.mxu0 %v419
  %899 = vmatmul.mubr.bf16.gmra.mxu0 %v418
  %v900 = vpop.f32.mrf.mxu0
  %v901 = vadd.f32 %v126, %v900
  %v902 = vpop.f32.mrf.mxu0
  %v903 = vpop.f32.mrf.mxu0
  %v904 = vadd.f32 %v126, %v903
  %v905 = vpop.f32.mrf.mxu0
  %906 = vmatprep.mubr.bf16.mxu0 %v421
  %907 = vmatmul.mubr.bf16.gmra.mxu0 %v420
  %v908 = vpop.f32.mrf.mxu0
  %v909 = vadd.f32 %v126, %v908
  %v910 = vpop.f32.mrf.mxu0
  %v911 = vpop.f32.mrf.mxu0
  %v912 = vadd.f32 %v126, %v911
  %v913 = vpop.f32.mrf.mxu0
  %914 = vmatprep.mubr.bf16.mxu0 %v423
  %915 = vmatmul.mubr.bf16.gmra.mxu0 %v422
  %v916 = vpop.f32.mrf.mxu0
  %v917 = vadd.f32 %v126, %v916
  %v918 = vpop.f32.mrf.mxu0
  %v919 = vpop.f32.mrf.mxu0
  %v920 = vadd.f32 %v126, %v919
  %v921 = vpop.f32.mrf.mxu0
  %922 = vdwg.mxu0
  %v923 = vand.u32 2147483647, %v629
  %v924 = vand.u32 2147483647, %v632
  %v925 = vand.u32 2147483647, %v637
  %v926 = vand.u32 2147483647, %v640
  %v927 = vand.u32 2147483647, %v645
  %v928 = vand.u32 2147483647, %v648
  %v929 = vand.u32 2147483647, %v653
  %v930 = vand.u32 2147483647, %v656
  %v931 = vand.u32 2147483647, %v661
  %v932 = vand.u32 2147483647, %v664
  %v933 = vand.u32 2147483647, %v669
  %v934 = vand.u32 2147483647, %v672
  %v935 = vand.u32 2147483647, %v677
  %v936 = vand.u32 2147483647, %v680
  %v937 = vand.u32 2147483647, %v685
  %v938 = vand.u32 2147483647, %v688
  %v939 = vand.u32 2147483647, %v693
  %v940 = vand.u32 2147483647, %v696
  %v941 = vand.u32 2147483647, %v701
  %v942 = vand.u32 2147483647, %v704
  %v943 = vand.u32 2147483647, %v709
  %v944 = vand.u32 2147483647, %v712
  %v945 = vand.u32 2147483647, %v717
  %v946 = vand.u32 2147483647, %v720
  %v947 = vand.u32 2147483647, %v725
  %v948 = vand.u32 2147483647, %v728
  %v949 = vand.u32 2147483647, %v733
  %v950 = vand.u32 2147483647, %v736
  %v951 = vand.u32 2147483647, %v741
  %v952 = vand.u32 2147483647, %v744
  %v953 = vand.u32 2147483647, %v749
  %v954 = vand.u32 2147483647, %v752
  %v955 = vand.u32 2147483647, %v757
  %v956 = vand.u32 2147483647, %v760
  %v957 = vand.u32 2147483647, %v765
  %v958 = vand.u32 2147483647, %v768
  %v959 = vand.u32 2147483647, %v773
  %v960 = vand.u32 2147483647, %v776
  %v961 = vand.u32 2147483647, %v781
  %v962 = vand.u32 2147483647, %v784
  %v963 = vand.u32 2147483647, %v789
  %v964 = vand.u32 2147483647, %v792
  %v965 = vand.u32 2147483647, %v797
  %v966 = vand.u32 2147483647, %v800
  %v967 = vand.u32 2147483647, %v805
  %v968 = vand.u32 2147483647, %v808
  %v969 = vand.u32 2147483647, %v813
  %v970 = vand.u32 2147483647, %v816
  %v971 = vand.u32 2147483647, %v821
  %v972 = vand.u32 2147483647, %v824
  %v973 = vand.u32 2147483647, %v829
  %v974 = vand.u32 2147483647, %v832
  %v975 = vand.u32 2147483647, %v837
  %v976 = vand.u32 2147483647, %v840
  %v977 = vand.u32 2147483647, %v845
  %v978 = vand.u32 2147483647, %v848
  %v979 = vand.u32 2147483647, %v853
  %v980 = vand.u32 2147483647, %v856
  %v981 = vand.u32 2147483647, %v861
  %v982 = vand.u32 2147483647, %v864
  %v983 = vand.u32 2147483647, %v869
  %v984 = vand.u32 2147483647, %v872
  %v985 = vand.u32 2147483647, %v877
  %v986 = vand.u32 2147483647, %v880
  %v987 = vand.u32 2147483647, %v885
  %v988 = vand.u32 2147483647, %v888
  %v989 = vand.u32 2147483647, %v893
  %v990 = vand.u32 2147483647, %v896
  %v991 = vand.u32 2147483647, %v901
  %v992 = vand.u32 2147483647, %v904
  %v993 = vand.u32 2147483647, %v909
  %v994 = vand.u32 2147483647, %v912
  %v995 = vand.u32 2147483647, %v917
  %v996 = vand.u32 2147483647, %v920
  %v997 = vsub.f32 0.0, %v923
  %v998 = vsub.f32 0.0, %v924
  %v999 = vsub.f32 0.0, %v925
  %v1000 = vsub.f32 0.0, %v926
  %v1001 = vsub.f32 0.0, %v927
  %v1002 = vsub.f32 0.0, %v928
  %v1003 = vsub.f32 0.0, %v929
  %v1004 = vsub.f32 0.0, %v930
  %v1005 = vsub.f32 0.0, %v931
  %v1006 = vsub.f32 0.0, %v932
  %v1007 = vsub.f32 0.0, %v933
  %v1008 = vsub.f32 0.0, %v934
  %v1009 = vsub.f32 0.0, %v935
  %v1010 = vsub.f32 0.0, %v936
  %v1011 = vsub.f32 0.0, %v937
  %v1012 = vsub.f32 0.0, %v938
  %v1013 = vsub.f32 0.0, %v939
  %v1014 = vsub.f32 0.0, %v940
  %v1015 = vsub.f32 0.0, %v941
  %v1016 = vsub.f32 0.0, %v942
  %v1017 = vsub.f32 0.0, %v943
  %v1018 = vsub.f32 0.0, %v944
  %v1019 = vsub.f32 0.0, %v945
  %v1020 = vsub.f32 0.0, %v946
  %v1021 = vsub.f32 0.0, %v947
  %v1022 = vsub.f32 0.0, %v948
  %v1023 = vsub.f32 0.0, %v949
  %v1024 = vsub.f32 0.0, %v950
  %v1025 = vsub.f32 0.0, %v951
  %v1026 = vsub.f32 0.0, %v952
  %v1027 = vsub.f32 0.0, %v953
  %v1028 = vsub.f32 0.0, %v954
  %v1029 = vsub.f32 0.0, %v955
  %v1030 = vsub.f32 0.0, %v956
  %v1031 = vsub.f32 0.0, %v957
  %v1032 = vsub.f32 0.0, %v958
  %v1033 = vsub.f32 0.0, %v959
  %v1034 = vsub.f32 0.0, %v960
  %v1035 = vsub.f32 0.0, %v961
  %v1036 = vsub.f32 0.0, %v962
  %v1037 = vsub.f32 0.0, %v963
  %v1038 = vsub.f32 0.0, %v964
  %v1039 = vsub.f32 0.0, %v965
  %v1040 = vsub.f32 0.0, %v966
  %v1041 = vsub.f32 0.0, %v967
  %v1042 = vsub.f32 0.0, %v968
  %v1043 = vsub.f32 0.0, %v969
  %v1044 = vsub.f32 0.0, %v970
  %v1045 = vsub.f32 0.0, %v971
  %v1046 = vsub.f32 0.0, %v972
  %v1047 = vsub.f32 0.0, %v973
  %v1048 = vsub.f32 0.0, %v974
  %v1049 = vsub.f32 0.0, %v975
  %v1050 = vsub.f32 0.0, %v976
  %v1051 = vsub.f32 0.0, %v977
  %v1052 = vsub.f32 0.0, %v978
  %v1053 = vsub.f32 0.0, %v979
  %v1054 = vsub.f32 0.0, %v980
  %v1055 = vsub.f32 0.0, %v981
  %v1056 = vsub.f32 0.0, %v982
  %v1057 = vsub.f32 0.0, %v983
  %v1058 = vsub.f32 0.0, %v984
  %v1059 = vsub.f32 0.0, %v985
  %v1060 = vsub.f32 0.0, %v986
  %v1061 = vsub.f32 0.0, %v987
  %v1062 = vsub.f32 0.0, %v988
  %v1063 = vsub.f32 0.0, %v989
  %v1064 = vsub.f32 0.0, %v990
  %v1065 = vsub.f32 0.0, %v991
  %v1066 = vsub.f32 0.0, %v992
  %v1067 = vsub.f32 0.0, %v993
  %v1068 = vsub.f32 0.0, %v994
  %v1069 = vsub.f32 0.0, %v995
  %v1070 = vsub.f32 0.0, %v996
  %v1071 = vmul.f32 %v997, 1.442695
  %v1072 = vpow.pop %v1071
  %v1073 = vmul.f32 %v998, 1.442695
  %v1074 = vpow.pop %v1073
  %v1075 = vmul.f32 %v999, 1.442695
  %v1076 = vpow.pop %v1075
  %v1077 = vmul.f32 %v1000, 1.442695
  %v1078 = vpow.pop %v1077
  %v1079 = vmul.f32 %v1001, 1.442695
  %v1080 = vpow.pop %v1079
  %v1081 = vmul.f32 %v1002, 1.442695
  %v1082 = vpow.pop %v1081
  %v1083 = vmul.f32 %v1003, 1.442695
  %v1084 = vpow.pop %v1083
  %v1085 = vmul.f32 %v1004, 1.442695
  %v1086 = vpow.pop %v1085
  %v1087 = vmul.f32 %v1005, 1.442695
  %v1088 = vpow.pop %v1087
  %v1089 = vmul.f32 %v1006, 1.442695
  %v1090 = vpow.pop %v1089
  %v1091 = vmul.f32 %v1007, 1.442695
  %v1092 = vpow.pop %v1091
  %v1093 = vmul.f32 %v1008, 1.442695
  %v1094 = vpow.pop %v1093
  %v1095 = vmul.f32 %v1009, 1.442695
  %v1096 = vpow.pop %v1095
  %v1097 = vmul.f32 %v1010, 1.442695
  %v1098 = vpow.pop %v1097
  %v1099 = vmul.f32 %v1011, 1.442695
  %v1100 = vpow.pop %v1099
  %v1101 = vmul.f32 %v1012, 1.442695
  %v1102 = vpow.pop %v1101
  %v1103 = vmul.f32 %v1013, 1.442695
  %v1104 = vpow.pop %v1103
  %v1105 = vmul.f32 %v1014, 1.442695
  %v1106 = vpow.pop %v1105
  %v1107 = vmul.f32 %v1015, 1.442695
  %v1108 = vpow.pop %v1107
  %v1109 = vmul.f32 %v1016, 1.442695
  %v1110 = vpow.pop %v1109
  %v1111 = vmul.f32 %v1017, 1.442695
  %v1112 = vpow.pop %v1111
  %v1113 = vmul.f32 %v1018, 1.442695
  %v1114 = vpow.pop %v1113
  %v1115 = vmul.f32 %v1019, 1.442695
  %v1116 = vpow.pop %v1115
  %v1117 = vmul.f32 %v1020, 1.442695
  %v1118 = vpow.pop %v1117
  %v1119 = vmul.f32 %v1021, 1.442695
  %v1120 = vpow.pop %v1119
  %v1121 = vmul.f32 %v1022, 1.442695
  %v1122 = vpow.pop %v1121
  %v1123 = vmul.f32 %v1023, 1.442695
  %v1124 = vpow.pop %v1123
  %v1125 = vmul.f32 %v1024, 1.442695
  %v1126 = vpow.pop %v1125
  %v1127 = vmul.f32 %v1025, 1.442695
  %v1128 = vpow.pop %v1127
  %v1129 = vmul.f32 %v1026, 1.442695
  %v1130 = vpow.pop %v1129
  %v1131 = vmul.f32 %v1027, 1.442695
  %v1132 = vpow.pop %v1131
  %v1133 = vmul.f32 %v1028, 1.442695
  %v1134 = vpow.pop %v1133
  %v1135 = vmul.f32 %v1029, 1.442695
  %v1136 = vpow.pop %v1135
  %v1137 = vmul.f32 %v1030, 1.442695
  %v1138 = vpow.pop %v1137
  %v1139 = vmul.f32 %v1031, 1.442695
  %v1140 = vpow.pop %v1139
  %v1141 = vmul.f32 %v1032, 1.442695
  %v1142 = vpow.pop %v1141
  %v1143 = vmul.f32 %v1033, 1.442695
  %v1144 = vpow.pop %v1143
  %v1145 = vmul.f32 %v1034, 1.442695
  %v1146 = vpow.pop %v1145
  %v1147 = vmul.f32 %v1035, 1.442695
  %v1148 = vpow.pop %v1147
  %v1149 = vmul.f32 %v1036, 1.442695
  %v1150 = vpow.pop %v1149
  %v1151 = vmul.f32 %v1037, 1.442695
  %v1152 = vpow.pop %v1151
  %v1153 = vmul.f32 %v1038, 1.442695
  %v1154 = vpow.pop %v1153
  %v1155 = vmul.f32 %v1039, 1.442695
  %v1156 = vpow.pop %v1155
  %v1157 = vmul.f32 %v1040, 1.442695
  %v1158 = vpow.pop %v1157
  %v1159 = vmul.f32 %v1041, 1.442695
  %v1160 = vpow.pop %v1159
  %v1161 = vmul.f32 %v1042, 1.442695
  %v1162 = vpow.pop %v1161
  %v1163 = vmul.f32 %v1043, 1.442695
  %v1164 = vpow.pop %v1163
  %v1165 = vmul.f32 %v1044, 1.442695
  %v1166 = vpow.pop %v1165
  %v1167 = vmul.f32 %v1045, 1.442695
  %v1168 = vpow.pop %v1167
  %v1169 = vmul.f32 %v1046, 1.442695
  %v1170 = vpow.pop %v1169
  %v1171 = vmul.f32 %v1047, 1.442695
  %v1172 = vpow.pop %v1171
  %v1173 = vmul.f32 %v1048, 1.442695
  %v1174 = vpow.pop %v1173
  %v1175 = vmul.f32 %v1049, 1.442695
  %v1176 = vpow.pop %v1175
  %v1177 = vmul.f32 %v1050, 1.442695
  %v1178 = vpow.pop %v1177
  %v1179 = vmul.f32 %v1051, 1.442695
  %v1180 = vpow.pop %v1179
  %v1181 = vmul.f32 %v1052, 1.442695
  %v1182 = vpow.pop %v1181
  %v1183 = vmul.f32 %v1053, 1.442695
  %v1184 = vpow.pop %v1183
  %v1185 = vmul.f32 %v1054, 1.442695
  %v1186 = vpow.pop %v1185
  %v1187 = vmul.f32 %v1055, 1.442695
  %v1188 = vpow.pop %v1187
  %v1189 = vmul.f32 %v1056, 1.442695
  %v1190 = vpow.pop %v1189
  %v1191 = vmul.f32 %v1057, 1.442695
  %v1192 = vpow.pop %v1191
  %v1193 = vmul.f32 %v1058, 1.442695
  %v1194 = vpow.pop %v1193
  %v1195 = vmul.f32 %v1059, 1.442695
  %v1196 = vpow.pop %v1195
  %v1197 = vmul.f32 %v1060, 1.442695
  %v1198 = vpow.pop %v1197
  %v1199 = vmul.f32 %v1061, 1.442695
  %v1200 = vpow.pop %v1199
  %v1201 = vmul.f32 %v1062, 1.442695
  %v1202 = vpow.pop %v1201
  %v1203 = vmul.f32 %v1063, 1.442695
  %v1204 = vpow.pop %v1203
  %v1205 = vmul.f32 %v1064, 1.442695
  %v1206 = vpow.pop %v1205
  %v1207 = vmul.f32 %v1065, 1.442695
  %v1208 = vpow.pop %v1207
  %v1209 = vmul.f32 %v1066, 1.442695
  %v1210 = vpow.pop %v1209
  %v1211 = vmul.f32 %v1067, 1.442695
  %v1212 = vpow.pop %v1211
  %v1213 = vmul.f32 %v1068, 1.442695
  %v1214 = vpow.pop %v1213
  %v1215 = vmul.f32 %v1069, 1.442695
  %v1216 = vpow.pop %v1215
  %v1217 = vmul.f32 %v1070, 1.442695
  %v1218 = vpow.pop %v1217
  %vm1219 = vcmp.ge.f32.partialorder %v629, 0.0
  %vm1220 = vcmp.ge.f32.partialorder %v632, 0.0
  %vm1221 = vcmp.ge.f32.partialorder %v637, 0.0
  %vm1222 = vcmp.ge.f32.partialorder %v640, 0.0
  %vm1223 = vcmp.ge.f32.partialorder %v645, 0.0
  %vm1224 = vcmp.ge.f32.partialorder %v648, 0.0
  %vm1225 = vcmp.ge.f32.partialorder %v653, 0.0
  %vm1226 = vcmp.ge.f32.partialorder %v656, 0.0
  %vm1227 = vcmp.ge.f32.partialorder %v661, 0.0
  %vm1228 = vcmp.ge.f32.partialorder %v664, 0.0
  %vm1229 = vcmp.ge.f32.partialorder %v669, 0.0
  %vm1230 = vcmp.ge.f32.partialorder %v672, 0.0
  %vm1231 = vcmp.ge.f32.partialorder %v677, 0.0
  %vm1232 = vcmp.ge.f32.partialorder %v680, 0.0
  %vm1233 = vcmp.ge.f32.partialorder %v685, 0.0
  %vm1234 = vcmp.ge.f32.partialorder %v688, 0.0
  %vm1235 = vcmp.ge.f32.partialorder %v693, 0.0
  %vm1236 = vcmp.ge.f32.partialorder %v696, 0.0
  %vm1237 = vcmp.ge.f32.partialorder %v701, 0.0
  %vm1238 = vcmp.ge.f32.partialorder %v704, 0.0
  %vm1239 = vcmp.ge.f32.partialorder %v709, 0.0
  %vm1240 = vcmp.ge.f32.partialorder %v712, 0.0
  %vm1241 = vcmp.ge.f32.partialorder %v717, 0.0
  %vm1242 = vcmp.ge.f32.partialorder %v720, 0.0
  %vm1243 = vcmp.ge.f32.partialorder %v725, 0.0
  %vm1244 = vcmp.ge.f32.partialorder %v728, 0.0
  %vm1245 = vcmp.ge.f32.partialorder %v733, 0.0
  %vm1246 = vcmp.ge.f32.partialorder %v736, 0.0
  %vm1247 = vcmp.ge.f32.partialorder %v741, 0.0
  %vm1248 = vcmp.ge.f32.partialorder %v744, 0.0
  %vm1249 = vcmp.ge.f32.partialorder %v749, 0.0
  %vm1250 = vcmp.ge.f32.partialorder %v752, 0.0
  %vm1251 = vcmp.ge.f32.partialorder %v757, 0.0
  %vm1252 = vcmp.ge.f32.partialorder %v760, 0.0
  %vm1253 = vcmp.ge.f32.partialorder %v765, 0.0
  %vm1254 = vcmp.ge.f32.partialorder %v768, 0.0
  %vm1255 = vcmp.ge.f32.partialorder %v773, 0.0
  %vm1256 = vcmp.ge.f32.partialorder %v776, 0.0
  %vm1257 = vcmp.ge.f32.partialorder %v781, 0.0
  %vm1258 = vcmp.ge.f32.partialorder %v784, 0.0
  %vm1259 = vcmp.ge.f32.partialorder %v789, 0.0
  %vm1260 = vcmp.ge.f32.partialorder %v792, 0.0
  %vm1261 = vcmp.ge.f32.partialorder %v797, 0.0
  %vm1262 = vcmp.ge.f32.partialorder %v800, 0.0
  %vm1263 = vcmp.ge.f32.partialorder %v805, 0.0
  %vm1264 = vcmp.ge.f32.partialorder %v808, 0.0
  %vm1265 = vcmp.ge.f32.partialorder %v813, 0.0
  %vm1266 = vcmp.ge.f32.partialorder %v816, 0.0
  %vm1267 = vcmp.ge.f32.partialorder %v821, 0.0
  %vm1268 = vcmp.ge.f32.partialorder %v824, 0.0
  %vm1269 = vcmp.ge.f32.partialorder %v829, 0.0
  %vm1270 = vcmp.ge.f32.partialorder %v832, 0.0
  %vm1271 = vcmp.ge.f32.partialorder %v837, 0.0
  %vm1272 = vcmp.ge.f32.partialorder %v840, 0.0
  %vm1273 = vcmp.ge.f32.partialorder %v845, 0.0
  %vm1274 = vcmp.ge.f32.partialorder %v848, 0.0
  %vm1275 = vcmp.ge.f32.partialorder %v853, 0.0
  %vm1276 = vcmp.ge.f32.partialorder %v856, 0.0
  %vm1277 = vcmp.ge.f32.partialorder %v861, 0.0
  %vm1278 = vcmp.ge.f32.partialorder %v864, 0.0
  %vm1279 = vcmp.ge.f32.partialorder %v869, 0.0
  %vm1280 = vcmp.ge.f32.partialorder %v872, 0.0
  %vm1281 = vcmp.ge.f32.partialorder %v877, 0.0
  %vm1282 = vcmp.ge.f32.partialorder %v880, 0.0
  %vm1283 = vcmp.ge.f32.partialorder %v885, 0.0
  %vm1284 = vcmp.ge.f32.partialorder %v888, 0.0
  %vm1285 = vcmp.ge.f32.partialorder %v893, 0.0
  %vm1286 = vcmp.ge.f32.partialorder %v896, 0.0
  %vm1287 = vcmp.ge.f32.partialorder %v901, 0.0
  %vm1288 = vcmp.ge.f32.partialorder %v904, 0.0
  %vm1289 = vcmp.ge.f32.partialorder %v909, 0.0
  %vm1290 = vcmp.ge.f32.partialorder %v912, 0.0
  %vm1291 = vcmp.ge.f32.partialorder %v917, 0.0
  %vm1292 = vcmp.ge.f32.partialorder %v920, 0.0
  %v1293 = vadd.f32 %v1072, 1.0
  %v1294 = vadd.f32 %v1074, 1.0
  %v1295 = vadd.f32 %v1076, 1.0
  %v1296 = vadd.f32 %v1078, 1.0
  %v1297 = vadd.f32 %v1080, 1.0
  %v1298 = vadd.f32 %v1082, 1.0
  %v1299 = vadd.f32 %v1084, 1.0
  %v1300 = vadd.f32 %v1086, 1.0
  %v1301 = vadd.f32 %v1088, 1.0
  %v1302 = vadd.f32 %v1090, 1.0
  %v1303 = vadd.f32 %v1092, 1.0
  %v1304 = vadd.f32 %v1094, 1.0
  %v1305 = vadd.f32 %v1096, 1.0
  %v1306 = vadd.f32 %v1098, 1.0
  %v1307 = vadd.f32 %v1100, 1.0
  %v1308 = vadd.f32 %v1102, 1.0
  %v1309 = vadd.f32 %v1104, 1.0
  %v1310 = vadd.f32 %v1106, 1.0
  %v1311 = vadd.f32 %v1108, 1.0
  %v1312 = vadd.f32 %v1110, 1.0
  %v1313 = vadd.f32 %v1112, 1.0
  %v1314 = vadd.f32 %v1114, 1.0
  %v1315 = vadd.f32 %v1116, 1.0
  %v1316 = vadd.f32 %v1118, 1.0
  %v1317 = vadd.f32 %v1120, 1.0
  %v1318 = vadd.f32 %v1122, 1.0
  %v1319 = vadd.f32 %v1124, 1.0
  %v1320 = vadd.f32 %v1126, 1.0
  %v1321 = vadd.f32 %v1128, 1.0
  %v1322 = vadd.f32 %v1130, 1.0
  %v1323 = vadd.f32 %v1132, 1.0
  %v1324 = vadd.f32 %v1134, 1.0
  %v1325 = vadd.f32 %v1136, 1.0
  %v1326 = vadd.f32 %v1138, 1.0
  %v1327 = vadd.f32 %v1140, 1.0
  %v1328 = vadd.f32 %v1142, 1.0
  %v1329 = vadd.f32 %v1144, 1.0
  %v1330 = vadd.f32 %v1146, 1.0
  %v1331 = vadd.f32 %v1148, 1.0
  %v1332 = vadd.f32 %v1150, 1.0
  %v1333 = vadd.f32 %v1152, 1.0
  %v1334 = vadd.f32 %v1154, 1.0
  %v1335 = vadd.f32 %v1156, 1.0
  %v1336 = vadd.f32 %v1158, 1.0
  %v1337 = vadd.f32 %v1160, 1.0
  %v1338 = vadd.f32 %v1162, 1.0
  %v1339 = vadd.f32 %v1164, 1.0
  %v1340 = vadd.f32 %v1166, 1.0
  %v1341 = vadd.f32 %v1168, 1.0
  %v1342 = vadd.f32 %v1170, 1.0
  %v1343 = vadd.f32 %v1172, 1.0
  %v1344 = vadd.f32 %v1174, 1.0
  %v1345 = vadd.f32 %v1176, 1.0
  %v1346 = vadd.f32 %v1178, 1.0
  %v1347 = vadd.f32 %v1180, 1.0
  %v1348 = vadd.f32 %v1182, 1.0
  %v1349 = vadd.f32 %v1184, 1.0
  %v1350 = vadd.f32 %v1186, 1.0
  %v1351 = vadd.f32 %v1188, 1.0
  %v1352 = vadd.f32 %v1190, 1.0
  %v1353 = vadd.f32 %v1192, 1.0
  %v1354 = vadd.f32 %v1194, 1.0
  %v1355 = vadd.f32 %v1196, 1.0
  %v1356 = vadd.f32 %v1198, 1.0
  %v1357 = vadd.f32 %v1200, 1.0
  %v1358 = vadd.f32 %v1202, 1.0
  %v1359 = vadd.f32 %v1204, 1.0
  %v1360 = vadd.f32 %v1206, 1.0
  %v1361 = vadd.f32 %v1208, 1.0
  %v1362 = vadd.f32 %v1210, 1.0
  %v1363 = vadd.f32 %v1212, 1.0
  %v1364 = vadd.f32 %v1214, 1.0
  %v1365 = vadd.f32 %v1216, 1.0
  %v1366 = vadd.f32 %v1218, 1.0
  %v1367 = vrcp.pop %v1293
  %v1368 = vmul.f32 1.0, %v1367
  %v1369 = vrcp.pop %v1294
  %v1370 = vmul.f32 1.0, %v1369
  %v1371 = vrcp.pop %v1295
  %v1372 = vmul.f32 1.0, %v1371
  %v1373 = vrcp.pop %v1296
  %v1374 = vmul.f32 1.0, %v1373
  %v1375 = vrcp.pop %v1297
  %v1376 = vmul.f32 1.0, %v1375
  %v1377 = vrcp.pop %v1298
  %v1378 = vmul.f32 1.0, %v1377
  %v1379 = vrcp.pop %v1299
  %v1380 = vmul.f32 1.0, %v1379
  %v1381 = vrcp.pop %v1300
  %v1382 = vmul.f32 1.0, %v1381
  %v1383 = vrcp.pop %v1301
  %v1384 = vmul.f32 1.0, %v1383
  %v1385 = vrcp.pop %v1302
  %v1386 = vmul.f32 1.0, %v1385
  %v1387 = vrcp.pop %v1303
  %v1388 = vmul.f32 1.0, %v1387
  %v1389 = vrcp.pop %v1304
  %v1390 = vmul.f32 1.0, %v1389
  %v1391 = vrcp.pop %v1305
  %v1392 = vmul.f32 1.0, %v1391
  %v1393 = vrcp.pop %v1306
  %v1394 = vmul.f32 1.0, %v1393
  %v1395 = vrcp.pop %v1307
  %v1396 = vmul.f32 1.0, %v1395
  %v1397 = vrcp.pop %v1308
  %v1398 = vmul.f32 1.0, %v1397
  %v1399 = vrcp.pop %v1309
  %v1400 = vmul.f32 1.0, %v1399
  %v1401 = vrcp.pop %v1310
  %v1402 = vmul.f32 1.0, %v1401
  %v1403 = vrcp.pop %v1311
  %v1404 = vmul.f32 1.0, %v1403
  %v1405 = vrcp.pop %v1312
  %v1406 = vmul.f32 1.0, %v1405
  %v1407 = vrcp.pop %v1313
  %v1408 = vmul.f32 1.0, %v1407
  %v1409 = vrcp.pop %v1314
  %v1410 = vmul.f32 1.0, %v1409
  %v1411 = vrcp.pop %v1315
  %v1412 = vmul.f32 1.0, %v1411
  %v1413 = vrcp.pop %v1316
  %v1414 = vmul.f32 1.0, %v1413
  %v1415 = vrcp.pop %v1317
  %v1416 = vmul.f32 1.0, %v1415
  %v1417 = vrcp.pop %v1318
  %v1418 = vmul.f32 1.0, %v1417
  %v1419 = vrcp.pop %v1319
  %v1420 = vmul.f32 1.0, %v1419
  %v1421 = vrcp.pop %v1320
  %v1422 = vmul.f32 1.0, %v1421
  %v1423 = vrcp.pop %v1321
  %v1424 = vmul.f32 1.0, %v1423
  %v1425 = vrcp.pop %v1322
  %v1426 = vmul.f32 1.0, %v1425
  %v1427 = vrcp.pop %v1323
  %v1428 = vmul.f32 1.0, %v1427
  %v1429 = vrcp.pop %v1324
  %v1430 = vmul.f32 1.0, %v1429
  %v1431 = vrcp.pop %v1325
  %v1432 = vmul.f32 1.0, %v1431
  %v1433 = vrcp.pop %v1326
  %v1434 = vmul.f32 1.0, %v1433
  %v1435 = vrcp.pop %v1327
  %v1436 = vmul.f32 1.0, %v1435
  %v1437 = vrcp.pop %v1328
  %v1438 = vmul.f32 1.0, %v1437
  %v1439 = vrcp.pop %v1329
  %v1440 = vmul.f32 1.0, %v1439
  %v1441 = vrcp.pop %v1330
  %v1442 = vmul.f32 1.0, %v1441
  %v1443 = vrcp.pop %v1331
  %v1444 = vmul.f32 1.0, %v1443
  %v1445 = vrcp.pop %v1332
  %v1446 = vmul.f32 1.0, %v1445
  %v1447 = vrcp.pop %v1333
  %v1448 = vmul.f32 1.0, %v1447
  %v1449 = vrcp.pop %v1334
  %v1450 = vmul.f32 1.0, %v1449
  %v1451 = vrcp.pop %v1335
  %v1452 = vmul.f32 1.0, %v1451
  %v1453 = vrcp.pop %v1336
  %v1454 = vmul.f32 1.0, %v1453
  %v1455 = vrcp.pop %v1337
  %v1456 = vmul.f32 1.0, %v1455
  %v1457 = vrcp.pop %v1338
  %v1458 = vmul.f32 1.0, %v1457
  %v1459 = vrcp.pop %v1339
  %v1460 = vmul.f32 1.0, %v1459
  %v1461 = vrcp.pop %v1340
  %v1462 = vmul.f32 1.0, %v1461
  %v1463 = vrcp.pop %v1341
  %v1464 = vmul.f32 1.0, %v1463
  %v1465 = vrcp.pop %v1342
  %v1466 = vmul.f32 1.0, %v1465
  %v1467 = vrcp.pop %v1343
  %v1468 = vmul.f32 1.0, %v1467
  %v1469 = vrcp.pop %v1344
  %v1470 = vmul.f32 1.0, %v1469
  %v1471 = vrcp.pop %v1345
  %v1472 = vmul.f32 1.0, %v1471
  %v1473 = vrcp.pop %v1346
  %v1474 = vmul.f32 1.0, %v1473
  %v1475 = vrcp.pop %v1347
  %v1476 = vmul.f32 1.0, %v1475
  %v1477 = vrcp.pop %v1348
  %v1478 = vmul.f32 1.0, %v1477
  %v1479 = vrcp.pop %v1349
  %v1480 = vmul.f32 1.0, %v1479
  %v1481 = vrcp.pop %v1350
  %v1482 = vmul.f32 1.0, %v1481
  %v1483 = vrcp.pop %v1351
  %v1484 = vmul.f32 1.0, %v1483
  %v1485 = vrcp.pop %v1352
  %v1486 = vmul.f32 1.0, %v1485
  %v1487 = vrcp.pop %v1353
  %v1488 = vmul.f32 1.0, %v1487
  %v1489 = vrcp.pop %v1354
  %v1490 = vmul.f32 1.0, %v1489
  %v1491 = vrcp.pop %v1355
  %v1492 = vmul.f32 1.0, %v1491
  %v1493 = vrcp.pop %v1356
  %v1494 = vmul.f32 1.0, %v1493
  %v1495 = vrcp.pop %v1357
  %v1496 = vmul.f32 1.0, %v1495
  %v1497 = vrcp.pop %v1358
  %v1498 = vmul.f32 1.0, %v1497
  %v1499 = vrcp.pop %v1359
  %v1500 = vmul.f32 1.0, %v1499
  %v1501 = vrcp.pop %v1360
  %v1502 = vmul.f32 1.0, %v1501
  %v1503 = vrcp.pop %v1361
  %v1504 = vmul.f32 1.0, %v1503
  %v1505 = vrcp.pop %v1362
  %v1506 = vmul.f32 1.0, %v1505
  %v1507 = vrcp.pop %v1363
  %v1508 = vmul.f32 1.0, %v1507
  %v1509 = vrcp.pop %v1364
  %v1510 = vmul.f32 1.0, %v1509
  %v1511 = vrcp.pop %v1365
  %v1512 = vmul.f32 1.0, %v1511
  %v1513 = vrcp.pop %v1366
  %v1514 = vmul.f32 1.0, %v1513
  %v1515 = vmul.f32 %v1072, %v1367
  %v1516 = vmul.f32 %v1074, %v1369
  %v1517 = vmul.f32 %v1076, %v1371
  %v1518 = vmul.f32 %v1078, %v1373
  %v1519 = vmul.f32 %v1080, %v1375
  %v1520 = vmul.f32 %v1082, %v1377
  %v1521 = vmul.f32 %v1084, %v1379
  %v1522 = vmul.f32 %v1086, %v1381
  %v1523 = vmul.f32 %v1088, %v1383
  %v1524 = vmul.f32 %v1090, %v1385
  %v1525 = vmul.f32 %v1092, %v1387
  %v1526 = vmul.f32 %v1094, %v1389
  %v1527 = vmul.f32 %v1096, %v1391
  %v1528 = vmul.f32 %v1098, %v1393
  %v1529 = vmul.f32 %v1100, %v1395
  %v1530 = vmul.f32 %v1102, %v1397
  %v1531 = vmul.f32 %v1104, %v1399
  %v1532 = vmul.f32 %v1106, %v1401
  %v1533 = vmul.f32 %v1108, %v1403
  %v1534 = vmul.f32 %v1110, %v1405
  %v1535 = vmul.f32 %v1112, %v1407
  %v1536 = vmul.f32 %v1114, %v1409
  %v1537 = vmul.f32 %v1116, %v1411
  %v1538 = vmul.f32 %v1118, %v1413
  %v1539 = vmul.f32 %v1120, %v1415
  %v1540 = vmul.f32 %v1122, %v1417
  %v1541 = vmul.f32 %v1124, %v1419
  %v1542 = vmul.f32 %v1126, %v1421
  %v1543 = vmul.f32 %v1128, %v1423
  %v1544 = vmul.f32 %v1130, %v1425
  %v1545 = vmul.f32 %v1132, %v1427
  %v1546 = vmul.f32 %v1134, %v1429
  %v1547 = vmul.f32 %v1136, %v1431
  %v1548 = vmul.f32 %v1138, %v1433
  %v1549 = vmul.f32 %v1140, %v1435
  %v1550 = vmul.f32 %v1142, %v1437
  %v1551 = vmul.f32 %v1144, %v1439
  %v1552 = vmul.f32 %v1146, %v1441
  %v1553 = vmul.f32 %v1148, %v1443
  %v1554 = vmul.f32 %v1150, %v1445
  %v1555 = vmul.f32 %v1152, %v1447
  %v1556 = vmul.f32 %v1154, %v1449
  %v1557 = vmul.f32 %v1156, %v1451
  %v1558 = vmul.f32 %v1158, %v1453
  %v1559 = vmul.f32 %v1160, %v1455
  %v1560 = vmul.f32 %v1162, %v1457
  %v1561 = vmul.f32 %v1164, %v1459
  %v1562 = vmul.f32 %v1166, %v1461
  %v1563 = vmul.f32 %v1168, %v1463
  %v1564 = vmul.f32 %v1170, %v1465
  %v1565 = vmul.f32 %v1172, %v1467
  %v1566 = vmul.f32 %v1174, %v1469
  %v1567 = vmul.f32 %v1176, %v1471
  %v1568 = vmul.f32 %v1178, %v1473
  %v1569 = vmul.f32 %v1180, %v1475
  %v1570 = vmul.f32 %v1182, %v1477
  %v1571 = vmul.f32 %v1184, %v1479
  %v1572 = vmul.f32 %v1186, %v1481
  %v1573 = vmul.f32 %v1188, %v1483
  %v1574 = vmul.f32 %v1190, %v1485
  %v1575 = vmul.f32 %v1192, %v1487
  %v1576 = vmul.f32 %v1194, %v1489
  %v1577 = vmul.f32 %v1196, %v1491
  %v1578 = vmul.f32 %v1198, %v1493
  %v1579 = vmul.f32 %v1200, %v1495
  %v1580 = vmul.f32 %v1202, %v1497
  %v1581 = vmul.f32 %v1204, %v1499
  %v1582 = vmul.f32 %v1206, %v1501
  %v1583 = vmul.f32 %v1208, %v1503
  %v1584 = vmul.f32 %v1210, %v1505
  %v1585 = vmul.f32 %v1212, %v1507
  %v1586 = vmul.f32 %v1214, %v1509
  %v1587 = vmul.f32 %v1216, %v1511
  %v1588 = vmul.f32 %v1218, %v1513
  %v1589 = vsel %vm1219, %v1368, %v1515
  %v1590 = vsel %vm1220, %v1370, %v1516
  %v1591 = vsel %vm1221, %v1372, %v1517
  %v1592 = vsel %vm1222, %v1374, %v1518
  %v1593 = vsel %vm1223, %v1376, %v1519
  %v1594 = vsel %vm1224, %v1378, %v1520
  %v1595 = vsel %vm1225, %v1380, %v1521
  %v1596 = vsel %vm1226, %v1382, %v1522
  %v1597 = vsel %vm1227, %v1384, %v1523
  %v1598 = vsel %vm1228, %v1386, %v1524
  %v1599 = vsel %vm1229, %v1388, %v1525
  %v1600 = vsel %vm1230, %v1390, %v1526
  %v1601 = vsel %vm1231, %v1392, %v1527
  %v1602 = vsel %vm1232, %v1394, %v1528
  %v1603 = vsel %vm1233, %v1396, %v1529
  %v1604 = vsel %vm1234, %v1398, %v1530
  %v1605 = vsel %vm1235, %v1400, %v1531
  %v1606 = vsel %vm1236, %v1402, %v1532
  %v1607 = vsel %vm1237, %v1404, %v1533
  %v1608 = vsel %vm1238, %v1406, %v1534
  %v1609 = vsel %vm1239, %v1408, %v1535
  %v1610 = vsel %vm1240, %v1410, %v1536
  %v1611 = vsel %vm1241, %v1412, %v1537
  %v1612 = vsel %vm1242, %v1414, %v1538
  %v1613 = vsel %vm1243, %v1416, %v1539
  %v1614 = vsel %vm1244, %v1418, %v1540
  %v1615 = vsel %vm1245, %v1420, %v1541
  %v1616 = vsel %vm1246, %v1422, %v1542
  %v1617 = vsel %vm1247, %v1424, %v1543
  %v1618 = vsel %vm1248, %v1426, %v1544
  %v1619 = vsel %vm1249, %v1428, %v1545
  %v1620 = vsel %vm1250, %v1430, %v1546
  %v1621 = vsel %vm1251, %v1432, %v1547
  %v1622 = vsel %vm1252, %v1434, %v1548
  %v1623 = vsel %vm1253, %v1436, %v1549
  %v1624 = vsel %vm1254, %v1438, %v1550
  %v1625 = vsel %vm1255, %v1440, %v1551
  %v1626 = vsel %vm1256, %v1442, %v1552
  %v1627 = vsel %vm1257, %v1444, %v1553
  %v1628 = vsel %vm1258, %v1446, %v1554
  %v1629 = vsel %vm1259, %v1448, %v1555
  %v1630 = vsel %vm1260, %v1450, %v1556
  %v1631 = vsel %vm1261, %v1452, %v1557
  %v1632 = vsel %vm1262, %v1454, %v1558
  %v1633 = vsel %vm1263, %v1456, %v1559
  %v1634 = vsel %vm1264, %v1458, %v1560
  %v1635 = vsel %vm1265, %v1460, %v1561
  %v1636 = vsel %vm1266, %v1462, %v1562
  %v1637 = vsel %vm1267, %v1464, %v1563
  %v1638 = vsel %vm1268, %v1466, %v1564
  %v1639 = vsel %vm1269, %v1468, %v1565
  %v1640 = vsel %vm1270, %v1470, %v1566
  %v1641 = vsel %vm1271, %v1472, %v1567
  %v1642 = vsel %vm1272, %v1474, %v1568
  %v1643 = vsel %vm1273, %v1476, %v1569
  %v1644 = vsel %vm1274, %v1478, %v1570
  %v1645 = vsel %vm1275, %v1480, %v1571
  %v1646 = vsel %vm1276, %v1482, %v1572
  %v1647 = vsel %vm1277, %v1484, %v1573
  %v1648 = vsel %vm1278, %v1486, %v1574
  %v1649 = vsel %vm1279, %v1488, %v1575
  %v1650 = vsel %vm1280, %v1490, %v1576
  %v1651 = vsel %vm1281, %v1492, %v1577
  %v1652 = vsel %vm1282, %v1494, %v1578
  %v1653 = vsel %vm1283, %v1496, %v1579
  %v1654 = vsel %vm1284, %v1498, %v1580
  %v1655 = vsel %vm1285, %v1500, %v1581
  %v1656 = vsel %vm1286, %v1502, %v1582
  %v1657 = vsel %vm1287, %v1504, %v1583
  %v1658 = vsel %vm1288, %v1506, %v1584
  %v1659 = vsel %vm1289, %v1508, %v1585
  %v1660 = vsel %vm1290, %v1510, %v1586
  %v1661 = vsel %vm1291, %v1512, %v1587
  %v1662 = vsel %vm1292, %v1514, %v1588
  %1663 = vst [vmem:[%s3] sm:$0xff] %v1589
  %1664 = vst [vmem:[%s3 + $0x8] sm:$0xff] %v1590
  %1665 = vst [vmem:[%s3 + $0x10] sm:$0xff] %v1591
  %1666 = vst [vmem:[%s3 + $0x18] sm:$0xff] %v1592
  %1667 = vst [vmem:[%s3 + $0x20] sm:$0xff] %v1593
  %1668 = vst [vmem:[%s3 + $0x28] sm:$0xff] %v1594
  %1669 = vst [vmem:[%s3 + $0x30] sm:$0xff] %v1595
  %1670 = vst [vmem:[%s3 + $0x38] sm:$0xff] %v1596
  %1671 = vst [vmem:[%s3 + $0x40] sm:$0xff] %v1597
  %1672 = vst [vmem:[%s3 + $0x48] sm:$0xff] %v1598
  %1673 = vst [vmem:[%s3 + $0x50] sm:$0xff] %v1599
  %1674 = vst [vmem:[%s3 + $0x58] sm:$0xff] %v1600
  %1675 = vst [vmem:[%s3 + $0x60] sm:$0xff] %v1601
  %1676 = vst [vmem:[%s3 + $0x68] sm:$0xff] %v1602
  %1677 = vst [vmem:[%s3 + $0x70] sm:$0xff] %v1603
  %1678 = vst [vmem:[%s3 + $0x78] sm:$0xff] %v1604
  %1679 = vst [vmem:[%s3 + $0x80] sm:$0xff] %v1605
  %1680 = vst [vmem:[%s3 + $0x88] sm:$0xff] %v1606
  %1681 = vst [vmem:[%s3 + $0x90] sm:$0xff] %v1607
  %1682 = vst [vmem:[%s3 + $0x98] sm:$0xff] %v1608
  %1683 = vst [vmem:[%s3 + $0xa0] sm:$0xff] %v1609
  %1684 = vst [vmem:[%s3 + $0xa8] sm:$0xff] %v1610
  %1685 = vst [vmem:[%s3 + $0xb0] sm:$0xff] %v1611
  %1686 = vst [vmem:[%s3 + $0xb8] sm:$0xff] %v1612
  %1687 = vst [vmem:[%s3 + $0xc0] sm:$0xff] %v1613
  %1688 = vst [vmem:[%s3 + $0xc8] sm:$0xff] %v1614
  %1689 = vst [vmem:[%s3 + $0xd0] sm:$0xff] %v1615
  %1690 = vst [vmem:[%s3 + $0xd8] sm:$0xff] %v1616
  %1691 = vst [vmem:[%s3 + $0xe0] sm:$0xff] %v1617
  %1692 = vst [vmem:[%s3 + $0xe8] sm:$0xff] %v1618
  %1693 = vst [vmem:[%s3 + $0xf0] sm:$0xff] %v1619
  %1694 = vst [vmem:[%s3 + $0xf8] sm:$0xff] %v1620
  %1695 = vst [vmem:[%s3 + $0x100] sm:$0xff] %v1621
  %1696 = vst [vmem:[%s3 + $0x108] sm:$0xff] %v1622
  %1697 = vst [vmem:[%s3 + $0x110] sm:$0xff] %v1623
  %1698 = vst [vmem:[%s3 + $0x118] sm:$0xff] %v1624
  %1699 = vst [vmem:[%s3 + $0x120] sm:$0xff] %v1625
  %1700 = vst [vmem:[%s3 + $0x128] sm:$0xff] %v1626
  %1701 = vst [vmem:[%s3 + $0x130] sm:$0xff] %v1627
  %1702 = vst [vmem:[%s3 + $0x138] sm:$0xff] %v1628
  %1703 = vst [vmem:[%s3 + $0x140] sm:$0xff] %v1629
  %1704 = vst [vmem:[%s3 + $0x148] sm:$0xff] %v1630
  %1705 = vst [vmem:[%s3 + $0x150] sm:$0xff] %v1631
  %1706 = vst [vmem:[%s3 + $0x158] sm:$0xff] %v1632
  %1707 = vst [vmem:[%s3 + $0x160] sm:$0xff] %v1633
  %1708 = vst [vmem:[%s3 + $0x168] sm:$0xff] %v1634
  %1709 = vst [vmem:[%s3 + $0x170] sm:$0xff] %v1635
  %1710 = vst [vmem:[%s3 + $0x178] sm:$0xff] %v1636
  %1711 = vst [vmem:[%s3 + $0x180] sm:$0xff] %v1637
  %1712 = vst [vmem:[%s3 + $0x188] sm:$0xff] %v1638
  %1713 = vst [vmem:[%s3 + $0x190] sm:$0xff] %v1639
  %1714 = vst [vmem:[%s3 + $0x198] sm:$0xff] %v1640
  %1715 = vst [vmem:[%s3 + $0x1a0] sm:$0xff] %v1641
  %1716 = vst [vmem:[%s3 + $0x1a8] sm:$0xff] %v1642
  %1717 = vst [vmem:[%s3 + $0x1b0] sm:$0xff] %v1643
  %1718 = vst [vmem:[%s3 + $0x1b8] sm:$0xff] %v1644
  %1719 = vst [vmem:[%s3 + $0x1c0] sm:$0xff] %v1645
  %1720 = vst [vmem:[%s3 + $0x1c8] sm:$0xff] %v1646
  %1721 = vst [vmem:[%s3 + $0x1d0] sm:$0xff] %v1647
  %1722 = vst [vmem:[%s3 + $0x1d8] sm:$0xff] %v1648
  %1723 = vst [vmem:[%s3 + $0x1e0] sm:$0xff] %v1649
  %1724 = vst [vmem:[%s3 + $0x1e8] sm:$0xff] %v1650
  %1725 = vst [vmem:[%s3 + $0x1f0] sm:$0xff] %v1651
  %1726 = vst [vmem:[%s3 + $0x1f8] sm:$0xff] %v1652
  %1727 = vst [vmem:[%s3 + $0x200] sm:$0xff] %v1653
  %1728 = vst [vmem:[%s3 + $0x208] sm:$0xff] %v1654
  %1729 = vst [vmem:[%s3 + $0x210] sm:$0xff] %v1655
  %1730 = vst [vmem:[%s3 + $0x218] sm:$0xff] %v1656
  %1731 = vst [vmem:[%s3 + $0x220] sm:$0xff] %v1657
  %1732 = vst [vmem:[%s3 + $0x228] sm:$0xff] %v1658
  %1733 = vst [vmem:[%s3 + $0x230] sm:$0xff] %v1659
  %1734 = vst [vmem:[%s3 + $0x238] sm:$0xff] %v1660
  %1735 = vst [vmem:[%s3 + $0x240] sm:$0xff] %v1661
  %1736 = vst [vmem:[%s3 + $0x248] sm:$0xff] %v1662
  // Predicated region
  $region14: #{_lambda_.23} parent=0 // pred_check
    _
  $region15: #{_lambda_.23} parent=0 // pred_check_branch
    %1738 = sbr.rel (0) target = $region17
  $region16: #{_lambda_.23} parent=0 // pred_region
    _
  $region17: #{_lambda_.23} parent=0 // pred_fallthru
    _
  // Predicated region
  $region18: #{_lambda_.23} parent=0 // pred_check
    _
  $region19: #{_lambda_.23} parent=0 // pred_check_branch
    %1740 = sbr.rel (0) target = $region21
  $region20: #{_lambda_.23} parent=0 // pred_region
    _
  $region21: #{_lambda_.23} parent=0 // pred_fallthru
    _

</llo_original>
